<compile_context>
chip_gen: v7x
topology: tpu7x:2x2x1
jax: 0.10.0
libtpu: 0.0.40
codegen_flags: <defaults>
</compile_context>

<pallas_src>
import functools

import jax
import jax.numpy as jnp
from jax import lax
from jax.experimental import pallas as pl
from jax.experimental.pallas import tpu as pltpu

LN_EPS = 1e-5        # nn.LayerNorm default eps
NORM_EPS = 1e-12     # F.normalize default eps
NEG_BIG = -1e30      # off-head-block softmax bias


# --------------------------- in-kernel math helpers ---------------------------
def _erf(x):
    # Abramowitz & Stegun 7.1.26 (abs err ~1.5e-7): mul/add/exp only.
    a1, a2, a3, a4, a5 = 0.254829592, -0.284496736, 1.421413741, -1.453152027, 1.061405429
    p = 0.3275911
    s = jnp.where(x >= 0.0, 1.0, -1.0)
    ax = jnp.abs(x)
    t = 1.0 / (1.0 + p * ax)
    poly = ((((a5 * t + a4) * t + a3) * t + a2) * t + a1) * t
    return s * (1.0 - poly * jnp.exp(-ax * ax))


def _layernorm(x, w, b):
    mu = jnp.mean(x, axis=-1, keepdims=True)
    xc = x - mu
    var = jnp.mean(xc * xc, axis=-1, keepdims=True)
    return xc * lax.rsqrt(var + LN_EPS) * w + b


def _mm(a, b, dims):
    """2-D matmul with explicit contraction dims so transposes stay in the MXU feed."""
    return lax.dot_general(a, b, (dims, ((), ())), preferred_element_type=jnp.float32)


# --------------------------- fully fused BasicBlock kernel --------------------
def _make_fused_kernel(NB, B, H, W, C, HP, PAD):
    HW = H * W
    BHW = B * HW
    C3 = 3 * C
    HP2 = 2 * HP

    def kernel(x_ref, masks_ref, rowp_ref, bias_ref,
               qkv_w_ref, qkv_dw_ref, proj_w_ref,
               pin_w_ref, ffn_dw_ref, pout_w_ref,
               o_ref, pad_a_ref, pad_f_ref):
        # Identity for in-kernel NCHW <-> token-major transposes (MXU matmul, no XLA op).
        r = lax.broadcasted_iota(jnp.int32, (HW, HW), 0)
        c = lax.broadcasted_iota(jnp.int32, (HW, HW), 1)
        ident = jnp.where(r == c, 1.0, 0.0).astype(jnp.float32)

        # Zero ONLY the dwconv halo rows, once per call (the body rows are fully
        # overwritten before every read).
        pad_a_ref[0:PAD, :] = jnp.zeros((PAD, C3), jnp.float32)
        pad_a_ref[PAD + BHW:PAD + BHW + PAD, :] = jnp.zeros((PAD, C3), jnp.float32)
        pad_f_ref[0:PAD, :] = jnp.zeros((PAD, HP2), jnp.float32)
        pad_f_ref[PAD + BHW:PAD + BHW + PAD, :] = jnp.zeros((PAD, HP2), jnp.float32)

        # Per-tap combined (row x column) validity masks, loaded once and reused by
        # every dwconv (also make the batch-merged slab exact at image boundaries).
        tap_mask = [masks_ref[:, t:t + 1] for t in range(9)]

        def dwconv(val, w9, pad_ref):
            """3x3 depthwise conv (padding=1, bias=False) on the merged (B*HW, ch) slab."""
            pad_ref[PAD:PAD + BHW, :] = val
            acc = jnp.zeros(val.shape, jnp.float32)
            for dh in range(3):
                for dw in range(3):
                    t = dh * 3 + dw
                    off = (dh - 1) * W + (dw - 1)
                    tap = pad_ref[PAD + off:PAD + off + BHW, :] * w9[t:t + 1, :]
                    if t != 4:                       # center tap never crosses a boundary
                        tap = tap * tap_mask[t]
                    acc = acc + tap
            return acc

        # ---- NCHW -> token-major (B*HW, C), folded into the kernel -------------------
        x = jnp.concatenate(
            [_mm(ident, x_ref[b], ((1,), (1,))) for b in range(B)], axis=0)   # (BHW, C)

        for blk in range(NB):
            rp = rowp_ref[blk]                       # (8, C) packed small params
            ln1_w, ln1_b = rp[0:1, :], rp[1:2, :]
            ln2_w, ln2_b = rp[2:3, :], rp[3:4, :]
            temp_c = rp[4:5, :]

            # ---------------- x = x + Attention(norm1(x)) ----------------
            y = _layernorm(x, ln1_w, ln1_b)
            qkv = _mm(y, qkv_w_ref[blk], ((1,), (0,)))           # (BHW, 3C)
            qkv = dwconv(qkv, qkv_dw_ref[blk], pad_a_ref)
            q = qkv[:, 0:C]
            k = qkv[:, C:2 * C]
            v = qkv[:, 2 * C:3 * C]

            outs = []
            for b in range(B):
                s0 = b * HW
                qb = q[s0:s0 + HW]
                kb = k[s0:s0 + HW]
                vb = v[s0:s0 + HW]
                # F.normalize over the spatial axis (per image); per-head temperature
                # folded into the q scaling (exact).  rsqrt -> EUP slot.
                qn = qb * (lax.rsqrt(jnp.maximum(jnp.sum(qb * qb, axis=0, keepdims=True),
                                                 NORM_EPS * NORM_EPS)) * temp_c)
                kn = kb * lax.rsqrt(jnp.maximum(jnp.sum(kb * kb, axis=0, keepdims=True),
                                                NORM_EPS * NORM_EPS))
                # All heads at once: (C, C) logits + block-diagonal head bias, row softmax.
                s = _mm(qn, kn, ((0,), (0,))) + bias_ref[...]
                s = s - jnp.max(s, axis=-1, keepdims=True)
                e = jnp.exp(s)
                attn = e * pl.reciprocal(jnp.sum(e, axis=-1, keepdims=True), approx=True)
                outs.append(_mm(vb, attn, ((1,), (1,))))          # (HW, C)
            out = jnp.concatenate(outs, axis=0)                   # (BHW, C)
            x = x + _mm(out, proj_w_ref[blk], ((1,), (0,)))

            # ---------------- x = x + FeedForward(norm2(x)) ----------------
            y = _layernorm(x, ln2_w, ln2_b)
            yin = _mm(y, pin_w_ref[blk], ((1,), (0,)))            # (BHW, 2*HP)
            yin = dwconv(yin, ffn_dw_ref[blk], pad_f_ref)
            x1 = yin[:, 0:HP]
            x2 = yin[:, HP:2 * HP]
            gate = 0.5 * x1 * (1.0 + _erf(x1 * 0.7071067811865476)) * x2      # erf-GELU gate
            x = x + _mm(gate, pout_w_ref[blk], ((1,), (0,)))

        # ---- token-major -> NCHW, again via identity matmuls -------------------------
        for b in range(B):
            o_ref[b] = _mm(x[b * HW:(b + 1) * HW], ident, ((0,), (0,)))       # (C, HW)

    return kernel


def _fused_basic_block(x_bc_hw, pk, B, C, H, W):
    """One pallas_call for the whole BasicBlock.  x_bc_hw: (B, C, H*W) f32."""
    HW = H * W
    BHW = B * HW
    NB = pk['qkv_w'].shape[0]
    HP = pk['pout_w'].shape[1]
    C3 = 3 * C
    HP2 = 2 * HP
    PAD = max(8, ((W + 1 + 7) // 8) * 8)          # >= W + 1, sublane aligned
    kernel = _make_fused_kernel(NB, B, H, W, C, HP, PAD)

    def rep(shape):                                # whole-array operand, VMEM resident
        n = len(shape)
        return pl.BlockSpec(shape, lambda i, _n=n: (0,) * _n)

    in_specs = [
        rep((B, C, HW)),        # x (NCHW with spatial flattened)
        rep((BHW, 9)),          # packed per-tap boundary masks
        rep((NB, 8, C)),        # packed ln1 w/b, ln2 w/b, temperature
        rep((C, C)),            # block-diagonal head bias (shared by both blocks)
        rep((NB, C, C3)),       # qkv 1x1
        rep((NB, 9, C3)),       # qkv depthwise taps
        rep((NB, C, C)),        # attention project_out
        rep((NB, C, HP2)),      # ffn project_in (lane padded)
        rep((NB, 9, HP2)),      # ffn depthwise taps (lane padded)
        rep((NB, HP, C)),       # ffn project_out (row padded)
    ]

    flops = (2 * NB * BHW * (C * C3 + 9 * C3 + 2 * C * C + C * C
                             + C * HP2 + 9 * HP2 + HP * C)
             + 2 * 2 * B * HW * HW * C)            # + identity-matmul transposes
    transcendentals = NB * (B * C * C + BHW * HP)
    bytes_accessed = 4 * (2 * B * C * HW + BHW * 9 + C * C
                          + NB * (8 * C + C * C3 + 9 * C3 + C * C
                                  + C * HP2 + 9 * HP2 + HP * C))

    return pl.pallas_call(
        kernel,
        out_shape=jax.ShapeDtypeStruct((B, C, HW), jnp.float32),
        grid=(1,),
        in_specs=in_specs,
        out_specs=rep((B, C, HW)),
        scratch_shapes=[pltpu.VMEM((BHW + 2 * PAD, C3), jnp.float32),
                        pltpu.VMEM((BHW + 2 * PAD, HP2), jnp.float32)],
        compiler_params=pltpu.CompilerParams(dimension_semantics=("arbitrary",)),
        cost_estimate=pl.CostEstimate(flops=flops, transcendentals=transcendentals,
                                      bytes_accessed=bytes_accessed),
    )(x_bc_hw, pk['masks9'], pk['rowp'], pk['attn_bias'],
      pk['qkv_w'], pk['qkv_dw'], pk['proj_w'],
      pk['pin_w'], pk['ffn_dw'], pk['pout_w'])


# --------------------------- parameter packing (outside the jitted path) ------
def prepare_params(params, C, num_heads, H, W, B):
    ch = C // num_heads
    hidden = params[0]['pout_w'].shape[0]
    HP = ((hidden + 127) // 128) * 128
    HW = H * W

    rowp, qkv_w, qkv_dw, proj_w, pin_w, ffn_dw, pout_w = [], [], [], [], [], [], []
    for p in params:
        temp_c = jnp.repeat(p['temperature'], ch).reshape(1, C)
        rowp.append(jnp.concatenate(
            [p['ln1_w'].reshape(1, C), p['ln1_b'].reshape(1, C),
             p['ln2_w'].reshape(1, C), p['ln2_b'].reshape(1, C),
             temp_c, jnp.zeros((3, C), jnp.float32)], axis=0))
        qkv_w.append(p['qkv_w'])
        qkv_dw.append(p['qkv_dw_w'])
        proj_w.append(p['proj_w'])
        # Lane-dense FFN: zero-pad hidden -> HP; exact (padded channels stay zero
        # through project_in / dwconv / GELU gate, padded pout rows contribute 0).
        pin = jnp.zeros((C, 2 * HP), jnp.float32)
        pin = pin.at[:, :hidden].set(p['pin_w'][:, :hidden])
        pin = pin.at[:, HP:HP + hidden].set(p['pin_w'][:, hidden:])
        dwp = jnp.zeros((9, 2 * HP), jnp.float32)
        dwp = dwp.at[:, :hidden].set(p['ffn_dw_w'][:, :hidden])
        dwp = dwp.at[:, HP:HP + hidden].set(p['ffn_dw_w'][:, hidden:])
        pin_w.append(pin)
        ffn_dw.append(dwp)
        pout_w.append(jnp.zeros((HP, C), jnp.float32).at[:hidden].set(p['pout_w']))

    head_id = jnp.arange(C) // ch
    attn_bias = jnp.where(head_id[:, None] == head_id[None, :], 0.0, NEG_BIG).astype(jnp.float32)

    # Combined (row x column) validity mask per 3x3 tap on the batch-merged token axis.
    h_idx = jnp.arange(HW) // W
    w_idx = jnp.arange(HW) % W
    cols = []
    for dh in range(3):
        for dw in range(3):
            v_ok = jnp.ones((HW,), bool) if dh == 1 else (h_idx > 0 if dh == 0 else h_idx < H - 1)
            h_ok = jnp.ones((HW,), bool) if dw == 1 else (w_idx > 0 if dw == 0 else w_idx < W - 1)
            cols.append((v_ok & h_ok).astype(jnp.float32))
    masks9 = jnp.tile(jnp.stack(cols, axis=1), (B, 1))                    # (B*HW, 9)

    stack = lambda xs: jnp.stack(xs, axis=0).astype(jnp.float32)
    return dict(masks9=masks9, rowp=stack(rowp), attn_bias=attn_bias,
                qkv_w=stack(qkv_w), qkv_dw=stack(qkv_dw), proj_w=stack(proj_w),
                pin_w=stack(pin_w), ffn_dw=stack(ffn_dw), pout_w=stack(pout_w))


def basic_block_forward(x_nchw, pk):
    """BasicBlock forward (stack of TransformerBlocks), NCHW in / NCHW out."""
    B, C, H, W = x_nchw.shape
    x = x_nchw.reshape(B, C, H * W)              # free reshape; transposes happen in-kernel
    y = _fused_basic_block(x, pk, B, C, H, W)
    return y.reshape(B, C, H, W)


# --------------------------- deterministic parameters -------------------------
def init_params(key, dim, num_heads, ffn_factor, num_blocks):
    hidden = int(dim * ffn_factor)
    params = []
    for b in range(num_blocks):
        ks = jax.random.split(jax.random.fold_in(key, b), 8)
        params.append({
            'ln1_w': jnp.ones((dim,), jnp.float32),
            'ln1_b': jnp.zeros((dim,), jnp.float32),
            'qkv_w': 0.05 * jax.random.normal(ks[0], (dim, 3 * dim), jnp.float32),
            'qkv_dw_w': 0.05 * jax.random.normal(ks[1], (9, 3 * dim), jnp.float32),
            'temperature': jnp.ones((num_heads,), jnp.float32),
            'proj_w': 0.05 * jax.random.normal(ks[2], (dim, dim), jnp.float32),
            'ln2_w': jnp.ones((dim,), jnp.float32),
            'ln2_b': jnp.zeros((dim,), jnp.float32),
            'pin_w': 0.05 * jax.random.normal(ks[3], (dim, 2 * hidden), jnp.float32),
            'ffn_dw_w': 0.05 * jax.random.normal(ks[4], (9, 2 * hidden), jnp.float32),
            'pout_w': 0.05 * jax.random.normal(ks[5], (hidden, dim), jnp.float32),
        })
    return params


# --------------------------- pure-JAX reference (for self-check) --------------
def reference_forward(x_nchw, params, num_heads):
    B, C, H, W = x_nchw.shape
    HW = H * W
    ch = C // num_heads

    def ln2d(x, w, b):
        xc = jnp.transpose(x, (0, 2, 3, 1))
        mu = jnp.mean(xc, axis=-1, keepdims=True)
        var = jnp.mean((xc - mu) ** 2, axis=-1, keepdims=True)
        y = (xc - mu) / jnp.sqrt(var + LN_EPS) * w + b
        return jnp.transpose(y, (0, 3, 1, 2))

    def conv1x1(x, w):
        return jnp.einsum('bchw,cd->bdhw', x, w, precision='highest')

    def dwconv(x, taps):
        xp = jnp.pad(x, ((0, 0), (0, 0), (1, 1), (1, 1)))
        out = jnp.zeros_like(x)
        for kh in range(3):
            for kw in range(3):
                out = out + xp[:, :, kh:kh + H, kw:kw + W] * taps[kh * 3 + kw][None, :, None, None]
        return out

    x = x_nchw
    for p in params:
        y = ln2d(x, p['ln1_w'], p['ln1_b'])
        qkv = dwconv(conv1x1(y, p['qkv_w']), p['qkv_dw_w'])
        q, k, v = jnp.split(qkv, 3, axis=1)
        heads = lambda t: t.reshape(B, num_heads, ch, HW)
        q, k, v = heads(q), heads(k), heads(v)
        q = q / jnp.maximum(jnp.sqrt(jnp.sum(q * q, axis=-1, keepdims=True)), NORM_EPS)
        k = k / jnp.maximum(jnp.sqrt(jnp.sum(k * k, axis=-1, keepdims=True)), NORM_EPS)
        attn = jnp.einsum('bhcn,bhdn->bhcd', q, k, precision='highest')
        attn = attn * p['temperature'][None, :, None, None]
        attn = jax.nn.softmax(attn, axis=-1)
        out = jnp.einsum('bhcd,bhdn->bhcn', attn, v, precision='highest')
        out = out.reshape(B, C, H, W)
        x = x + conv1x1(out, p['proj_w'])

        y = ln2d(x, p['ln2_w'], p['ln2_b'])
        hidden = p['pout_w'].shape[0]
        yin = dwconv(conv1x1(y, p['pin_w']), p['ffn_dw_w'])
        x1, x2 = yin[:, :hidden], yin[:, hidden:]
        g = jax.nn.gelu(x1, approximate=False) * x2
        x = x + conv1x1(g, p['pout_w'])
    return x


if __name__ == "__main__":
    B, C, H, W = 2, 32, 8, 8          # NCHW input; dim=32 divisible by num_heads=8
    num_heads = 8
    ffn_expansion_factor = 2.66       # hidden = int(32 * 2.66) = 85 -> padded to 128
    num_blocks = 2

    key = jax.random.PRNGKey(0)
    kx, kp = jax.random.split(key)
    x = jax.random.normal(kx, (B, C, H, W), jnp.float32)
    params = init_params(kp, C, num_heads, ffn_expansion_factor, num_blocks)

    packed = prepare_params(params, C, num_heads, H, W, B)   # hoisted out of the jitted path
    fwd = jax.jit(basic_block_forward)
    out = jax.block_until_ready(fwd(x, packed))

    assert out.shape == (B, C, H, W) and out.dtype == jnp.float32
    assert bool(jnp.all(jnp.isfinite(out)))

    ref = jax.jit(functools.partial(reference_forward, num_heads=num_heads))(x, params)
    ref = jax.block_until_ready(ref)
    max_err = float(jnp.max(jnp.abs(out - ref)))
    assert max_err < 2e-2, f"mismatch vs pure-JAX reference: max abs err = {max_err}"

    print("KERNEL_OK")
</pallas_src>

<mosaic_0001>
module attributes {stable_mosaic.version = 11 : i64} {
  func.func @kernel(%arg0: i32, %arg1: memref<2x32x64xf32, #tpu.memory_space<vmem>>, %arg2: memref<128x9xf32, #tpu.memory_space<vmem>>, %arg3: memref<2x8x32xf32, #tpu.memory_space<vmem>>, %arg4: memref<32x32xf32, #tpu.memory_space<vmem>>, %arg5: memref<2x32x96xf32, #tpu.memory_space<vmem>>, %arg6: memref<2x9x96xf32, #tpu.memory_space<vmem>>, %arg7: memref<2x32x32xf32, #tpu.memory_space<vmem>>, %arg8: memref<2x32x256xf32, #tpu.memory_space<vmem>>, %arg9: memref<2x9x256xf32, #tpu.memory_space<vmem>>, %arg10: memref<2x128x32xf32, #tpu.memory_space<vmem>>, %arg11: memref<2x32x64xf32, #tpu.memory_space<vmem>>, %arg12: memref<160x96xf32, #tpu.memory_space<vmem>>, %arg13: memref<160x256xf32, #tpu.memory_space<vmem>>) attributes {dimension_semantics = [#tpu.dimension_semantics<arbitrary>], iteration_bounds = array<i64: 1>, scalar_prefetch = 0 : i64, scratch_operands = 2 : i64, tpu.core_type = #tpu.core_type<tc>, window_params = [{pipeline_mode = #tpu.pipeline_mode<synchronous>, transform_indices = @transform_0, window_bounds = array<i64: 2, 32, 64>}, {pipeline_mode = #tpu.pipeline_mode<synchronous>, transform_indices = @transform_1, window_bounds = array<i64: 128, 9>}, {pipeline_mode = #tpu.pipeline_mode<synchronous>, transform_indices = @transform_2, window_bounds = array<i64: 2, 8, 32>}, {pipeline_mode = #tpu.pipeline_mode<synchronous>, transform_indices = @transform_3, window_bounds = array<i64: 32, 32>}, {pipeline_mode = #tpu.pipeline_mode<synchronous>, transform_indices = @transform_4, window_bounds = array<i64: 2, 32, 96>}, {pipeline_mode = #tpu.pipeline_mode<synchronous>, transform_indices = @transform_5, window_bounds = array<i64: 2, 9, 96>}, {pipeline_mode = #tpu.pipeline_mode<synchronous>, transform_indices = @transform_6, window_bounds = array<i64: 2, 32, 32>}, {pipeline_mode = #tpu.pipeline_mode<synchronous>, transform_indices = @transform_7, window_bounds = array<i64: 2, 32, 256>}, {pipeline_mode = #tpu.pipeline_mode<synchronous>, transform_indices = @transform_8, window_bounds = array<i64: 2, 9, 256>}, {pipeline_mode = #tpu.pipeline_mode<synchronous>, transform_indices = @transform_9, window_bounds = array<i64: 2, 128, 32>}, {pipeline_mode = #tpu.pipeline_mode<synchronous>, transform_indices = @transform_10, window_bounds = array<i64: 2, 32, 64>}]} {
    %0 = tpu.iota {dimensions = array<i32: 0>} : vector<64x64xi32>
    %1 = tpu.iota {dimensions = array<i32: 1>} : vector<64x64xi32>
    %2 = arith.cmpi eq, %0, %1 : vector<64x64xi32>
    %cst = arith.constant 1.000000e+00 : f32
    %cst_0 = arith.constant 0.000000e+00 : f32
    %3 = vector.broadcast %cst : f32 to vector<64x64xf32>
    %4 = vector.broadcast %cst_0 : f32 to vector<64x64xf32>
    %5 = arith.select %2, %3, %4 : vector<64x64xi1>, vector<64x64xf32>
    %cst_1 = arith.constant 0.000000e+00 : f32
    %6 = vector.broadcast %cst_1 : f32 to vector<16x96xf32>
    %c0 = arith.constant 0 : index
    %c0_2 = arith.constant 0 : index
    %7 = vector.load %arg12[%c0, %c0_2] : memref<160x96xf32, #tpu.memory_space<vmem>>, vector<16x96xf32>
    tpu.vector_store %arg12[%c0, %c0_2], %6 {strides = array<i32>} : memref<160x96xf32, #tpu.memory_space<vmem>>, vector<16x96xf32>,
    %cst_3 = arith.constant 0.000000e+00 : f32
    %8 = vector.broadcast %cst_3 : f32 to vector<16x96xf32>
    %c144 = arith.constant 144 : index
    %c0_4 = arith.constant 0 : index
    %9 = vector.load %arg12[%c144, %c0_4] : memref<160x96xf32, #tpu.memory_space<vmem>>, vector<16x96xf32>
    tpu.vector_store %arg12[%c144, %c0_4], %8 {strides = array<i32>} : memref<160x96xf32, #tpu.memory_space<vmem>>, vector<16x96xf32>,
    %cst_5 = arith.constant 0.000000e+00 : f32
    %10 = vector.broadcast %cst_5 : f32 to vector<16x256xf32>
    %c0_6 = arith.constant 0 : index
    %c0_7 = arith.constant 0 : index
    %11 = vector.load %arg13[%c0_6, %c0_7] : memref<160x256xf32, #tpu.memory_space<vmem>>, vector<16x256xf32>
    tpu.vector_store %arg13[%c0_6, %c0_7], %10 {strides = array<i32>} : memref<160x256xf32, #tpu.memory_space<vmem>>, vector<16x256xf32>,
    %cst_8 = arith.constant 0.000000e+00 : f32
    %12 = vector.broadcast %cst_8 : f32 to vector<16x256xf32>
    %c144_9 = arith.constant 144 : index
    %c0_10 = arith.constant 0 : index
    %13 = vector.load %arg13[%c144_9, %c0_10] : memref<160x256xf32, #tpu.memory_space<vmem>>, vector<16x256xf32>
    tpu.vector_store %arg13[%c144_9, %c0_10], %12 {strides = array<i32>} : memref<160x256xf32, #tpu.memory_space<vmem>>, vector<16x256xf32>,
    %c0_11 = arith.constant 0 : index
    %c0_12 = arith.constant 0 : index
    %14 = vector.load %arg2[%c0_11, %c0_12] : memref<128x9xf32, #tpu.memory_space<vmem>>, vector<128x1xf32>
    %c0_13 = arith.constant 0 : index
    %c1 = arith.constant 1 : index
    %15 = vector.load %arg2[%c0_13, %c1] : memref<128x9xf32, #tpu.memory_space<vmem>>, vector<128x1xf32>
    %c0_14 = arith.constant 0 : index
    %c2 = arith.constant 2 : index
    %16 = vector.load %arg2[%c0_14, %c2] : memref<128x9xf32, #tpu.memory_space<vmem>>, vector<128x1xf32>
    %c0_15 = arith.constant 0 : index
    %c3 = arith.constant 3 : index
    %17 = vector.load %arg2[%c0_15, %c3] : memref<128x9xf32, #tpu.memory_space<vmem>>, vector<128x1xf32>
    %c0_16 = arith.constant 0 : index
    %c5 = arith.constant 5 : index
    %18 = vector.load %arg2[%c0_16, %c5] : memref<128x9xf32, #tpu.memory_space<vmem>>, vector<128x1xf32>
    %c0_17 = arith.constant 0 : index
    %c6 = arith.constant 6 : index
    %19 = vector.load %arg2[%c0_17, %c6] : memref<128x9xf32, #tpu.memory_space<vmem>>, vector<128x1xf32>
    %c0_18 = arith.constant 0 : index
    %c7 = arith.constant 7 : index
    %20 = vector.load %arg2[%c0_18, %c7] : memref<128x9xf32, #tpu.memory_space<vmem>>, vector<128x1xf32>
    %c0_19 = arith.constant 0 : index
    %c8 = arith.constant 8 : index
    %21 = vector.load %arg2[%c0_19, %c8] : memref<128x9xf32, #tpu.memory_space<vmem>>, vector<128x1xf32>
    %c0_20 = arith.constant 0 : index
    %c0_21 = arith.constant 0 : index
    %c0_22 = arith.constant 0 : index
    %22 = vector.load %arg1[%c0_20, %c0_21, %c0_22] : memref<2x32x64xf32, #tpu.memory_space<vmem>>, vector<1x32x64xf32>
    %23 = vector.shape_cast %22 : vector<1x32x64xf32> to vector<32x64xf32>
    %cst_23 = arith.constant dense<0.000000e+00> : vector<64x32xf32>
    %24 = tpu.matmul %5, %23, %cst_23 {dimension_numbers = #tpu.dot_dimension_numbers<[1], [1], [0], [0], [0, 0, 1, 0], [], []>} : vector<64x64xf32>, vector<32x64xf32>, vector<64x32xf32> -> vector<64x32xf32>
    %c1_24 = arith.constant 1 : index
    %c0_25 = arith.constant 0 : index
    %c0_26 = arith.constant 0 : index
    %25 = vector.load %arg1[%c1_24, %c0_25, %c0_26] : memref<2x32x64xf32, #tpu.memory_space<vmem>>, vector<1x32x64xf32>
    %26 = vector.shape_cast %25 : vector<1x32x64xf32> to vector<32x64xf32>
    %cst_27 = arith.constant dense<0.000000e+00> : vector<64x32xf32>
    %27 = tpu.matmul %5, %26, %cst_27 {dimension_numbers = #tpu.dot_dimension_numbers<[1], [1], [0], [0], [0, 0, 1, 0], [], []>} : vector<64x64xf32>, vector<32x64xf32>, vector<64x32xf32> -> vector<64x32xf32>
    %28 = tpu.concatenate %24, %27 in 0 : vector<64x32xf32>, vector<64x32xf32> -> vector<128x32xf32>
    %c0_28 = arith.constant 0 : index
    %c0_29 = arith.constant 0 : index
    %c0_30 = arith.constant 0 : index
    %29 = vector.load %arg3[%c0_28, %c0_29, %c0_30] : memref<2x8x32xf32, #tpu.memory_space<vmem>>, vector<1x8x32xf32>
    %30 = vector.shape_cast %29 : vector<1x8x32xf32> to vector<8x32xf32>
    %31 = vector.extract_strided_slice %30 {offsets = [0, 0], sizes = [1, 32], strides = [1, 1]} : vector<8x32xf32> to vector<1x32xf32>
    %32 = vector.extract_strided_slice %30 {offsets = [1, 0], sizes = [1, 32], strides = [1, 1]} : vector<8x32xf32> to vector<1x32xf32>
    %33 = vector.extract_strided_slice %30 {offsets = [2, 0], sizes = [1, 32], strides = [1, 1]} : vector<8x32xf32> to vector<1x32xf32>
    %34 = vector.extract_strided_slice %30 {offsets = [3, 0], sizes = [1, 32], strides = [1, 1]} : vector<8x32xf32> to vector<1x32xf32>
    %35 = vector.extract_strided_slice %30 {offsets = [4, 0], sizes = [1, 32], strides = [1, 1]} : vector<8x32xf32> to vector<1x32xf32>
    %cst_31 = arith.constant dense<0.000000e+00> : vector<128xf32>
    %36 = vector.multi_reduction <add>, %28, %cst_31 [1] : vector<128x32xf32> to vector<128xf32>
    %37 = vector.shape_cast %36 : vector<128xf32> to vector<128x1xf32>
    %cst_32 = arith.constant 3.200000e+01 : f32
    %38 = vector.broadcast %cst_32 : f32 to vector<128x1xf32>
    %39 = arith.divf %37, %38 : vector<128x1xf32>
    %40 = vector.broadcast %39 : vector<128x1xf32> to vector<128x32xf32>
    %41 = arith.subf %28, %40 : vector<128x32xf32>
    %42 = arith.mulf %41, %41 : vector<128x32xf32>
    %cst_33 = arith.constant dense<0.000000e+00> : vector<128xf32>
    %43 = vector.multi_reduction <add>, %42, %cst_33 [1] : vector<128x32xf32> to vector<128xf32>
    %44 = vector.shape_cast %43 : vector<128xf32> to vector<128x1xf32>
    %cst_34 = arith.constant 3.200000e+01 : f32
    %45 = vector.broadcast %cst_34 : f32 to vector<128x1xf32>
    %46 = arith.divf %44, %45 : vector<128x1xf32>
    %cst_35 = arith.constant 9.99999974E-6 : f32
    %47 = vector.broadcast %cst_35 : f32 to vector<128x1xf32>
    %48 = arith.addf %46, %47 : vector<128x1xf32>
    %49 = math.rsqrt %48 : vector<128x1xf32>
    %50 = vector.broadcast %49 : vector<128x1xf32> to vector<128x32xf32>
    %51 = arith.mulf %41, %50 : vector<128x32xf32>
    %52 = vector.broadcast %31 : vector<1x32xf32> to vector<128x32xf32>
    %53 = arith.mulf %51, %52 : vector<128x32xf32>
    %54 = vector.broadcast %32 : vector<1x32xf32> to vector<128x32xf32>
    %55 = arith.addf %53, %54 : vector<128x32xf32>
    %c0_36 = arith.constant 0 : index
    %c0_37 = arith.constant 0 : index
    %c0_38 = arith.constant 0 : index
    %56 = vector.load %arg5[%c0_36, %c0_37, %c0_38] : memref<2x32x96xf32, #tpu.memory_space<vmem>>, vector<1x32x96xf32>
    %57 = vector.shape_cast %56 : vector<1x32x96xf32> to vector<32x96xf32>
    %cst_39 = arith.constant dense<0.000000e+00> : vector<128x96xf32>
    %58 = tpu.matmul %55, %57, %cst_39 {dimension_numbers = #tpu.dot_dimension_numbers<[1], [0], [0], [1], [0, 0, 1, 1], [], []>} : vector<128x32xf32>, vector<32x96xf32>, vector<128x96xf32> -> vector<128x96xf32>
    %c0_40 = arith.constant 0 : index
    %c0_41 = arith.constant 0 : index
    %c0_42 = arith.constant 0 : index
    %59 = vector.load %arg6[%c0_40, %c0_41, %c0_42] : memref<2x9x96xf32, #tpu.memory_space<vmem>>, vector<1x9x96xf32>
    %60 = vector.shape_cast %59 : vector<1x9x96xf32> to vector<9x96xf32>
    %c16 = arith.constant 16 : index
    %c0_43 = arith.constant 0 : index
    %61 = vector.load %arg12[%c16, %c0_43] : memref<160x96xf32, #tpu.memory_space<vmem>>, vector<128x96xf32>
    tpu.vector_store %arg12[%c16, %c0_43], %58 {strides = array<i32>} : memref<160x96xf32, #tpu.memory_space<vmem>>, vector<128x96xf32>,
    %cst_44 = arith.constant 0.000000e+00 : f32
    %62 = vector.broadcast %cst_44 : f32 to vector<128x96xf32>
    %c7_45 = arith.constant 7 : index
    %c0_46 = arith.constant 0 : index
    %63 = vector.load %arg12[%c7_45, %c0_46] : memref<160x96xf32, #tpu.memory_space<vmem>>, vector<128x96xf32>
    %64 = vector.extract_strided_slice %60 {offsets = [0, 0], sizes = [1, 96], strides = [1, 1]} : vector<9x96xf32> to vector<1x96xf32>
    %65 = vector.broadcast %64 : vector<1x96xf32> to vector<128x96xf32>
    %66 = arith.mulf %63, %65 : vector<128x96xf32>
    %67 = vector.broadcast %14 : vector<128x1xf32> to vector<128x96xf32>
    %68 = arith.mulf %66, %67 : vector<128x96xf32>
    %69 = arith.addf %62, %68 : vector<128x96xf32>
    %c8_47 = arith.constant 8 : index
    %c0_48 = arith.constant 0 : index
    %70 = vector.load %arg12[%c8_47, %c0_48] : memref<160x96xf32, #tpu.memory_space<vmem>>, vector<128x96xf32>
    %71 = vector.extract_strided_slice %60 {offsets = [1, 0], sizes = [1, 96], strides = [1, 1]} : vector<9x96xf32> to vector<1x96xf32>
    %72 = vector.broadcast %71 : vector<1x96xf32> to vector<128x96xf32>
    %73 = arith.mulf %70, %72 : vector<128x96xf32>
    %74 = vector.broadcast %15 : vector<128x1xf32> to vector<128x96xf32>
    %75 = arith.mulf %73, %74 : vector<128x96xf32>
    %76 = arith.addf %69, %75 : vector<128x96xf32>
    %c9 = arith.constant 9 : index
    %c0_49 = arith.constant 0 : index
    %77 = vector.load %arg12[%c9, %c0_49] : memref<160x96xf32, #tpu.memory_space<vmem>>, vector<128x96xf32>
    %78 = vector.extract_strided_slice %60 {offsets = [2, 0], sizes = [1, 96], strides = [1, 1]} : vector<9x96xf32> to vector<1x96xf32>
    %79 = vector.broadcast %78 : vector<1x96xf32> to vector<128x96xf32>
    %80 = arith.mulf %77, %79 : vector<128x96xf32>
    %81 = vector.broadcast %16 : vector<128x1xf32> to vector<128x96xf32>
    %82 = arith.mulf %80, %81 : vector<128x96xf32>
    %83 = arith.addf %76, %82 : vector<128x96xf32>
    %c15 = arith.constant 15 : index
    %c0_50 = arith.constant 0 : index
    %84 = vector.load %arg12[%c15, %c0_50] : memref<160x96xf32, #tpu.memory_space<vmem>>, vector<128x96xf32>
    %85 = vector.extract_strided_slice %60 {offsets = [3, 0], sizes = [1, 96], strides = [1, 1]} : vector<9x96xf32> to vector<1x96xf32>
    %86 = vector.broadcast %85 : vector<1x96xf32> to vector<128x96xf32>
    %87 = arith.mulf %84, %86 : vector<128x96xf32>
    %88 = vector.broadcast %17 : vector<128x1xf32> to vector<128x96xf32>
    %89 = arith.mulf %87, %88 : vector<128x96xf32>
    %90 = arith.addf %83, %89 : vector<128x96xf32>
    %c16_51 = arith.constant 16 : index
    %c0_52 = arith.constant 0 : index
    %91 = vector.load %arg12[%c16_51, %c0_52] : memref<160x96xf32, #tpu.memory_space<vmem>>, vector<128x96xf32>
    %92 = vector.extract_strided_slice %60 {offsets = [4, 0], sizes = [1, 96], strides = [1, 1]} : vector<9x96xf32> to vector<1x96xf32>
    %93 = vector.broadcast %92 : vector<1x96xf32> to vector<128x96xf32>
    %94 = arith.mulf %91, %93 : vector<128x96xf32>
    %95 = arith.addf %90, %94 : vector<128x96xf32>
    %c17 = arith.constant 17 : index
    %c0_53 = arith.constant 0 : index
    %96 = vector.load %arg12[%c17, %c0_53] : memref<160x96xf32, #tpu.memory_space<vmem>>, vector<128x96xf32>
    %97 = vector.extract_strided_slice %60 {offsets = [5, 0], sizes = [1, 96], strides = [1, 1]} : vector<9x96xf32> to vector<1x96xf32>
    %98 = vector.broadcast %97 : vector<1x96xf32> to vector<128x96xf32>
    %99 = arith.mulf %96, %98 : vector<128x96xf32>
    %100 = vector.broadcast %18 : vector<128x1xf32> to vector<128x96xf32>
    %101 = arith.mulf %99, %100 : vector<128x96xf32>
    %102 = arith.addf %95, %101 : vector<128x96xf32>
    %c23 = arith.constant 23 : index
    %c0_54 = arith.constant 0 : index
    %103 = vector.load %arg12[%c23, %c0_54] : memref<160x96xf32, #tpu.memory_space<vmem>>, vector<128x96xf32>
    %104 = vector.extract_strided_slice %60 {offsets = [6, 0], sizes = [1, 96], strides = [1, 1]} : vector<9x96xf32> to vector<1x96xf32>
    %105 = vector.broadcast %104 : vector<1x96xf32> to vector<128x96xf32>
    %106 = arith.mulf %103, %105 : vector<128x96xf32>
    %107 = vector.broadcast %19 : vector<128x1xf32> to vector<128x96xf32>
    %108 = arith.mulf %106, %107 : vector<128x96xf32>
    %109 = arith.addf %102, %108 : vector<128x96xf32>
    %c24 = arith.constant 24 : index
    %c0_55 = arith.constant 0 : index
    %110 = vector.load %arg12[%c24, %c0_55] : memref<160x96xf32, #tpu.memory_space<vmem>>, vector<128x96xf32>
    %111 = vector.extract_strided_slice %60 {offsets = [7, 0], sizes = [1, 96], strides = [1, 1]} : vector<9x96xf32> to vector<1x96xf32>
    %112 = vector.broadcast %111 : vector<1x96xf32> to vector<128x96xf32>
    %113 = arith.mulf %110, %112 : vector<128x96xf32>
    %114 = vector.broadcast %20 : vector<128x1xf32> to vector<128x96xf32>
    %115 = arith.mulf %113, %114 : vector<128x96xf32>
    %116 = arith.addf %109, %115 : vector<128x96xf32>
    %c25 = arith.constant 25 : index
    %c0_56 = arith.constant 0 : index
    %117 = vector.load %arg12[%c25, %c0_56] : memref<160x96xf32, #tpu.memory_space<vmem>>, vector<128x96xf32>
    %118 = vector.extract_strided_slice %60 {offsets = [8, 0], sizes = [1, 96], strides = [1, 1]} : vector<9x96xf32> to vector<1x96xf32>
    %119 = vector.broadcast %118 : vector<1x96xf32> to vector<128x96xf32>
    %120 = arith.mulf %117, %119 : vector<128x96xf32>
    %121 = vector.broadcast %21 : vector<128x1xf32> to vector<128x96xf32>
    %122 = arith.mulf %120, %121 : vector<128x96xf32>
    %123 = arith.addf %116, %122 : vector<128x96xf32>
    %124 = vector.extract_strided_slice %123 {offsets = [0, 0], sizes = [128, 32], strides = [1, 1]} : vector<128x96xf32> to vector<128x32xf32>
    %125 = vector.extract_strided_slice %123 {offsets = [0, 32], sizes = [128, 32], strides = [1, 1]} : vector<128x96xf32> to vector<128x32xf32>
    %126 = vector.extract_strided_slice %123 {offsets = [0, 64], sizes = [128, 32], strides = [1, 1]} : vector<128x96xf32> to vector<128x32xf32>
    %127 = vector.extract_strided_slice %124 {offsets = [0, 0], sizes = [64, 32], strides = [1, 1]} : vector<128x32xf32> to vector<64x32xf32>
    %128 = vector.extract_strided_slice %125 {offsets = [0, 0], sizes = [64, 32], strides = [1, 1]} : vector<128x32xf32> to vector<64x32xf32>
    %129 = vector.extract_strided_slice %126 {offsets = [0, 0], sizes = [64, 32], strides = [1, 1]} : vector<128x32xf32> to vector<64x32xf32>
    %130 = arith.mulf %127, %127 : vector<64x32xf32>
    %cst_57 = arith.constant dense<0.000000e+00> : vector<32xf32>
    %131 = vector.multi_reduction <add>, %130, %cst_57 [0] : vector<64x32xf32> to vector<32xf32>
    %132 = vector.shape_cast %131 : vector<32xf32> to vector<1x32xf32>
    %cst_58 = arith.constant 1.000000e-24 : f32
    %133 = vector.broadcast %cst_58 : f32 to vector<1x32xf32>
    %134 = arith.maximumf %132, %133 : vector<1x32xf32>
    %135 = math.rsqrt %134 : vector<1x32xf32>
    %136 = arith.mulf %135, %35 : vector<1x32xf32>
    %137 = vector.broadcast %136 : vector<1x32xf32> to vector<64x32xf32>
    %138 = arith.mulf %127, %137 : vector<64x32xf32>
    %139 = arith.mulf %128, %128 : vector<64x32xf32>
    %cst_59 = arith.constant dense<0.000000e+00> : vector<32xf32>
    %140 = vector.multi_reduction <add>, %139, %cst_59 [0] : vector<64x32xf32> to vector<32xf32>
    %141 = vector.shape_cast %140 : vector<32xf32> to vector<1x32xf32>
    %cst_60 = arith.constant 1.000000e-24 : f32
    %142 = vector.broadcast %cst_60 : f32 to vector<1x32xf32>
    %143 = arith.maximumf %141, %142 : vector<1x32xf32>
    %144 = math.rsqrt %143 : vector<1x32xf32>
    %145 = vector.broadcast %144 : vector<1x32xf32> to vector<64x32xf32>
    %146 = arith.mulf %128, %145 : vector<64x32xf32>
    %cst_61 = arith.constant dense<0.000000e+00> : vector<32x32xf32>
    %147 = tpu.matmul %138, %146, %cst_61 {dimension_numbers = #tpu.dot_dimension_numbers<[0], [0], [1], [1], [0, 1, 1, 1], [], []>} : vector<64x32xf32>, vector<64x32xf32>, vector<32x32xf32> -> vector<32x32xf32>
    %c0_62 = arith.constant 0 : index
    %c0_63 = arith.constant 0 : index
    %148 = vector.load %arg4[%c0_62, %c0_63] : memref<32x32xf32, #tpu.memory_space<vmem>>, vector<32x32xf32>
    %149 = arith.addf %147, %148 : vector<32x32xf32>
    %cst_64 = arith.constant dense<0xFF800000> : vector<32xf32>
    %150 = vector.multi_reduction <maximumf>, %149, %cst_64 [1] : vector<32x32xf32> to vector<32xf32>
    %151 = vector.shape_cast %150 : vector<32xf32> to vector<32x1xf32>
    %152 = vector.broadcast %151 : vector<32x1xf32> to vector<32x32xf32>
    %153 = arith.subf %149, %152 : vector<32x32xf32>
    %154 = math.exp %153 : vector<32x32xf32>
    %cst_65 = arith.constant dense<0.000000e+00> : vector<32xf32>
    %155 = vector.multi_reduction <add>, %154, %cst_65 [1] : vector<32x32xf32> to vector<32xf32>
    %156 = vector.shape_cast %155 : vector<32xf32> to vector<32x1xf32>
    %157 = tpu.reciprocal %156 {approx = true} : vector<32x1xf32> -> vector<32x1xf32>
    %158 = vector.broadcast %157 : vector<32x1xf32> to vector<32x32xf32>
    %159 = arith.mulf %154, %158 : vector<32x32xf32>
    %cst_66 = arith.constant dense<0.000000e+00> : vector<64x32xf32>
    %160 = tpu.matmul %129, %159, %cst_66 {dimension_numbers = #tpu.dot_dimension_numbers<[1], [1], [0], [0], [0, 0, 1, 0], [], []>} : vector<64x32xf32>, vector<32x32xf32>, vector<64x32xf32> -> vector<64x32xf32>
    %161 = vector.extract_strided_slice %124 {offsets = [64, 0], sizes = [64, 32], strides = [1, 1]} : vector<128x32xf32> to vector<64x32xf32>
    %162 = vector.extract_strided_slice %125 {offsets = [64, 0], sizes = [64, 32], strides = [1, 1]} : vector<128x32xf32> to vector<64x32xf32>
    %163 = vector.extract_strided_slice %126 {offsets = [64, 0], sizes = [64, 32], strides = [1, 1]} : vector<128x32xf32> to vector<64x32xf32>
    %164 = arith.mulf %161, %161 : vector<64x32xf32>
    %cst_67 = arith.constant dense<0.000000e+00> : vector<32xf32>
    %165 = vector.multi_reduction <add>, %164, %cst_67 [0] : vector<64x32xf32> to vector<32xf32>
    %166 = vector.shape_cast %165 : vector<32xf32> to vector<1x32xf32>
    %cst_68 = arith.constant 1.000000e-24 : f32
    %167 = vector.broadcast %cst_68 : f32 to vector<1x32xf32>
    %168 = arith.maximumf %166, %167 : vector<1x32xf32>
    %169 = math.rsqrt %168 : vector<1x32xf32>
    %170 = arith.mulf %169, %35 : vector<1x32xf32>
    %171 = vector.broadcast %170 : vector<1x32xf32> to vector<64x32xf32>
    %172 = arith.mulf %161, %171 : vector<64x32xf32>
    %173 = arith.mulf %162, %162 : vector<64x32xf32>
    %cst_69 = arith.constant dense<0.000000e+00> : vector<32xf32>
    %174 = vector.multi_reduction <add>, %173, %cst_69 [0] : vector<64x32xf32> to vector<32xf32>
    %175 = vector.shape_cast %174 : vector<32xf32> to vector<1x32xf32>
    %cst_70 = arith.constant 1.000000e-24 : f32
    %176 = vector.broadcast %cst_70 : f32 to vector<1x32xf32>
    %177 = arith.maximumf %175, %176 : vector<1x32xf32>
    %178 = math.rsqrt %177 : vector<1x32xf32>
    %179 = vector.broadcast %178 : vector<1x32xf32> to vector<64x32xf32>
    %180 = arith.mulf %162, %179 : vector<64x32xf32>
    %cst_71 = arith.constant dense<0.000000e+00> : vector<32x32xf32>
    %181 = tpu.matmul %172, %180, %cst_71 {dimension_numbers = #tpu.dot_dimension_numbers<[0], [0], [1], [1], [0, 1, 1, 1], [], []>} : vector<64x32xf32>, vector<64x32xf32>, vector<32x32xf32> -> vector<32x32xf32>
    %c0_72 = arith.constant 0 : index
    %c0_73 = arith.constant 0 : index
    %182 = vector.load %arg4[%c0_72, %c0_73] : memref<32x32xf32, #tpu.memory_space<vmem>>, vector<32x32xf32>
    %183 = arith.addf %181, %182 : vector<32x32xf32>
    %cst_74 = arith.constant dense<0xFF800000> : vector<32xf32>
    %184 = vector.multi_reduction <maximumf>, %183, %cst_74 [1] : vector<32x32xf32> to vector<32xf32>
    %185 = vector.shape_cast %184 : vector<32xf32> to vector<32x1xf32>
    %186 = vector.broadcast %185 : vector<32x1xf32> to vector<32x32xf32>
    %187 = arith.subf %183, %186 : vector<32x32xf32>
    %188 = math.exp %187 : vector<32x32xf32>
    %cst_75 = arith.constant dense<0.000000e+00> : vector<32xf32>
    %189 = vector.multi_reduction <add>, %188, %cst_75 [1] : vector<32x32xf32> to vector<32xf32>
    %190 = vector.shape_cast %189 : vector<32xf32> to vector<32x1xf32>
    %191 = tpu.reciprocal %190 {approx = true} : vector<32x1xf32> -> vector<32x1xf32>
    %192 = vector.broadcast %191 : vector<32x1xf32> to vector<32x32xf32>
    %193 = arith.mulf %188, %192 : vector<32x32xf32>
    %cst_76 = arith.constant dense<0.000000e+00> : vector<64x32xf32>
    %194 = tpu.matmul %163, %193, %cst_76 {dimension_numbers = #tpu.dot_dimension_numbers<[1], [1], [0], [0], [0, 0, 1, 0], [], []>} : vector<64x32xf32>, vector<32x32xf32>, vector<64x32xf32> -> vector<64x32xf32>
    %195 = tpu.concatenate %160, %194 in 0 : vector<64x32xf32>, vector<64x32xf32> -> vector<128x32xf32>
    %c0_77 = arith.constant 0 : index
    %c0_78 = arith.constant 0 : index
    %c0_79 = arith.constant 0 : index
    %196 = vector.load %arg7[%c0_77, %c0_78, %c0_79] : memref<2x32x32xf32, #tpu.memory_space<vmem>>, vector<1x32x32xf32>
    %197 = vector.shape_cast %196 : vector<1x32x32xf32> to vector<32x32xf32>
    %cst_80 = arith.constant dense<0.000000e+00> : vector<128x32xf32>
    %198 = tpu.matmul %195, %197, %cst_80 {dimension_numbers = #tpu.dot_dimension_numbers<[1], [0], [0], [1], [0, 0, 1, 1], [], []>} : vector<128x32xf32>, vector<32x32xf32>, vector<128x32xf32> -> vector<128x32xf32>
    %199 = arith.addf %28, %198 : vector<128x32xf32>
    %cst_81 = arith.constant dense<0.000000e+00> : vector<128xf32>
    %200 = vector.multi_reduction <add>, %199, %cst_81 [1] : vector<128x32xf32> to vector<128xf32>
    %201 = vector.shape_cast %200 : vector<128xf32> to vector<128x1xf32>
    %cst_82 = arith.constant 3.200000e+01 : f32
    %202 = vector.broadcast %cst_82 : f32 to vector<128x1xf32>
    %203 = arith.divf %201, %202 : vector<128x1xf32>
    %204 = vector.broadcast %203 : vector<128x1xf32> to vector<128x32xf32>
    %205 = arith.subf %199, %204 : vector<128x32xf32>
    %206 = arith.mulf %205, %205 : vector<128x32xf32>
    %cst_83 = arith.constant dense<0.000000e+00> : vector<128xf32>
    %207 = vector.multi_reduction <add>, %206, %cst_83 [1] : vector<128x32xf32> to vector<128xf32>
    %208 = vector.shape_cast %207 : vector<128xf32> to vector<128x1xf32>
    %cst_84 = arith.constant 3.200000e+01 : f32
    %209 = vector.broadcast %cst_84 : f32 to vector<128x1xf32>
    %210 = arith.divf %208, %209 : vector<128x1xf32>
    %cst_85 = arith.constant 9.99999974E-6 : f32
    %211 = vector.broadcast %cst_85 : f32 to vector<128x1xf32>
    %212 = arith.addf %210, %211 : vector<128x1xf32>
    %213 = math.rsqrt %212 : vector<128x1xf32>
    %214 = vector.broadcast %213 : vector<128x1xf32> to vector<128x32xf32>
    %215 = arith.mulf %205, %214 : vector<128x32xf32>
    %216 = vector.broadcast %33 : vector<1x32xf32> to vector<128x32xf32>
    %217 = arith.mulf %215, %216 : vector<128x32xf32>
    %218 = vector.broadcast %34 : vector<1x32xf32> to vector<128x32xf32>
    %219 = arith.addf %217, %218 : vector<128x32xf32>
    %c0_86 = arith.constant 0 : index
    %c0_87 = arith.constant 0 : index
    %c0_88 = arith.constant 0 : index
    %220 = vector.load %arg8[%c0_86, %c0_87, %c0_88] : memref<2x32x256xf32, #tpu.memory_space<vmem>>, vector<1x32x256xf32>
    %221 = vector.shape_cast %220 : vector<1x32x256xf32> to vector<32x256xf32>
    %cst_89 = arith.constant dense<0.000000e+00> : vector<128x256xf32>
    %222 = tpu.matmul %219, %221, %cst_89 {dimension_numbers = #tpu.dot_dimension_numbers<[1], [0], [0], [1], [0, 0, 1, 1], [], []>} : vector<128x32xf32>, vector<32x256xf32>, vector<128x256xf32> -> vector<128x256xf32>
    %c0_90 = arith.constant 0 : index
    %c0_91 = arith.constant 0 : index
    %c0_92 = arith.constant 0 : index
    %223 = vector.load %arg9[%c0_90, %c0_91, %c0_92] : memref<2x9x256xf32, #tpu.memory_space<vmem>>, vector<1x9x256xf32>
    %224 = vector.shape_cast %223 : vector<1x9x256xf32> to vector<9x256xf32>
    %c16_93 = arith.constant 16 : index
    %c0_94 = arith.constant 0 : index
    %225 = vector.load %arg13[%c16_93, %c0_94] : memref<160x256xf32, #tpu.memory_space<vmem>>, vector<128x256xf32>
    tpu.vector_store %arg13[%c16_93, %c0_94], %222 {strides = array<i32>} : memref<160x256xf32, #tpu.memory_space<vmem>>, vector<128x256xf32>,
    %cst_95 = arith.constant 0.000000e+00 : f32
    %226 = vector.broadcast %cst_95 : f32 to vector<128x256xf32>
    %c7_96 = arith.constant 7 : index
    %c0_97 = arith.constant 0 : index
    %227 = vector.load %arg13[%c7_96, %c0_97] : memref<160x256xf32, #tpu.memory_space<vmem>>, vector<128x256xf32>
    %228 = vector.extract_strided_slice %224 {offsets = [0, 0], sizes = [1, 256], strides = [1, 1]} : vector<9x256xf32> to vector<1x256xf32>
    %229 = vector.broadcast %228 : vector<1x256xf32> to vector<128x256xf32>
    %230 = arith.mulf %227, %229 : vector<128x256xf32>
    %231 = vector.broadcast %14 : vector<128x1xf32> to vector<128x256xf32>
    %232 = arith.mulf %230, %231 : vector<128x256xf32>
    %233 = arith.addf %226, %232 : vector<128x256xf32>
    %c8_98 = arith.constant 8 : index
    %c0_99 = arith.constant 0 : index
    %234 = vector.load %arg13[%c8_98, %c0_99] : memref<160x256xf32, #tpu.memory_space<vmem>>, vector<128x256xf32>
    %235 = vector.extract_strided_slice %224 {offsets = [1, 0], sizes = [1, 256], strides = [1, 1]} : vector<9x256xf32> to vector<1x256xf32>
    %236 = vector.broadcast %235 : vector<1x256xf32> to vector<128x256xf32>
    %237 = arith.mulf %234, %236 : vector<128x256xf32>
    %238 = vector.broadcast %15 : vector<128x1xf32> to vector<128x256xf32>
    %239 = arith.mulf %237, %238 : vector<128x256xf32>
    %240 = arith.addf %233, %239 : vector<128x256xf32>
    %c9_100 = arith.constant 9 : index
    %c0_101 = arith.constant 0 : index
    %241 = vector.load %arg13[%c9_100, %c0_101] : memref<160x256xf32, #tpu.memory_space<vmem>>, vector<128x256xf32>
    %242 = vector.extract_strided_slice %224 {offsets = [2, 0], sizes = [1, 256], strides = [1, 1]} : vector<9x256xf32> to vector<1x256xf32>
    %243 = vector.broadcast %242 : vector<1x256xf32> to vector<128x256xf32>
    %244 = arith.mulf %241, %243 : vector<128x256xf32>
    %245 = vector.broadcast %16 : vector<128x1xf32> to vector<128x256xf32>
    %246 = arith.mulf %244, %245 : vector<128x256xf32>
    %247 = arith.addf %240, %246 : vector<128x256xf32>
    %c15_102 = arith.constant 15 : index
    %c0_103 = arith.constant 0 : index
    %248 = vector.load %arg13[%c15_102, %c0_103] : memref<160x256xf32, #tpu.memory_space<vmem>>, vector<128x256xf32>
    %249 = vector.extract_strided_slice %224 {offsets = [3, 0], sizes = [1, 256], strides = [1, 1]} : vector<9x256xf32> to vector<1x256xf32>
    %250 = vector.broadcast %249 : vector<1x256xf32> to vector<128x256xf32>
    %251 = arith.mulf %248, %250 : vector<128x256xf32>
    %252 = vector.broadcast %17 : vector<128x1xf32> to vector<128x256xf32>
    %253 = arith.mulf %251, %252 : vector<128x256xf32>
    %254 = arith.addf %247, %253 : vector<128x256xf32>
    %c16_104 = arith.constant 16 : index
    %c0_105 = arith.constant 0 : index
    %255 = vector.load %arg13[%c16_104, %c0_105] : memref<160x256xf32, #tpu.memory_space<vmem>>, vector<128x256xf32>
    %256 = vector.extract_strided_slice %224 {offsets = [4, 0], sizes = [1, 256], strides = [1, 1]} : vector<9x256xf32> to vector<1x256xf32>
    %257 = vector.broadcast %256 : vector<1x256xf32> to vector<128x256xf32>
    %258 = arith.mulf %255, %257 : vector<128x256xf32>
    %259 = arith.addf %254, %258 : vector<128x256xf32>
    %c17_106 = arith.constant 17 : index
    %c0_107 = arith.constant 0 : index
    %260 = vector.load %arg13[%c17_106, %c0_107] : memref<160x256xf32, #tpu.memory_space<vmem>>, vector<128x256xf32>
    %261 = vector.extract_strided_slice %224 {offsets = [5, 0], sizes = [1, 256], strides = [1, 1]} : vector<9x256xf32> to vector<1x256xf32>
    %262 = vector.broadcast %261 : vector<1x256xf32> to vector<128x256xf32>
    %263 = arith.mulf %260, %262 : vector<128x256xf32>
    %264 = vector.broadcast %18 : vector<128x1xf32> to vector<128x256xf32>
    %265 = arith.mulf %263, %264 : vector<128x256xf32>
    %266 = arith.addf %259, %265 : vector<128x256xf32>
    %c23_108 = arith.constant 23 : index
    %c0_109 = arith.constant 0 : index
    %267 = vector.load %arg13[%c23_108, %c0_109] : memref<160x256xf32, #tpu.memory_space<vmem>>, vector<128x256xf32>
    %268 = vector.extract_strided_slice %224 {offsets = [6, 0], sizes = [1, 256], strides = [1, 1]} : vector<9x256xf32> to vector<1x256xf32>
    %269 = vector.broadcast %268 : vector<1x256xf32> to vector<128x256xf32>
    %270 = arith.mulf %267, %269 : vector<128x256xf32>
    %271 = vector.broadcast %19 : vector<128x1xf32> to vector<128x256xf32>
    %272 = arith.mulf %270, %271 : vector<128x256xf32>
    %273 = arith.addf %266, %272 : vector<128x256xf32>
    %c24_110 = arith.constant 24 : index
    %c0_111 = arith.constant 0 : index
    %274 = vector.load %arg13[%c24_110, %c0_111] : memref<160x256xf32, #tpu.memory_space<vmem>>, vector<128x256xf32>
    %275 = vector.extract_strided_slice %224 {offsets = [7, 0], sizes = [1, 256], strides = [1, 1]} : vector<9x256xf32> to vector<1x256xf32>
    %276 = vector.broadcast %275 : vector<1x256xf32> to vector<128x256xf32>
    %277 = arith.mulf %274, %276 : vector<128x256xf32>
    %278 = vector.broadcast %20 : vector<128x1xf32> to vector<128x256xf32>
    %279 = arith.mulf %277, %278 : vector<128x256xf32>
    %280 = arith.addf %273, %279 : vector<128x256xf32>
    %c25_112 = arith.constant 25 : index
    %c0_113 = arith.constant 0 : index
    %281 = vector.load %arg13[%c25_112, %c0_113] : memref<160x256xf32, #tpu.memory_space<vmem>>, vector<128x256xf32>
    %282 = vector.extract_strided_slice %224 {offsets = [8, 0], sizes = [1, 256], strides = [1, 1]} : vector<9x256xf32> to vector<1x256xf32>
    %283 = vector.broadcast %282 : vector<1x256xf32> to vector<128x256xf32>
    %284 = arith.mulf %281, %283 : vector<128x256xf32>
    %285 = vector.broadcast %21 : vector<128x1xf32> to vector<128x256xf32>
    %286 = arith.mulf %284, %285 : vector<128x256xf32>
    %287 = arith.addf %280, %286 : vector<128x256xf32>
    %288 = vector.extract_strided_slice %287 {offsets = [0, 0], sizes = [128, 128], strides = [1, 1]} : vector<128x256xf32> to vector<128x128xf32>
    %289 = vector.extract_strided_slice %287 {offsets = [0, 128], sizes = [128, 128], strides = [1, 1]} : vector<128x256xf32> to vector<128x128xf32>
    %cst_114 = arith.constant 5.000000e-01 : f32
    %290 = vector.broadcast %cst_114 : f32 to vector<128x128xf32>
    %291 = arith.mulf %290, %288 : vector<128x128xf32>
    %cst_115 = arith.constant 0.707106769 : f32
    %292 = vector.broadcast %cst_115 : f32 to vector<128x128xf32>
    %293 = arith.mulf %288, %292 : vector<128x128xf32>
    %cst_116 = arith.constant 0.000000e+00 : f32
    %294 = vector.broadcast %cst_116 : f32 to vector<128x128xf32>
    %295 = arith.cmpf oge, %293, %294 : vector<128x128xf32>
    %cst_117 = arith.constant 1.000000e+00 : f32
    %cst_118 = arith.constant -1.000000e+00 : f32
    %296 = vector.broadcast %cst_117 : f32 to vector<128x128xf32>
    %297 = vector.broadcast %cst_118 : f32 to vector<128x128xf32>
    %298 = arith.select %295, %296, %297 : vector<128x128xi1>, vector<128x128xf32>
    %299 = math.absf %293 : vector<128x128xf32>
    %cst_119 = arith.constant 0.327591091 : f32
    %300 = vector.broadcast %cst_119 : f32 to vector<128x128xf32>
    %301 = arith.mulf %300, %299 : vector<128x128xf32>
    %cst_120 = arith.constant 1.000000e+00 : f32
    %302 = vector.broadcast %cst_120 : f32 to vector<128x128xf32>
    %303 = arith.addf %302, %301 : vector<128x128xf32>
    %cst_121 = arith.constant 1.000000e+00 : f32
    %304 = vector.broadcast %cst_121 : f32 to vector<128x128xf32>
    %305 = arith.divf %304, %303 : vector<128x128xf32>
    %cst_122 = arith.constant 1.06140542 : f32
    %306 = vector.broadcast %cst_122 : f32 to vector<128x128xf32>
    %307 = arith.mulf %306, %305 : vector<128x128xf32>
    %cst_123 = arith.constant -1.45315206 : f32
    %308 = vector.broadcast %cst_123 : f32 to vector<128x128xf32>
    %309 = arith.addf %307, %308 : vector<128x128xf32>
    %310 = arith.mulf %309, %305 : vector<128x128xf32>
    %cst_124 = arith.constant 1.42141378 : f32
    %311 = vector.broadcast %cst_124 : f32 to vector<128x128xf32>
    %312 = arith.addf %310, %311 : vector<128x128xf32>
    %313 = arith.mulf %312, %305 : vector<128x128xf32>
    %cst_125 = arith.constant -0.284496725 : f32
    %314 = vector.broadcast %cst_125 : f32 to vector<128x128xf32>
    %315 = arith.addf %313, %314 : vector<128x128xf32>
    %316 = arith.mulf %315, %305 : vector<128x128xf32>
    %cst_126 = arith.constant 0.254829586 : f32
    %317 = vector.broadcast %cst_126 : f32 to vector<128x128xf32>
    %318 = arith.addf %316, %317 : vector<128x128xf32>
    %319 = arith.mulf %318, %305 : vector<128x128xf32>
    %cst_127 = arith.constant 0.000000e+00 : f32
    %320 = vector.broadcast %cst_127 : f32 to vector<128x128xf32>
    %321 = arith.subf %320, %299 : vector<128x128xf32>
    %322 = arith.mulf %321, %299 : vector<128x128xf32>
    %323 = math.exp %322 : vector<128x128xf32>
    %324 = arith.mulf %319, %323 : vector<128x128xf32>
    %cst_128 = arith.constant 1.000000e+00 : f32
    %325 = vector.broadcast %cst_128 : f32 to vector<128x128xf32>
    %326 = arith.subf %325, %324 : vector<128x128xf32>
    %327 = arith.mulf %298, %326 : vector<128x128xf32>
    %cst_129 = arith.constant 1.000000e+00 : f32
    %328 = vector.broadcast %cst_129 : f32 to vector<128x128xf32>
    %329 = arith.addf %328, %327 : vector<128x128xf32>
    %330 = arith.mulf %291, %329 : vector<128x128xf32>
    %331 = arith.mulf %330, %289 : vector<128x128xf32>
    %c0_130 = arith.constant 0 : index
    %c0_131 = arith.constant 0 : index
    %c0_132 = arith.constant 0 : index
    %332 = vector.load %arg10[%c0_130, %c0_131, %c0_132] : memref<2x128x32xf32, #tpu.memory_space<vmem>>, vector<1x128x32xf32>
    %333 = vector.shape_cast %332 : vector<1x128x32xf32> to vector<128x32xf32>
    %cst_133 = arith.constant dense<0.000000e+00> : vector<128x32xf32>
    %334 = tpu.matmul %331, %333, %cst_133 {dimension_numbers = #tpu.dot_dimension_numbers<[1], [0], [0], [1], [0, 0, 1, 1], [], []>} : vector<128x128xf32>, vector<128x32xf32>, vector<128x32xf32> -> vector<128x32xf32>
    %335 = arith.addf %199, %334 : vector<128x32xf32>
    %c1_134 = arith.constant 1 : index
    %c0_135 = arith.constant 0 : index
    %c0_136 = arith.constant 0 : index
    %336 = vector.load %arg3[%c1_134, %c0_135, %c0_136] : memref<2x8x32xf32, #tpu.memory_space<vmem>>, vector<1x8x32xf32>
    %337 = vector.shape_cast %336 : vector<1x8x32xf32> to vector<8x32xf32>
    %338 = vector.extract_strided_slice %337 {offsets = [0, 0], sizes = [1, 32], strides = [1, 1]} : vector<8x32xf32> to vector<1x32xf32>
    %339 = vector.extract_strided_slice %337 {offsets = [1, 0], sizes = [1, 32], strides = [1, 1]} : vector<8x32xf32> to vector<1x32xf32>
    %340 = vector.extract_strided_slice %337 {offsets = [2, 0], sizes = [1, 32], strides = [1, 1]} : vector<8x32xf32> to vector<1x32xf32>
    %341 = vector.extract_strided_slice %337 {offsets = [3, 0], sizes = [1, 32], strides = [1, 1]} : vector<8x32xf32> to vector<1x32xf32>
    %342 = vector.extract_strided_slice %337 {offsets = [4, 0], sizes = [1, 32], strides = [1, 1]} : vector<8x32xf32> to vector<1x32xf32>
    %cst_137 = arith.constant dense<0.000000e+00> : vector<128xf32>
    %343 = vector.multi_reduction <add>, %335, %cst_137 [1] : vector<128x32xf32> to vector<128xf32>
    %344 = vector.shape_cast %343 : vector<128xf32> to vector<128x1xf32>
    %cst_138 = arith.constant 3.200000e+01 : f32
    %345 = vector.broadcast %cst_138 : f32 to vector<128x1xf32>
    %346 = arith.divf %344, %345 : vector<128x1xf32>
    %347 = vector.broadcast %346 : vector<128x1xf32> to vector<128x32xf32>
    %348 = arith.subf %335, %347 : vector<128x32xf32>
    %349 = arith.mulf %348, %348 : vector<128x32xf32>
    %cst_139 = arith.constant dense<0.000000e+00> : vector<128xf32>
    %350 = vector.multi_reduction <add>, %349, %cst_139 [1] : vector<128x32xf32> to vector<128xf32>
    %351 = vector.shape_cast %350 : vector<128xf32> to vector<128x1xf32>
    %cst_140 = arith.constant 3.200000e+01 : f32
    %352 = vector.broadcast %cst_140 : f32 to vector<128x1xf32>
    %353 = arith.divf %351, %352 : vector<128x1xf32>
    %cst_141 = arith.constant 9.99999974E-6 : f32
    %354 = vector.broadcast %cst_141 : f32 to vector<128x1xf32>
    %355 = arith.addf %353, %354 : vector<128x1xf32>
    %356 = math.rsqrt %355 : vector<128x1xf32>
    %357 = vector.broadcast %356 : vector<128x1xf32> to vector<128x32xf32>
    %358 = arith.mulf %348, %357 : vector<128x32xf32>
    %359 = vector.broadcast %338 : vector<1x32xf32> to vector<128x32xf32>
    %360 = arith.mulf %358, %359 : vector<128x32xf32>
    %361 = vector.broadcast %339 : vector<1x32xf32> to vector<128x32xf32>
    %362 = arith.addf %360, %361 : vector<128x32xf32>
    %c1_142 = arith.constant 1 : index
    %c0_143 = arith.constant 0 : index
    %c0_144 = arith.constant 0 : index
    %363 = vector.load %arg5[%c1_142, %c0_143, %c0_144] : memref<2x32x96xf32, #tpu.memory_space<vmem>>, vector<1x32x96xf32>
    %364 = vector.shape_cast %363 : vector<1x32x96xf32> to vector<32x96xf32>
    %cst_145 = arith.constant dense<0.000000e+00> : vector<128x96xf32>
    %365 = tpu.matmul %362, %364, %cst_145 {dimension_numbers = #tpu.dot_dimension_numbers<[1], [0], [0], [1], [0, 0, 1, 1], [], []>} : vector<128x32xf32>, vector<32x96xf32>, vector<128x96xf32> -> vector<128x96xf32>
    %c1_146 = arith.constant 1 : index
    %c0_147 = arith.constant 0 : index
    %c0_148 = arith.constant 0 : index
    %366 = vector.load %arg6[%c1_146, %c0_147, %c0_148] : memref<2x9x96xf32, #tpu.memory_space<vmem>>, vector<1x9x96xf32>
    %367 = vector.shape_cast %366 : vector<1x9x96xf32> to vector<9x96xf32>
    %c16_149 = arith.constant 16 : index
    %c0_150 = arith.constant 0 : index
    %368 = vector.load %arg12[%c16_149, %c0_150] : memref<160x96xf32, #tpu.memory_space<vmem>>, vector<128x96xf32>
    tpu.vector_store %arg12[%c16_149, %c0_150], %365 {strides = array<i32>} : memref<160x96xf32, #tpu.memory_space<vmem>>, vector<128x96xf32>,
    %cst_151 = arith.constant 0.000000e+00 : f32
    %369 = vector.broadcast %cst_151 : f32 to vector<128x96xf32>
    %c7_152 = arith.constant 7 : index
    %c0_153 = arith.constant 0 : index
    %370 = vector.load %arg12[%c7_152, %c0_153] : memref<160x96xf32, #tpu.memory_space<vmem>>, vector<128x96xf32>
    %371 = vector.extract_strided_slice %367 {offsets = [0, 0], sizes = [1, 96], strides = [1, 1]} : vector<9x96xf32> to vector<1x96xf32>
    %372 = vector.broadcast %371 : vector<1x96xf32> to vector<128x96xf32>
    %373 = arith.mulf %370, %372 : vector<128x96xf32>
    %374 = vector.broadcast %14 : vector<128x1xf32> to vector<128x96xf32>
    %375 = arith.mulf %373, %374 : vector<128x96xf32>
    %376 = arith.addf %369, %375 : vector<128x96xf32>
    %c8_154 = arith.constant 8 : index
    %c0_155 = arith.constant 0 : index
    %377 = vector.load %arg12[%c8_154, %c0_155] : memref<160x96xf32, #tpu.memory_space<vmem>>, vector<128x96xf32>
    %378 = vector.extract_strided_slice %367 {offsets = [1, 0], sizes = [1, 96], strides = [1, 1]} : vector<9x96xf32> to vector<1x96xf32>
    %379 = vector.broadcast %378 : vector<1x96xf32> to vector<128x96xf32>
    %380 = arith.mulf %377, %379 : vector<128x96xf32>
    %381 = vector.broadcast %15 : vector<128x1xf32> to vector<128x96xf32>
    %382 = arith.mulf %380, %381 : vector<128x96xf32>
    %383 = arith.addf %376, %382 : vector<128x96xf32>
    %c9_156 = arith.constant 9 : index
    %c0_157 = arith.constant 0 : index
    %384 = vector.load %arg12[%c9_156, %c0_157] : memref<160x96xf32, #tpu.memory_space<vmem>>, vector<128x96xf32>
    %385 = vector.extract_strided_slice %367 {offsets = [2, 0], sizes = [1, 96], strides = [1, 1]} : vector<9x96xf32> to vector<1x96xf32>
    %386 = vector.broadcast %385 : vector<1x96xf32> to vector<128x96xf32>
    %387 = arith.mulf %384, %386 : vector<128x96xf32>
    %388 = vector.broadcast %16 : vector<128x1xf32> to vector<128x96xf32>
    %389 = arith.mulf %387, %388 : vector<128x96xf32>
    %390 = arith.addf %383, %389 : vector<128x96xf32>
    %c15_158 = arith.constant 15 : index
    %c0_159 = arith.constant 0 : index
    %391 = vector.load %arg12[%c15_158, %c0_159] : memref<160x96xf32, #tpu.memory_space<vmem>>, vector<128x96xf32>
    %392 = vector.extract_strided_slice %367 {offsets = [3, 0], sizes = [1, 96], strides = [1, 1]} : vector<9x96xf32> to vector<1x96xf32>
    %393 = vector.broadcast %392 : vector<1x96xf32> to vector<128x96xf32>
    %394 = arith.mulf %391, %393 : vector<128x96xf32>
    %395 = vector.broadcast %17 : vector<128x1xf32> to vector<128x96xf32>
    %396 = arith.mulf %394, %395 : vector<128x96xf32>
    %397 = arith.addf %390, %396 : vector<128x96xf32>
    %c16_160 = arith.constant 16 : index
    %c0_161 = arith.constant 0 : index
    %398 = vector.load %arg12[%c16_160, %c0_161] : memref<160x96xf32, #tpu.memory_space<vmem>>, vector<128x96xf32>
    %399 = vector.extract_strided_slice %367 {offsets = [4, 0], sizes = [1, 96], strides = [1, 1]} : vector<9x96xf32> to vector<1x96xf32>
    %400 = vector.broadcast %399 : vector<1x96xf32> to vector<128x96xf32>
    %401 = arith.mulf %398, %400 : vector<128x96xf32>
    %402 = arith.addf %397, %401 : vector<128x96xf32>
    %c17_162 = arith.constant 17 : index
    %c0_163 = arith.constant 0 : index
    %403 = vector.load %arg12[%c17_162, %c0_163] : memref<160x96xf32, #tpu.memory_space<vmem>>, vector<128x96xf32>
    %404 = vector.extract_strided_slice %367 {offsets = [5, 0], sizes = [1, 96], strides = [1, 1]} : vector<9x96xf32> to vector<1x96xf32>
    %405 = vector.broadcast %404 : vector<1x96xf32> to vector<128x96xf32>
    %406 = arith.mulf %403, %405 : vector<128x96xf32>
    %407 = vector.broadcast %18 : vector<128x1xf32> to vector<128x96xf32>
    %408 = arith.mulf %406, %407 : vector<128x96xf32>
    %409 = arith.addf %402, %408 : vector<128x96xf32>
    %c23_164 = arith.constant 23 : index
    %c0_165 = arith.constant 0 : index
    %410 = vector.load %arg12[%c23_164, %c0_165] : memref<160x96xf32, #tpu.memory_space<vmem>>, vector<128x96xf32>
    %411 = vector.extract_strided_slice %367 {offsets = [6, 0], sizes = [1, 96], strides = [1, 1]} : vector<9x96xf32> to vector<1x96xf32>
    %412 = vector.broadcast %411 : vector<1x96xf32> to vector<128x96xf32>
    %413 = arith.mulf %410, %412 : vector<128x96xf32>
    %414 = vector.broadcast %19 : vector<128x1xf32> to vector<128x96xf32>
    %415 = arith.mulf %413, %414 : vector<128x96xf32>
    %416 = arith.addf %409, %415 : vector<128x96xf32>
    %c24_166 = arith.constant 24 : index
    %c0_167 = arith.constant 0 : index
    %417 = vector.load %arg12[%c24_166, %c0_167] : memref<160x96xf32, #tpu.memory_space<vmem>>, vector<128x96xf32>
    %418 = vector.extract_strided_slice %367 {offsets = [7, 0], sizes = [1, 96], strides = [1, 1]} : vector<9x96xf32> to vector<1x96xf32>
    %419 = vector.broadcast %418 : vector<1x96xf32> to vector<128x96xf32>
    %420 = arith.mulf %417, %419 : vector<128x96xf32>
    %421 = vector.broadcast %20 : vector<128x1xf32> to vector<128x96xf32>
    %422 = arith.mulf %420, %421 : vector<128x96xf32>
    %423 = arith.addf %416, %422 : vector<128x96xf32>
    %c25_168 = arith.constant 25 : index
    %c0_169 = arith.constant 0 : index
    %424 = vector.load %arg12[%c25_168, %c0_169] : memref<160x96xf32, #tpu.memory_space<vmem>>, vector<128x96xf32>
    %425 = vector.extract_strided_slice %367 {offsets = [8, 0], sizes = [1, 96], strides = [1, 1]} : vector<9x96xf32> to vector<1x96xf32>
    %426 = vector.broadcast %425 : vector<1x96xf32> to vector<128x96xf32>
    %427 = arith.mulf %424, %426 : vector<128x96xf32>
    %428 = vector.broadcast %21 : vector<128x1xf32> to vector<128x96xf32>
    %429 = arith.mulf %427, %428 : vector<128x96xf32>
    %430 = arith.addf %423, %429 : vector<128x96xf32>
    %431 = vector.extract_strided_slice %430 {offsets = [0, 0], sizes = [128, 32], strides = [1, 1]} : vector<128x96xf32> to vector<128x32xf32>
    %432 = vector.extract_strided_slice %430 {offsets = [0, 32], sizes = [128, 32], strides = [1, 1]} : vector<128x96xf32> to vector<128x32xf32>
    %433 = vector.extract_strided_slice %430 {offsets = [0, 64], sizes = [128, 32], strides = [1, 1]} : vector<128x96xf32> to vector<128x32xf32>
    %434 = vector.extract_strided_slice %431 {offsets = [0, 0], sizes = [64, 32], strides = [1, 1]} : vector<128x32xf32> to vector<64x32xf32>
    %435 = vector.extract_strided_slice %432 {offsets = [0, 0], sizes = [64, 32], strides = [1, 1]} : vector<128x32xf32> to vector<64x32xf32>
    %436 = vector.extract_strided_slice %433 {offsets = [0, 0], sizes = [64, 32], strides = [1, 1]} : vector<128x32xf32> to vector<64x32xf32>
    %437 = arith.mulf %434, %434 : vector<64x32xf32>
    %cst_170 = arith.constant dense<0.000000e+00> : vector<32xf32>
    %438 = vector.multi_reduction <add>, %437, %cst_170 [0] : vector<64x32xf32> to vector<32xf32>
    %439 = vector.shape_cast %438 : vector<32xf32> to vector<1x32xf32>
    %cst_171 = arith.constant 1.000000e-24 : f32
    %440 = vector.broadcast %cst_171 : f32 to vector<1x32xf32>
    %441 = arith.maximumf %439, %440 : vector<1x32xf32>
    %442 = math.rsqrt %441 : vector<1x32xf32>
    %443 = arith.mulf %442, %342 : vector<1x32xf32>
    %444 = vector.broadcast %443 : vector<1x32xf32> to vector<64x32xf32>
    %445 = arith.mulf %434, %444 : vector<64x32xf32>
    %446 = arith.mulf %435, %435 : vector<64x32xf32>
    %cst_172 = arith.constant dense<0.000000e+00> : vector<32xf32>
    %447 = vector.multi_reduction <add>, %446, %cst_172 [0] : vector<64x32xf32> to vector<32xf32>
    %448 = vector.shape_cast %447 : vector<32xf32> to vector<1x32xf32>
    %cst_173 = arith.constant 1.000000e-24 : f32
    %449 = vector.broadcast %cst_173 : f32 to vector<1x32xf32>
    %450 = arith.maximumf %448, %449 : vector<1x32xf32>
    %451 = math.rsqrt %450 : vector<1x32xf32>
    %452 = vector.broadcast %451 : vector<1x32xf32> to vector<64x32xf32>
    %453 = arith.mulf %435, %452 : vector<64x32xf32>
    %cst_174 = arith.constant dense<0.000000e+00> : vector<32x32xf32>
    %454 = tpu.matmul %445, %453, %cst_174 {dimension_numbers = #tpu.dot_dimension_numbers<[0], [0], [1], [1], [0, 1, 1, 1], [], []>} : vector<64x32xf32>, vector<64x32xf32>, vector<32x32xf32> -> vector<32x32xf32>
    %c0_175 = arith.constant 0 : index
    %c0_176 = arith.constant 0 : index
    %455 = vector.load %arg4[%c0_175, %c0_176] : memref<32x32xf32, #tpu.memory_space<vmem>>, vector<32x32xf32>
    %456 = arith.addf %454, %455 : vector<32x32xf32>
    %cst_177 = arith.constant dense<0xFF800000> : vector<32xf32>
    %457 = vector.multi_reduction <maximumf>, %456, %cst_177 [1] : vector<32x32xf32> to vector<32xf32>
    %458 = vector.shape_cast %457 : vector<32xf32> to vector<32x1xf32>
    %459 = vector.broadcast %458 : vector<32x1xf32> to vector<32x32xf32>
    %460 = arith.subf %456, %459 : vector<32x32xf32>
    %461 = math.exp %460 : vector<32x32xf32>
    %cst_178 = arith.constant dense<0.000000e+00> : vector<32xf32>
    %462 = vector.multi_reduction <add>, %461, %cst_178 [1] : vector<32x32xf32> to vector<32xf32>
    %463 = vector.shape_cast %462 : vector<32xf32> to vector<32x1xf32>
    %464 = tpu.reciprocal %463 {approx = true} : vector<32x1xf32> -> vector<32x1xf32>
    %465 = vector.broadcast %464 : vector<32x1xf32> to vector<32x32xf32>
    %466 = arith.mulf %461, %465 : vector<32x32xf32>
    %cst_179 = arith.constant dense<0.000000e+00> : vector<64x32xf32>
    %467 = tpu.matmul %436, %466, %cst_179 {dimension_numbers = #tpu.dot_dimension_numbers<[1], [1], [0], [0], [0, 0, 1, 0], [], []>} : vector<64x32xf32>, vector<32x32xf32>, vector<64x32xf32> -> vector<64x32xf32>
    %468 = vector.extract_strided_slice %431 {offsets = [64, 0], sizes = [64, 32], strides = [1, 1]} : vector<128x32xf32> to vector<64x32xf32>
    %469 = vector.extract_strided_slice %432 {offsets = [64, 0], sizes = [64, 32], strides = [1, 1]} : vector<128x32xf32> to vector<64x32xf32>
    %470 = vector.extract_strided_slice %433 {offsets = [64, 0], sizes = [64, 32], strides = [1, 1]} : vector<128x32xf32> to vector<64x32xf32>
    %471 = arith.mulf %468, %468 : vector<64x32xf32>
    %cst_180 = arith.constant dense<0.000000e+00> : vector<32xf32>
    %472 = vector.multi_reduction <add>, %471, %cst_180 [0] : vector<64x32xf32> to vector<32xf32>
    %473 = vector.shape_cast %472 : vector<32xf32> to vector<1x32xf32>
    %cst_181 = arith.constant 1.000000e-24 : f32
    %474 = vector.broadcast %cst_181 : f32 to vector<1x32xf32>
    %475 = arith.maximumf %473, %474 : vector<1x32xf32>
    %476 = math.rsqrt %475 : vector<1x32xf32>
    %477 = arith.mulf %476, %342 : vector<1x32xf32>
    %478 = vector.broadcast %477 : vector<1x32xf32> to vector<64x32xf32>
    %479 = arith.mulf %468, %478 : vector<64x32xf32>
    %480 = arith.mulf %469, %469 : vector<64x32xf32>
    %cst_182 = arith.constant dense<0.000000e+00> : vector<32xf32>
    %481 = vector.multi_reduction <add>, %480, %cst_182 [0] : vector<64x32xf32> to vector<32xf32>
    %482 = vector.shape_cast %481 : vector<32xf32> to vector<1x32xf32>
    %cst_183 = arith.constant 1.000000e-24 : f32
    %483 = vector.broadcast %cst_183 : f32 to vector<1x32xf32>
    %484 = arith.maximumf %482, %483 : vector<1x32xf32>
    %485 = math.rsqrt %484 : vector<1x32xf32>
    %486 = vector.broadcast %485 : vector<1x32xf32> to vector<64x32xf32>
    %487 = arith.mulf %469, %486 : vector<64x32xf32>
    %cst_184 = arith.constant dense<0.000000e+00> : vector<32x32xf32>
    %488 = tpu.matmul %479, %487, %cst_184 {dimension_numbers = #tpu.dot_dimension_numbers<[0], [0], [1], [1], [0, 1, 1, 1], [], []>} : vector<64x32xf32>, vector<64x32xf32>, vector<32x32xf32> -> vector<32x32xf32>
    %c0_185 = arith.constant 0 : index
    %c0_186 = arith.constant 0 : index
    %489 = vector.load %arg4[%c0_185, %c0_186] : memref<32x32xf32, #tpu.memory_space<vmem>>, vector<32x32xf32>
    %490 = arith.addf %488, %489 : vector<32x32xf32>
    %cst_187 = arith.constant dense<0xFF800000> : vector<32xf32>
    %491 = vector.multi_reduction <maximumf>, %490, %cst_187 [1] : vector<32x32xf32> to vector<32xf32>
    %492 = vector.shape_cast %491 : vector<32xf32> to vector<32x1xf32>
    %493 = vector.broadcast %492 : vector<32x1xf32> to vector<32x32xf32>
    %494 = arith.subf %490, %493 : vector<32x32xf32>
    %495 = math.exp %494 : vector<32x32xf32>
    %cst_188 = arith.constant dense<0.000000e+00> : vector<32xf32>
    %496 = vector.multi_reduction <add>, %495, %cst_188 [1] : vector<32x32xf32> to vector<32xf32>
    %497 = vector.shape_cast %496 : vector<32xf32> to vector<32x1xf32>
    %498 = tpu.reciprocal %497 {approx = true} : vector<32x1xf32> -> vector<32x1xf32>
    %499 = vector.broadcast %498 : vector<32x1xf32> to vector<32x32xf32>
    %500 = arith.mulf %495, %499 : vector<32x32xf32>
    %cst_189 = arith.constant dense<0.000000e+00> : vector<64x32xf32>
    %501 = tpu.matmul %470, %500, %cst_189 {dimension_numbers = #tpu.dot_dimension_numbers<[1], [1], [0], [0], [0, 0, 1, 0], [], []>} : vector<64x32xf32>, vector<32x32xf32>, vector<64x32xf32> -> vector<64x32xf32>
    %502 = tpu.concatenate %467, %501 in 0 : vector<64x32xf32>, vector<64x32xf32> -> vector<128x32xf32>
    %c1_190 = arith.constant 1 : index
    %c0_191 = arith.constant 0 : index
    %c0_192 = arith.constant 0 : index
    %503 = vector.load %arg7[%c1_190, %c0_191, %c0_192] : memref<2x32x32xf32, #tpu.memory_space<vmem>>, vector<1x32x32xf32>
    %504 = vector.shape_cast %503 : vector<1x32x32xf32> to vector<32x32xf32>
    %cst_193 = arith.constant dense<0.000000e+00> : vector<128x32xf32>
    %505 = tpu.matmul %502, %504, %cst_193 {dimension_numbers = #tpu.dot_dimension_numbers<[1], [0], [0], [1], [0, 0, 1, 1], [], []>} : vector<128x32xf32>, vector<32x32xf32>, vector<128x32xf32> -> vector<128x32xf32>
    %506 = arith.addf %335, %505 : vector<128x32xf32>
    %cst_194 = arith.constant dense<0.000000e+00> : vector<128xf32>
    %507 = vector.multi_reduction <add>, %506, %cst_194 [1] : vector<128x32xf32> to vector<128xf32>
    %508 = vector.shape_cast %507 : vector<128xf32> to vector<128x1xf32>
    %cst_195 = arith.constant 3.200000e+01 : f32
    %509 = vector.broadcast %cst_195 : f32 to vector<128x1xf32>
    %510 = arith.divf %508, %509 : vector<128x1xf32>
    %511 = vector.broadcast %510 : vector<128x1xf32> to vector<128x32xf32>
    %512 = arith.subf %506, %511 : vector<128x32xf32>
    %513 = arith.mulf %512, %512 : vector<128x32xf32>
    %cst_196 = arith.constant dense<0.000000e+00> : vector<128xf32>
    %514 = vector.multi_reduction <add>, %513, %cst_196 [1] : vector<128x32xf32> to vector<128xf32>
    %515 = vector.shape_cast %514 : vector<128xf32> to vector<128x1xf32>
    %cst_197 = arith.constant 3.200000e+01 : f32
    %516 = vector.broadcast %cst_197 : f32 to vector<128x1xf32>
    %517 = arith.divf %515, %516 : vector<128x1xf32>
    %cst_198 = arith.constant 9.99999974E-6 : f32
    %518 = vector.broadcast %cst_198 : f32 to vector<128x1xf32>
    %519 = arith.addf %517, %518 : vector<128x1xf32>
    %520 = math.rsqrt %519 : vector<128x1xf32>
    %521 = vector.broadcast %520 : vector<128x1xf32> to vector<128x32xf32>
    %522 = arith.mulf %512, %521 : vector<128x32xf32>
    %523 = vector.broadcast %340 : vector<1x32xf32> to vector<128x32xf32>
    %524 = arith.mulf %522, %523 : vector<128x32xf32>
    %525 = vector.broadcast %341 : vector<1x32xf32> to vector<128x32xf32>
    %526 = arith.addf %524, %525 : vector<128x32xf32>
    %c1_199 = arith.constant 1 : index
    %c0_200 = arith.constant 0 : index
    %c0_201 = arith.constant 0 : index
    %527 = vector.load %arg8[%c1_199, %c0_200, %c0_201] : memref<2x32x256xf32, #tpu.memory_space<vmem>>, vector<1x32x256xf32>
    %528 = vector.shape_cast %527 : vector<1x32x256xf32> to vector<32x256xf32>
    %cst_202 = arith.constant dense<0.000000e+00> : vector<128x256xf32>
    %529 = tpu.matmul %526, %528, %cst_202 {dimension_numbers = #tpu.dot_dimension_numbers<[1], [0], [0], [1], [0, 0, 1, 1], [], []>} : vector<128x32xf32>, vector<32x256xf32>, vector<128x256xf32> -> vector<128x256xf32>
    %c1_203 = arith.constant 1 : index
    %c0_204 = arith.constant 0 : index
    %c0_205 = arith.constant 0 : index
    %530 = vector.load %arg9[%c1_203, %c0_204, %c0_205] : memref<2x9x256xf32, #tpu.memory_space<vmem>>, vector<1x9x256xf32>
    %531 = vector.shape_cast %530 : vector<1x9x256xf32> to vector<9x256xf32>
    %c16_206 = arith.constant 16 : index
    %c0_207 = arith.constant 0 : index
    %532 = vector.load %arg13[%c16_206, %c0_207] : memref<160x256xf32, #tpu.memory_space<vmem>>, vector<128x256xf32>
    tpu.vector_store %arg13[%c16_206, %c0_207], %529 {strides = array<i32>} : memref<160x256xf32, #tpu.memory_space<vmem>>, vector<128x256xf32>,
    %cst_208 = arith.constant 0.000000e+00 : f32
    %533 = vector.broadcast %cst_208 : f32 to vector<128x256xf32>
    %c7_209 = arith.constant 7 : index
    %c0_210 = arith.constant 0 : index
    %534 = vector.load %arg13[%c7_209, %c0_210] : memref<160x256xf32, #tpu.memory_space<vmem>>, vector<128x256xf32>
    %535 = vector.extract_strided_slice %531 {offsets = [0, 0], sizes = [1, 256], strides = [1, 1]} : vector<9x256xf32> to vector<1x256xf32>
    %536 = vector.broadcast %535 : vector<1x256xf32> to vector<128x256xf32>
    %537 = arith.mulf %534, %536 : vector<128x256xf32>
    %538 = vector.broadcast %14 : vector<128x1xf32> to vector<128x256xf32>
    %539 = arith.mulf %537, %538 : vector<128x256xf32>
    %540 = arith.addf %533, %539 : vector<128x256xf32>
    %c8_211 = arith.constant 8 : index
    %c0_212 = arith.constant 0 : index
    %541 = vector.load %arg13[%c8_211, %c0_212] : memref<160x256xf32, #tpu.memory_space<vmem>>, vector<128x256xf32>
    %542 = vector.extract_strided_slice %531 {offsets = [1, 0], sizes = [1, 256], strides = [1, 1]} : vector<9x256xf32> to vector<1x256xf32>
    %543 = vector.broadcast %542 : vector<1x256xf32> to vector<128x256xf32>
    %544 = arith.mulf %541, %543 : vector<128x256xf32>
    %545 = vector.broadcast %15 : vector<128x1xf32> to vector<128x256xf32>
    %546 = arith.mulf %544, %545 : vector<128x256xf32>
    %547 = arith.addf %540, %546 : vector<128x256xf32>
    %c9_213 = arith.constant 9 : index
    %c0_214 = arith.constant 0 : index
    %548 = vector.load %arg13[%c9_213, %c0_214] : memref<160x256xf32, #tpu.memory_space<vmem>>, vector<128x256xf32>
    %549 = vector.extract_strided_slice %531 {offsets = [2, 0], sizes = [1, 256], strides = [1, 1]} : vector<9x256xf32> to vector<1x256xf32>
    %550 = vector.broadcast %549 : vector<1x256xf32> to vector<128x256xf32>
    %551 = arith.mulf %548, %550 : vector<128x256xf32>
    %552 = vector.broadcast %16 : vector<128x1xf32> to vector<128x256xf32>
    %553 = arith.mulf %551, %552 : vector<128x256xf32>
    %554 = arith.addf %547, %553 : vector<128x256xf32>
    %c15_215 = arith.constant 15 : index
    %c0_216 = arith.constant 0 : index
    %555 = vector.load %arg13[%c15_215, %c0_216] : memref<160x256xf32, #tpu.memory_space<vmem>>, vector<128x256xf32>
    %556 = vector.extract_strided_slice %531 {offsets = [3, 0], sizes = [1, 256], strides = [1, 1]} : vector<9x256xf32> to vector<1x256xf32>
    %557 = vector.broadcast %556 : vector<1x256xf32> to vector<128x256xf32>
    %558 = arith.mulf %555, %557 : vector<128x256xf32>
    %559 = vector.broadcast %17 : vector<128x1xf32> to vector<128x256xf32>
    %560 = arith.mulf %558, %559 : vector<128x256xf32>
    %561 = arith.addf %554, %560 : vector<128x256xf32>
    %c16_217 = arith.constant 16 : index
    %c0_218 = arith.constant 0 : index
    %562 = vector.load %arg13[%c16_217, %c0_218] : memref<160x256xf32, #tpu.memory_space<vmem>>, vector<128x256xf32>
    %563 = vector.extract_strided_slice %531 {offsets = [4, 0], sizes = [1, 256], strides = [1, 1]} : vector<9x256xf32> to vector<1x256xf32>
    %564 = vector.broadcast %563 : vector<1x256xf32> to vector<128x256xf32>
    %565 = arith.mulf %562, %564 : vector<128x256xf32>
    %566 = arith.addf %561, %565 : vector<128x256xf32>
    %c17_219 = arith.constant 17 : index
    %c0_220 = arith.constant 0 : index
    %567 = vector.load %arg13[%c17_219, %c0_220] : memref<160x256xf32, #tpu.memory_space<vmem>>, vector<128x256xf32>
    %568 = vector.extract_strided_slice %531 {offsets = [5, 0], sizes = [1, 256], strides = [1, 1]} : vector<9x256xf32> to vector<1x256xf32>
    %569 = vector.broadcast %568 : vector<1x256xf32> to vector<128x256xf32>
    %570 = arith.mulf %567, %569 : vector<128x256xf32>
    %571 = vector.broadcast %18 : vector<128x1xf32> to vector<128x256xf32>
    %572 = arith.mulf %570, %571 : vector<128x256xf32>
    %573 = arith.addf %566, %572 : vector<128x256xf32>
    %c23_221 = arith.constant 23 : index
    %c0_222 = arith.constant 0 : index
    %574 = vector.load %arg13[%c23_221, %c0_222] : memref<160x256xf32, #tpu.memory_space<vmem>>, vector<128x256xf32>
    %575 = vector.extract_strided_slice %531 {offsets = [6, 0], sizes = [1, 256], strides = [1, 1]} : vector<9x256xf32> to vector<1x256xf32>
    %576 = vector.broadcast %575 : vector<1x256xf32> to vector<128x256xf32>
    %577 = arith.mulf %574, %576 : vector<128x256xf32>
    %578 = vector.broadcast %19 : vector<128x1xf32> to vector<128x256xf32>
    %579 = arith.mulf %577, %578 : vector<128x256xf32>
    %580 = arith.addf %573, %579 : vector<128x256xf32>
    %c24_223 = arith.constant 24 : index
    %c0_224 = arith.constant 0 : index
    %581 = vector.load %arg13[%c24_223, %c0_224] : memref<160x256xf32, #tpu.memory_space<vmem>>, vector<128x256xf32>
    %582 = vector.extract_strided_slice %531 {offsets = [7, 0], sizes = [1, 256], strides = [1, 1]} : vector<9x256xf32> to vector<1x256xf32>
    %583 = vector.broadcast %582 : vector<1x256xf32> to vector<128x256xf32>
    %584 = arith.mulf %581, %583 : vector<128x256xf32>
    %585 = vector.broadcast %20 : vector<128x1xf32> to vector<128x256xf32>
    %586 = arith.mulf %584, %585 : vector<128x256xf32>
    %587 = arith.addf %580, %586 : vector<128x256xf32>
    %c25_225 = arith.constant 25 : index
    %c0_226 = arith.constant 0 : index
    %588 = vector.load %arg13[%c25_225, %c0_226] : memref<160x256xf32, #tpu.memory_space<vmem>>, vector<128x256xf32>
    %589 = vector.extract_strided_slice %531 {offsets = [8, 0], sizes = [1, 256], strides = [1, 1]} : vector<9x256xf32> to vector<1x256xf32>
    %590 = vector.broadcast %589 : vector<1x256xf32> to vector<128x256xf32>
    %591 = arith.mulf %588, %590 : vector<128x256xf32>
    %592 = vector.broadcast %21 : vector<128x1xf32> to vector<128x256xf32>
    %593 = arith.mulf %591, %592 : vector<128x256xf32>
    %594 = arith.addf %587, %593 : vector<128x256xf32>
    %595 = vector.extract_strided_slice %594 {offsets = [0, 0], sizes = [128, 128], strides = [1, 1]} : vector<128x256xf32> to vector<128x128xf32>
    %596 = vector.extract_strided_slice %594 {offsets = [0, 128], sizes = [128, 128], strides = [1, 1]} : vector<128x256xf32> to vector<128x128xf32>
    %cst_227 = arith.constant 5.000000e-01 : f32
    %597 = vector.broadcast %cst_227 : f32 to vector<128x128xf32>
    %598 = arith.mulf %597, %595 : vector<128x128xf32>
    %cst_228 = arith.constant 0.707106769 : f32
    %599 = vector.broadcast %cst_228 : f32 to vector<128x128xf32>
    %600 = arith.mulf %595, %599 : vector<128x128xf32>
    %cst_229 = arith.constant 0.000000e+00 : f32
    %601 = vector.broadcast %cst_229 : f32 to vector<128x128xf32>
    %602 = arith.cmpf oge, %600, %601 : vector<128x128xf32>
    %cst_230 = arith.constant 1.000000e+00 : f32
    %cst_231 = arith.constant -1.000000e+00 : f32
    %603 = vector.broadcast %cst_230 : f32 to vector<128x128xf32>
    %604 = vector.broadcast %cst_231 : f32 to vector<128x128xf32>
    %605 = arith.select %602, %603, %604 : vector<128x128xi1>, vector<128x128xf32>
    %606 = math.absf %600 : vector<128x128xf32>
    %cst_232 = arith.constant 0.327591091 : f32
    %607 = vector.broadcast %cst_232 : f32 to vector<128x128xf32>
    %608 = arith.mulf %607, %606 : vector<128x128xf32>
    %cst_233 = arith.constant 1.000000e+00 : f32
    %609 = vector.broadcast %cst_233 : f32 to vector<128x128xf32>
    %610 = arith.addf %609, %608 : vector<128x128xf32>
    %cst_234 = arith.constant 1.000000e+00 : f32
    %611 = vector.broadcast %cst_234 : f32 to vector<128x128xf32>
    %612 = arith.divf %611, %610 : vector<128x128xf32>
    %cst_235 = arith.constant 1.06140542 : f32
    %613 = vector.broadcast %cst_235 : f32 to vector<128x128xf32>
    %614 = arith.mulf %613, %612 : vector<128x128xf32>
    %cst_236 = arith.constant -1.45315206 : f32
    %615 = vector.broadcast %cst_236 : f32 to vector<128x128xf32>
    %616 = arith.addf %614, %615 : vector<128x128xf32>
    %617 = arith.mulf %616, %612 : vector<128x128xf32>
    %cst_237 = arith.constant 1.42141378 : f32
    %618 = vector.broadcast %cst_237 : f32 to vector<128x128xf32>
    %619 = arith.addf %617, %618 : vector<128x128xf32>
    %620 = arith.mulf %619, %612 : vector<128x128xf32>
    %cst_238 = arith.constant -0.284496725 : f32
    %621 = vector.broadcast %cst_238 : f32 to vector<128x128xf32>
    %622 = arith.addf %620, %621 : vector<128x128xf32>
    %623 = arith.mulf %622, %612 : vector<128x128xf32>
    %cst_239 = arith.constant 0.254829586 : f32
    %624 = vector.broadcast %cst_239 : f32 to vector<128x128xf32>
    %625 = arith.addf %623, %624 : vector<128x128xf32>
    %626 = arith.mulf %625, %612 : vector<128x128xf32>
    %cst_240 = arith.constant 0.000000e+00 : f32
    %627 = vector.broadcast %cst_240 : f32 to vector<128x128xf32>
    %628 = arith.subf %627, %606 : vector<128x128xf32>
    %629 = arith.mulf %628, %606 : vector<128x128xf32>
    %630 = math.exp %629 : vector<128x128xf32>
    %631 = arith.mulf %626, %630 : vector<128x128xf32>
    %cst_241 = arith.constant 1.000000e+00 : f32
    %632 = vector.broadcast %cst_241 : f32 to vector<128x128xf32>
    %633 = arith.subf %632, %631 : vector<128x128xf32>
    %634 = arith.mulf %605, %633 : vector<128x128xf32>
    %cst_242 = arith.constant 1.000000e+00 : f32
    %635 = vector.broadcast %cst_242 : f32 to vector<128x128xf32>
    %636 = arith.addf %635, %634 : vector<128x128xf32>
    %637 = arith.mulf %598, %636 : vector<128x128xf32>
    %638 = arith.mulf %637, %596 : vector<128x128xf32>
    %c1_243 = arith.constant 1 : index
    %c0_244 = arith.constant 0 : index
    %c0_245 = arith.constant 0 : index
    %639 = vector.load %arg10[%c1_243, %c0_244, %c0_245] : memref<2x128x32xf32, #tpu.memory_space<vmem>>, vector<1x128x32xf32>
    %640 = vector.shape_cast %639 : vector<1x128x32xf32> to vector<128x32xf32>
    %cst_246 = arith.constant dense<0.000000e+00> : vector<128x32xf32>
    %641 = tpu.matmul %638, %640, %cst_246 {dimension_numbers = #tpu.dot_dimension_numbers<[1], [0], [0], [1], [0, 0, 1, 1], [], []>} : vector<128x128xf32>, vector<128x32xf32>, vector<128x32xf32> -> vector<128x32xf32>
    %642 = arith.addf %506, %641 : vector<128x32xf32>
    %643 = vector.extract_strided_slice %642 {offsets = [0, 0], sizes = [64, 32], strides = [1, 1]} : vector<128x32xf32> to vector<64x32xf32>
    %cst_247 = arith.constant dense<0.000000e+00> : vector<32x64xf32>
    %644 = tpu.matmul %643, %5, %cst_247 {dimension_numbers = #tpu.dot_dimension_numbers<[0], [0], [1], [1], [0, 1, 1, 1], [], []>} : vector<64x32xf32>, vector<64x64xf32>, vector<32x64xf32> -> vector<32x64xf32>
    %c0_248 = arith.constant 0 : index
    %c0_249 = arith.constant 0 : index
    %c0_250 = arith.constant 0 : index
    %645 = vector.load %arg11[%c0_248, %c0_249, %c0_250] : memref<2x32x64xf32, #tpu.memory_space<vmem>>, vector<1x32x64xf32>
    %646 = vector.shape_cast %645 : vector<1x32x64xf32> to vector<32x64xf32>
    %647 = vector.shape_cast %644 : vector<32x64xf32> to vector<1x32x64xf32>
    tpu.vector_store %arg11[%c0_248, %c0_249, %c0_250], %647 {strides = array<i32>} : memref<2x32x64xf32, #tpu.memory_space<vmem>>, vector<1x32x64xf32>,
    %648 = vector.extract_strided_slice %642 {offsets = [64, 0], sizes = [64, 32], strides = [1, 1]} : vector<128x32xf32> to vector<64x32xf32>
    %cst_251 = arith.constant dense<0.000000e+00> : vector<32x64xf32>
    %649 = tpu.matmul %648, %5, %cst_251 {dimension_numbers = #tpu.dot_dimension_numbers<[0], [0], [1], [1], [0, 1, 1, 1], [], []>} : vector<64x32xf32>, vector<64x64xf32>, vector<32x64xf32> -> vector<32x64xf32>
    %c1_252 = arith.constant 1 : index
    %c0_253 = arith.constant 0 : index
    %c0_254 = arith.constant 0 : index
    %650 = vector.load %arg11[%c1_252, %c0_253, %c0_254] : memref<2x32x64xf32, #tpu.memory_space<vmem>>, vector<1x32x64xf32>
    %651 = vector.shape_cast %650 : vector<1x32x64xf32> to vector<32x64xf32>
    %652 = vector.shape_cast %649 : vector<32x64xf32> to vector<1x32x64xf32>
    tpu.vector_store %arg11[%c1_252, %c0_253, %c0_254], %652 {strides = array<i32>} : memref<2x32x64xf32, #tpu.memory_space<vmem>>, vector<1x32x64xf32>,
    return
  }
  func.func @transform_0(%arg0: i32) -> (i32, i32, i32) {
    %c0_i32 = arith.constant 0 : i32
    %c0_i32_0 = arith.constant 0 : i32
    %c0_i32_1 = arith.constant 0 : i32
    %c0_i32_2 = arith.constant 0 : i32
    return %c0_i32, %c0_i32_0, %c0_i32_1 : i32, i32, i32
  }
  func.func @transform_1(%arg0: i32) -> (i32, i32) {
    %c0_i32 = arith.constant 0 : i32
    %c0_i32_0 = arith.constant 0 : i32
    %c0_i32_1 = arith.constant 0 : i32
    return %c0_i32, %c0_i32_0 : i32, i32
  }
  func.func @transform_2(%arg0: i32) -> (i32, i32, i32) {
    %c0_i32 = arith.constant 0 : i32
    %c0_i32_0 = arith.constant 0 : i32
    %c0_i32_1 = arith.constant 0 : i32
    %c0_i32_2 = arith.constant 0 : i32
    return %c0_i32, %c0_i32_0, %c0_i32_1 : i32, i32, i32
  }
  func.func @transform_3(%arg0: i32) -> (i32, i32) {
    %c0_i32 = arith.constant 0 : i32
    %c0_i32_0 = arith.constant 0 : i32
    %c0_i32_1 = arith.constant 0 : i32
    return %c0_i32, %c0_i32_0 : i32, i32
  }
  func.func @transform_4(%arg0: i32) -> (i32, i32, i32) {
    %c0_i32 = arith.constant 0 : i32
    %c0_i32_0 = arith.constant 0 : i32
    %c0_i32_1 = arith.constant 0 : i32
    %c0_i32_2 = arith.constant 0 : i32
    return %c0_i32, %c0_i32_0, %c0_i32_1 : i32, i32, i32
  }
  func.func @transform_5(%arg0: i32) -> (i32, i32, i32) {
    %c0_i32 = arith.constant 0 : i32
    %c0_i32_0 = arith.constant 0 : i32
    %c0_i32_1 = arith.constant 0 : i32
    %c0_i32_2 = arith.constant 0 : i32
    return %c0_i32, %c0_i32_0, %c0_i32_1 : i32, i32, i32
  }
  func.func @transform_6(%arg0: i32) -> (i32, i32, i32) {
    %c0_i32 = arith.constant 0 : i32
    %c0_i32_0 = arith.constant 0 : i32
    %c0_i32_1 = arith.constant 0 : i32
    %c0_i32_2 = arith.constant 0 : i32
    return %c0_i32, %c0_i32_0, %c0_i32_1 : i32, i32, i32
  }
  func.func @transform_7(%arg0: i32) -> (i32, i32, i32) {
    %c0_i32 = arith.constant 0 : i32
    %c0_i32_0 = arith.constant 0 : i32
    %c0_i32_1 = arith.constant 0 : i32
    %c0_i32_2 = arith.constant 0 : i32
    return %c0_i32, %c0_i32_0, %c0_i32_1 : i32, i32, i32
  }
  func.func @transform_8(%arg0: i32) -> (i32, i32, i32) {
    %c0_i32 = arith.constant 0 : i32
    %c0_i32_0 = arith.constant 0 : i32
    %c0_i32_1 = arith.constant 0 : i32
    %c0_i32_2 = arith.constant 0 : i32
    return %c0_i32, %c0_i32_0, %c0_i32_1 : i32, i32, i32
  }
  func.func @transform_9(%arg0: i32) -> (i32, i32, i32) {
    %c0_i32 = arith.constant 0 : i32
    %c0_i32_0 = arith.constant 0 : i32
    %c0_i32_1 = arith.constant 0 : i32
    %c0_i32_2 = arith.constant 0 : i32
    return %c0_i32, %c0_i32_0, %c0_i32_1 : i32, i32, i32
  }
  func.func @transform_10(%arg0: i32) -> (i32, i32, i32) {
    %c0_i32 = arith.constant 0 : i32
    %c0_i32_0 = arith.constant 0 : i32
    %c0_i32_1 = arith.constant 0 : i32
    %c0_i32_2 = arith.constant 0 : i32
    return %c0_i32, %c0_i32_0, %c0_i32_1 : i32, i32, i32
  }
}

</mosaic_0001>

<llo_original>
// kernel: basic_block_forward.1
$region0: #{basic_block_forward.1}
  #allocation0 [shape = 'u32[]', space=smem, size = 0x4, offset = 0x4, fixed_abs, tag = 'smem constant byte address 0x4 - core index']
  #allocation1 [shape = 'u32[144,128]{1,0:T(1,128)}', space=vmem, size = 0x12000, scoped, tag = 'internal scratch']
  #allocation2 [shape = 'f32[160,96]{1,0:T(8,128)}', space=vmem, size = 0x14000, scoped, tag = 'scratch operand']
  #allocation3 [shape = 'f32[160,256]{1,0:T(8,128)}', space=vmem, size = 0x28000, scoped, tag = 'scratch operand']
  %s0 = inlined_call_operand.vmem [shape: f32[2,32,64], index: 0, kind: input, shape index: {}]
  %s1 = inlined_call_operand.vmem [shape: f32[128,9], index: 1, kind: input, shape index: {}]
  %s2 = inlined_call_operand.vmem [shape: f32[2,8,32], index: 2, kind: input, shape index: {}]
  %s3 = inlined_call_operand.vmem [shape: f32[32,32], index: 3, kind: input, shape index: {}]
  %s4 = inlined_call_operand.vmem [shape: f32[2,32,96], index: 4, kind: input, shape index: {}]
  %s5 = inlined_call_operand.vmem [shape: f32[2,9,96], index: 5, kind: input, shape index: {}]
  %s6 = inlined_call_operand.vmem [shape: f32[2,32,32], index: 6, kind: input, shape index: {}]
  %s7 = inlined_call_operand.vmem [shape: f32[2,32,256], index: 7, kind: input, shape index: {}]
  %s8 = inlined_call_operand.vmem [shape: f32[2,9,256], index: 8, kind: input, shape index: {}]
  %s9 = inlined_call_operand.vmem [shape: f32[2,128,32], index: 9, kind: input, shape index: {}]
  %s10 = inlined_call_operand.vmem [shape: f32[2,32,64], index: 10, kind: output, shape index: {}]
  %s11 = sld [smem:[#allocation0]]
  $region50: #{basic_block_forward.1} parent=0
    _
  %s13 = ssub.s32 1, %s11
  %s14 = scalar_select 0, %s13, %s11
  // Predicated region
  $region2: #{basic_block_forward.1} parent=0 // pred_check
    _
  $region3: #{basic_block_forward.1} parent=0 // pred_check_branch
    %16 = sbr.rel (0) target = $region5
  $region4: #{basic_block_forward.1} parent=0 // pred_region
    _
  $region5: #{basic_block_forward.1} parent=0 // pred_fallthru
    _
  // Predicated region
  $region6: #{basic_block_forward.1} parent=0 // pred_check
    _
  $region7: #{basic_block_forward.1} parent=0 // pred_check_branch
    %18 = sbr.rel (0) target = $region9
  $region8: #{basic_block_forward.1} parent=0 // pred_region
    _
  $region9: #{basic_block_forward.1} parent=0 // pred_fallthru
    _
  // Predicated region
  $region10: #{basic_block_forward.1} parent=0 // pred_check
    _
  $region11: #{basic_block_forward.1} parent=0 // pred_check_branch
    %20 = sbr.rel (0) target = $region13
  $region12: #{basic_block_forward.1} parent=0 // pred_region
    _
  $region13: #{basic_block_forward.1} parent=0 // pred_fallthru
    _
  // Predicated region
  $region14: #{basic_block_forward.1} parent=0 // pred_check
    _
  $region15: #{basic_block_forward.1} parent=0 // pred_check_branch
    %22 = sbr.rel (0) target = $region17
  $region16: #{basic_block_forward.1} parent=0 // pred_region
    _
  $region17: #{basic_block_forward.1} parent=0 // pred_fallthru
    _
  // Predicated region
  $region18: #{basic_block_forward.1} parent=0 // pred_check
    _
  $region19: #{basic_block_forward.1} parent=0 // pred_check_branch
    %24 = sbr.rel (0) target = $region21
  $region20: #{basic_block_forward.1} parent=0 // pred_region
    _
  $region21: #{basic_block_forward.1} parent=0 // pred_fallthru
    _
  // Predicated region
  $region22: #{basic_block_forward.1} parent=0 // pred_check
    _
  $region23: #{basic_block_forward.1} parent=0 // pred_check_branch
    %26 = sbr.rel (0) target = $region25
  $region24: #{basic_block_forward.1} parent=0 // pred_region
    _
  $region25: #{basic_block_forward.1} parent=0 // pred_fallthru
    _
  // Predicated region
  $region26: #{basic_block_forward.1} parent=0 // pred_check
    _
  $region27: #{basic_block_forward.1} parent=0 // pred_check_branch
    %28 = sbr.rel (0) target = $region29
  $region28: #{basic_block_forward.1} parent=0 // pred_region
    _
  $region29: #{basic_block_forward.1} parent=0 // pred_fallthru
    _
  // Predicated region
  $region30: #{basic_block_forward.1} parent=0 // pred_check
    _
  $region31: #{basic_block_forward.1} parent=0 // pred_check_branch
    %30 = sbr.rel (0) target = $region33
  $region32: #{basic_block_forward.1} parent=0 // pred_region
    _
  $region33: #{basic_block_forward.1} parent=0 // pred_fallthru
    _
  // Predicated region
  $region34: #{basic_block_forward.1} parent=0 // pred_check
    _
  $region35: #{basic_block_forward.1} parent=0 // pred_check_branch
    %32 = sbr.rel (0) target = $region37
  $region36: #{basic_block_forward.1} parent=0 // pred_region
    _
  $region37: #{basic_block_forward.1} parent=0 // pred_fallthru
    _
  // Predicated region
  $region38: #{basic_block_forward.1} parent=0 // pred_check
    _
  $region39: #{basic_block_forward.1} parent=0 // pred_check_branch
    %34 = sbr.rel (0) target = $region41
  $region40: #{basic_block_forward.1} parent=0 // pred_region
    _
  $region41: #{basic_block_forward.1} parent=0 // pred_fallthru
    _
  %v35 = vlaneseq
  %v36 = vshrl.u32 %v35, 7
  %v37 = vadd.s32 %v36, 8
  %v38 = vadd.s32 %v36, 16
  %v39 = vadd.s32 %v36, 24
  %v40 = vadd.s32 %v36, 32
  %v41 = vadd.s32 %v36, 40
  %v42 = vadd.s32 %v36, 48
  %v43 = vadd.s32 %v36, 56
  %v44 = vlaneseq
  %v45 = vand.u32 %v44, 127
  %vm46 = vcmp.eq.s32.totalorder %v36, %v45
  %vm47 = vcmp.eq.s32.totalorder %v37, %v45
  %vm48 = vcmp.eq.s32.totalorder %v38, %v45
  %vm49 = vcmp.eq.s32.totalorder %v39, %v45
  %vm50 = vcmp.eq.s32.totalorder %v40, %v45
  %vm51 = vcmp.eq.s32.totalorder %v41, %v45
  %vm52 = vcmp.eq.s32.totalorder %v42, %v45
  %vm53 = vcmp.eq.s32.totalorder %v43, %v45
  %v54 = vsel %vm46, 1.0, 0.0
  %v55 = vsel %vm47, 1.0, 0.0
  %v56 = vsel %vm48, 1.0, 0.0
  %v57 = vsel %vm49, 1.0, 0.0
  %v58 = vsel %vm50, 1.0, 0.0
  %v59 = vsel %vm51, 1.0, 0.0
  %v60 = vsel %vm52, 1.0, 0.0
  %v61 = vsel %vm53, 1.0, 0.0
  %vm62 = vcmask 785408
  %63 = vst.msk [vmem:[#allocation2] sm:$0xff] %vm62, 0.0
  %64 = vst.msk [vmem:[#allocation2 + $0x8] sm:$0xff] %vm62, 0.0
  %65 = vst.msk [vmem:[#allocation2 + $0x90] sm:$0xff] %vm62, 0.0
  %66 = vst.msk [vmem:[#allocation2 + $0x98] sm:$0xff] %vm62, 0.0
  %67 = vst [vmem:[#allocation3] sm:$0xff] 0.0
  %68 = vst [vmem:[#allocation3 + $0x8] sm:$0xff] 0.0
  %69 = vst [vmem:[#allocation3 + $0x10] sm:$0xff] 0.0
  %70 = vst [vmem:[#allocation3 + $0x18] sm:$0xff] 0.0
  %71 = vst [vmem:[#allocation3 + $0x120] sm:$0xff] 0.0
  %72 = vst [vmem:[#allocation3 + $0x128] sm:$0xff] 0.0
  %73 = vst [vmem:[#allocation3 + $0x130] sm:$0xff] 0.0
  %74 = vst [vmem:[#allocation3 + $0x138] sm:$0xff] 0.0
  %v75 = vld [vmem:[%s1] sm:$0xff]
  %v76 = vld [vmem:[%s1 + $0x8] sm:$0xff]
  %v77 = vld [vmem:[%s1 + $0x10] sm:$0xff]
  %v78 = vld [vmem:[%s1 + $0x18] sm:$0xff]
  %v79 = vld [vmem:[%s1 + $0x20] sm:$0xff]
  %v80 = vld [vmem:[%s1 + $0x28] sm:$0xff]
  %v81 = vld [vmem:[%s1 + $0x30] sm:$0xff]
  %v82 = vld [vmem:[%s1 + $0x38] sm:$0xff]
  %v83 = vld [vmem:[%s1 + $0x40] sm:$0xff]
  %v84 = vld [vmem:[%s1 + $0x48] sm:$0xff]
  %v85 = vld [vmem:[%s1 + $0x50] sm:$0xff]
  %v86 = vld [vmem:[%s1 + $0x58] sm:$0xff]
  %v87 = vld [vmem:[%s1 + $0x60] sm:$0xff]
  %v88 = vld [vmem:[%s1 + $0x68] sm:$0xff]
  %v89 = vld [vmem:[%s1 + $0x70] sm:$0xff]
  %v90 = vld [vmem:[%s1 + $0x78] sm:$0xff]
  %v91 = vld [vmem:[%s0] sm:$0xff]
  %v92 = vld [vmem:[%s0 + $0x8] sm:$0xff]
  %v93 = vld [vmem:[%s0 + $0x10] sm:$0xff]
  %v94 = vld [vmem:[%s0 + $0x18] sm:$0xff]
  %vm95 = vcmask 523264
  %v97 = vsel %vm95, %v54, 0
  %v100 = vsel %vm95, %v55, 0
  %v103 = vsel %vm95, %v56, 0
  %v106 = vsel %vm95, %v57, 0
  %v109 = vsel %vm95, %v58, 0
  %v112 = vsel %vm95, %v59, 0
  %v115 = vsel %vm95, %v60, 0
  %v118 = vsel %vm95, %v61, 0
  %v121 = vsel %vm95, %v91, 0
  %v124 = vsel %vm95, %v92, 0
  %v127 = vsel %vm95, %v93, 0
  %v130 = vsel %vm95, %v94, 0
  %132 = vmatprep.subr.mxu0 0.0
  %133 = vmatpush1.xpose.msra.mxu0 %v121
  %134 = vmatprep.subr.mxu0 0.0
  %135 = vmatpush1.xpose.msra.mxu0 %v124
  %136 = vmatprep.subr.mxu0 0.0
  %137 = vmatpush1.xpose.msra.mxu0 %v127
  %138 = vmatprep.subr.mxu0 0.0
  %139 = vmatpush1.xpose.msra.mxu0 %v130
  %140 = vmatprep.subr.mxu0 0.0
  %141 = vmatpush1.xpose.msra.mxu0 0.0
  %142 = vmatprep.subr.mxu0 0.0
  %143 = vmatpush1.xpose.msra.mxu0 0.0
  %144 = vmatprep.subr.mxu0 0.0
  %145 = vmatpush1.xpose.msra.mxu0 0.0
  %146 = vmatprep.subr.mxu0 0.0
  %147 = vmatpush1.xpose.msra.mxu0 0.0
  %148 = vmatprep.subr.mxu0 0.0
  %149 = vmatpush1.xpose.msra.mxu0 0.0
  %150 = vmatprep.subr.mxu0 0.0
  %151 = vmatpush1.xpose.msra.mxu0 0.0
  %152 = vmatprep.subr.mxu0 0.0
  %153 = vmatpush1.xpose.msra.mxu0 0.0
  %154 = vmatprep.subr.mxu0 0.0
  %155 = vmatpush1.xpose.msra.mxu0 0.0
  %156 = vmatprep.subr.mxu0 0.0
  %157 = vmatpush1.xpose.msra.mxu0 0.0
  %158 = vmatprep.subr.mxu0 0.0
  %159 = vmatpush1.xpose.msra.mxu0 0.0
  %160 = vmatprep.subr.mxu0 0.0
  %161 = vmatpush1.xpose.msra.mxu0 0.0
  %162 = vmatprep.subr.mxu0 0.0
  %163 = vmatpush1.xpose.msra.mxu0 0.0
  %164 = vmatprep.subr.mxu0 0.0
  %165 = vmatpush1.xpose.msra.mxu0 0.0
  %166 = vmatprep.subr.mxu0 0.0
  %167 = vmatpush1.xpose.msra.mxu0 0.0
  %168 = vmatprep.subr.mxu0 0.0
  %169 = vmatpush1.xpose.msra.mxu0 0.0
  %170 = vmatprep.subr.mxu0 0.0
  %171 = vmatpush1.xpose.msra.mxu0 0.0
  %172 = vmatprep.subr.mxu0 0.0
  %173 = vmatpush1.xpose.msra.mxu0 0.0
  %174 = vmatprep.subr.mxu0 0.0
  %175 = vmatpush1.xpose.msra.mxu0 0.0
  %176 = vmatprep.subr.mxu0 0.0
  %177 = vmatpush1.xpose.msra.mxu0 0.0
  %178 = vmatprep.subr.mxu0 0.0
  %179 = vmatpush1.xpose.msra.mxu0 0.0
  %180 = vmatprep.subr.mxu0 0.0
  %181 = vmatpush1.xpose.msra.mxu0 0.0
  %182 = vmatprep.subr.mxu0 0.0
  %183 = vmatpush1.xpose.msra.mxu0 0.0
  %184 = vmatprep.subr.mxu0 0.0
  %185 = vmatpush1.xpose.msra.mxu0 0.0
  %186 = vmatprep.subr.mxu0 0.0
  %187 = vmatpush1.xpose.msra.mxu0 0.0
  %188 = vmatprep.subr.mxu0 0.0
  %189 = vmatpush1.xpose.msra.mxu0 0.0
  %190 = vmatprep.subr.mxu0 0.0
  %191 = vmatpush1.xpose.msra.mxu0 0.0
  %192 = vmatprep.subr.mxu0 0.0
  %193 = vmatpush1.xpose.msra.mxu0 0.0
  %194 = vmatprep.subr.mxu0 0.0
  %195 = vmatpush1.xpose.msra.mxu0 0.0
  %196 = vmatprep.mubr.f32.mxu0 0.0
  %197 = vmatmul.mubr.f32.gmra.mrb[0].mxu0 %v97
  %v198 = vpop.f32.mrb[0].mxu0
  %v199 = vadd.f32 0.0, %v198
  %v200 = vpop.f32.mrb[0].mxu0
  %201 = vmatprep.mubr.f32.mxu0 0.0
  %202 = vmatmul.mubr.f32.gmra.mrb[0].mxu0 %v100
  %v203 = vpop.f32.mrb[0].mxu0
  %v204 = vadd.f32 0.0, %v203
  %v205 = vpop.f32.mrb[0].mxu0
  %206 = vmatprep.mubr.f32.mxu0 0.0
  %207 = vmatmul.mubr.f32.gmra.mrb[0].mxu0 %v103
  %v208 = vpop.f32.mrb[0].mxu0
  %v209 = vadd.f32 0.0, %v208
  %v210 = vpop.f32.mrb[0].mxu0
  %211 = vmatprep.mubr.f32.mxu0 0.0
  %212 = vmatmul.mubr.f32.gmra.mrb[0].mxu0 %v106
  %v213 = vpop.f32.mrb[0].mxu0
  %v214 = vadd.f32 0.0, %v213
  %v215 = vpop.f32.mrb[0].mxu0
  %216 = vmatprep.mubr.f32.mxu0 0.0
  %217 = vmatmul.mubr.f32.gmra.mrb[0].mxu0 %v109
  %v218 = vpop.f32.mrb[0].mxu0
  %v219 = vadd.f32 0.0, %v218
  %v220 = vpop.f32.mrb[0].mxu0
  %221 = vmatprep.mubr.f32.mxu0 0.0
  %222 = vmatmul.mubr.f32.gmra.mrb[0].mxu0 %v112
  %v223 = vpop.f32.mrb[0].mxu0
  %v224 = vadd.f32 0.0, %v223
  %v225 = vpop.f32.mrb[0].mxu0
  %226 = vmatprep.mubr.f32.mxu0 0.0
  %227 = vmatmul.mubr.f32.gmra.mrb[0].mxu0 %v115
  %v228 = vpop.f32.mrb[0].mxu0
  %v229 = vadd.f32 0.0, %v228
  %v230 = vpop.f32.mrb[0].mxu0
  %231 = vmatprep.mubr.f32.mxu0 0.0
  %232 = vmatmul.mubr.f32.gmra.mrb[0].mxu0 %v118
  %v233 = vpop.f32.mrb[0].mxu0
  %v234 = vadd.f32 0.0, %v233
  %v235 = vpop.f32.mrb[0].mxu0
  %236 = vdwg.mxu0
  %s237 = scalar_lea.vmem %s0, 32
  %v238 = vld [vmem:[%s237] sm:$0xff]
  %v239 = vld [vmem:[%s237 + $0x8] sm:$0xff]
  %v240 = vld [vmem:[%s237 + $0x10] sm:$0xff]
  %v241 = vld [vmem:[%s237 + $0x18] sm:$0xff]
  %v243 = vsel %vm95, %v238, 0
  %v246 = vsel %vm95, %v239, 0
  %v249 = vsel %vm95, %v240, 0
  %v252 = vsel %vm95, %v241, 0
  %254 = vmatprep.subr.mxu0 0.0
  %255 = vmatpush1.xpose.msra.mxu0 %v243
  %256 = vmatprep.subr.mxu0 0.0
  %257 = vmatpush1.xpose.msra.mxu0 %v246
  %258 = vmatprep.subr.mxu0 0.0
  %259 = vmatpush1.xpose.msra.mxu0 %v249
  %260 = vmatprep.subr.mxu0 0.0
  %261 = vmatpush1.xpose.msra.mxu0 %v252
  %262 = vmatprep.subr.mxu0 0.0
  %263 = vmatpush1.xpose.msra.mxu0 0.0
  %264 = vmatprep.subr.mxu0 0.0
  %265 = vmatpush1.xpose.msra.mxu0 0.0
  %266 = vmatprep.subr.mxu0 0.0
  %267 = vmatpush1.xpose.msra.mxu0 0.0
  %268 = vmatprep.subr.mxu0 0.0
  %269 = vmatpush1.xpose.msra.mxu0 0.0
  %270 = vmatprep.subr.mxu0 0.0
  %271 = vmatpush1.xpose.msra.mxu0 0.0
  %272 = vmatprep.subr.mxu0 0.0
  %273 = vmatpush1.xpose.msra.mxu0 0.0
  %274 = vmatprep.subr.mxu0 0.0
  %275 = vmatpush1.xpose.msra.mxu0 0.0
  %276 = vmatprep.subr.mxu0 0.0
  %277 = vmatpush1.xpose.msra.mxu0 0.0
  %278 = vmatprep.subr.mxu0 0.0
  %279 = vmatpush1.xpose.msra.mxu0 0.0
  %280 = vmatprep.subr.mxu0 0.0
  %281 = vmatpush1.xpose.msra.mxu0 0.0
  %282 = vmatprep.subr.mxu0 0.0
  %283 = vmatpush1.xpose.msra.mxu0 0.0
  %284 = vmatprep.subr.mxu0 0.0
  %285 = vmatpush1.xpose.msra.mxu0 0.0
  %286 = vmatprep.subr.mxu0 0.0
  %287 = vmatpush1.xpose.msra.mxu0 0.0
  %288 = vmatprep.subr.mxu0 0.0
  %289 = vmatpush1.xpose.msra.mxu0 0.0
  %290 = vmatprep.subr.mxu0 0.0
  %291 = vmatpush1.xpose.msra.mxu0 0.0
  %292 = vmatprep.subr.mxu0 0.0
  %293 = vmatpush1.xpose.msra.mxu0 0.0
  %294 = vmatprep.subr.mxu0 0.0
  %295 = vmatpush1.xpose.msra.mxu0 0.0
  %296 = vmatprep.subr.mxu0 0.0
  %297 = vmatpush1.xpose.msra.mxu0 0.0
  %298 = vmatprep.subr.mxu0 0.0
  %299 = vmatpush1.xpose.msra.mxu0 0.0
  %300 = vmatprep.subr.mxu0 0.0
  %301 = vmatpush1.xpose.msra.mxu0 0.0
  %302 = vmatprep.subr.mxu0 0.0
  %303 = vmatpush1.xpose.msra.mxu0 0.0
  %304 = vmatprep.subr.mxu0 0.0
  %305 = vmatpush1.xpose.msra.mxu0 0.0
  %306 = vmatprep.subr.mxu0 0.0
  %307 = vmatpush1.xpose.msra.mxu0 0.0
  %308 = vmatprep.subr.mxu0 0.0
  %309 = vmatpush1.xpose.msra.mxu0 0.0
  %310 = vmatprep.subr.mxu0 0.0
  %311 = vmatpush1.xpose.msra.mxu0 0.0
  %312 = vmatprep.subr.mxu0 0.0
  %313 = vmatpush1.xpose.msra.mxu0 0.0
  %314 = vmatprep.subr.mxu0 0.0
  %315 = vmatpush1.xpose.msra.mxu0 0.0
  %316 = vmatprep.subr.mxu0 0.0
  %317 = vmatpush1.xpose.msra.mxu0 0.0
  %318 = vmatprep.mubr.f32.mxu0 0.0
  %319 = vmatmul.mubr.f32.gmra.mrb[0].mxu0 %v97
  %v320 = vpop.f32.mrb[0].mxu0
  %v321 = vadd.f32 0.0, %v320
  %v322 = vpop.f32.mrb[0].mxu0
  %323 = vmatprep.mubr.f32.mxu0 0.0
  %324 = vmatmul.mubr.f32.gmra.mrb[0].mxu0 %v100
  %v325 = vpop.f32.mrb[0].mxu0
  %v326 = vadd.f32 0.0, %v325
  %v327 = vpop.f32.mrb[0].mxu0
  %328 = vmatprep.mubr.f32.mxu0 0.0
  %329 = vmatmul.mubr.f32.gmra.mrb[0].mxu0 %v103
  %v330 = vpop.f32.mrb[0].mxu0
  %v331 = vadd.f32 0.0, %v330
  %v332 = vpop.f32.mrb[0].mxu0
  %333 = vmatprep.mubr.f32.mxu0 0.0
  %334 = vmatmul.mubr.f32.gmra.mrb[0].mxu0 %v106
  %v335 = vpop.f32.mrb[0].mxu0
  %v336 = vadd.f32 0.0, %v335
  %v337 = vpop.f32.mrb[0].mxu0
  %338 = vmatprep.mubr.f32.mxu0 0.0
  %339 = vmatmul.mubr.f32.gmra.mrb[0].mxu0 %v109
  %v340 = vpop.f32.mrb[0].mxu0
  %v341 = vadd.f32 0.0, %v340
  %v342 = vpop.f32.mrb[0].mxu0
  %343 = vmatprep.mubr.f32.mxu0 0.0
  %344 = vmatmul.mubr.f32.gmra.mrb[0].mxu0 %v112
  %v345 = vpop.f32.mrb[0].mxu0
  %v346 = vadd.f32 0.0, %v345
  %v347 = vpop.f32.mrb[0].mxu0
  %348 = vmatprep.mubr.f32.mxu0 0.0
  %349 = vmatmul.mubr.f32.gmra.mrb[0].mxu0 %v115
  %v350 = vpop.f32.mrb[0].mxu0
  %v351 = vadd.f32 0.0, %v350
  %v352 = vpop.f32.mrb[0].mxu0
  %353 = vmatprep.mubr.f32.mxu0 0.0
  %354 = vmatmul.mubr.f32.gmra.mrb[0].mxu0 %v118
  %v355 = vpop.f32.mrb[0].mxu0
  %v356 = vadd.f32 0.0, %v355
  %v357 = vpop.f32.mrb[0].mxu0
  %358 = vdwg.mxu0
  %v359 = vld [vmem:[%s2] sm:$0xff]
  %vm360 = vcmask 261120
  %v361 = vsel %vm360, %v199, 0.0
  %362 = vadd.xlane.f32.xlu0 %v361
  %v363 = vpop.xlane.xlu0 %362
  %v364 = vsel %vm360, %v204, 0.0
  %365 = vadd.xlane.f32.xlu0 %v364
  %v366 = vpop.xlane.xlu0 %365
  %v367 = vsel %vm360, %v209, 0.0
  %368 = vadd.xlane.f32.xlu0 %v367
  %v369 = vpop.xlane.xlu0 %368
  %v370 = vsel %vm360, %v214, 0.0
  %371 = vadd.xlane.f32.xlu0 %v370
  %v372 = vpop.xlane.xlu0 %371
  %v373 = vsel %vm360, %v219, 0.0
  %374 = vadd.xlane.f32.xlu0 %v373
  %v375 = vpop.xlane.xlu0 %374
  %v376 = vsel %vm360, %v224, 0.0
  %377 = vadd.xlane.f32.xlu0 %v376
  %v378 = vpop.xlane.xlu0 %377
  %v379 = vsel %vm360, %v229, 0.0
  %380 = vadd.xlane.f32.xlu0 %v379
  %v381 = vpop.xlane.xlu0 %380
  %v382 = vsel %vm360, %v234, 0.0
  %383 = vadd.xlane.f32.xlu0 %v382
  %v384 = vpop.xlane.xlu0 %383
  %v385 = vsel %vm360, %v321, 0.0
  %386 = vadd.xlane.f32.xlu0 %v385
  %v387 = vpop.xlane.xlu0 %386
  %v388 = vsel %vm360, %v326, 0.0
  %389 = vadd.xlane.f32.xlu0 %v388
  %v390 = vpop.xlane.xlu0 %389
  %v391 = vsel %vm360, %v331, 0.0
  %392 = vadd.xlane.f32.xlu0 %v391
  %v393 = vpop.xlane.xlu0 %392
  %v394 = vsel %vm360, %v336, 0.0
  %395 = vadd.xlane.f32.xlu0 %v394
  %v396 = vpop.xlane.xlu0 %395
  %v397 = vsel %vm360, %v341, 0.0
  %398 = vadd.xlane.f32.xlu0 %v397
  %v399 = vpop.xlane.xlu0 %398
  %v400 = vsel %vm360, %v346, 0.0
  %401 = vadd.xlane.f32.xlu0 %v400
  %v402 = vpop.xlane.xlu0 %401
  %v403 = vsel %vm360, %v351, 0.0
  %404 = vadd.xlane.f32.xlu0 %v403
  %v405 = vpop.xlane.xlu0 %404
  %v406 = vsel %vm360, %v356, 0.0
  %407 = vadd.xlane.f32.xlu0 %v406
  %v408 = vpop.xlane.xlu0 %407
  %v409 = vrcp.pop 32.0
  %v410 = vmul.f32 %v363, %v409
  %v411 = vmul.f32 %v366, %v409
  %v412 = vmul.f32 %v369, %v409
  %v413 = vmul.f32 %v372, %v409
  %v414 = vmul.f32 %v375, %v409
  %v415 = vmul.f32 %v378, %v409
  %v416 = vmul.f32 %v381, %v409
  %v417 = vmul.f32 %v384, %v409
  %v418 = vmul.f32 %v387, %v409
  %v419 = vmul.f32 %v390, %v409
  %v420 = vmul.f32 %v393, %v409
  %v421 = vmul.f32 %v396, %v409
  %v422 = vmul.f32 %v399, %v409
  %v423 = vmul.f32 %v402, %v409
  %v424 = vmul.f32 %v405, %v409
  %v425 = vmul.f32 %v408, %v409
  %v426 = vsub.f32 %v199, %v410
  %v427 = vsub.f32 %v204, %v411
  %v428 = vsub.f32 %v209, %v412
  %v429 = vsub.f32 %v214, %v413
  %v430 = vsub.f32 %v219, %v414
  %v431 = vsub.f32 %v224, %v415
  %v432 = vsub.f32 %v229, %v416
  %v433 = vsub.f32 %v234, %v417
  %v434 = vsub.f32 %v321, %v418
  %v435 = vsub.f32 %v326, %v419
  %v436 = vsub.f32 %v331, %v420
  %v437 = vsub.f32 %v336, %v421
  %v438 = vsub.f32 %v341, %v422
  %v439 = vsub.f32 %v346, %v423
  %v440 = vsub.f32 %v351, %v424
  %v441 = vsub.f32 %v356, %v425
  %v442 = vmul.f32 %v426, %v426
  %v443 = vmul.f32 %v427, %v427
  %v444 = vmul.f32 %v428, %v428
  %v445 = vmul.f32 %v429, %v429
  %v446 = vmul.f32 %v430, %v430
  %v447 = vmul.f32 %v431, %v431
  %v448 = vmul.f32 %v432, %v432
  %v449 = vmul.f32 %v433, %v433
  %v450 = vmul.f32 %v434, %v434
  %v451 = vmul.f32 %v435, %v435
  %v452 = vmul.f32 %v436, %v436
  %v453 = vmul.f32 %v437, %v437
  %v454 = vmul.f32 %v438, %v438
  %v455 = vmul.f32 %v439, %v439
  %v456 = vmul.f32 %v440, %v440
  %v457 = vmul.f32 %v441, %v441
  %v458 = vsel %vm360, %v442, 0.0
  %459 = vadd.xlane.f32.xlu0 %v458
  %v460 = vpop.xlane.xlu0 %459
  %v461 = vsel %vm360, %v443, 0.0
  %462 = vadd.xlane.f32.xlu0 %v461
  %v463 = vpop.xlane.xlu0 %462
  %v464 = vsel %vm360, %v444, 0.0
  %465 = vadd.xlane.f32.xlu0 %v464
  %v466 = vpop.xlane.xlu0 %465
  %v467 = vsel %vm360, %v445, 0.0
  %468 = vadd.xlane.f32.xlu0 %v467
  %v469 = vpop.xlane.xlu0 %468
  %v470 = vsel %vm360, %v446, 0.0
  %471 = vadd.xlane.f32.xlu0 %v470
  %v472 = vpop.xlane.xlu0 %471
  %v473 = vsel %vm360, %v447, 0.0
  %474 = vadd.xlane.f32.xlu0 %v473
  %v475 = vpop.xlane.xlu0 %474
  %v476 = vsel %vm360, %v448, 0.0
  %477 = vadd.xlane.f32.xlu0 %v476
  %v478 = vpop.xlane.xlu0 %477
  %v479 = vsel %vm360, %v449, 0.0
  %480 = vadd.xlane.f32.xlu0 %v479
  %v481 = vpop.xlane.xlu0 %480
  %v482 = vsel %vm360, %v450, 0.0
  %483 = vadd.xlane.f32.xlu0 %v482
  %v484 = vpop.xlane.xlu0 %483
  %v485 = vsel %vm360, %v451, 0.0
  %486 = vadd.xlane.f32.xlu0 %v485
  %v487 = vpop.xlane.xlu0 %486
  %v488 = vsel %vm360, %v452, 0.0
  %489 = vadd.xlane.f32.xlu0 %v488
  %v490 = vpop.xlane.xlu0 %489
  %v491 = vsel %vm360, %v453, 0.0
  %492 = vadd.xlane.f32.xlu0 %v491
  %v493 = vpop.xlane.xlu0 %492
  %v494 = vsel %vm360, %v454, 0.0
  %495 = vadd.xlane.f32.xlu0 %v494
  %v496 = vpop.xlane.xlu0 %495
  %v497 = vsel %vm360, %v455, 0.0
  %498 = vadd.xlane.f32.xlu0 %v497
  %v499 = vpop.xlane.xlu0 %498
  %v500 = vsel %vm360, %v456, 0.0
  %501 = vadd.xlane.f32.xlu0 %v500
  %v502 = vpop.xlane.xlu0 %501
  %v503 = vsel %vm360, %v457, 0.0
  %504 = vadd.xlane.f32.xlu0 %v503
  %v505 = vpop.xlane.xlu0 %504
  %v506 = vmul.f32 %v460, %v409
  %v507 = vmul.f32 %v463, %v409
  %v508 = vmul.f32 %v466, %v409
  %v509 = vmul.f32 %v469, %v409
  %v510 = vmul.f32 %v472, %v409
  %v511 = vmul.f32 %v475, %v409
  %v512 = vmul.f32 %v478, %v409
  %v513 = vmul.f32 %v481, %v409
  %v514 = vmul.f32 %v484, %v409
  %v515 = vmul.f32 %v487, %v409
  %v516 = vmul.f32 %v490, %v409
  %v517 = vmul.f32 %v493, %v409
  %v518 = vmul.f32 %v496, %v409
  %v519 = vmul.f32 %v499, %v409
  %v520 = vmul.f32 %v502, %v409
  %v521 = vmul.f32 %v505, %v409
  %v522 = vadd.f32 %v506, 1e-05
  %v523 = vadd.f32 %v507, 1e-05
  %v524 = vadd.f32 %v508, 1e-05
  %v525 = vadd.f32 %v509, 1e-05
  %v526 = vadd.f32 %v510, 1e-05
  %v527 = vadd.f32 %v511, 1e-05
  %v528 = vadd.f32 %v512, 1e-05
  %v529 = vadd.f32 %v513, 1e-05
  %v530 = vadd.f32 %v514, 1e-05
  %v531 = vadd.f32 %v515, 1e-05
  %v532 = vadd.f32 %v516, 1e-05
  %v533 = vadd.f32 %v517, 1e-05
  %v534 = vadd.f32 %v518, 1e-05
  %v535 = vadd.f32 %v519, 1e-05
  %v536 = vadd.f32 %v520, 1e-05
  %v537 = vadd.f32 %v521, 1e-05
  %v538 = vrsqrt.pop %v522
  %v539 = vrsqrt.pop %v523
  %v540 = vrsqrt.pop %v524
  %v541 = vrsqrt.pop %v525
  %v542 = vrsqrt.pop %v526
  %v543 = vrsqrt.pop %v527
  %v544 = vrsqrt.pop %v528
  %v545 = vrsqrt.pop %v529
  %v546 = vrsqrt.pop %v530
  %v547 = vrsqrt.pop %v531
  %v548 = vrsqrt.pop %v532
  %v549 = vrsqrt.pop %v533
  %v550 = vrsqrt.pop %v534
  %v551 = vrsqrt.pop %v535
  %v552 = vrsqrt.pop %v536
  %v553 = vrsqrt.pop %v537
  %v554 = vmul.f32 %v426, %v538
  %v555 = vmul.f32 %v427, %v539
  %v556 = vmul.f32 %v428, %v540
  %v557 = vmul.f32 %v429, %v541
  %v558 = vmul.f32 %v430, %v542
  %v559 = vmul.f32 %v431, %v543
  %v560 = vmul.f32 %v432, %v544
  %v561 = vmul.f32 %v433, %v545
  %v562 = vmul.f32 %v434, %v546
  %v563 = vmul.f32 %v435, %v547
  %v564 = vmul.f32 %v436, %v548
  %v565 = vmul.f32 %v437, %v549
  %v566 = vmul.f32 %v438, %v550
  %v567 = vmul.f32 %v439, %v551
  %v568 = vmul.f32 %v440, %v552
  %v569 = vmul.f32 %v441, %v553
  %v570 = vlaneseq
  %v571 = vshrl.u32 %v570, 7
  %v572 = vsub.s32 0, %v571
  %v573 = vrot.slane %v359, %v572
  %v574 = vmul.f32 %v554, %v573
  %v575 = vmul.f32 %v555, %v573
  %v576 = vmul.f32 %v556, %v573
  %v577 = vmul.f32 %v557, %v573
  %v578 = vmul.f32 %v558, %v573
  %v579 = vmul.f32 %v559, %v573
  %v580 = vmul.f32 %v560, %v573
  %v581 = vmul.f32 %v561, %v573
  %v582 = vmul.f32 %v562, %v573
  %v583 = vmul.f32 %v563, %v573
  %v584 = vmul.f32 %v564, %v573
  %v585 = vmul.f32 %v565, %v573
  %v586 = vmul.f32 %v566, %v573
  %v587 = vmul.f32 %v567, %v573
  %v588 = vmul.f32 %v568, %v573
  %v589 = vmul.f32 %v569, %v573
  %v590 = vlaneseq
  %v591 = vshrl.u32 %v590, 7
  %v592 = vsub.s32 1, %v591
  %v593 = vrot.slane %v359, %v592
  %v594 = vadd.f32 %v574, %v593
  %v595 = vadd.f32 %v575, %v593
  %v596 = vadd.f32 %v576, %v593
  %v597 = vadd.f32 %v577, %v593
  %v598 = vadd.f32 %v578, %v593
  %v599 = vadd.f32 %v579, %v593
  %v600 = vadd.f32 %v580, %v593
  %v601 = vadd.f32 %v581, %v593
  %v602 = vadd.f32 %v582, %v593
  %v603 = vadd.f32 %v583, %v593
  %v604 = vadd.f32 %v584, %v593
  %v605 = vadd.f32 %v585, %v593
  %v606 = vadd.f32 %v586, %v593
  %v607 = vadd.f32 %v587, %v593
  %v608 = vadd.f32 %v588, %v593
  %v609 = vadd.f32 %v589, %v593
  %v610 = vld [vmem:[%s4] sm:$0xff]
  %v611 = vld [vmem:[%s4 + $0x8] sm:$0xff]
  %v612 = vld [vmem:[%s4 + $0x10] sm:$0xff]
  %v613 = vld [vmem:[%s4 + $0x18] sm:$0xff]
  %v615 = vsel %vm360, %v594, 0
  %v618 = vsel %vm360, %v595, 0
  %v621 = vsel %vm360, %v596, 0
  %v624 = vsel %vm360, %v597, 0
  %v627 = vsel %vm360, %v598, 0
  %v630 = vsel %vm360, %v599, 0
  %v633 = vsel %vm360, %v600, 0
  %v636 = vsel %vm360, %v601, 0
  %v639 = vsel %vm360, %v602, 0
  %v642 = vsel %vm360, %v603, 0
  %v645 = vsel %vm360, %v604, 0
  %v648 = vsel %vm360, %v605, 0
  %v651 = vsel %vm360, %v606, 0
  %v654 = vsel %vm360, %v607, 0
  %v657 = vsel %vm360, %v608, 0
  %v660 = vsel %vm360, %v609, 0
  %662 = vmatprep.subr.mxu0 0.0
  %663 = vmatpush1.msra.mxu0 %v610
  %664 = vmatprep.subr.mxu0 0.0
  %665 = vmatpush1.msra.mxu0 %v611
  %666 = vmatprep.subr.mxu0 0.0
  %667 = vmatpush1.msra.mxu0 %v612
  %668 = vmatprep.subr.mxu0 0.0
  %669 = vmatpush1.msra.mxu0 %v613
  %670 = vmatprep.subr.mxu0 0.0
  %671 = vmatpush1.msra.mxu0 0.0
  %672 = vmatprep.subr.mxu0 0.0
  %673 = vmatpush1.msra.mxu0 0.0
  %674 = vmatprep.subr.mxu0 0.0
  %675 = vmatpush1.msra.mxu0 0.0
  %676 = vmatprep.subr.mxu0 0.0
  %677 = vmatpush1.msra.mxu0 0.0
  %678 = vmatprep.subr.mxu0 0.0
  %679 = vmatpush1.msra.mxu0 0.0
  %680 = vmatprep.subr.mxu0 0.0
  %681 = vmatpush1.msra.mxu0 0.0
  %682 = vmatprep.subr.mxu0 0.0
  %683 = vmatpush1.msra.mxu0 0.0
  %684 = vmatprep.subr.mxu0 0.0
  %685 = vmatpush1.msra.mxu0 0.0
  %686 = vmatprep.subr.mxu0 0.0
  %687 = vmatpush1.msra.mxu0 0.0
  %688 = vmatprep.subr.mxu0 0.0
  %689 = vmatpush1.msra.mxu0 0.0
  %690 = vmatprep.subr.mxu0 0.0
  %691 = vmatpush1.msra.mxu0 0.0
  %692 = vmatprep.subr.mxu0 0.0
  %693 = vmatpush1.msra.mxu0 0.0
  %694 = vmatprep.subr.mxu0 0.0
  %695 = vmatpush1.msra.mxu0 0.0
  %696 = vmatprep.subr.mxu0 0.0
  %697 = vmatpush1.msra.mxu0 0.0
  %698 = vmatprep.subr.mxu0 0.0
  %699 = vmatpush1.msra.mxu0 0.0
  %700 = vmatprep.subr.mxu0 0.0
  %701 = vmatpush1.msra.mxu0 0.0
  %702 = vmatprep.subr.mxu0 0.0
  %703 = vmatpush1.msra.mxu0 0.0
  %704 = vmatprep.subr.mxu0 0.0
  %705 = vmatpush1.msra.mxu0 0.0
  %706 = vmatprep.subr.mxu0 0.0
  %707 = vmatpush1.msra.mxu0 0.0
  %708 = vmatprep.subr.mxu0 0.0
  %709 = vmatpush1.msra.mxu0 0.0
  %710 = vmatprep.subr.mxu0 0.0
  %711 = vmatpush1.msra.mxu0 0.0
  %712 = vmatprep.subr.mxu0 0.0
  %713 = vmatpush1.msra.mxu0 0.0
  %714 = vmatprep.subr.mxu0 0.0
  %715 = vmatpush1.msra.mxu0 0.0
  %716 = vmatprep.subr.mxu0 0.0
  %717 = vmatpush1.msra.mxu0 0.0
  %718 = vmatprep.subr.mxu0 0.0
  %719 = vmatpush1.msra.mxu0 0.0
  %720 = vmatprep.subr.mxu0 0.0
  %721 = vmatpush1.msra.mxu0 0.0
  %722 = vmatprep.subr.mxu0 0.0
  %723 = vmatpush1.msra.mxu0 0.0
  %724 = vmatprep.subr.mxu0 0.0
  %725 = vmatpush1.msra.mxu0 0.0
  %726 = vmatprep.mubr.f32.mxu0 0.0
  %727 = vmatmul.mubr.f32.gmra.mrb[0].mxu0 %v615
  %v728 = vpop.f32.mrb[0].mxu0
  %v729 = vadd.f32 0.0, %v728
  %v730 = vpop.f32.mrb[0].mxu0
  %731 = vmatprep.mubr.f32.mxu0 0.0
  %732 = vmatmul.mubr.f32.gmra.mrb[0].mxu0 %v618
  %v733 = vpop.f32.mrb[0].mxu0
  %v734 = vadd.f32 0.0, %v733
  %v735 = vpop.f32.mrb[0].mxu0
  %736 = vmatprep.mubr.f32.mxu0 0.0
  %737 = vmatmul.mubr.f32.gmra.mrb[0].mxu0 %v621
  %v738 = vpop.f32.mrb[0].mxu0
  %v739 = vadd.f32 0.0, %v738
  %v740 = vpop.f32.mrb[0].mxu0
  %741 = vmatprep.mubr.f32.mxu0 0.0
  %742 = vmatmul.mubr.f32.gmra.mrb[0].mxu0 %v624
  %v743 = vpop.f32.mrb[0].mxu0
  %v744 = vadd.f32 0.0, %v743
  %v745 = vpop.f32.mrb[0].mxu0
  %746 = vmatprep.mubr.f32.mxu0 0.0
  %747 = vmatmul.mubr.f32.gmra.mrb[0].mxu0 %v627
  %v748 = vpop.f32.mrb[0].mxu0
  %v749 = vadd.f32 0.0, %v748
  %v750 = vpop.f32.mrb[0].mxu0
  %751 = vmatprep.mubr.f32.mxu0 0.0
  %752 = vmatmul.mubr.f32.gmra.mrb[0].mxu0 %v630
  %v753 = vpop.f32.mrb[0].mxu0
  %v754 = vadd.f32 0.0, %v753
  %v755 = vpop.f32.mrb[0].mxu0
  %756 = vmatprep.mubr.f32.mxu0 0.0
  %757 = vmatmul.mubr.f32.gmra.mrb[0].mxu0 %v633
  %v758 = vpop.f32.mrb[0].mxu0
  %v759 = vadd.f32 0.0, %v758
  %v760 = vpop.f32.mrb[0].mxu0
  %761 = vmatprep.mubr.f32.mxu0 0.0
  %762 = vmatmul.mubr.f32.gmra.mrb[0].mxu0 %v636
  %v763 = vpop.f32.mrb[0].mxu0
  %v764 = vadd.f32 0.0, %v763
  %v765 = vpop.f32.mrb[0].mxu0
  %766 = vmatprep.mubr.f32.mxu0 0.0
  %767 = vmatmul.mubr.f32.gmra.mrb[0].mxu0 %v639
  %v768 = vpop.f32.mrb[0].mxu0
  %v769 = vadd.f32 0.0, %v768
  %v770 = vpop.f32.mrb[0].mxu0
  %771 = vmatprep.mubr.f32.mxu0 0.0
  %772 = vmatmul.mubr.f32.gmra.mrb[0].mxu0 %v642
  %v773 = vpop.f32.mrb[0].mxu0
  %v774 = vadd.f32 0.0, %v773
  %v775 = vpop.f32.mrb[0].mxu0
  %776 = vmatprep.mubr.f32.mxu0 0.0
  %777 = vmatmul.mubr.f32.gmra.mrb[0].mxu0 %v645
  %v778 = vpop.f32.mrb[0].mxu0
  %v779 = vadd.f32 0.0, %v778
  %v780 = vpop.f32.mrb[0].mxu0
  %781 = vmatprep.mubr.f32.mxu0 0.0
  %782 = vmatmul.mubr.f32.gmra.mrb[0].mxu0 %v648
  %v783 = vpop.f32.mrb[0].mxu0
  %v784 = vadd.f32 0.0, %v783
  %v785 = vpop.f32.mrb[0].mxu0
  %786 = vmatprep.mubr.f32.mxu0 0.0
  %787 = vmatmul.mubr.f32.gmra.mrb[0].mxu0 %v651
  %v788 = vpop.f32.mrb[0].mxu0
  %v789 = vadd.f32 0.0, %v788
  %v790 = vpop.f32.mrb[0].mxu0
  %791 = vmatprep.mubr.f32.mxu0 0.0
  %792 = vmatmul.mubr.f32.gmra.mrb[0].mxu0 %v654
  %v793 = vpop.f32.mrb[0].mxu0
  %v794 = vadd.f32 0.0, %v793
  %v795 = vpop.f32.mrb[0].mxu0
  %796 = vmatprep.mubr.f32.mxu0 0.0
  %797 = vmatmul.mubr.f32.gmra.mrb[0].mxu0 %v657
  %v798 = vpop.f32.mrb[0].mxu0
  %v799 = vadd.f32 0.0, %v798
  %v800 = vpop.f32.mrb[0].mxu0
  %801 = vmatprep.mubr.f32.mxu0 0.0
  %802 = vmatmul.mubr.f32.gmra.mrb[0].mxu0 %v660
  %v803 = vpop.f32.mrb[0].mxu0
  %v804 = vadd.f32 0.0, %v803
  %v805 = vpop.f32.mrb[0].mxu0
  %806 = vdwg.mxu0
  %v807 = vld [vmem:[%s5] sm:$0xff]
  %v808 = vld [vmem:[%s5 + $0x8] sm:$0x1]
  %809 = vst.msk [vmem:[#allocation2 + $0x10] sm:$0xff] %vm62, %v729
  %810 = vst.msk [vmem:[#allocation2 + $0x18] sm:$0xff] %vm62, %v734
  %811 = vst.msk [vmem:[#allocation2 + $0x20] sm:$0xff] %vm62, %v739
  %812 = vst.msk [vmem:[#allocation2 + $0x28] sm:$0xff] %vm62, %v744
  %813 = vst.msk [vmem:[#allocation2 + $0x30] sm:$0xff] %vm62, %v749
  %814 = vst.msk [vmem:[#allocation2 + $0x38] sm:$0xff] %vm62, %v754
  %815 = vst.msk [vmem:[#allocation2 + $0x40] sm:$0xff] %vm62, %v759
  %816 = vst.msk [vmem:[#allocation2 + $0x48] sm:$0xff] %vm62, %v764
  %817 = vst.msk [vmem:[#allocation2 + $0x50] sm:$0xff] %vm62, %v769
  %818 = vst.msk [vmem:[#allocation2 + $0x58] sm:$0xff] %vm62, %v774
  %819 = vst.msk [vmem:[#allocation2 + $0x60] sm:$0xff] %vm62, %v779
  %820 = vst.msk [vmem:[#allocation2 + $0x68] sm:$0xff] %vm62, %v784
  %821 = vst.msk [vmem:[#allocation2 + $0x70] sm:$0xff] %vm62, %v789
  %822 = vst.msk [vmem:[#allocation2 + $0x78] sm:$0xff] %vm62, %v794
  %823 = vst.msk [vmem:[#allocation2 + $0x80] sm:$0xff] %vm62, %v799
  %824 = vst.msk [vmem:[#allocation2 + $0x88] sm:$0xff] %vm62, %v804
  %v825 = vld [vmem:[#allocation2 + $0x7] sm:$0xff]
  %v826 = vld [vmem:[#allocation2 + $0xf] sm:$0xff]
  %v827 = vld [vmem:[#allocation2 + $0x17] sm:$0xff]
  %v828 = vld [vmem:[#allocation2 + $0x1f] sm:$0xff]
  %v829 = vld [vmem:[#allocation2 + $0x27] sm:$0xff]
  %v830 = vld [vmem:[#allocation2 + $0x2f] sm:$0xff]
  %v831 = vld [vmem:[#allocation2 + $0x37] sm:$0xff]
  %v832 = vld [vmem:[#allocation2 + $0x3f] sm:$0xff]
  %v833 = vld [vmem:[#allocation2 + $0x47] sm:$0xff]
  %v834 = vld [vmem:[#allocation2 + $0x4f] sm:$0xff]
  %v835 = vld [vmem:[#allocation2 + $0x57] sm:$0xff]
  %v836 = vld [vmem:[#allocation2 + $0x5f] sm:$0xff]
  %v837 = vld [vmem:[#allocation2 + $0x67] sm:$0xff]
  %v838 = vld [vmem:[#allocation2 + $0x6f] sm:$0xff]
  %v839 = vld [vmem:[#allocation2 + $0x77] sm:$0xff]
  %v840 = vld [vmem:[#allocation2 + $0x7f] sm:$0xff]
  %v841 = vlaneseq
  %v842 = vshrl.u32 %v841, 7
  %v843 = vsub.s32 0, %v842
  %v844 = vrot.slane %v807, %v843
  %v845 = vmul.f32 %v825, %v844
  %v846 = vmul.f32 %v826, %v844
  %v847 = vmul.f32 %v827, %v844
  %v848 = vmul.f32 %v828, %v844
  %v849 = vmul.f32 %v829, %v844
  %v850 = vmul.f32 %v830, %v844
  %v851 = vmul.f32 %v831, %v844
  %v852 = vmul.f32 %v832, %v844
  %v853 = vmul.f32 %v833, %v844
  %v854 = vmul.f32 %v834, %v844
  %v855 = vmul.f32 %v835, %v844
  %v856 = vmul.f32 %v836, %v844
  %v857 = vmul.f32 %v837, %v844
  %v858 = vmul.f32 %v838, %v844
  %v859 = vmul.f32 %v839, %v844
  %v860 = vmul.f32 %v840, %v844
  %862 = vset.pattern.permute.xlu0 0
  %863 = vperm.xlu0 %862, %v75
  %v864 = vpop.permute.xlu0 %863
  %867 = vset.pattern.permute.xlu0 0
  %868 = vperm.xlu0 %867, %v76
  %v869 = vpop.permute.xlu0 %868
  %872 = vset.pattern.permute.xlu0 0
  %873 = vperm.xlu0 %872, %v77
  %v874 = vpop.permute.xlu0 %873
  %877 = vset.pattern.permute.xlu0 0
  %878 = vperm.xlu0 %877, %v78
  %v879 = vpop.permute.xlu0 %878
  %882 = vset.pattern.permute.xlu0 0
  %883 = vperm.xlu0 %882, %v79
  %v884 = vpop.permute.xlu0 %883
  %887 = vset.pattern.permute.xlu0 0
  %888 = vperm.xlu0 %887, %v80
  %v889 = vpop.permute.xlu0 %888
  %892 = vset.pattern.permute.xlu0 0
  %893 = vperm.xlu0 %892, %v81
  %v894 = vpop.permute.xlu0 %893
  %897 = vset.pattern.permute.xlu0 0
  %898 = vperm.xlu0 %897, %v82
  %v899 = vpop.permute.xlu0 %898
  %902 = vset.pattern.permute.xlu0 0
  %903 = vperm.xlu0 %902, %v83
  %v904 = vpop.permute.xlu0 %903
  %907 = vset.pattern.permute.xlu0 0
  %908 = vperm.xlu0 %907, %v84
  %v909 = vpop.permute.xlu0 %908
  %912 = vset.pattern.permute.xlu0 0
  %913 = vperm.xlu0 %912, %v85
  %v914 = vpop.permute.xlu0 %913
  %917 = vset.pattern.permute.xlu0 0
  %918 = vperm.xlu0 %917, %v86
  %v919 = vpop.permute.xlu0 %918
  %922 = vset.pattern.permute.xlu0 0
  %923 = vperm.xlu0 %922, %v87
  %v924 = vpop.permute.xlu0 %923
  %927 = vset.pattern.permute.xlu0 0
  %928 = vperm.xlu0 %927, %v88
  %v929 = vpop.permute.xlu0 %928
  %932 = vset.pattern.permute.xlu0 0
  %933 = vperm.xlu0 %932, %v89
  %v934 = vpop.permute.xlu0 %933
  %937 = vset.pattern.permute.xlu0 0
  %938 = vperm.xlu0 %937, %v90
  %v939 = vpop.permute.xlu0 %938
  %v941 = vmul.f32 %v845, %v864
  %v942 = vmul.f32 %v846, %v869
  %v943 = vmul.f32 %v847, %v874
  %v944 = vmul.f32 %v848, %v879
  %v945 = vmul.f32 %v849, %v884
  %v946 = vmul.f32 %v850, %v889
  %v947 = vmul.f32 %v851, %v894
  %v948 = vmul.f32 %v852, %v899
  %v949 = vmul.f32 %v853, %v904
  %v950 = vmul.f32 %v854, %v909
  %v951 = vmul.f32 %v855, %v914
  %v952 = vmul.f32 %v856, %v919
  %v953 = vmul.f32 %v857, %v924
  %v954 = vmul.f32 %v858, %v929
  %v955 = vmul.f32 %v859, %v934
  %v956 = vmul.f32 %v860, %v939
  %v957 = vadd.f32 %v941, 0.0
  %v958 = vadd.f32 %v942, 0.0
  %v959 = vadd.f32 %v943, 0.0
  %v960 = vadd.f32 %v944, 0.0
  %v961 = vadd.f32 %v945, 0.0
  %v962 = vadd.f32 %v946, 0.0
  %v963 = vadd.f32 %v947, 0.0
  %v964 = vadd.f32 %v948, 0.0
  %v965 = vadd.f32 %v949, 0.0
  %v966 = vadd.f32 %v950, 0.0
  %v967 = vadd.f32 %v951, 0.0
  %v968 = vadd.f32 %v952, 0.0
  %v969 = vadd.f32 %v953, 0.0
  %v970 = vadd.f32 %v954, 0.0
  %v971 = vadd.f32 %v955, 0.0
  %v972 = vadd.f32 %v956, 0.0
  %v973 = vld [vmem:[#allocation2 + $0x8] sm:$0xff]
  %v974 = vld [vmem:[#allocation2 + $0x10] sm:$0xff]
  %v975 = vld [vmem:[#allocation2 + $0x18] sm:$0xff]
  %v976 = vld [vmem:[#allocation2 + $0x20] sm:$0xff]
  %v977 = vld [vmem:[#allocation2 + $0x28] sm:$0xff]
  %v978 = vld [vmem:[#allocation2 + $0x30] sm:$0xff]
  %v979 = vld [vmem:[#allocation2 + $0x38] sm:$0xff]
  %v980 = vld [vmem:[#allocation2 + $0x40] sm:$0xff]
  %v981 = vld [vmem:[#allocation2 + $0x48] sm:$0xff]
  %v982 = vld [vmem:[#allocation2 + $0x50] sm:$0xff]
  %v983 = vld [vmem:[#allocation2 + $0x58] sm:$0xff]
  %v984 = vld [vmem:[#allocation2 + $0x60] sm:$0xff]
  %v985 = vld [vmem:[#allocation2 + $0x68] sm:$0xff]
  %v986 = vld [vmem:[#allocation2 + $0x70] sm:$0xff]
  %v987 = vld [vmem:[#allocation2 + $0x78] sm:$0xff]
  %v988 = vld [vmem:[#allocation2 + $0x80] sm:$0xff]
  %v989 = vlaneseq
  %v990 = vshrl.u32 %v989, 7
  %v991 = vsub.s32 1, %v990
  %v992 = vrot.slane %v807, %v991
  %v993 = vmul.f32 %v973, %v992
  %v994 = vmul.f32 %v974, %v992
  %v995 = vmul.f32 %v975, %v992
  %v996 = vmul.f32 %v976, %v992
  %v997 = vmul.f32 %v977, %v992
  %v998 = vmul.f32 %v978, %v992
  %v999 = vmul.f32 %v979, %v992
  %v1000 = vmul.f32 %v980, %v992
  %v1001 = vmul.f32 %v981, %v992
  %v1002 = vmul.f32 %v982, %v992
  %v1003 = vmul.f32 %v983, %v992
  %v1004 = vmul.f32 %v984, %v992
  %v1005 = vmul.f32 %v985, %v992
  %v1006 = vmul.f32 %v986, %v992
  %v1007 = vmul.f32 %v987, %v992
  %v1008 = vmul.f32 %v988, %v992
  %1009 = vset.pattern.permute.xlu0 1
  %1010 = vperm.xlu0 %1009, %v75
  %v1011 = vpop.permute.xlu0 %1010
  %1013 = vset.pattern.permute.xlu0 1
  %1014 = vperm.xlu0 %1013, %v76
  %v1015 = vpop.permute.xlu0 %1014
  %1017 = vset.pattern.permute.xlu0 1
  %1018 = vperm.xlu0 %1017, %v77
  %v1019 = vpop.permute.xlu0 %1018
  %1021 = vset.pattern.permute.xlu0 1
  %1022 = vperm.xlu0 %1021, %v78
  %v1023 = vpop.permute.xlu0 %1022
  %1025 = vset.pattern.permute.xlu0 1
  %1026 = vperm.xlu0 %1025, %v79
  %v1027 = vpop.permute.xlu0 %1026
  %1029 = vset.pattern.permute.xlu0 1
  %1030 = vperm.xlu0 %1029, %v80
  %v1031 = vpop.permute.xlu0 %1030
  %1033 = vset.pattern.permute.xlu0 1
  %1034 = vperm.xlu0 %1033, %v81
  %v1035 = vpop.permute.xlu0 %1034
  %1037 = vset.pattern.permute.xlu0 1
  %1038 = vperm.xlu0 %1037, %v82
  %v1039 = vpop.permute.xlu0 %1038
  %1041 = vset.pattern.permute.xlu0 1
  %1042 = vperm.xlu0 %1041, %v83
  %v1043 = vpop.permute.xlu0 %1042
  %1045 = vset.pattern.permute.xlu0 1
  %1046 = vperm.xlu0 %1045, %v84
  %v1047 = vpop.permute.xlu0 %1046
  %1049 = vset.pattern.permute.xlu0 1
  %1050 = vperm.xlu0 %1049, %v85
  %v1051 = vpop.permute.xlu0 %1050
  %1053 = vset.pattern.permute.xlu0 1
  %1054 = vperm.xlu0 %1053, %v86
  %v1055 = vpop.permute.xlu0 %1054
  %1057 = vset.pattern.permute.xlu0 1
  %1058 = vperm.xlu0 %1057, %v87
  %v1059 = vpop.permute.xlu0 %1058
  %1061 = vset.pattern.permute.xlu0 1
  %1062 = vperm.xlu0 %1061, %v88
  %v1063 = vpop.permute.xlu0 %1062
  %1065 = vset.pattern.permute.xlu0 1
  %1066 = vperm.xlu0 %1065, %v89
  %v1067 = vpop.permute.xlu0 %1066
  %1069 = vset.pattern.permute.xlu0 1
  %1070 = vperm.xlu0 %1069, %v90
  %v1071 = vpop.permute.xlu0 %1070
  %v1073 = vmul.f32 %v993, %v1011
  %v1074 = vmul.f32 %v994, %v1015
  %v1075 = vmul.f32 %v995, %v1019
  %v1076 = vmul.f32 %v996, %v1023
  %v1077 = vmul.f32 %v997, %v1027
  %v1078 = vmul.f32 %v998, %v1031
  %v1079 = vmul.f32 %v999, %v1035
  %v1080 = vmul.f32 %v1000, %v1039
  %v1081 = vmul.f32 %v1001, %v1043
  %v1082 = vmul.f32 %v1002, %v1047
  %v1083 = vmul.f32 %v1003, %v1051
  %v1084 = vmul.f32 %v1004, %v1055
  %v1085 = vmul.f32 %v1005, %v1059
  %v1086 = vmul.f32 %v1006, %v1063
  %v1087 = vmul.f32 %v1007, %v1067
  %v1088 = vmul.f32 %v1008, %v1071
  %v1089 = vadd.f32 %v957, %v1073
  %v1090 = vadd.f32 %v958, %v1074
  %v1091 = vadd.f32 %v959, %v1075
  %v1092 = vadd.f32 %v960, %v1076
  %v1093 = vadd.f32 %v961, %v1077
  %v1094 = vadd.f32 %v962, %v1078
  %v1095 = vadd.f32 %v963, %v1079
  %v1096 = vadd.f32 %v964, %v1080
  %v1097 = vadd.f32 %v965, %v1081
  %v1098 = vadd.f32 %v966, %v1082
  %v1099 = vadd.f32 %v967, %v1083
  %v1100 = vadd.f32 %v968, %v1084
  %v1101 = vadd.f32 %v969, %v1085
  %v1102 = vadd.f32 %v970, %v1086
  %v1103 = vadd.f32 %v971, %v1087
  %v1104 = vadd.f32 %v972, %v1088
  %v1105 = vld [vmem:[#allocation2 + $0x9] sm:$0xff]
  %v1106 = vld [vmem:[#allocation2 + $0x11] sm:$0xff]
  %v1107 = vld [vmem:[#allocation2 + $0x19] sm:$0xff]
  %v1108 = vld [vmem:[#allocation2 + $0x21] sm:$0xff]
  %v1109 = vld [vmem:[#allocation2 + $0x29] sm:$0xff]
  %v1110 = vld [vmem:[#allocation2 + $0x31] sm:$0xff]
  %v1111 = vld [vmem:[#allocation2 + $0x39] sm:$0xff]
  %v1112 = vld [vmem:[#allocation2 + $0x41] sm:$0xff]
  %v1113 = vld [vmem:[#allocation2 + $0x49] sm:$0xff]
  %v1114 = vld [vmem:[#allocation2 + $0x51] sm:$0xff]
  %v1115 = vld [vmem:[#allocation2 + $0x59] sm:$0xff]
  %v1116 = vld [vmem:[#allocation2 + $0x61] sm:$0xff]
  %v1117 = vld [vmem:[#allocation2 + $0x69] sm:$0xff]
  %v1118 = vld [vmem:[#allocation2 + $0x71] sm:$0xff]
  %v1119 = vld [vmem:[#allocation2 + $0x79] sm:$0xff]
  %v1120 = vld [vmem:[#allocation2 + $0x81] sm:$0xff]
  %v1121 = vlaneseq
  %v1122 = vshrl.u32 %v1121, 7
  %v1123 = vsub.s32 2, %v1122
  %v1124 = vrot.slane %v807, %v1123
  %v1125 = vmul.f32 %v1105, %v1124
  %v1126 = vmul.f32 %v1106, %v1124
  %v1127 = vmul.f32 %v1107, %v1124
  %v1128 = vmul.f32 %v1108, %v1124
  %v1129 = vmul.f32 %v1109, %v1124
  %v1130 = vmul.f32 %v1110, %v1124
  %v1131 = vmul.f32 %v1111, %v1124
  %v1132 = vmul.f32 %v1112, %v1124
  %v1133 = vmul.f32 %v1113, %v1124
  %v1134 = vmul.f32 %v1114, %v1124
  %v1135 = vmul.f32 %v1115, %v1124
  %v1136 = vmul.f32 %v1116, %v1124
  %v1137 = vmul.f32 %v1117, %v1124
  %v1138 = vmul.f32 %v1118, %v1124
  %v1139 = vmul.f32 %v1119, %v1124
  %v1140 = vmul.f32 %v1120, %v1124
  %1141 = vset.pattern.permute.xlu0 2
  %1142 = vperm.xlu0 %1141, %v75
  %v1143 = vpop.permute.xlu0 %1142
  %1145 = vset.pattern.permute.xlu0 2
  %1146 = vperm.xlu0 %1145, %v76
  %v1147 = vpop.permute.xlu0 %1146
  %1149 = vset.pattern.permute.xlu0 2
  %1150 = vperm.xlu0 %1149, %v77
  %v1151 = vpop.permute.xlu0 %1150
  %1153 = vset.pattern.permute.xlu0 2
  %1154 = vperm.xlu0 %1153, %v78
  %v1155 = vpop.permute.xlu0 %1154
  %1157 = vset.pattern.permute.xlu0 2
  %1158 = vperm.xlu0 %1157, %v79
  %v1159 = vpop.permute.xlu0 %1158
  %1161 = vset.pattern.permute.xlu0 2
  %1162 = vperm.xlu0 %1161, %v80
  %v1163 = vpop.permute.xlu0 %1162
  %1165 = vset.pattern.permute.xlu0 2
  %1166 = vperm.xlu0 %1165, %v81
  %v1167 = vpop.permute.xlu0 %1166
  %1169 = vset.pattern.permute.xlu0 2
  %1170 = vperm.xlu0 %1169, %v82
  %v1171 = vpop.permute.xlu0 %1170
  %1173 = vset.pattern.permute.xlu0 2
  %1174 = vperm.xlu0 %1173, %v83
  %v1175 = vpop.permute.xlu0 %1174
  %1177 = vset.pattern.permute.xlu0 2
  %1178 = vperm.xlu0 %1177, %v84
  %v1179 = vpop.permute.xlu0 %1178
  %1181 = vset.pattern.permute.xlu0 2
  %1182 = vperm.xlu0 %1181, %v85
  %v1183 = vpop.permute.xlu0 %1182
  %1185 = vset.pattern.permute.xlu0 2
  %1186 = vperm.xlu0 %1185, %v86
  %v1187 = vpop.permute.xlu0 %1186
  %1189 = vset.pattern.permute.xlu0 2
  %1190 = vperm.xlu0 %1189, %v87
  %v1191 = vpop.permute.xlu0 %1190
  %1193 = vset.pattern.permute.xlu0 2
  %1194 = vperm.xlu0 %1193, %v88
  %v1195 = vpop.permute.xlu0 %1194
  %1197 = vset.pattern.permute.xlu0 2
  %1198 = vperm.xlu0 %1197, %v89
  %v1199 = vpop.permute.xlu0 %1198
  %1201 = vset.pattern.permute.xlu0 2
  %1202 = vperm.xlu0 %1201, %v90
  %v1203 = vpop.permute.xlu0 %1202
  %v1205 = vmul.f32 %v1125, %v1143
  %v1206 = vmul.f32 %v1126, %v1147
  %v1207 = vmul.f32 %v1127, %v1151
  %v1208 = vmul.f32 %v1128, %v1155
  %v1209 = vmul.f32 %v1129, %v1159
  %v1210 = vmul.f32 %v1130, %v1163
  %v1211 = vmul.f32 %v1131, %v1167
  %v1212 = vmul.f32 %v1132, %v1171
  %v1213 = vmul.f32 %v1133, %v1175
  %v1214 = vmul.f32 %v1134, %v1179
  %v1215 = vmul.f32 %v1135, %v1183
  %v1216 = vmul.f32 %v1136, %v1187
  %v1217 = vmul.f32 %v1137, %v1191
  %v1218 = vmul.f32 %v1138, %v1195
  %v1219 = vmul.f32 %v1139, %v1199
  %v1220 = vmul.f32 %v1140, %v1203
  %v1221 = vadd.f32 %v1089, %v1205
  %v1222 = vadd.f32 %v1090, %v1206
  %v1223 = vadd.f32 %v1091, %v1207
  %v1224 = vadd.f32 %v1092, %v1208
  %v1225 = vadd.f32 %v1093, %v1209
  %v1226 = vadd.f32 %v1094, %v1210
  %v1227 = vadd.f32 %v1095, %v1211
  %v1228 = vadd.f32 %v1096, %v1212
  %v1229 = vadd.f32 %v1097, %v1213
  %v1230 = vadd.f32 %v1098, %v1214
  %v1231 = vadd.f32 %v1099, %v1215
  %v1232 = vadd.f32 %v1100, %v1216
  %v1233 = vadd.f32 %v1101, %v1217
  %v1234 = vadd.f32 %v1102, %v1218
  %v1235 = vadd.f32 %v1103, %v1219
  %v1236 = vadd.f32 %v1104, %v1220
  %v1237 = vld [vmem:[#allocation2 + $0xf] sm:$0xff]
  %v1238 = vld [vmem:[#allocation2 + $0x17] sm:$0xff]
  %v1239 = vld [vmem:[#allocation2 + $0x1f] sm:$0xff]
  %v1240 = vld [vmem:[#allocation2 + $0x27] sm:$0xff]
  %v1241 = vld [vmem:[#allocation2 + $0x2f] sm:$0xff]
  %v1242 = vld [vmem:[#allocation2 + $0x37] sm:$0xff]
  %v1243 = vld [vmem:[#allocation2 + $0x3f] sm:$0xff]
  %v1244 = vld [vmem:[#allocation2 + $0x47] sm:$0xff]
  %v1245 = vld [vmem:[#allocation2 + $0x4f] sm:$0xff]
  %v1246 = vld [vmem:[#allocation2 + $0x57] sm:$0xff]
  %v1247 = vld [vmem:[#allocation2 + $0x5f] sm:$0xff]
  %v1248 = vld [vmem:[#allocation2 + $0x67] sm:$0xff]
  %v1249 = vld [vmem:[#allocation2 + $0x6f] sm:$0xff]
  %v1250 = vld [vmem:[#allocation2 + $0x77] sm:$0xff]
  %v1251 = vld [vmem:[#allocation2 + $0x7f] sm:$0xff]
  %v1252 = vld [vmem:[#allocation2 + $0x87] sm:$0xff]
  %v1253 = vlaneseq
  %v1254 = vshrl.u32 %v1253, 7
  %v1255 = vsub.s32 3, %v1254
  %v1256 = vrot.slane %v807, %v1255
  %v1257 = vmul.f32 %v1237, %v1256
  %v1258 = vmul.f32 %v1238, %v1256
  %v1259 = vmul.f32 %v1239, %v1256
  %v1260 = vmul.f32 %v1240, %v1256
  %v1261 = vmul.f32 %v1241, %v1256
  %v1262 = vmul.f32 %v1242, %v1256
  %v1263 = vmul.f32 %v1243, %v1256
  %v1264 = vmul.f32 %v1244, %v1256
  %v1265 = vmul.f32 %v1245, %v1256
  %v1266 = vmul.f32 %v1246, %v1256
  %v1267 = vmul.f32 %v1247, %v1256
  %v1268 = vmul.f32 %v1248, %v1256
  %v1269 = vmul.f32 %v1249, %v1256
  %v1270 = vmul.f32 %v1250, %v1256
  %v1271 = vmul.f32 %v1251, %v1256
  %v1272 = vmul.f32 %v1252, %v1256
  %1273 = vset.pattern.permute.xlu0 3
  %1274 = vperm.xlu0 %1273, %v75
  %v1275 = vpop.permute.xlu0 %1274
  %1277 = vset.pattern.permute.xlu0 3
  %1278 = vperm.xlu0 %1277, %v76
  %v1279 = vpop.permute.xlu0 %1278
  %1281 = vset.pattern.permute.xlu0 3
  %1282 = vperm.xlu0 %1281, %v77
  %v1283 = vpop.permute.xlu0 %1282
  %1285 = vset.pattern.permute.xlu0 3
  %1286 = vperm.xlu0 %1285, %v78
  %v1287 = vpop.permute.xlu0 %1286
  %1289 = vset.pattern.permute.xlu0 3
  %1290 = vperm.xlu0 %1289, %v79
  %v1291 = vpop.permute.xlu0 %1290
  %1293 = vset.pattern.permute.xlu0 3
  %1294 = vperm.xlu0 %1293, %v80
  %v1295 = vpop.permute.xlu0 %1294
  %1297 = vset.pattern.permute.xlu0 3
  %1298 = vperm.xlu0 %1297, %v81
  %v1299 = vpop.permute.xlu0 %1298
  %1301 = vset.pattern.permute.xlu0 3
  %1302 = vperm.xlu0 %1301, %v82
  %v1303 = vpop.permute.xlu0 %1302
  %1305 = vset.pattern.permute.xlu0 3
  %1306 = vperm.xlu0 %1305, %v83
  %v1307 = vpop.permute.xlu0 %1306
  %1309 = vset.pattern.permute.xlu0 3
  %1310 = vperm.xlu0 %1309, %v84
  %v1311 = vpop.permute.xlu0 %1310
  %1313 = vset.pattern.permute.xlu0 3
  %1314 = vperm.xlu0 %1313, %v85
  %v1315 = vpop.permute.xlu0 %1314
  %1317 = vset.pattern.permute.xlu0 3
  %1318 = vperm.xlu0 %1317, %v86
  %v1319 = vpop.permute.xlu0 %1318
  %1321 = vset.pattern.permute.xlu0 3
  %1322 = vperm.xlu0 %1321, %v87
  %v1323 = vpop.permute.xlu0 %1322
  %1325 = vset.pattern.permute.xlu0 3
  %1326 = vperm.xlu0 %1325, %v88
  %v1327 = vpop.permute.xlu0 %1326
  %1329 = vset.pattern.permute.xlu0 3
  %1330 = vperm.xlu0 %1329, %v89
  %v1331 = vpop.permute.xlu0 %1330
  %1333 = vset.pattern.permute.xlu0 3
  %1334 = vperm.xlu0 %1333, %v90
  %v1335 = vpop.permute.xlu0 %1334
  %v1337 = vmul.f32 %v1257, %v1275
  %v1338 = vmul.f32 %v1258, %v1279
  %v1339 = vmul.f32 %v1259, %v1283
  %v1340 = vmul.f32 %v1260, %v1287
  %v1341 = vmul.f32 %v1261, %v1291
  %v1342 = vmul.f32 %v1262, %v1295
  %v1343 = vmul.f32 %v1263, %v1299
  %v1344 = vmul.f32 %v1264, %v1303
  %v1345 = vmul.f32 %v1265, %v1307
  %v1346 = vmul.f32 %v1266, %v1311
  %v1347 = vmul.f32 %v1267, %v1315
  %v1348 = vmul.f32 %v1268, %v1319
  %v1349 = vmul.f32 %v1269, %v1323
  %v1350 = vmul.f32 %v1270, %v1327
  %v1351 = vmul.f32 %v1271, %v1331
  %v1352 = vmul.f32 %v1272, %v1335
  %v1353 = vadd.f32 %v1221, %v1337
  %v1354 = vadd.f32 %v1222, %v1338
  %v1355 = vadd.f32 %v1223, %v1339
  %v1356 = vadd.f32 %v1224, %v1340
  %v1357 = vadd.f32 %v1225, %v1341
  %v1358 = vadd.f32 %v1226, %v1342
  %v1359 = vadd.f32 %v1227, %v1343
  %v1360 = vadd.f32 %v1228, %v1344
  %v1361 = vadd.f32 %v1229, %v1345
  %v1362 = vadd.f32 %v1230, %v1346
  %v1363 = vadd.f32 %v1231, %v1347
  %v1364 = vadd.f32 %v1232, %v1348
  %v1365 = vadd.f32 %v1233, %v1349
  %v1366 = vadd.f32 %v1234, %v1350
  %v1367 = vadd.f32 %v1235, %v1351
  %v1368 = vadd.f32 %v1236, %v1352
  %v1369 = vld [vmem:[#allocation2 + $0x10] sm:$0xff]
  %v1370 = vld [vmem:[#allocation2 + $0x18] sm:$0xff]
  %v1371 = vld [vmem:[#allocation2 + $0x20] sm:$0xff]
  %v1372 = vld [vmem:[#allocation2 + $0x28] sm:$0xff]
  %v1373 = vld [vmem:[#allocation2 + $0x30] sm:$0xff]
  %v1374 = vld [vmem:[#allocation2 + $0x38] sm:$0xff]
  %v1375 = vld [vmem:[#allocation2 + $0x40] sm:$0xff]
  %v1376 = vld [vmem:[#allocation2 + $0x48] sm:$0xff]
  %v1377 = vld [vmem:[#allocation2 + $0x50] sm:$0xff]
  %v1378 = vld [vmem:[#allocation2 + $0x58] sm:$0xff]
  %v1379 = vld [vmem:[#allocation2 + $0x60] sm:$0xff]
  %v1380 = vld [vmem:[#allocation2 + $0x68] sm:$0xff]
  %v1381 = vld [vmem:[#allocation2 + $0x70] sm:$0xff]
  %v1382 = vld [vmem:[#allocation2 + $0x78] sm:$0xff]
  %v1383 = vld [vmem:[#allocation2 + $0x80] sm:$0xff]
  %v1384 = vld [vmem:[#allocation2 + $0x88] sm:$0xff]
  %v1385 = vlaneseq
  %v1386 = vshrl.u32 %v1385, 7
  %v1387 = vsub.s32 4, %v1386
  %v1388 = vrot.slane %v807, %v1387
  %v1389 = vmul.f32 %v1369, %v1388
  %v1390 = vmul.f32 %v1370, %v1388
  %v1391 = vmul.f32 %v1371, %v1388
  %v1392 = vmul.f32 %v1372, %v1388
  %v1393 = vmul.f32 %v1373, %v1388
  %v1394 = vmul.f32 %v1374, %v1388
  %v1395 = vmul.f32 %v1375, %v1388
  %v1396 = vmul.f32 %v1376, %v1388
  %v1397 = vmul.f32 %v1377, %v1388
  %v1398 = vmul.f32 %v1378, %v1388
  %v1399 = vmul.f32 %v1379, %v1388
  %v1400 = vmul.f32 %v1380, %v1388
  %v1401 = vmul.f32 %v1381, %v1388
  %v1402 = vmul.f32 %v1382, %v1388
  %v1403 = vmul.f32 %v1383, %v1388
  %v1404 = vmul.f32 %v1384, %v1388
  %v1405 = vadd.f32 %v1353, %v1389
  %v1406 = vadd.f32 %v1354, %v1390
  %v1407 = vadd.f32 %v1355, %v1391
  %v1408 = vadd.f32 %v1356, %v1392
  %v1409 = vadd.f32 %v1357, %v1393
  %v1410 = vadd.f32 %v1358, %v1394
  %v1411 = vadd.f32 %v1359, %v1395
  %v1412 = vadd.f32 %v1360, %v1396
  %v1413 = vadd.f32 %v1361, %v1397
  %v1414 = vadd.f32 %v1362, %v1398
  %v1415 = vadd.f32 %v1363, %v1399
  %v1416 = vadd.f32 %v1364, %v1400
  %v1417 = vadd.f32 %v1365, %v1401
  %v1418 = vadd.f32 %v1366, %v1402
  %v1419 = vadd.f32 %v1367, %v1403
  %v1420 = vadd.f32 %v1368, %v1404
  %v1421 = vld [vmem:[#allocation2 + $0x11] sm:$0xff]
  %v1422 = vld [vmem:[#allocation2 + $0x19] sm:$0xff]
  %v1423 = vld [vmem:[#allocation2 + $0x21] sm:$0xff]
  %v1424 = vld [vmem:[#allocation2 + $0x29] sm:$0xff]
  %v1425 = vld [vmem:[#allocation2 + $0x31] sm:$0xff]
  %v1426 = vld [vmem:[#allocation2 + $0x39] sm:$0xff]
  %v1427 = vld [vmem:[#allocation2 + $0x41] sm:$0xff]
  %v1428 = vld [vmem:[#allocation2 + $0x49] sm:$0xff]
  %v1429 = vld [vmem:[#allocation2 + $0x51] sm:$0xff]
  %v1430 = vld [vmem:[#allocation2 + $0x59] sm:$0xff]
  %v1431 = vld [vmem:[#allocation2 + $0x61] sm:$0xff]
  %v1432 = vld [vmem:[#allocation2 + $0x69] sm:$0xff]
  %v1433 = vld [vmem:[#allocation2 + $0x71] sm:$0xff]
  %v1434 = vld [vmem:[#allocation2 + $0x79] sm:$0xff]
  %v1435 = vld [vmem:[#allocation2 + $0x81] sm:$0xff]
  %v1436 = vld [vmem:[#allocation2 + $0x89] sm:$0xff]
  %v1437 = vlaneseq
  %v1438 = vshrl.u32 %v1437, 7
  %v1439 = vsub.s32 5, %v1438
  %v1440 = vrot.slane %v807, %v1439
  %v1441 = vmul.f32 %v1421, %v1440
  %v1442 = vmul.f32 %v1422, %v1440
  %v1443 = vmul.f32 %v1423, %v1440
  %v1444 = vmul.f32 %v1424, %v1440
  %v1445 = vmul.f32 %v1425, %v1440
  %v1446 = vmul.f32 %v1426, %v1440
  %v1447 = vmul.f32 %v1427, %v1440
  %v1448 = vmul.f32 %v1428, %v1440
  %v1449 = vmul.f32 %v1429, %v1440
  %v1450 = vmul.f32 %v1430, %v1440
  %v1451 = vmul.f32 %v1431, %v1440
  %v1452 = vmul.f32 %v1432, %v1440
  %v1453 = vmul.f32 %v1433, %v1440
  %v1454 = vmul.f32 %v1434, %v1440
  %v1455 = vmul.f32 %v1435, %v1440
  %v1456 = vmul.f32 %v1436, %v1440
  %1457 = vset.pattern.permute.xlu0 5
  %1458 = vperm.xlu0 %1457, %v75
  %v1459 = vpop.permute.xlu0 %1458
  %1461 = vset.pattern.permute.xlu0 5
  %1462 = vperm.xlu0 %1461, %v76
  %v1463 = vpop.permute.xlu0 %1462
  %1465 = vset.pattern.permute.xlu0 5
  %1466 = vperm.xlu0 %1465, %v77
  %v1467 = vpop.permute.xlu0 %1466
  %1469 = vset.pattern.permute.xlu0 5
  %1470 = vperm.xlu0 %1469, %v78
  %v1471 = vpop.permute.xlu0 %1470
  %1473 = vset.pattern.permute.xlu0 5
  %1474 = vperm.xlu0 %1473, %v79
  %v1475 = vpop.permute.xlu0 %1474
  %1477 = vset.pattern.permute.xlu0 5
  %1478 = vperm.xlu0 %1477, %v80
  %v1479 = vpop.permute.xlu0 %1478
  %1481 = vset.pattern.permute.xlu0 5
  %1482 = vperm.xlu0 %1481, %v81
  %v1483 = vpop.permute.xlu0 %1482
  %1485 = vset.pattern.permute.xlu0 5
  %1486 = vperm.xlu0 %1485, %v82
  %v1487 = vpop.permute.xlu0 %1486
  %1489 = vset.pattern.permute.xlu0 5
  %1490 = vperm.xlu0 %1489, %v83
  %v1491 = vpop.permute.xlu0 %1490
  %1493 = vset.pattern.permute.xlu0 5
  %1494 = vperm.xlu0 %1493, %v84
  %v1495 = vpop.permute.xlu0 %1494
  %1497 = vset.pattern.permute.xlu0 5
  %1498 = vperm.xlu0 %1497, %v85
  %v1499 = vpop.permute.xlu0 %1498
  %1501 = vset.pattern.permute.xlu0 5
  %1502 = vperm.xlu0 %1501, %v86
  %v1503 = vpop.permute.xlu0 %1502
  %1505 = vset.pattern.permute.xlu0 5
  %1506 = vperm.xlu0 %1505, %v87
  %v1507 = vpop.permute.xlu0 %1506
  %1509 = vset.pattern.permute.xlu0 5
  %1510 = vperm.xlu0 %1509, %v88
  %v1511 = vpop.permute.xlu0 %1510
  %1513 = vset.pattern.permute.xlu0 5
  %1514 = vperm.xlu0 %1513, %v89
  %v1515 = vpop.permute.xlu0 %1514
  %1517 = vset.pattern.permute.xlu0 5
  %1518 = vperm.xlu0 %1517, %v90
  %v1519 = vpop.permute.xlu0 %1518
  %v1521 = vmul.f32 %v1441, %v1459
  %v1522 = vmul.f32 %v1442, %v1463
  %v1523 = vmul.f32 %v1443, %v1467
  %v1524 = vmul.f32 %v1444, %v1471
  %v1525 = vmul.f32 %v1445, %v1475
  %v1526 = vmul.f32 %v1446, %v1479
  %v1527 = vmul.f32 %v1447, %v1483
  %v1528 = vmul.f32 %v1448, %v1487
  %v1529 = vmul.f32 %v1449, %v1491
  %v1530 = vmul.f32 %v1450, %v1495
  %v1531 = vmul.f32 %v1451, %v1499
  %v1532 = vmul.f32 %v1452, %v1503
  %v1533 = vmul.f32 %v1453, %v1507
  %v1534 = vmul.f32 %v1454, %v1511
  %v1535 = vmul.f32 %v1455, %v1515
  %v1536 = vmul.f32 %v1456, %v1519
  %v1537 = vadd.f32 %v1405, %v1521
  %v1538 = vadd.f32 %v1406, %v1522
  %v1539 = vadd.f32 %v1407, %v1523
  %v1540 = vadd.f32 %v1408, %v1524
  %v1541 = vadd.f32 %v1409, %v1525
  %v1542 = vadd.f32 %v1410, %v1526
  %v1543 = vadd.f32 %v1411, %v1527
  %v1544 = vadd.f32 %v1412, %v1528
  %v1545 = vadd.f32 %v1413, %v1529
  %v1546 = vadd.f32 %v1414, %v1530
  %v1547 = vadd.f32 %v1415, %v1531
  %v1548 = vadd.f32 %v1416, %v1532
  %v1549 = vadd.f32 %v1417, %v1533
  %v1550 = vadd.f32 %v1418, %v1534
  %v1551 = vadd.f32 %v1419, %v1535
  %v1552 = vadd.f32 %v1420, %v1536
  %v1553 = vld [vmem:[#allocation2 + $0x17] sm:$0xff]
  %v1554 = vld [vmem:[#allocation2 + $0x1f] sm:$0xff]
  %v1555 = vld [vmem:[#allocation2 + $0x27] sm:$0xff]
  %v1556 = vld [vmem:[#allocation2 + $0x2f] sm:$0xff]
  %v1557 = vld [vmem:[#allocation2 + $0x37] sm:$0xff]
  %v1558 = vld [vmem:[#allocation2 + $0x3f] sm:$0xff]
  %v1559 = vld [vmem:[#allocation2 + $0x47] sm:$0xff]
  %v1560 = vld [vmem:[#allocation2 + $0x4f] sm:$0xff]
  %v1561 = vld [vmem:[#allocation2 + $0x57] sm:$0xff]
  %v1562 = vld [vmem:[#allocation2 + $0x5f] sm:$0xff]
  %v1563 = vld [vmem:[#allocation2 + $0x67] sm:$0xff]
  %v1564 = vld [vmem:[#allocation2 + $0x6f] sm:$0xff]
  %v1565 = vld [vmem:[#allocation2 + $0x77] sm:$0xff]
  %v1566 = vld [vmem:[#allocation2 + $0x7f] sm:$0xff]
  %v1567 = vld [vmem:[#allocation2 + $0x87] sm:$0xff]
  %v1568 = vld [vmem:[#allocation2 + $0x8f] sm:$0xff]
  %v1569 = vlaneseq
  %v1570 = vshrl.u32 %v1569, 7
  %v1571 = vsub.s32 6, %v1570
  %v1572 = vrot.slane %v807, %v1571
  %v1573 = vmul.f32 %v1553, %v1572
  %v1574 = vmul.f32 %v1554, %v1572
  %v1575 = vmul.f32 %v1555, %v1572
  %v1576 = vmul.f32 %v1556, %v1572
  %v1577 = vmul.f32 %v1557, %v1572
  %v1578 = vmul.f32 %v1558, %v1572
  %v1579 = vmul.f32 %v1559, %v1572
  %v1580 = vmul.f32 %v1560, %v1572
  %v1581 = vmul.f32 %v1561, %v1572
  %v1582 = vmul.f32 %v1562, %v1572
  %v1583 = vmul.f32 %v1563, %v1572
  %v1584 = vmul.f32 %v1564, %v1572
  %v1585 = vmul.f32 %v1565, %v1572
  %v1586 = vmul.f32 %v1566, %v1572
  %v1587 = vmul.f32 %v1567, %v1572
  %v1588 = vmul.f32 %v1568, %v1572
  %1589 = vset.pattern.permute.xlu0 6
  %1590 = vperm.xlu0 %1589, %v75
  %v1591 = vpop.permute.xlu0 %1590
  %1593 = vset.pattern.permute.xlu0 6
  %1594 = vperm.xlu0 %1593, %v76
  %v1595 = vpop.permute.xlu0 %1594
  %1597 = vset.pattern.permute.xlu0 6
  %1598 = vperm.xlu0 %1597, %v77
  %v1599 = vpop.permute.xlu0 %1598
  %1601 = vset.pattern.permute.xlu0 6
  %1602 = vperm.xlu0 %1601, %v78
  %v1603 = vpop.permute.xlu0 %1602
  %1605 = vset.pattern.permute.xlu0 6
  %1606 = vperm.xlu0 %1605, %v79
  %v1607 = vpop.permute.xlu0 %1606
  %1609 = vset.pattern.permute.xlu0 6
  %1610 = vperm.xlu0 %1609, %v80
  %v1611 = vpop.permute.xlu0 %1610
  %1613 = vset.pattern.permute.xlu0 6
  %1614 = vperm.xlu0 %1613, %v81
  %v1615 = vpop.permute.xlu0 %1614
  %1617 = vset.pattern.permute.xlu0 6
  %1618 = vperm.xlu0 %1617, %v82
  %v1619 = vpop.permute.xlu0 %1618
  %1621 = vset.pattern.permute.xlu0 6
  %1622 = vperm.xlu0 %1621, %v83
  %v1623 = vpop.permute.xlu0 %1622
  %1625 = vset.pattern.permute.xlu0 6
  %1626 = vperm.xlu0 %1625, %v84
  %v1627 = vpop.permute.xlu0 %1626
  %1629 = vset.pattern.permute.xlu0 6
  %1630 = vperm.xlu0 %1629, %v85
  %v1631 = vpop.permute.xlu0 %1630
  %1633 = vset.pattern.permute.xlu0 6
  %1634 = vperm.xlu0 %1633, %v86
  %v1635 = vpop.permute.xlu0 %1634
  %1637 = vset.pattern.permute.xlu0 6
  %1638 = vperm.xlu0 %1637, %v87
  %v1639 = vpop.permute.xlu0 %1638
  %1641 = vset.pattern.permute.xlu0 6
  %1642 = vperm.xlu0 %1641, %v88
  %v1643 = vpop.permute.xlu0 %1642
  %1645 = vset.pattern.permute.xlu0 6
  %1646 = vperm.xlu0 %1645, %v89
  %v1647 = vpop.permute.xlu0 %1646
  %1649 = vset.pattern.permute.xlu0 6
  %1650 = vperm.xlu0 %1649, %v90
  %v1651 = vpop.permute.xlu0 %1650
  %v1653 = vmul.f32 %v1573, %v1591
  %v1654 = vmul.f32 %v1574, %v1595
  %v1655 = vmul.f32 %v1575, %v1599
  %v1656 = vmul.f32 %v1576, %v1603
  %v1657 = vmul.f32 %v1577, %v1607
  %v1658 = vmul.f32 %v1578, %v1611
  %v1659 = vmul.f32 %v1579, %v1615
  %v1660 = vmul.f32 %v1580, %v1619
  %v1661 = vmul.f32 %v1581, %v1623
  %v1662 = vmul.f32 %v1582, %v1627
  %v1663 = vmul.f32 %v1583, %v1631
  %v1664 = vmul.f32 %v1584, %v1635
  %v1665 = vmul.f32 %v1585, %v1639
  %v1666 = vmul.f32 %v1586, %v1643
  %v1667 = vmul.f32 %v1587, %v1647
  %v1668 = vmul.f32 %v1588, %v1651
  %v1669 = vadd.f32 %v1537, %v1653
  %v1670 = vadd.f32 %v1538, %v1654
  %v1671 = vadd.f32 %v1539, %v1655
  %v1672 = vadd.f32 %v1540, %v1656
  %v1673 = vadd.f32 %v1541, %v1657
  %v1674 = vadd.f32 %v1542, %v1658
  %v1675 = vadd.f32 %v1543, %v1659
  %v1676 = vadd.f32 %v1544, %v1660
  %v1677 = vadd.f32 %v1545, %v1661
  %v1678 = vadd.f32 %v1546, %v1662
  %v1679 = vadd.f32 %v1547, %v1663
  %v1680 = vadd.f32 %v1548, %v1664
  %v1681 = vadd.f32 %v1549, %v1665
  %v1682 = vadd.f32 %v1550, %v1666
  %v1683 = vadd.f32 %v1551, %v1667
  %v1684 = vadd.f32 %v1552, %v1668
  %v1685 = vld [vmem:[#allocation2 + $0x18] sm:$0xff]
  %v1686 = vld [vmem:[#allocation2 + $0x20] sm:$0xff]
  %v1687 = vld [vmem:[#allocation2 + $0x28] sm:$0xff]
  %v1688 = vld [vmem:[#allocation2 + $0x30] sm:$0xff]
  %v1689 = vld [vmem:[#allocation2 + $0x38] sm:$0xff]
  %v1690 = vld [vmem:[#allocation2 + $0x40] sm:$0xff]
  %v1691 = vld [vmem:[#allocation2 + $0x48] sm:$0xff]
  %v1692 = vld [vmem:[#allocation2 + $0x50] sm:$0xff]
  %v1693 = vld [vmem:[#allocation2 + $0x58] sm:$0xff]
  %v1694 = vld [vmem:[#allocation2 + $0x60] sm:$0xff]
  %v1695 = vld [vmem:[#allocation2 + $0x68] sm:$0xff]
  %v1696 = vld [vmem:[#allocation2 + $0x70] sm:$0xff]
  %v1697 = vld [vmem:[#allocation2 + $0x78] sm:$0xff]
  %v1698 = vld [vmem:[#allocation2 + $0x80] sm:$0xff]
  %v1699 = vld [vmem:[#allocation2 + $0x88] sm:$0xff]
  %v1700 = vld [vmem:[#allocation2 + $0x90] sm:$0xff]
  %v1701 = vlaneseq
  %v1702 = vshrl.u32 %v1701, 7
  %v1703 = vsub.s32 7, %v1702
  %v1704 = vrot.slane %v807, %v1703
  %v1705 = vmul.f32 %v1685, %v1704
  %v1706 = vmul.f32 %v1686, %v1704
  %v1707 = vmul.f32 %v1687, %v1704
  %v1708 = vmul.f32 %v1688, %v1704
  %v1709 = vmul.f32 %v1689, %v1704
  %v1710 = vmul.f32 %v1690, %v1704
  %v1711 = vmul.f32 %v1691, %v1704
  %v1712 = vmul.f32 %v1692, %v1704
  %v1713 = vmul.f32 %v1693, %v1704
  %v1714 = vmul.f32 %v1694, %v1704
  %v1715 = vmul.f32 %v1695, %v1704
  %v1716 = vmul.f32 %v1696, %v1704
  %v1717 = vmul.f32 %v1697, %v1704
  %v1718 = vmul.f32 %v1698, %v1704
  %v1719 = vmul.f32 %v1699, %v1704
  %v1720 = vmul.f32 %v1700, %v1704
  %1721 = vset.pattern.permute.xlu0 7
  %1722 = vperm.xlu0 %1721, %v75
  %v1723 = vpop.permute.xlu0 %1722
  %1725 = vset.pattern.permute.xlu0 7
  %1726 = vperm.xlu0 %1725, %v76
  %v1727 = vpop.permute.xlu0 %1726
  %1729 = vset.pattern.permute.xlu0 7
  %1730 = vperm.xlu0 %1729, %v77
  %v1731 = vpop.permute.xlu0 %1730
  %1733 = vset.pattern.permute.xlu0 7
  %1734 = vperm.xlu0 %1733, %v78
  %v1735 = vpop.permute.xlu0 %1734
  %1737 = vset.pattern.permute.xlu0 7
  %1738 = vperm.xlu0 %1737, %v79
  %v1739 = vpop.permute.xlu0 %1738
  %1741 = vset.pattern.permute.xlu0 7
  %1742 = vperm.xlu0 %1741, %v80
  %v1743 = vpop.permute.xlu0 %1742
  %1745 = vset.pattern.permute.xlu0 7
  %1746 = vperm.xlu0 %1745, %v81
  %v1747 = vpop.permute.xlu0 %1746
  %1749 = vset.pattern.permute.xlu0 7
  %1750 = vperm.xlu0 %1749, %v82
  %v1751 = vpop.permute.xlu0 %1750
  %1753 = vset.pattern.permute.xlu0 7
  %1754 = vperm.xlu0 %1753, %v83
  %v1755 = vpop.permute.xlu0 %1754
  %1757 = vset.pattern.permute.xlu0 7
  %1758 = vperm.xlu0 %1757, %v84
  %v1759 = vpop.permute.xlu0 %1758
  %1761 = vset.pattern.permute.xlu0 7
  %1762 = vperm.xlu0 %1761, %v85
  %v1763 = vpop.permute.xlu0 %1762
  %1765 = vset.pattern.permute.xlu0 7
  %1766 = vperm.xlu0 %1765, %v86
  %v1767 = vpop.permute.xlu0 %1766
  %1769 = vset.pattern.permute.xlu0 7
  %1770 = vperm.xlu0 %1769, %v87
  %v1771 = vpop.permute.xlu0 %1770
  %1773 = vset.pattern.permute.xlu0 7
  %1774 = vperm.xlu0 %1773, %v88
  %v1775 = vpop.permute.xlu0 %1774
  %1777 = vset.pattern.permute.xlu0 7
  %1778 = vperm.xlu0 %1777, %v89
  %v1779 = vpop.permute.xlu0 %1778
  %1781 = vset.pattern.permute.xlu0 7
  %1782 = vperm.xlu0 %1781, %v90
  %v1783 = vpop.permute.xlu0 %1782
  %v1785 = vmul.f32 %v1705, %v1723
  %v1786 = vmul.f32 %v1706, %v1727
  %v1787 = vmul.f32 %v1707, %v1731
  %v1788 = vmul.f32 %v1708, %v1735
  %v1789 = vmul.f32 %v1709, %v1739
  %v1790 = vmul.f32 %v1710, %v1743
  %v1791 = vmul.f32 %v1711, %v1747
  %v1792 = vmul.f32 %v1712, %v1751
  %v1793 = vmul.f32 %v1713, %v1755
  %v1794 = vmul.f32 %v1714, %v1759
  %v1795 = vmul.f32 %v1715, %v1763
  %v1796 = vmul.f32 %v1716, %v1767
  %v1797 = vmul.f32 %v1717, %v1771
  %v1798 = vmul.f32 %v1718, %v1775
  %v1799 = vmul.f32 %v1719, %v1779
  %v1800 = vmul.f32 %v1720, %v1783
  %v1801 = vadd.f32 %v1669, %v1785
  %v1802 = vadd.f32 %v1670, %v1786
  %v1803 = vadd.f32 %v1671, %v1787
  %v1804 = vadd.f32 %v1672, %v1788
  %v1805 = vadd.f32 %v1673, %v1789
  %v1806 = vadd.f32 %v1674, %v1790
  %v1807 = vadd.f32 %v1675, %v1791
  %v1808 = vadd.f32 %v1676, %v1792
  %v1809 = vadd.f32 %v1677, %v1793
  %v1810 = vadd.f32 %v1678, %v1794
  %v1811 = vadd.f32 %v1679, %v1795
  %v1812 = vadd.f32 %v1680, %v1796
  %v1813 = vadd.f32 %v1681, %v1797
  %v1814 = vadd.f32 %v1682, %v1798
  %v1815 = vadd.f32 %v1683, %v1799
  %v1816 = vadd.f32 %v1684, %v1800
  %v1817 = vld [vmem:[#allocation2 + $0x19] sm:$0xff]
  %v1818 = vld [vmem:[#allocation2 + $0x21] sm:$0xff]
  %v1819 = vld [vmem:[#allocation2 + $0x29] sm:$0xff]
  %v1820 = vld [vmem:[#allocation2 + $0x31] sm:$0xff]
  %v1821 = vld [vmem:[#allocation2 + $0x39] sm:$0xff]
  %v1822 = vld [vmem:[#allocation2 + $0x41] sm:$0xff]
  %v1823 = vld [vmem:[#allocation2 + $0x49] sm:$0xff]
  %v1824 = vld [vmem:[#allocation2 + $0x51] sm:$0xff]
  %v1825 = vld [vmem:[#allocation2 + $0x59] sm:$0xff]
  %v1826 = vld [vmem:[#allocation2 + $0x61] sm:$0xff]
  %v1827 = vld [vmem:[#allocation2 + $0x69] sm:$0xff]
  %v1828 = vld [vmem:[#allocation2 + $0x71] sm:$0xff]
  %v1829 = vld [vmem:[#allocation2 + $0x79] sm:$0xff]
  %v1830 = vld [vmem:[#allocation2 + $0x81] sm:$0xff]
  %v1831 = vld [vmem:[#allocation2 + $0x89] sm:$0xff]
  %v1832 = vld [vmem:[#allocation2 + $0x91] sm:$0xff]
  %v1833 = vlaneseq
  %v1834 = vshrl.u32 %v1833, 7
  %v1835 = vsub.s32 0, %v1834
  %v1836 = vrot.slane %v808, %v1835
  %v1837 = vmul.f32 %v1817, %v1836
  %v1838 = vmul.f32 %v1818, %v1836
  %v1839 = vmul.f32 %v1819, %v1836
  %v1840 = vmul.f32 %v1820, %v1836
  %v1841 = vmul.f32 %v1821, %v1836
  %v1842 = vmul.f32 %v1822, %v1836
  %v1843 = vmul.f32 %v1823, %v1836
  %v1844 = vmul.f32 %v1824, %v1836
  %v1845 = vmul.f32 %v1825, %v1836
  %v1846 = vmul.f32 %v1826, %v1836
  %v1847 = vmul.f32 %v1827, %v1836
  %v1848 = vmul.f32 %v1828, %v1836
  %v1849 = vmul.f32 %v1829, %v1836
  %v1850 = vmul.f32 %v1830, %v1836
  %v1851 = vmul.f32 %v1831, %v1836
  %v1852 = vmul.f32 %v1832, %v1836
  %1853 = vset.pattern.permute.xlu0 8
  %1854 = vperm.xlu0 %1853, %v75
  %v1855 = vpop.permute.xlu0 %1854
  %1857 = vset.pattern.permute.xlu0 8
  %1858 = vperm.xlu0 %1857, %v76
  %v1859 = vpop.permute.xlu0 %1858
  %1861 = vset.pattern.permute.xlu0 8
  %1862 = vperm.xlu0 %1861, %v77
  %v1863 = vpop.permute.xlu0 %1862
  %1865 = vset.pattern.permute.xlu0 8
  %1866 = vperm.xlu0 %1865, %v78
  %v1867 = vpop.permute.xlu0 %1866
  %1869 = vset.pattern.permute.xlu0 8
  %1870 = vperm.xlu0 %1869, %v79
  %v1871 = vpop.permute.xlu0 %1870
  %1873 = vset.pattern.permute.xlu0 8
  %1874 = vperm.xlu0 %1873, %v80
  %v1875 = vpop.permute.xlu0 %1874
  %1877 = vset.pattern.permute.xlu0 8
  %1878 = vperm.xlu0 %1877, %v81
  %v1879 = vpop.permute.xlu0 %1878
  %1881 = vset.pattern.permute.xlu0 8
  %1882 = vperm.xlu0 %1881, %v82
  %v1883 = vpop.permute.xlu0 %1882
  %1885 = vset.pattern.permute.xlu0 8
  %1886 = vperm.xlu0 %1885, %v83
  %v1887 = vpop.permute.xlu0 %1886
  %1889 = vset.pattern.permute.xlu0 8
  %1890 = vperm.xlu0 %1889, %v84
  %v1891 = vpop.permute.xlu0 %1890
  %1893 = vset.pattern.permute.xlu0 8
  %1894 = vperm.xlu0 %1893, %v85
  %v1895 = vpop.permute.xlu0 %1894
  %1897 = vset.pattern.permute.xlu0 8
  %1898 = vperm.xlu0 %1897, %v86
  %v1899 = vpop.permute.xlu0 %1898
  %1901 = vset.pattern.permute.xlu0 8
  %1902 = vperm.xlu0 %1901, %v87
  %v1903 = vpop.permute.xlu0 %1902
  %1905 = vset.pattern.permute.xlu0 8
  %1906 = vperm.xlu0 %1905, %v88
  %v1907 = vpop.permute.xlu0 %1906
  %1909 = vset.pattern.permute.xlu0 8
  %1910 = vperm.xlu0 %1909, %v89
  %v1911 = vpop.permute.xlu0 %1910
  %1913 = vset.pattern.permute.xlu0 8
  %1914 = vperm.xlu0 %1913, %v90
  %v1915 = vpop.permute.xlu0 %1914
  %v1917 = vmul.f32 %v1837, %v1855
  %v1918 = vmul.f32 %v1838, %v1859
  %v1919 = vmul.f32 %v1839, %v1863
  %v1920 = vmul.f32 %v1840, %v1867
  %v1921 = vmul.f32 %v1841, %v1871
  %v1922 = vmul.f32 %v1842, %v1875
  %v1923 = vmul.f32 %v1843, %v1879
  %v1924 = vmul.f32 %v1844, %v1883
  %v1925 = vmul.f32 %v1845, %v1887
  %v1926 = vmul.f32 %v1846, %v1891
  %v1927 = vmul.f32 %v1847, %v1895
  %v1928 = vmul.f32 %v1848, %v1899
  %v1929 = vmul.f32 %v1849, %v1903
  %v1930 = vmul.f32 %v1850, %v1907
  %v1931 = vmul.f32 %v1851, %v1911
  %v1932 = vmul.f32 %v1852, %v1915
  %v1933 = vadd.f32 %v1801, %v1917
  %v1934 = vadd.f32 %v1802, %v1918
  %v1935 = vadd.f32 %v1803, %v1919
  %v1936 = vadd.f32 %v1804, %v1920
  %v1937 = vadd.f32 %v1805, %v1921
  %v1938 = vadd.f32 %v1806, %v1922
  %v1939 = vadd.f32 %v1807, %v1923
  %v1940 = vadd.f32 %v1808, %v1924
  %v1941 = vadd.f32 %v1809, %v1925
  %v1942 = vadd.f32 %v1810, %v1926
  %v1943 = vadd.f32 %v1811, %v1927
  %v1944 = vadd.f32 %v1812, %v1928
  %v1945 = vadd.f32 %v1813, %v1929
  %v1946 = vadd.f32 %v1814, %v1930
  %v1947 = vadd.f32 %v1815, %v1931
  %v1948 = vadd.f32 %v1816, %v1932
  %v1949 = vmul.f32 %v1933, %v1933
  %v1950 = vmul.f32 %v1934, %v1934
  %v1951 = vmul.f32 %v1935, %v1935
  %v1952 = vmul.f32 %v1936, %v1936
  %v1953 = vmul.f32 %v1937, %v1937
  %v1954 = vmul.f32 %v1938, %v1938
  %v1955 = vmul.f32 %v1939, %v1939
  %v1956 = vmul.f32 %v1940, %v1940
  %v1957 = vsel %vm360, %v1949, 0.0
  %v1958 = vsel %vm360, %v1950, 0.0
  %v1959 = vadd.f32 %v1957, %v1958
  %v1960 = vsel %vm360, %v1951, 0.0
  %v1961 = vadd.f32 %v1959, %v1960
  %v1962 = vsel %vm360, %v1952, 0.0
  %v1963 = vadd.f32 %v1961, %v1962
  %v1964 = vsel %vm360, %v1953, 0.0
  %v1965 = vadd.f32 %v1963, %v1964
  %v1966 = vsel %vm360, %v1954, 0.0
  %v1967 = vadd.f32 %v1965, %v1966
  %v1968 = vsel %vm360, %v1955, 0.0
  %v1969 = vadd.f32 %v1967, %v1968
  %v1970 = vsel %vm360, %v1956, 0.0
  %v1971 = vadd.f32 %v1969, %v1970
  %v1972 = vrot.slane %v1971, 4
  %v1973 = vadd.f32 %v1971, %v1972
  %v1974 = vrot.slane %v1973, 2
  %v1975 = vadd.f32 %v1973, %v1974
  %v1976 = vrot.slane %v1975, 1
  %v1977 = vadd.f32 %v1975, %v1976
  %v1978 = vmax.f32 %v1977, 1e-24
  %v1979 = vrsqrt.pop %v1978
  %v1980 = vmul.f32 %v1979, %v359
  %v1981 = vlaneseq
  %v1982 = vshrl.u32 %v1981, 7
  %v1983 = vsub.s32 4, %v1982
  %v1984 = vrot.slane %v1980, %v1983
  %v1985 = vmul.f32 %v1933, %v1984
  %v1986 = vmul.f32 %v1934, %v1984
  %v1987 = vmul.f32 %v1935, %v1984
  %v1988 = vmul.f32 %v1936, %v1984
  %v1989 = vmul.f32 %v1937, %v1984
  %v1990 = vmul.f32 %v1938, %v1984
  %v1991 = vmul.f32 %v1939, %v1984
  %v1992 = vmul.f32 %v1940, %v1984
  %vm1993 = vcmask 523520
  %v1994 = vsel %vm1993, %v1949, 0.0
  %v1995 = vsel %vm1993, %v1950, 0.0
  %v1996 = vadd.f32 %v1994, %v1995
  %v1997 = vsel %vm1993, %v1951, 0.0
  %v1998 = vadd.f32 %v1996, %v1997
  %v1999 = vsel %vm1993, %v1952, 0.0
  %v2000 = vadd.f32 %v1998, %v1999
  %v2001 = vsel %vm1993, %v1953, 0.0
  %v2002 = vadd.f32 %v2000, %v2001
  %v2003 = vsel %vm1993, %v1954, 0.0
  %v2004 = vadd.f32 %v2002, %v2003
  %v2005 = vsel %vm1993, %v1955, 0.0
  %v2006 = vadd.f32 %v2004, %v2005
  %v2007 = vsel %vm1993, %v1956, 0.0
  %v2008 = vadd.f32 %v2006, %v2007
  %v2009 = vrot.slane %v2008, 4
  %v2010 = vadd.f32 %v2008, %v2009
  %v2011 = vrot.slane %v2010, 2
  %v2012 = vadd.f32 %v2010, %v2011
  %v2013 = vrot.slane %v2012, 1
  %v2014 = vadd.f32 %v2012, %v2013
  %v2015 = vmax.f32 %v2014, 1e-24
  %v2016 = vrsqrt.pop %v2015
  %v2017 = vmul.f32 %v1933, %v2016
  %v2018 = vmul.f32 %v1934, %v2016
  %v2019 = vmul.f32 %v1935, %v2016
  %v2020 = vmul.f32 %v1936, %v2016
  %v2021 = vmul.f32 %v1937, %v2016
  %v2022 = vmul.f32 %v1938, %v2016
  %v2023 = vmul.f32 %v1939, %v2016
  %v2024 = vmul.f32 %v1940, %v2016
  %v2025 = vld [vmem:[%s3] sm:$0xff]
  %v2026 = vld [vmem:[%s3 + $0x8] sm:$0xff]
  %v2027 = vld [vmem:[%s3 + $0x10] sm:$0xff]
  %v2028 = vld [vmem:[%s3 + $0x18] sm:$0xff]
  %2029 = vxpose.xlu0.b32.start [1/16] %v1985, 128
  %2030 = vxpose.xlu0.b32.cont [2/16] %v1986, 128
  %2031 = vxpose.xlu0.b32.cont [3/16] %v1987, 128
  %2032 = vxpose.xlu0.b32.cont [4/16] %v1988, 128
  %2033 = vxpose.xlu0.b32.cont [5/16] %v1989, 128
  %2034 = vxpose.xlu0.b32.cont [6/16] %v1990, 128
  %2035 = vxpose.xlu0.b32.cont [7/16] %v1991, 128
  %2036 = vxpose.xlu0.b32.cont [8/16] %v1992, 128
  %2037 = vxpose.xlu0.b32.cont [9/16] 0.0, 128
  %2038 = vxpose.xlu0.b32.cont [10/16] 0.0, 128
  %2039 = vxpose.xlu0.b32.cont [11/16] 0.0, 128
  %2040 = vxpose.xlu0.b32.cont [12/16] 0.0, 128
  %2041 = vxpose.xlu0.b32.cont [13/16] 0.0, 128
  %2042 = vxpose.xlu0.b32.cont [14/16] 0.0, 128
  %2043 = vxpose.xlu0.b32.cont [15/16] 0.0, 128
  %2044 = vxpose.xlu0.b32.end [16/16] 0.0, 128
  %v2045 = vpop.trf.xlu0
  %v2046 = vpop.trf.xlu0
  %v2047 = vpop.trf.xlu0
  %v2048 = vpop.trf.xlu0
  %v2049 = vpop.trf.xlu0
  %v2050 = vpop.trf.xlu0
  %v2051 = vpop.trf.xlu0
  %v2052 = vpop.trf.xlu0
  %v2053 = vpop.trf.xlu0
  %v2054 = vpop.trf.xlu0
  %v2055 = vpop.trf.xlu0
  %v2056 = vpop.trf.xlu0
  %v2057 = vpop.trf.xlu0
  %v2058 = vpop.trf.xlu0
  %v2059 = vpop.trf.xlu0
  %v2060 = vpop.trf.xlu0
  %2069 = vrot.lane.b32.xlu0 %v2017, 96
  %v2070 = vpop.permute.xlu0 %2069
  %2071 = vrot.lane.b32.xlu0 %v2018, 96
  %v2072 = vpop.permute.xlu0 %2071
  %2073 = vrot.lane.b32.xlu0 %v2019, 96
  %v2074 = vpop.permute.xlu0 %2073
  %2075 = vrot.lane.b32.xlu0 %v2020, 96
  %v2076 = vpop.permute.xlu0 %2075
  %2077 = vrot.lane.b32.xlu0 %v2021, 96
  %v2078 = vpop.permute.xlu0 %2077
  %2079 = vrot.lane.b32.xlu0 %v2022, 96
  %v2080 = vpop.permute.xlu0 %2079
  %2081 = vrot.lane.b32.xlu0 %v2023, 96
  %v2082 = vpop.permute.xlu0 %2081
  %2083 = vrot.lane.b32.xlu0 %v2024, 96
  %v2084 = vpop.permute.xlu0 %2083
  %v2094 = vsel %vm95, %v2045, 0
  %v2097 = vsel %vm95, %v2046, 0
  %v2100 = vsel %vm95, %v2047, 0
  %v2103 = vsel %vm95, %v2048, 0
  %2105 = vmatprep.subr.mxu0 0.0
  %2106 = vmatpush1.msra.mxu0 %v2070
  %2107 = vmatprep.subr.mxu0 0.0
  %2108 = vmatpush1.msra.mxu0 %v2072
  %2109 = vmatprep.subr.mxu0 0.0
  %2110 = vmatpush1.msra.mxu0 %v2074
  %2111 = vmatprep.subr.mxu0 0.0
  %2112 = vmatpush1.msra.mxu0 %v2076
  %2113 = vmatprep.subr.mxu0 0.0
  %2114 = vmatpush1.msra.mxu0 %v2078
  %2115 = vmatprep.subr.mxu0 0.0
  %2116 = vmatpush1.msra.mxu0 %v2080
  %2117 = vmatprep.subr.mxu0 0.0
  %2118 = vmatpush1.msra.mxu0 %v2082
  %2119 = vmatprep.subr.mxu0 0.0
  %2120 = vmatpush1.msra.mxu0 %v2084
  %2121 = vmatprep.subr.mxu0 0.0
  %2122 = vmatpush1.msra.mxu0 0.0
  %2123 = vmatprep.subr.mxu0 0.0
  %2124 = vmatpush1.msra.mxu0 0.0
  %2125 = vmatprep.subr.mxu0 0.0
  %2126 = vmatpush1.msra.mxu0 0.0
  %2127 = vmatprep.subr.mxu0 0.0
  %2128 = vmatpush1.msra.mxu0 0.0
  %2129 = vmatprep.subr.mxu0 0.0
  %2130 = vmatpush1.msra.mxu0 0.0
  %2131 = vmatprep.subr.mxu0 0.0
  %2132 = vmatpush1.msra.mxu0 0.0
  %2133 = vmatprep.subr.mxu0 0.0
  %2134 = vmatpush1.msra.mxu0 0.0
  %2135 = vmatprep.subr.mxu0 0.0
  %2136 = vmatpush1.msra.mxu0 0.0
  %2137 = vmatprep.subr.mxu0 0.0
  %2138 = vmatpush1.msra.mxu0 0.0
  %2139 = vmatprep.subr.mxu0 0.0
  %2140 = vmatpush1.msra.mxu0 0.0
  %2141 = vmatprep.subr.mxu0 0.0
  %2142 = vmatpush1.msra.mxu0 0.0
  %2143 = vmatprep.subr.mxu0 0.0
  %2144 = vmatpush1.msra.mxu0 0.0
  %2145 = vmatprep.subr.mxu0 0.0
  %2146 = vmatpush1.msra.mxu0 0.0
  %2147 = vmatprep.subr.mxu0 0.0
  %2148 = vmatpush1.msra.mxu0 0.0
  %2149 = vmatprep.subr.mxu0 0.0
  %2150 = vmatpush1.msra.mxu0 0.0
  %2151 = vmatprep.subr.mxu0 0.0
  %2152 = vmatpush1.msra.mxu0 0.0
  %2153 = vmatprep.subr.mxu0 0.0
  %2154 = vmatpush1.msra.mxu0 0.0
  %2155 = vmatprep.subr.mxu0 0.0
  %2156 = vmatpush1.msra.mxu0 0.0
  %2157 = vmatprep.subr.mxu0 0.0
  %2158 = vmatpush1.msra.mxu0 0.0
  %2159 = vmatprep.subr.mxu0 0.0
  %2160 = vmatpush1.msra.mxu0 0.0
  %2161 = vmatprep.subr.mxu0 0.0
  %2162 = vmatpush1.msra.mxu0 0.0
  %2163 = vmatprep.subr.mxu0 0.0
  %2164 = vmatpush1.msra.mxu0 0.0
  %2165 = vmatprep.subr.mxu0 0.0
  %2166 = vmatpush1.msra.mxu0 0.0
  %2167 = vmatprep.subr.mxu0 0.0
  %2168 = vmatpush1.msra.mxu0 0.0
  %2169 = vmatprep.mubr.f32.mxu0 0.0
  %2170 = vmatmul.mubr.f32.gmra.mrb[0].mxu0 %v2094
  %v2171 = vpop.f32.mrb[0].mxu0
  %v2172 = vadd.f32 %v2025, %v2171
  %v2173 = vpop.f32.mrb[0].mxu0
  %2174 = vmatprep.mubr.f32.mxu0 0.0
  %2175 = vmatmul.mubr.f32.gmra.mrb[0].mxu0 %v2097
  %v2176 = vpop.f32.mrb[0].mxu0
  %v2177 = vadd.f32 %v2026, %v2176
  %v2178 = vpop.f32.mrb[0].mxu0
  %2179 = vmatprep.mubr.f32.mxu0 0.0
  %2180 = vmatmul.mubr.f32.gmra.mrb[0].mxu0 %v2100
  %v2181 = vpop.f32.mrb[0].mxu0
  %v2182 = vadd.f32 %v2027, %v2181
  %v2183 = vpop.f32.mrb[0].mxu0
  %2184 = vmatprep.mubr.f32.mxu0 0.0
  %2185 = vmatmul.mubr.f32.gmra.mrb[0].mxu0 %v2103
  %v2186 = vpop.f32.mrb[0].mxu0
  %v2187 = vadd.f32 %v2028, %v2186
  %v2188 = vpop.f32.mrb[0].mxu0
  %2189 = vdwg.mxu0
  %v2190 = vsel %vm360, %v2172, -inf
  %2191 = vmax.xlane.f32.xlu0 %v2190
  %v2192 = vpop.xlane.xlu0 %2191
  %v2193 = vsel %vm360, %v2177, -inf
  %2194 = vmax.xlane.f32.xlu0 %v2193
  %v2195 = vpop.xlane.xlu0 %2194
  %v2196 = vsel %vm360, %v2182, -inf
  %2197 = vmax.xlane.f32.xlu0 %v2196
  %v2198 = vpop.xlane.xlu0 %2197
  %v2199 = vsel %vm360, %v2187, -inf
  %2200 = vmax.xlane.f32.xlu0 %v2199
  %v2201 = vpop.xlane.xlu0 %2200
  %v2202 = vsub.f32 %v2172, %v2192
  %v2203 = vsub.f32 %v2177, %v2195
  %v2204 = vsub.f32 %v2182, %v2198
  %v2205 = vsub.f32 %v2187, %v2201
  %v2206 = vmul.f32 %v2202, 1.442695
  %v2207 = vpow.pop %v2206
  %v2208 = vmul.f32 %v2203, 1.442695
  %v2209 = vpow.pop %v2208
  %v2210 = vmul.f32 %v2204, 1.442695
  %v2211 = vpow.pop %v2210
  %v2212 = vmul.f32 %v2205, 1.442695
  %v2213 = vpow.pop %v2212
  %v2214 = vsel %vm360, %v2207, 0.0
  %2215 = vadd.xlane.f32.xlu0 %v2214
  %v2216 = vpop.xlane.xlu0 %2215
  %v2217 = vsel %vm360, %v2209, 0.0
  %2218 = vadd.xlane.f32.xlu0 %v2217
  %v2219 = vpop.xlane.xlu0 %2218
  %v2220 = vsel %vm360, %v2211, 0.0
  %2221 = vadd.xlane.f32.xlu0 %v2220
  %v2222 = vpop.xlane.xlu0 %2221
  %v2223 = vsel %vm360, %v2213, 0.0
  %2224 = vadd.xlane.f32.xlu0 %v2223
  %v2225 = vpop.xlane.xlu0 %2224
  %v2226 = vrcp.pop %v2216
  %v2227 = vrcp.pop %v2219
  %v2228 = vrcp.pop %v2222
  %v2229 = vrcp.pop %v2225
  %v2230 = vmul.f32 %v2207, %v2226
  %v2231 = vmul.f32 %v2209, %v2227
  %v2232 = vmul.f32 %v2211, %v2228
  %v2233 = vmul.f32 %v2213, %v2229
  %2242 = vrot.lane.b32.xlu0 %v1933, 64
  %v2243 = vpop.permute.xlu0 %2242
  %2244 = vrot.lane.b32.xlu0 %v1934, 64
  %v2245 = vpop.permute.xlu0 %2244
  %2246 = vrot.lane.b32.xlu0 %v1935, 64
  %v2247 = vpop.permute.xlu0 %2246
  %2248 = vrot.lane.b32.xlu0 %v1936, 64
  %v2249 = vpop.permute.xlu0 %2248
  %2250 = vrot.lane.b32.xlu0 %v1937, 64
  %v2251 = vpop.permute.xlu0 %2250
  %2252 = vrot.lane.b32.xlu0 %v1938, 64
  %v2253 = vpop.permute.xlu0 %2252
  %2254 = vrot.lane.b32.xlu0 %v1939, 64
  %v2255 = vpop.permute.xlu0 %2254
  %2256 = vrot.lane.b32.xlu0 %v1940, 64
  %v2257 = vpop.permute.xlu0 %2256
  %v2258 = vsel %vm360, %v2243, 0
  %v2260 = vsel %vm360, %v2245, 0
  %v2262 = vsel %vm360, %v2247, 0
  %v2264 = vsel %vm360, %v2249, 0
  %v2266 = vsel %vm360, %v2251, 0
  %v2268 = vsel %vm360, %v2253, 0
  %v2270 = vsel %vm360, %v2255, 0
  %v2272 = vsel %vm360, %v2257, 0
  %v2275 = vsel %vm360, %v2230, 0
  %v2278 = vsel %vm360, %v2231, 0
  %v2281 = vsel %vm360, %v2232, 0
  %v2284 = vsel %vm360, %v2233, 0
  %2286 = vmatprep.subr.mxu0 0.0
  %2287 = vmatpush1.xpose.msra.mxu0 %v2275
  %2288 = vmatprep.subr.mxu0 0.0
  %2289 = vmatpush1.xpose.msra.mxu0 %v2278
  %2290 = vmatprep.subr.mxu0 0.0
  %2291 = vmatpush1.xpose.msra.mxu0 %v2281
  %2292 = vmatprep.subr.mxu0 0.0
  %2293 = vmatpush1.xpose.msra.mxu0 %v2284
  %2294 = vmatprep.subr.mxu0 0.0
  %2295 = vmatpush1.xpose.msra.mxu0 0.0
  %2296 = vmatprep.subr.mxu0 0.0
  %2297 = vmatpush1.xpose.msra.mxu0 0.0
  %2298 = vmatprep.subr.mxu0 0.0
  %2299 = vmatpush1.xpose.msra.mxu0 0.0
  %2300 = vmatprep.subr.mxu0 0.0
  %2301 = vmatpush1.xpose.msra.mxu0 0.0
  %2302 = vmatprep.subr.mxu0 0.0
  %2303 = vmatpush1.xpose.msra.mxu0 0.0
  %2304 = vmatprep.subr.mxu0 0.0
  %2305 = vmatpush1.xpose.msra.mxu0 0.0
  %2306 = vmatprep.subr.mxu0 0.0
  %2307 = vmatpush1.xpose.msra.mxu0 0.0
  %2308 = vmatprep.subr.mxu0 0.0
  %2309 = vmatpush1.xpose.msra.mxu0 0.0
  %2310 = vmatprep.subr.mxu0 0.0
  %2311 = vmatpush1.xpose.msra.mxu0 0.0
  %2312 = vmatprep.subr.mxu0 0.0
  %2313 = vmatpush1.xpose.msra.mxu0 0.0
  %2314 = vmatprep.subr.mxu0 0.0
  %2315 = vmatpush1.xpose.msra.mxu0 0.0
  %2316 = vmatprep.subr.mxu0 0.0
  %2317 = vmatpush1.xpose.msra.mxu0 0.0
  %2318 = vmatprep.subr.mxu0 0.0
  %2319 = vmatpush1.xpose.msra.mxu0 0.0
  %2320 = vmatprep.subr.mxu0 0.0
  %2321 = vmatpush1.xpose.msra.mxu0 0.0
  %2322 = vmatprep.subr.mxu0 0.0
  %2323 = vmatpush1.xpose.msra.mxu0 0.0
  %2324 = vmatprep.subr.mxu0 0.0
  %2325 = vmatpush1.xpose.msra.mxu0 0.0
  %2326 = vmatprep.subr.mxu0 0.0
  %2327 = vmatpush1.xpose.msra.mxu0 0.0
  %2328 = vmatprep.subr.mxu0 0.0
  %2329 = vmatpush1.xpose.msra.mxu0 0.0
  %2330 = vmatprep.subr.mxu0 0.0
  %2331 = vmatpush1.xpose.msra.mxu0 0.0
  %2332 = vmatprep.subr.mxu0 0.0
  %2333 = vmatpush1.xpose.msra.mxu0 0.0
  %2334 = vmatprep.subr.mxu0 0.0
  %2335 = vmatpush1.xpose.msra.mxu0 0.0
  %2336 = vmatprep.subr.mxu0 0.0
  %2337 = vmatpush1.xpose.msra.mxu0 0.0
  %2338 = vmatprep.subr.mxu0 0.0
  %2339 = vmatpush1.xpose.msra.mxu0 0.0
  %2340 = vmatprep.subr.mxu0 0.0
  %2341 = vmatpush1.xpose.msra.mxu0 0.0
  %2342 = vmatprep.subr.mxu0 0.0
  %2343 = vmatpush1.xpose.msra.mxu0 0.0
  %2344 = vmatprep.subr.mxu0 0.0
  %2345 = vmatpush1.xpose.msra.mxu0 0.0
  %2346 = vmatprep.subr.mxu0 0.0
  %2347 = vmatpush1.xpose.msra.mxu0 0.0
  %2348 = vmatprep.subr.mxu0 0.0
  %2349 = vmatpush1.xpose.msra.mxu0 0.0
  %2350 = vmatprep.mubr.f32.mxu0 0.0
  %2351 = vmatmul.mubr.f32.gmra.mrb[0].mxu0 %v2258
  %v2352 = vpop.f32.mrb[0].mxu0
  %v2353 = vadd.f32 0.0, %v2352
  %v2354 = vpop.f32.mrb[0].mxu0
  %2355 = vmatprep.mubr.f32.mxu0 0.0
  %2356 = vmatmul.mubr.f32.gmra.mrb[0].mxu0 %v2260
  %v2357 = vpop.f32.mrb[0].mxu0
  %v2358 = vadd.f32 0.0, %v2357
  %v2359 = vpop.f32.mrb[0].mxu0
  %2360 = vmatprep.mubr.f32.mxu0 0.0
  %2361 = vmatmul.mubr.f32.gmra.mrb[0].mxu0 %v2262
  %v2362 = vpop.f32.mrb[0].mxu0
  %v2363 = vadd.f32 0.0, %v2362
  %v2364 = vpop.f32.mrb[0].mxu0
  %2365 = vmatprep.mubr.f32.mxu0 0.0
  %2366 = vmatmul.mubr.f32.gmra.mrb[0].mxu0 %v2264
  %v2367 = vpop.f32.mrb[0].mxu0
  %v2368 = vadd.f32 0.0, %v2367
  %v2369 = vpop.f32.mrb[0].mxu0
  %2370 = vmatprep.mubr.f32.mxu0 0.0
  %2371 = vmatmul.mubr.f32.gmra.mrb[0].mxu0 %v2266
  %v2372 = vpop.f32.mrb[0].mxu0
  %v2373 = vadd.f32 0.0, %v2372
  %v2374 = vpop.f32.mrb[0].mxu0
  %2375 = vmatprep.mubr.f32.mxu0 0.0
  %2376 = vmatmul.mubr.f32.gmra.mrb[0].mxu0 %v2268
  %v2377 = vpop.f32.mrb[0].mxu0
  %v2378 = vadd.f32 0.0, %v2377
  %v2379 = vpop.f32.mrb[0].mxu0
  %2380 = vmatprep.mubr.f32.mxu0 0.0
  %2381 = vmatmul.mubr.f32.gmra.mrb[0].mxu0 %v2270
  %v2382 = vpop.f32.mrb[0].mxu0
  %v2383 = vadd.f32 0.0, %v2382
  %v2384 = vpop.f32.mrb[0].mxu0
  %2385 = vmatprep.mubr.f32.mxu0 0.0
  %2386 = vmatmul.mubr.f32.gmra.mrb[0].mxu0 %v2272
  %v2387 = vpop.f32.mrb[0].mxu0
  %v2388 = vadd.f32 0.0, %v2387
  %v2389 = vpop.f32.mrb[0].mxu0
  %2390 = vdwg.mxu0
  %v2391 = vmul.f32 %v1941, %v1941
  %v2392 = vmul.f32 %v1942, %v1942
  %v2393 = vmul.f32 %v1943, %v1943
  %v2394 = vmul.f32 %v1944, %v1944
  %v2395 = vmul.f32 %v1945, %v1945
  %v2396 = vmul.f32 %v1946, %v1946
  %v2397 = vmul.f32 %v1947, %v1947
  %v2398 = vmul.f32 %v1948, %v1948
  %v2399 = vsel %vm360, %v2391, 0.0
  %v2400 = vsel %vm360, %v2392, 0.0
  %v2401 = vadd.f32 %v2399, %v2400
  %v2402 = vsel %vm360, %v2393, 0.0
  %v2403 = vadd.f32 %v2401, %v2402
  %v2404 = vsel %vm360, %v2394, 0.0
  %v2405 = vadd.f32 %v2403, %v2404
  %v2406 = vsel %vm360, %v2395, 0.0
  %v2407 = vadd.f32 %v2405, %v2406
  %v2408 = vsel %vm360, %v2396, 0.0
  %v2409 = vadd.f32 %v2407, %v2408
  %v2410 = vsel %vm360, %v2397, 0.0
  %v2411 = vadd.f32 %v2409, %v2410
  %v2412 = vsel %vm360, %v2398, 0.0
  %v2413 = vadd.f32 %v2411, %v2412
  %v2414 = vrot.slane %v2413, 4
  %v2415 = vadd.f32 %v2413, %v2414
  %v2416 = vrot.slane %v2415, 2
  %v2417 = vadd.f32 %v2415, %v2416
  %v2418 = vrot.slane %v2417, 1
  %v2419 = vadd.f32 %v2417, %v2418
  %v2420 = vmax.f32 %v2419, 1e-24
  %v2421 = vrsqrt.pop %v2420
  %v2422 = vmul.f32 %v2421, %v359
  %v2423 = vlaneseq
  %v2424 = vshrl.u32 %v2423, 7
  %v2425 = vsub.s32 4, %v2424
  %v2426 = vrot.slane %v2422, %v2425
  %v2427 = vmul.f32 %v1941, %v2426
  %v2428 = vmul.f32 %v1942, %v2426
  %v2429 = vmul.f32 %v1943, %v2426
  %v2430 = vmul.f32 %v1944, %v2426
  %v2431 = vmul.f32 %v1945, %v2426
  %v2432 = vmul.f32 %v1946, %v2426
  %v2433 = vmul.f32 %v1947, %v2426
  %v2434 = vmul.f32 %v1948, %v2426
  %v2435 = vsel %vm1993, %v2391, 0.0
  %v2436 = vsel %vm1993, %v2392, 0.0
  %v2437 = vadd.f32 %v2435, %v2436
  %v2438 = vsel %vm1993, %v2393, 0.0
  %v2439 = vadd.f32 %v2437, %v2438
  %v2440 = vsel %vm1993, %v2394, 0.0
  %v2441 = vadd.f32 %v2439, %v2440
  %v2442 = vsel %vm1993, %v2395, 0.0
  %v2443 = vadd.f32 %v2441, %v2442
  %v2444 = vsel %vm1993, %v2396, 0.0
  %v2445 = vadd.f32 %v2443, %v2444
  %v2446 = vsel %vm1993, %v2397, 0.0
  %v2447 = vadd.f32 %v2445, %v2446
  %v2448 = vsel %vm1993, %v2398, 0.0
  %v2449 = vadd.f32 %v2447, %v2448
  %v2450 = vrot.slane %v2449, 4
  %v2451 = vadd.f32 %v2449, %v2450
  %v2452 = vrot.slane %v2451, 2
  %v2453 = vadd.f32 %v2451, %v2452
  %v2454 = vrot.slane %v2453, 1
  %v2455 = vadd.f32 %v2453, %v2454
  %v2456 = vmax.f32 %v2455, 1e-24
  %v2457 = vrsqrt.pop %v2456
  %v2458 = vmul.f32 %v1941, %v2457
  %v2459 = vmul.f32 %v1942, %v2457
  %v2460 = vmul.f32 %v1943, %v2457
  %v2461 = vmul.f32 %v1944, %v2457
  %v2462 = vmul.f32 %v1945, %v2457
  %v2463 = vmul.f32 %v1946, %v2457
  %v2464 = vmul.f32 %v1947, %v2457
  %v2465 = vmul.f32 %v1948, %v2457
  %2466 = vxpose.xlu0.b32.start [1/16] %v2427, 128
  %2467 = vxpose.xlu0.b32.cont [2/16] %v2428, 128
  %2468 = vxpose.xlu0.b32.cont [3/16] %v2429, 128
  %2469 = vxpose.xlu0.b32.cont [4/16] %v2430, 128
  %2470 = vxpose.xlu0.b32.cont [5/16] %v2431, 128
  %2471 = vxpose.xlu0.b32.cont [6/16] %v2432, 128
  %2472 = vxpose.xlu0.b32.cont [7/16] %v2433, 128
  %2473 = vxpose.xlu0.b32.cont [8/16] %v2434, 128
  %2474 = vxpose.xlu0.b32.cont [9/16] 0.0, 128
  %2475 = vxpose.xlu0.b32.cont [10/16] 0.0, 128
  %2476 = vxpose.xlu0.b32.cont [11/16] 0.0, 128
  %2477 = vxpose.xlu0.b32.cont [12/16] 0.0, 128
  %2478 = vxpose.xlu0.b32.cont [13/16] 0.0, 128
  %2479 = vxpose.xlu0.b32.cont [14/16] 0.0, 128
  %2480 = vxpose.xlu0.b32.cont [15/16] 0.0, 128
  %2481 = vxpose.xlu0.b32.end [16/16] 0.0, 128
  %v2482 = vpop.trf.xlu0
  %v2483 = vpop.trf.xlu0
  %v2484 = vpop.trf.xlu0
  %v2485 = vpop.trf.xlu0
  %v2486 = vpop.trf.xlu0
  %v2487 = vpop.trf.xlu0
  %v2488 = vpop.trf.xlu0
  %v2489 = vpop.trf.xlu0
  %v2490 = vpop.trf.xlu0
  %v2491 = vpop.trf.xlu0
  %v2492 = vpop.trf.xlu0
  %v2493 = vpop.trf.xlu0
  %v2494 = vpop.trf.xlu0
  %v2495 = vpop.trf.xlu0
  %v2496 = vpop.trf.xlu0
  %v2497 = vpop.trf.xlu0
  %2506 = vrot.lane.b32.xlu0 %v2458, 96
  %v2507 = vpop.permute.xlu0 %2506
  %2508 = vrot.lane.b32.xlu0 %v2459, 96
  %v2509 = vpop.permute.xlu0 %2508
  %2510 = vrot.lane.b32.xlu0 %v2460, 96
  %v2511 = vpop.permute.xlu0 %2510
  %2512 = vrot.lane.b32.xlu0 %v2461, 96
  %v2513 = vpop.permute.xlu0 %2512
  %2514 = vrot.lane.b32.xlu0 %v2462, 96
  %v2515 = vpop.permute.xlu0 %2514
  %2516 = vrot.lane.b32.xlu0 %v2463, 96
  %v2517 = vpop.permute.xlu0 %2516
  %2518 = vrot.lane.b32.xlu0 %v2464, 96
  %v2519 = vpop.permute.xlu0 %2518
  %2520 = vrot.lane.b32.xlu0 %v2465, 96
  %v2521 = vpop.permute.xlu0 %2520
  %v2531 = vsel %vm95, %v2482, 0
  %v2534 = vsel %vm95, %v2483, 0
  %v2537 = vsel %vm95, %v2484, 0
  %v2540 = vsel %vm95, %v2485, 0
  %2542 = vmatprep.subr.mxu0 0.0
  %2543 = vmatpush1.msra.mxu0 %v2507
  %2544 = vmatprep.subr.mxu0 0.0
  %2545 = vmatpush1.msra.mxu0 %v2509
  %2546 = vmatprep.subr.mxu0 0.0
  %2547 = vmatpush1.msra.mxu0 %v2511
  %2548 = vmatprep.subr.mxu0 0.0
  %2549 = vmatpush1.msra.mxu0 %v2513
  %2550 = vmatprep.subr.mxu0 0.0
  %2551 = vmatpush1.msra.mxu0 %v2515
  %2552 = vmatprep.subr.mxu0 0.0
  %2553 = vmatpush1.msra.mxu0 %v2517
  %2554 = vmatprep.subr.mxu0 0.0
  %2555 = vmatpush1.msra.mxu0 %v2519
  %2556 = vmatprep.subr.mxu0 0.0
  %2557 = vmatpush1.msra.mxu0 %v2521
  %2558 = vmatprep.subr.mxu0 0.0
  %2559 = vmatpush1.msra.mxu0 0.0
  %2560 = vmatprep.subr.mxu0 0.0
  %2561 = vmatpush1.msra.mxu0 0.0
  %2562 = vmatprep.subr.mxu0 0.0
  %2563 = vmatpush1.msra.mxu0 0.0
  %2564 = vmatprep.subr.mxu0 0.0
  %2565 = vmatpush1.msra.mxu0 0.0
  %2566 = vmatprep.subr.mxu0 0.0
  %2567 = vmatpush1.msra.mxu0 0.0
  %2568 = vmatprep.subr.mxu0 0.0
  %2569 = vmatpush1.msra.mxu0 0.0
  %2570 = vmatprep.subr.mxu0 0.0
  %2571 = vmatpush1.msra.mxu0 0.0
  %2572 = vmatprep.subr.mxu0 0.0
  %2573 = vmatpush1.msra.mxu0 0.0
  %2574 = vmatprep.subr.mxu0 0.0
  %2575 = vmatpush1.msra.mxu0 0.0
  %2576 = vmatprep.subr.mxu0 0.0
  %2577 = vmatpush1.msra.mxu0 0.0
  %2578 = vmatprep.subr.mxu0 0.0
  %2579 = vmatpush1.msra.mxu0 0.0
  %2580 = vmatprep.subr.mxu0 0.0
  %2581 = vmatpush1.msra.mxu0 0.0
  %2582 = vmatprep.subr.mxu0 0.0
  %2583 = vmatpush1.msra.mxu0 0.0
  %2584 = vmatprep.subr.mxu0 0.0
  %2585 = vmatpush1.msra.mxu0 0.0
  %2586 = vmatprep.subr.mxu0 0.0
  %2587 = vmatpush1.msra.mxu0 0.0
  %2588 = vmatprep.subr.mxu0 0.0
  %2589 = vmatpush1.msra.mxu0 0.0
  %2590 = vmatprep.subr.mxu0 0.0
  %2591 = vmatpush1.msra.mxu0 0.0
  %2592 = vmatprep.subr.mxu0 0.0
  %2593 = vmatpush1.msra.mxu0 0.0
  %2594 = vmatprep.subr.mxu0 0.0
  %2595 = vmatpush1.msra.mxu0 0.0
  %2596 = vmatprep.subr.mxu0 0.0
  %2597 = vmatpush1.msra.mxu0 0.0
  %2598 = vmatprep.subr.mxu0 0.0
  %2599 = vmatpush1.msra.mxu0 0.0
  %2600 = vmatprep.subr.mxu0 0.0
  %2601 = vmatpush1.msra.mxu0 0.0
  %2602 = vmatprep.subr.mxu0 0.0
  %2603 = vmatpush1.msra.mxu0 0.0
  %2604 = vmatprep.subr.mxu0 0.0
  %2605 = vmatpush1.msra.mxu0 0.0
  %2606 = vmatprep.mubr.f32.mxu0 0.0
  %2607 = vmatmul.mubr.f32.gmra.mrb[0].mxu0 %v2531
  %v2608 = vpop.f32.mrb[0].mxu0
  %v2609 = vadd.f32 %v2025, %v2608
  %v2610 = vpop.f32.mrb[0].mxu0
  %2611 = vmatprep.mubr.f32.mxu0 0.0
  %2612 = vmatmul.mubr.f32.gmra.mrb[0].mxu0 %v2534
  %v2613 = vpop.f32.mrb[0].mxu0
  %v2614 = vadd.f32 %v2026, %v2613
  %v2615 = vpop.f32.mrb[0].mxu0
  %2616 = vmatprep.mubr.f32.mxu0 0.0
  %2617 = vmatmul.mubr.f32.gmra.mrb[0].mxu0 %v2537
  %v2618 = vpop.f32.mrb[0].mxu0
  %v2619 = vadd.f32 %v2027, %v2618
  %v2620 = vpop.f32.mrb[0].mxu0
  %2621 = vmatprep.mubr.f32.mxu0 0.0
  %2622 = vmatmul.mubr.f32.gmra.mrb[0].mxu0 %v2540
  %v2623 = vpop.f32.mrb[0].mxu0
  %v2624 = vadd.f32 %v2028, %v2623
  %v2625 = vpop.f32.mrb[0].mxu0
  %2626 = vdwg.mxu0
  %v2627 = vsel %vm360, %v2609, -inf
  %2628 = vmax.xlane.f32.xlu0 %v2627
  %v2629 = vpop.xlane.xlu0 %2628
  %v2630 = vsel %vm360, %v2614, -inf
  %2631 = vmax.xlane.f32.xlu0 %v2630
  %v2632 = vpop.xlane.xlu0 %2631
  %v2633 = vsel %vm360, %v2619, -inf
  %2634 = vmax.xlane.f32.xlu0 %v2633
  %v2635 = vpop.xlane.xlu0 %2634
  %v2636 = vsel %vm360, %v2624, -inf
  %2637 = vmax.xlane.f32.xlu0 %v2636
  %v2638 = vpop.xlane.xlu0 %2637
  %v2639 = vsub.f32 %v2609, %v2629
  %v2640 = vsub.f32 %v2614, %v2632
  %v2641 = vsub.f32 %v2619, %v2635
  %v2642 = vsub.f32 %v2624, %v2638
  %v2643 = vmul.f32 %v2639, 1.442695
  %v2644 = vpow.pop %v2643
  %v2645 = vmul.f32 %v2640, 1.442695
  %v2646 = vpow.pop %v2645
  %v2647 = vmul.f32 %v2641, 1.442695
  %v2648 = vpow.pop %v2647
  %v2649 = vmul.f32 %v2642, 1.442695
  %v2650 = vpow.pop %v2649
  %v2651 = vsel %vm360, %v2644, 0.0
  %2652 = vadd.xlane.f32.xlu0 %v2651
  %v2653 = vpop.xlane.xlu0 %2652
  %v2654 = vsel %vm360, %v2646, 0.0
  %2655 = vadd.xlane.f32.xlu0 %v2654
  %v2656 = vpop.xlane.xlu0 %2655
  %v2657 = vsel %vm360, %v2648, 0.0
  %2658 = vadd.xlane.f32.xlu0 %v2657
  %v2659 = vpop.xlane.xlu0 %2658
  %v2660 = vsel %vm360, %v2650, 0.0
  %2661 = vadd.xlane.f32.xlu0 %v2660
  %v2662 = vpop.xlane.xlu0 %2661
  %v2663 = vrcp.pop %v2653
  %v2664 = vrcp.pop %v2656
  %v2665 = vrcp.pop %v2659
  %v2666 = vrcp.pop %v2662
  %v2667 = vmul.f32 %v2644, %v2663
  %v2668 = vmul.f32 %v2646, %v2664
  %v2669 = vmul.f32 %v2648, %v2665
  %v2670 = vmul.f32 %v2650, %v2666
  %2679 = vrot.lane.b32.xlu0 %v1941, 64
  %v2680 = vpop.permute.xlu0 %2679
  %2681 = vrot.lane.b32.xlu0 %v1942, 64
  %v2682 = vpop.permute.xlu0 %2681
  %2683 = vrot.lane.b32.xlu0 %v1943, 64
  %v2684 = vpop.permute.xlu0 %2683
  %2685 = vrot.lane.b32.xlu0 %v1944, 64
  %v2686 = vpop.permute.xlu0 %2685
  %2687 = vrot.lane.b32.xlu0 %v1945, 64
  %v2688 = vpop.permute.xlu0 %2687
  %2689 = vrot.lane.b32.xlu0 %v1946, 64
  %v2690 = vpop.permute.xlu0 %2689
  %2691 = vrot.lane.b32.xlu0 %v1947, 64
  %v2692 = vpop.permute.xlu0 %2691
  %2693 = vrot.lane.b32.xlu0 %v1948, 64
  %v2694 = vpop.permute.xlu0 %2693
  %v2695 = vsel %vm360, %v2680, 0
  %v2697 = vsel %vm360, %v2682, 0
  %v2699 = vsel %vm360, %v2684, 0
  %v2701 = vsel %vm360, %v2686, 0
  %v2703 = vsel %vm360, %v2688, 0
  %v2705 = vsel %vm360, %v2690, 0
  %v2707 = vsel %vm360, %v2692, 0
  %v2709 = vsel %vm360, %v2694, 0
  %v2712 = vsel %vm360, %v2667, 0
  %v2715 = vsel %vm360, %v2668, 0
  %v2718 = vsel %vm360, %v2669, 0
  %v2721 = vsel %vm360, %v2670, 0
  %2723 = vmatprep.subr.mxu0 0.0
  %2724 = vmatpush1.xpose.msra.mxu0 %v2712
  %2725 = vmatprep.subr.mxu0 0.0
  %2726 = vmatpush1.xpose.msra.mxu0 %v2715
  %2727 = vmatprep.subr.mxu0 0.0
  %2728 = vmatpush1.xpose.msra.mxu0 %v2718
  %2729 = vmatprep.subr.mxu0 0.0
  %2730 = vmatpush1.xpose.msra.mxu0 %v2721
  %2731 = vmatprep.subr.mxu0 0.0
  %2732 = vmatpush1.xpose.msra.mxu0 0.0
  %2733 = vmatprep.subr.mxu0 0.0
  %2734 = vmatpush1.xpose.msra.mxu0 0.0
  %2735 = vmatprep.subr.mxu0 0.0
  %2736 = vmatpush1.xpose.msra.mxu0 0.0
  %2737 = vmatprep.subr.mxu0 0.0
  %2738 = vmatpush1.xpose.msra.mxu0 0.0
  %2739 = vmatprep.subr.mxu0 0.0
  %2740 = vmatpush1.xpose.msra.mxu0 0.0
  %2741 = vmatprep.subr.mxu0 0.0
  %2742 = vmatpush1.xpose.msra.mxu0 0.0
  %2743 = vmatprep.subr.mxu0 0.0
  %2744 = vmatpush1.xpose.msra.mxu0 0.0
  %2745 = vmatprep.subr.mxu0 0.0
  %2746 = vmatpush1.xpose.msra.mxu0 0.0
  %2747 = vmatprep.subr.mxu0 0.0
  %2748 = vmatpush1.xpose.msra.mxu0 0.0
  %2749 = vmatprep.subr.mxu0 0.0
  %2750 = vmatpush1.xpose.msra.mxu0 0.0
  %2751 = vmatprep.subr.mxu0 0.0
  %2752 = vmatpush1.xpose.msra.mxu0 0.0
  %2753 = vmatprep.subr.mxu0 0.0
  %2754 = vmatpush1.xpose.msra.mxu0 0.0
  %2755 = vmatprep.subr.mxu0 0.0
  %2756 = vmatpush1.xpose.msra.mxu0 0.0
  %2757 = vmatprep.subr.mxu0 0.0
  %2758 = vmatpush1.xpose.msra.mxu0 0.0
  %2759 = vmatprep.subr.mxu0 0.0
  %2760 = vmatpush1.xpose.msra.mxu0 0.0
  %2761 = vmatprep.subr.mxu0 0.0
  %2762 = vmatpush1.xpose.msra.mxu0 0.0
  %2763 = vmatprep.subr.mxu0 0.0
  %2764 = vmatpush1.xpose.msra.mxu0 0.0
  %2765 = vmatprep.subr.mxu0 0.0
  %2766 = vmatpush1.xpose.msra.mxu0 0.0
  %2767 = vmatprep.subr.mxu0 0.0
  %2768 = vmatpush1.xpose.msra.mxu0 0.0
  %2769 = vmatprep.subr.mxu0 0.0
  %2770 = vmatpush1.xpose.msra.mxu0 0.0
  %2771 = vmatprep.subr.mxu0 0.0
  %2772 = vmatpush1.xpose.msra.mxu0 0.0
  %2773 = vmatprep.subr.mxu0 0.0
  %2774 = vmatpush1.xpose.msra.mxu0 0.0
  %2775 = vmatprep.subr.mxu0 0.0
  %2776 = vmatpush1.xpose.msra.mxu0 0.0
  %2777 = vmatprep.subr.mxu0 0.0
  %2778 = vmatpush1.xpose.msra.mxu0 0.0
  %2779 = vmatprep.subr.mxu0 0.0
  %2780 = vmatpush1.xpose.msra.mxu0 0.0
  %2781 = vmatprep.subr.mxu0 0.0
  %2782 = vmatpush1.xpose.msra.mxu0 0.0
  %2783 = vmatprep.subr.mxu0 0.0
  %2784 = vmatpush1.xpose.msra.mxu0 0.0
  %2785 = vmatprep.subr.mxu0 0.0
  %2786 = vmatpush1.xpose.msra.mxu0 0.0
  %2787 = vmatprep.mubr.f32.mxu0 0.0
  %2788 = vmatmul.mubr.f32.gmra.mrb[0].mxu0 %v2695
  %v2789 = vpop.f32.mrb[0].mxu0
  %v2790 = vadd.f32 0.0, %v2789
  %v2791 = vpop.f32.mrb[0].mxu0
  %2792 = vmatprep.mubr.f32.mxu0 0.0
  %2793 = vmatmul.mubr.f32.gmra.mrb[0].mxu0 %v2697
  %v2794 = vpop.f32.mrb[0].mxu0
  %v2795 = vadd.f32 0.0, %v2794
  %v2796 = vpop.f32.mrb[0].mxu0
  %2797 = vmatprep.mubr.f32.mxu0 0.0
  %2798 = vmatmul.mubr.f32.gmra.mrb[0].mxu0 %v2699
  %v2799 = vpop.f32.mrb[0].mxu0
  %v2800 = vadd.f32 0.0, %v2799
  %v2801 = vpop.f32.mrb[0].mxu0
  %2802 = vmatprep.mubr.f32.mxu0 0.0
  %2803 = vmatmul.mubr.f32.gmra.mrb[0].mxu0 %v2701
  %v2804 = vpop.f32.mrb[0].mxu0
  %v2805 = vadd.f32 0.0, %v2804
  %v2806 = vpop.f32.mrb[0].mxu0
  %2807 = vmatprep.mubr.f32.mxu0 0.0
  %2808 = vmatmul.mubr.f32.gmra.mrb[0].mxu0 %v2703
  %v2809 = vpop.f32.mrb[0].mxu0
  %v2810 = vadd.f32 0.0, %v2809
  %v2811 = vpop.f32.mrb[0].mxu0
  %2812 = vmatprep.mubr.f32.mxu0 0.0
  %2813 = vmatmul.mubr.f32.gmra.mrb[0].mxu0 %v2705
  %v2814 = vpop.f32.mrb[0].mxu0
  %v2815 = vadd.f32 0.0, %v2814
  %v2816 = vpop.f32.mrb[0].mxu0
  %2817 = vmatprep.mubr.f32.mxu0 0.0
  %2818 = vmatmul.mubr.f32.gmra.mrb[0].mxu0 %v2707
  %v2819 = vpop.f32.mrb[0].mxu0
  %v2820 = vadd.f32 0.0, %v2819
  %v2821 = vpop.f32.mrb[0].mxu0
  %2822 = vmatprep.mubr.f32.mxu0 0.0
  %2823 = vmatmul.mubr.f32.gmra.mrb[0].mxu0 %v2709
  %v2824 = vpop.f32.mrb[0].mxu0
  %v2825 = vadd.f32 0.0, %v2824
  %v2826 = vpop.f32.mrb[0].mxu0
  %2827 = vdwg.mxu0
  %v2828 = vld [vmem:[%s6] sm:$0xff]
  %v2829 = vld [vmem:[%s6 + $0x8] sm:$0xff]
  %v2830 = vld [vmem:[%s6 + $0x10] sm:$0xff]
  %v2831 = vld [vmem:[%s6 + $0x18] sm:$0xff]
  %v2833 = vsel %vm360, %v2353, 0
  %v2836 = vsel %vm360, %v2358, 0
  %v2839 = vsel %vm360, %v2363, 0
  %v2842 = vsel %vm360, %v2368, 0
  %v2845 = vsel %vm360, %v2373, 0
  %v2848 = vsel %vm360, %v2378, 0
  %v2851 = vsel %vm360, %v2383, 0
  %v2854 = vsel %vm360, %v2388, 0
  %v2857 = vsel %vm360, %v2790, 0
  %v2860 = vsel %vm360, %v2795, 0
  %v2863 = vsel %vm360, %v2800, 0
  %v2866 = vsel %vm360, %v2805, 0
  %v2869 = vsel %vm360, %v2810, 0
  %v2872 = vsel %vm360, %v2815, 0
  %v2875 = vsel %vm360, %v2820, 0
  %v2878 = vsel %vm360, %v2825, 0
  %2880 = vmatprep.subr.mxu0 0.0
  %2881 = vmatpush1.msra.mxu0 %v2828
  %2882 = vmatprep.subr.mxu0 0.0
  %2883 = vmatpush1.msra.mxu0 %v2829
  %2884 = vmatprep.subr.mxu0 0.0
  %2885 = vmatpush1.msra.mxu0 %v2830
  %2886 = vmatprep.subr.mxu0 0.0
  %2887 = vmatpush1.msra.mxu0 %v2831
  %2888 = vmatprep.subr.mxu0 0.0
  %2889 = vmatpush1.msra.mxu0 0.0
  %2890 = vmatprep.subr.mxu0 0.0
  %2891 = vmatpush1.msra.mxu0 0.0
  %2892 = vmatprep.subr.mxu0 0.0
  %2893 = vmatpush1.msra.mxu0 0.0
  %2894 = vmatprep.subr.mxu0 0.0
  %2895 = vmatpush1.msra.mxu0 0.0
  %2896 = vmatprep.subr.mxu0 0.0
  %2897 = vmatpush1.msra.mxu0 0.0
  %2898 = vmatprep.subr.mxu0 0.0
  %2899 = vmatpush1.msra.mxu0 0.0
  %2900 = vmatprep.subr.mxu0 0.0
  %2901 = vmatpush1.msra.mxu0 0.0
  %2902 = vmatprep.subr.mxu0 0.0
  %2903 = vmatpush1.msra.mxu0 0.0
  %2904 = vmatprep.subr.mxu0 0.0
  %2905 = vmatpush1.msra.mxu0 0.0
  %2906 = vmatprep.subr.mxu0 0.0
  %2907 = vmatpush1.msra.mxu0 0.0
  %2908 = vmatprep.subr.mxu0 0.0
  %2909 = vmatpush1.msra.mxu0 0.0
  %2910 = vmatprep.subr.mxu0 0.0
  %2911 = vmatpush1.msra.mxu0 0.0
  %2912 = vmatprep.subr.mxu0 0.0
  %2913 = vmatpush1.msra.mxu0 0.0
  %2914 = vmatprep.subr.mxu0 0.0
  %2915 = vmatpush1.msra.mxu0 0.0
  %2916 = vmatprep.subr.mxu0 0.0
  %2917 = vmatpush1.msra.mxu0 0.0
  %2918 = vmatprep.subr.mxu0 0.0
  %2919 = vmatpush1.msra.mxu0 0.0
  %2920 = vmatprep.subr.mxu0 0.0
  %2921 = vmatpush1.msra.mxu0 0.0
  %2922 = vmatprep.subr.mxu0 0.0
  %2923 = vmatpush1.msra.mxu0 0.0
  %2924 = vmatprep.subr.mxu0 0.0
  %2925 = vmatpush1.msra.mxu0 0.0
  %2926 = vmatprep.subr.mxu0 0.0
  %2927 = vmatpush1.msra.mxu0 0.0
  %2928 = vmatprep.subr.mxu0 0.0
  %2929 = vmatpush1.msra.mxu0 0.0
  %2930 = vmatprep.subr.mxu0 0.0
  %2931 = vmatpush1.msra.mxu0 0.0
  %2932 = vmatprep.subr.mxu0 0.0
  %2933 = vmatpush1.msra.mxu0 0.0
  %2934 = vmatprep.subr.mxu0 0.0
  %2935 = vmatpush1.msra.mxu0 0.0
  %2936 = vmatprep.subr.mxu0 0.0
  %2937 = vmatpush1.msra.mxu0 0.0
  %2938 = vmatprep.subr.mxu0 0.0
  %2939 = vmatpush1.msra.mxu0 0.0
  %2940 = vmatprep.subr.mxu0 0.0
  %2941 = vmatpush1.msra.mxu0 0.0
  %2942 = vmatprep.subr.mxu0 0.0
  %2943 = vmatpush1.msra.mxu0 0.0
  %2944 = vmatprep.mubr.f32.mxu0 0.0
  %2945 = vmatmul.mubr.f32.gmra.mrb[0].mxu0 %v2833
  %v2946 = vpop.f32.mrb[0].mxu0
  %v2947 = vadd.f32 0.0, %v2946
  %v2948 = vpop.f32.mrb[0].mxu0
  %2949 = vmatprep.mubr.f32.mxu0 0.0
  %2950 = vmatmul.mubr.f32.gmra.mrb[0].mxu0 %v2836
  %v2951 = vpop.f32.mrb[0].mxu0
  %v2952 = vadd.f32 0.0, %v2951
  %v2953 = vpop.f32.mrb[0].mxu0
  %2954 = vmatprep.mubr.f32.mxu0 0.0
  %2955 = vmatmul.mubr.f32.gmra.mrb[0].mxu0 %v2839
  %v2956 = vpop.f32.mrb[0].mxu0
  %v2957 = vadd.f32 0.0, %v2956
  %v2958 = vpop.f32.mrb[0].mxu0
  %2959 = vmatprep.mubr.f32.mxu0 0.0
  %2960 = vmatmul.mubr.f32.gmra.mrb[0].mxu0 %v2842
  %v2961 = vpop.f32.mrb[0].mxu0
  %v2962 = vadd.f32 0.0, %v2961
  %v2963 = vpop.f32.mrb[0].mxu0
  %2964 = vmatprep.mubr.f32.mxu0 0.0
  %2965 = vmatmul.mubr.f32.gmra.mrb[0].mxu0 %v2845
  %v2966 = vpop.f32.mrb[0].mxu0
  %v2967 = vadd.f32 0.0, %v2966
  %v2968 = vpop.f32.mrb[0].mxu0
  %2969 = vmatprep.mubr.f32.mxu0 0.0
  %2970 = vmatmul.mubr.f32.gmra.mrb[0].mxu0 %v2848
  %v2971 = vpop.f32.mrb[0].mxu0
  %v2972 = vadd.f32 0.0, %v2971
  %v2973 = vpop.f32.mrb[0].mxu0
  %2974 = vmatprep.mubr.f32.mxu0 0.0
  %2975 = vmatmul.mubr.f32.gmra.mrb[0].mxu0 %v2851
  %v2976 = vpop.f32.mrb[0].mxu0
  %v2977 = vadd.f32 0.0, %v2976
  %v2978 = vpop.f32.mrb[0].mxu0
  %2979 = vmatprep.mubr.f32.mxu0 0.0
  %2980 = vmatmul.mubr.f32.gmra.mrb[0].mxu0 %v2854
  %v2981 = vpop.f32.mrb[0].mxu0
  %v2982 = vadd.f32 0.0, %v2981
  %v2983 = vpop.f32.mrb[0].mxu0
  %2984 = vmatprep.mubr.f32.mxu0 0.0
  %2985 = vmatmul.mubr.f32.gmra.mrb[0].mxu0 %v2857
  %v2986 = vpop.f32.mrb[0].mxu0
  %v2987 = vadd.f32 0.0, %v2986
  %v2988 = vpop.f32.mrb[0].mxu0
  %2989 = vmatprep.mubr.f32.mxu0 0.0
  %2990 = vmatmul.mubr.f32.gmra.mrb[0].mxu0 %v2860
  %v2991 = vpop.f32.mrb[0].mxu0
  %v2992 = vadd.f32 0.0, %v2991
  %v2993 = vpop.f32.mrb[0].mxu0
  %2994 = vmatprep.mubr.f32.mxu0 0.0
  %2995 = vmatmul.mubr.f32.gmra.mrb[0].mxu0 %v2863
  %v2996 = vpop.f32.mrb[0].mxu0
  %v2997 = vadd.f32 0.0, %v2996
  %v2998 = vpop.f32.mrb[0].mxu0
  %2999 = vmatprep.mubr.f32.mxu0 0.0
  %3000 = vmatmul.mubr.f32.gmra.mrb[0].mxu0 %v2866
  %v3001 = vpop.f32.mrb[0].mxu0
  %v3002 = vadd.f32 0.0, %v3001
  %v3003 = vpop.f32.mrb[0].mxu0
  %3004 = vmatprep.mubr.f32.mxu0 0.0
  %3005 = vmatmul.mubr.f32.gmra.mrb[0].mxu0 %v2869
  %v3006 = vpop.f32.mrb[0].mxu0
  %v3007 = vadd.f32 0.0, %v3006
  %v3008 = vpop.f32.mrb[0].mxu0
  %3009 = vmatprep.mubr.f32.mxu0 0.0
  %3010 = vmatmul.mubr.f32.gmra.mrb[0].mxu0 %v2872
  %v3011 = vpop.f32.mrb[0].mxu0
  %v3012 = vadd.f32 0.0, %v3011
  %v3013 = vpop.f32.mrb[0].mxu0
  %3014 = vmatprep.mubr.f32.mxu0 0.0
  %3015 = vmatmul.mubr.f32.gmra.mrb[0].mxu0 %v2875
  %v3016 = vpop.f32.mrb[0].mxu0
  %v3017 = vadd.f32 0.0, %v3016
  %v3018 = vpop.f32.mrb[0].mxu0
  %3019 = vmatprep.mubr.f32.mxu0 0.0
  %3020 = vmatmul.mubr.f32.gmra.mrb[0].mxu0 %v2878
  %v3021 = vpop.f32.mrb[0].mxu0
  %v3022 = vadd.f32 0.0, %v3021
  %v3023 = vpop.f32.mrb[0].mxu0
  %3024 = vdwg.mxu0
  %v3025 = vadd.f32 %v199, %v2947
  %v3026 = vadd.f32 %v204, %v2952
  %v3027 = vadd.f32 %v209, %v2957
  %v3028 = vadd.f32 %v214, %v2962
  %v3029 = vadd.f32 %v219, %v2967
  %v3030 = vadd.f32 %v224, %v2972
  %v3031 = vadd.f32 %v229, %v2977
  %v3032 = vadd.f32 %v234, %v2982
  %v3033 = vadd.f32 %v321, %v2987
  %v3034 = vadd.f32 %v326, %v2992
  %v3035 = vadd.f32 %v331, %v2997
  %v3036 = vadd.f32 %v336, %v3002
  %v3037 = vadd.f32 %v341, %v3007
  %v3038 = vadd.f32 %v346, %v3012
  %v3039 = vadd.f32 %v351, %v3017
  %v3040 = vadd.f32 %v356, %v3022
  %v3041 = vsel %vm360, %v3025, 0.0
  %3042 = vadd.xlane.f32.xlu0 %v3041
  %v3043 = vpop.xlane.xlu0 %3042
  %v3044 = vsel %vm360, %v3026, 0.0
  %3045 = vadd.xlane.f32.xlu0 %v3044
  %v3046 = vpop.xlane.xlu0 %3045
  %v3047 = vsel %vm360, %v3027, 0.0
  %3048 = vadd.xlane.f32.xlu0 %v3047
  %v3049 = vpop.xlane.xlu0 %3048
  %v3050 = vsel %vm360, %v3028, 0.0
  %3051 = vadd.xlane.f32.xlu0 %v3050
  %v3052 = vpop.xlane.xlu0 %3051
  %v3053 = vsel %vm360, %v3029, 0.0
  %3054 = vadd.xlane.f32.xlu0 %v3053
  %v3055 = vpop.xlane.xlu0 %3054
  %v3056 = vsel %vm360, %v3030, 0.0
  %3057 = vadd.xlane.f32.xlu0 %v3056
  %v3058 = vpop.xlane.xlu0 %3057
  %v3059 = vsel %vm360, %v3031, 0.0
  %3060 = vadd.xlane.f32.xlu0 %v3059
  %v3061 = vpop.xlane.xlu0 %3060
  %v3062 = vsel %vm360, %v3032, 0.0
  %3063 = vadd.xlane.f32.xlu0 %v3062
  %v3064 = vpop.xlane.xlu0 %3063
  %v3065 = vsel %vm360, %v3033, 0.0
  %3066 = vadd.xlane.f32.xlu0 %v3065
  %v3067 = vpop.xlane.xlu0 %3066
  %v3068 = vsel %vm360, %v3034, 0.0
  %3069 = vadd.xlane.f32.xlu0 %v3068
  %v3070 = vpop.xlane.xlu0 %3069
  %v3071 = vsel %vm360, %v3035, 0.0
  %3072 = vadd.xlane.f32.xlu0 %v3071
  %v3073 = vpop.xlane.xlu0 %3072
  %v3074 = vsel %vm360, %v3036, 0.0
  %3075 = vadd.xlane.f32.xlu0 %v3074
  %v3076 = vpop.xlane.xlu0 %3075
  %v3077 = vsel %vm360, %v3037, 0.0
  %3078 = vadd.xlane.f32.xlu0 %v3077
  %v3079 = vpop.xlane.xlu0 %3078
  %v3080 = vsel %vm360, %v3038, 0.0
  %3081 = vadd.xlane.f32.xlu0 %v3080
  %v3082 = vpop.xlane.xlu0 %3081
  %v3083 = vsel %vm360, %v3039, 0.0
  %3084 = vadd.xlane.f32.xlu0 %v3083
  %v3085 = vpop.xlane.xlu0 %3084
  %v3086 = vsel %vm360, %v3040, 0.0
  %3087 = vadd.xlane.f32.xlu0 %v3086
  %v3088 = vpop.xlane.xlu0 %3087
  %v3089 = vmul.f32 %v3043, %v409
  %v3090 = vmul.f32 %v3046, %v409
  %v3091 = vmul.f32 %v3049, %v409
  %v3092 = vmul.f32 %v3052, %v409
  %v3093 = vmul.f32 %v3055, %v409
  %v3094 = vmul.f32 %v3058, %v409
  %v3095 = vmul.f32 %v3061, %v409
  %v3096 = vmul.f32 %v3064, %v409
  %v3097 = vmul.f32 %v3067, %v409
  %v3098 = vmul.f32 %v3070, %v409
  %v3099 = vmul.f32 %v3073, %v409
  %v3100 = vmul.f32 %v3076, %v409
  %v3101 = vmul.f32 %v3079, %v409
  %v3102 = vmul.f32 %v3082, %v409
  %v3103 = vmul.f32 %v3085, %v409
  %v3104 = vmul.f32 %v3088, %v409
  %v3105 = vsub.f32 %v3025, %v3089
  %v3106 = vsub.f32 %v3026, %v3090
  %v3107 = vsub.f32 %v3027, %v3091
  %v3108 = vsub.f32 %v3028, %v3092
  %v3109 = vsub.f32 %v3029, %v3093
  %v3110 = vsub.f32 %v3030, %v3094
  %v3111 = vsub.f32 %v3031, %v3095
  %v3112 = vsub.f32 %v3032, %v3096
  %v3113 = vsub.f32 %v3033, %v3097
  %v3114 = vsub.f32 %v3034, %v3098
  %v3115 = vsub.f32 %v3035, %v3099
  %v3116 = vsub.f32 %v3036, %v3100
  %v3117 = vsub.f32 %v3037, %v3101
  %v3118 = vsub.f32 %v3038, %v3102
  %v3119 = vsub.f32 %v3039, %v3103
  %v3120 = vsub.f32 %v3040, %v3104
  %v3121 = vmul.f32 %v3105, %v3105
  %v3122 = vmul.f32 %v3106, %v3106
  %v3123 = vmul.f32 %v3107, %v3107
  %v3124 = vmul.f32 %v3108, %v3108
  %v3125 = vmul.f32 %v3109, %v3109
  %v3126 = vmul.f32 %v3110, %v3110
  %v3127 = vmul.f32 %v3111, %v3111
  %v3128 = vmul.f32 %v3112, %v3112
  %v3129 = vmul.f32 %v3113, %v3113
  %v3130 = vmul.f32 %v3114, %v3114
  %v3131 = vmul.f32 %v3115, %v3115
  %v3132 = vmul.f32 %v3116, %v3116
  %v3133 = vmul.f32 %v3117, %v3117
  %v3134 = vmul.f32 %v3118, %v3118
  %v3135 = vmul.f32 %v3119, %v3119
  %v3136 = vmul.f32 %v3120, %v3120
  %v3137 = vsel %vm360, %v3121, 0.0
  %3138 = vadd.xlane.f32.xlu0 %v3137
  %v3139 = vpop.xlane.xlu0 %3138
  %v3140 = vsel %vm360, %v3122, 0.0
  %3141 = vadd.xlane.f32.xlu0 %v3140
  %v3142 = vpop.xlane.xlu0 %3141
  %v3143 = vsel %vm360, %v3123, 0.0
  %3144 = vadd.xlane.f32.xlu0 %v3143
  %v3145 = vpop.xlane.xlu0 %3144
  %v3146 = vsel %vm360, %v3124, 0.0
  %3147 = vadd.xlane.f32.xlu0 %v3146
  %v3148 = vpop.xlane.xlu0 %3147
  %v3149 = vsel %vm360, %v3125, 0.0
  %3150 = vadd.xlane.f32.xlu0 %v3149
  %v3151 = vpop.xlane.xlu0 %3150
  %v3152 = vsel %vm360, %v3126, 0.0
  %3153 = vadd.xlane.f32.xlu0 %v3152
  %v3154 = vpop.xlane.xlu0 %3153
  %v3155 = vsel %vm360, %v3127, 0.0
  %3156 = vadd.xlane.f32.xlu0 %v3155
  %v3157 = vpop.xlane.xlu0 %3156
  %v3158 = vsel %vm360, %v3128, 0.0
  %3159 = vadd.xlane.f32.xlu0 %v3158
  %v3160 = vpop.xlane.xlu0 %3159
  %v3161 = vsel %vm360, %v3129, 0.0
  %3162 = vadd.xlane.f32.xlu0 %v3161
  %v3163 = vpop.xlane.xlu0 %3162
  %v3164 = vsel %vm360, %v3130, 0.0
  %3165 = vadd.xlane.f32.xlu0 %v3164
  %v3166 = vpop.xlane.xlu0 %3165
  %v3167 = vsel %vm360, %v3131, 0.0
  %3168 = vadd.xlane.f32.xlu0 %v3167
  %v3169 = vpop.xlane.xlu0 %3168
  %v3170 = vsel %vm360, %v3132, 0.0
  %3171 = vadd.xlane.f32.xlu0 %v3170
  %v3172 = vpop.xlane.xlu0 %3171
  %v3173 = vsel %vm360, %v3133, 0.0
  %3174 = vadd.xlane.f32.xlu0 %v3173
  %v3175 = vpop.xlane.xlu0 %3174
  %v3176 = vsel %vm360, %v3134, 0.0
  %3177 = vadd.xlane.f32.xlu0 %v3176
  %v3178 = vpop.xlane.xlu0 %3177
  %v3179 = vsel %vm360, %v3135, 0.0
  %3180 = vadd.xlane.f32.xlu0 %v3179
  %v3181 = vpop.xlane.xlu0 %3180
  %v3182 = vsel %vm360, %v3136, 0.0
  %3183 = vadd.xlane.f32.xlu0 %v3182
  %v3184 = vpop.xlane.xlu0 %3183
  %v3185 = vmul.f32 %v3139, %v409
  %v3186 = vmul.f32 %v3142, %v409
  %v3187 = vmul.f32 %v3145, %v409
  %v3188 = vmul.f32 %v3148, %v409
  %v3189 = vmul.f32 %v3151, %v409
  %v3190 = vmul.f32 %v3154, %v409
  %v3191 = vmul.f32 %v3157, %v409
  %v3192 = vmul.f32 %v3160, %v409
  %v3193 = vmul.f32 %v3163, %v409
  %v3194 = vmul.f32 %v3166, %v409
  %v3195 = vmul.f32 %v3169, %v409
  %v3196 = vmul.f32 %v3172, %v409
  %v3197 = vmul.f32 %v3175, %v409
  %v3198 = vmul.f32 %v3178, %v409
  %v3199 = vmul.f32 %v3181, %v409
  %v3200 = vmul.f32 %v3184, %v409
  %v3201 = vadd.f32 %v3185, 1e-05
  %v3202 = vadd.f32 %v3186, 1e-05
  %v3203 = vadd.f32 %v3187, 1e-05
  %v3204 = vadd.f32 %v3188, 1e-05
  %v3205 = vadd.f32 %v3189, 1e-05
  %v3206 = vadd.f32 %v3190, 1e-05
  %v3207 = vadd.f32 %v3191, 1e-05
  %v3208 = vadd.f32 %v3192, 1e-05
  %v3209 = vadd.f32 %v3193, 1e-05
  %v3210 = vadd.f32 %v3194, 1e-05
  %v3211 = vadd.f32 %v3195, 1e-05
  %v3212 = vadd.f32 %v3196, 1e-05
  %v3213 = vadd.f32 %v3197, 1e-05
  %v3214 = vadd.f32 %v3198, 1e-05
  %v3215 = vadd.f32 %v3199, 1e-05
  %v3216 = vadd.f32 %v3200, 1e-05
  %v3217 = vrsqrt.pop %v3201
  %v3218 = vrsqrt.pop %v3202
  %v3219 = vrsqrt.pop %v3203
  %v3220 = vrsqrt.pop %v3204
  %v3221 = vrsqrt.pop %v3205
  %v3222 = vrsqrt.pop %v3206
  %v3223 = vrsqrt.pop %v3207
  %v3224 = vrsqrt.pop %v3208
  %v3225 = vrsqrt.pop %v3209
  %v3226 = vrsqrt.pop %v3210
  %v3227 = vrsqrt.pop %v3211
  %v3228 = vrsqrt.pop %v3212
  %v3229 = vrsqrt.pop %v3213
  %v3230 = vrsqrt.pop %v3214
  %v3231 = vrsqrt.pop %v3215
  %v3232 = vrsqrt.pop %v3216
  %v3233 = vmul.f32 %v3105, %v3217
  %v3234 = vmul.f32 %v3106, %v3218
  %v3235 = vmul.f32 %v3107, %v3219
  %v3236 = vmul.f32 %v3108, %v3220
  %v3237 = vmul.f32 %v3109, %v3221
  %v3238 = vmul.f32 %v3110, %v3222
  %v3239 = vmul.f32 %v3111, %v3223
  %v3240 = vmul.f32 %v3112, %v3224
  %v3241 = vmul.f32 %v3113, %v3225
  %v3242 = vmul.f32 %v3114, %v3226
  %v3243 = vmul.f32 %v3115, %v3227
  %v3244 = vmul.f32 %v3116, %v3228
  %v3245 = vmul.f32 %v3117, %v3229
  %v3246 = vmul.f32 %v3118, %v3230
  %v3247 = vmul.f32 %v3119, %v3231
  %v3248 = vmul.f32 %v3120, %v3232
  %v3249 = vlaneseq
  %v3250 = vshrl.u32 %v3249, 7
  %v3251 = vsub.s32 2, %v3250
  %v3252 = vrot.slane %v359, %v3251
  %v3253 = vmul.f32 %v3233, %v3252
  %v3254 = vmul.f32 %v3234, %v3252
  %v3255 = vmul.f32 %v3235, %v3252
  %v3256 = vmul.f32 %v3236, %v3252
  %v3257 = vmul.f32 %v3237, %v3252
  %v3258 = vmul.f32 %v3238, %v3252
  %v3259 = vmul.f32 %v3239, %v3252
  %v3260 = vmul.f32 %v3240, %v3252
  %v3261 = vmul.f32 %v3241, %v3252
  %v3262 = vmul.f32 %v3242, %v3252
  %v3263 = vmul.f32 %v3243, %v3252
  %v3264 = vmul.f32 %v3244, %v3252
  %v3265 = vmul.f32 %v3245, %v3252
  %v3266 = vmul.f32 %v3246, %v3252
  %v3267 = vmul.f32 %v3247, %v3252
  %v3268 = vmul.f32 %v3248, %v3252
  %v3269 = vlaneseq
  %v3270 = vshrl.u32 %v3269, 7
  %v3271 = vsub.s32 3, %v3270
  %v3272 = vrot.slane %v359, %v3271
  %v3273 = vadd.f32 %v3253, %v3272
  %v3274 = vadd.f32 %v3254, %v3272
  %v3275 = vadd.f32 %v3255, %v3272
  %v3276 = vadd.f32 %v3256, %v3272
  %v3277 = vadd.f32 %v3257, %v3272
  %v3278 = vadd.f32 %v3258, %v3272
  %v3279 = vadd.f32 %v3259, %v3272
  %v3280 = vadd.f32 %v3260, %v3272
  %v3281 = vadd.f32 %v3261, %v3272
  %v3282 = vadd.f32 %v3262, %v3272
  %v3283 = vadd.f32 %v3263, %v3272
  %v3284 = vadd.f32 %v3264, %v3272
  %v3285 = vadd.f32 %v3265, %v3272
  %v3286 = vadd.f32 %v3266, %v3272
  %v3287 = vadd.f32 %v3267, %v3272
  %v3288 = vadd.f32 %v3268, %v3272
  %v3289 = vld [vmem:[%s7] sm:$0xff]
  %v3290 = vld [vmem:[%s7 + $0x8] sm:$0xff]
  %v3291 = vld [vmem:[%s7 + $0x10] sm:$0xff]
  %v3292 = vld [vmem:[%s7 + $0x18] sm:$0xff]
  %v3293 = vld [vmem:[%s7 + $0x20] sm:$0xff]
  %v3294 = vld [vmem:[%s7 + $0x28] sm:$0xff]
  %v3295 = vld [vmem:[%s7 + $0x30] sm:$0xff]
  %v3296 = vld [vmem:[%s7 + $0x38] sm:$0xff]
  %v3298 = vsel %vm360, %v3273, 0
  %v3301 = vsel %vm360, %v3274, 0
  %v3304 = vsel %vm360, %v3275, 0
  %v3307 = vsel %vm360, %v3276, 0
  %v3310 = vsel %vm360, %v3277, 0
  %v3313 = vsel %vm360, %v3278, 0
  %v3316 = vsel %vm360, %v3279, 0
  %v3319 = vsel %vm360, %v3280, 0
  %v3322 = vsel %vm360, %v3281, 0
  %v3325 = vsel %vm360, %v3282, 0
  %v3328 = vsel %vm360, %v3283, 0
  %v3331 = vsel %vm360, %v3284, 0
  %v3334 = vsel %vm360, %v3285, 0
  %v3337 = vsel %vm360, %v3286, 0
  %v3340 = vsel %vm360, %v3287, 0
  %v3343 = vsel %vm360, %v3288, 0
  %3345 = vmatprep.subr.mxu0 %v3290
  %3346 = vmatpush1.msra.mxu0 %v3289
  %3347 = vmatprep.subr.mxu0 %v3292
  %3348 = vmatpush1.msra.mxu0 %v3291
  %3349 = vmatprep.subr.mxu0 %v3294
  %3350 = vmatpush1.msra.mxu0 %v3293
  %3351 = vmatprep.subr.mxu0 %v3296
  %3352 = vmatpush1.msra.mxu0 %v3295
  %3353 = vmatprep.subr.mxu0 0.0
  %3354 = vmatpush1.msra.mxu0 0.0
  %3355 = vmatprep.subr.mxu0 0.0
  %3356 = vmatpush1.msra.mxu0 0.0
  %3357 = vmatprep.subr.mxu0 0.0
  %3358 = vmatpush1.msra.mxu0 0.0
  %3359 = vmatprep.subr.mxu0 0.0
  %3360 = vmatpush1.msra.mxu0 0.0
  %3361 = vmatprep.subr.mxu0 0.0
  %3362 = vmatpush1.msra.mxu0 0.0
  %3363 = vmatprep.subr.mxu0 0.0
  %3364 = vmatpush1.msra.mxu0 0.0
  %3365 = vmatprep.subr.mxu0 0.0
  %3366 = vmatpush1.msra.mxu0 0.0
  %3367 = vmatprep.subr.mxu0 0.0
  %3368 = vmatpush1.msra.mxu0 0.0
  %3369 = vmatprep.subr.mxu0 0.0
  %3370 = vmatpush1.msra.mxu0 0.0
  %3371 = vmatprep.subr.mxu0 0.0
  %3372 = vmatpush1.msra.mxu0 0.0
  %3373 = vmatprep.subr.mxu0 0.0
  %3374 = vmatpush1.msra.mxu0 0.0
  %3375 = vmatprep.subr.mxu0 0.0
  %3376 = vmatpush1.msra.mxu0 0.0
  %3377 = vmatprep.subr.mxu0 0.0
  %3378 = vmatpush1.msra.mxu0 0.0
  %3379 = vmatprep.subr.mxu0 0.0
  %3380 = vmatpush1.msra.mxu0 0.0
  %3381 = vmatprep.subr.mxu0 0.0
  %3382 = vmatpush1.msra.mxu0 0.0
  %3383 = vmatprep.subr.mxu0 0.0
  %3384 = vmatpush1.msra.mxu0 0.0
  %3385 = vmatprep.subr.mxu0 0.0
  %3386 = vmatpush1.msra.mxu0 0.0
  %3387 = vmatprep.subr.mxu0 0.0
  %3388 = vmatpush1.msra.mxu0 0.0
  %3389 = vmatprep.subr.mxu0 0.0
  %3390 = vmatpush1.msra.mxu0 0.0
  %3391 = vmatprep.subr.mxu0 0.0
  %3392 = vmatpush1.msra.mxu0 0.0
  %3393 = vmatprep.subr.mxu0 0.0
  %3394 = vmatpush1.msra.mxu0 0.0
  %3395 = vmatprep.subr.mxu0 0.0
  %3396 = vmatpush1.msra.mxu0 0.0
  %3397 = vmatprep.subr.mxu0 0.0
  %3398 = vmatpush1.msra.mxu0 0.0
  %3399 = vmatprep.subr.mxu0 0.0
  %3400 = vmatpush1.msra.mxu0 0.0
  %3401 = vmatprep.subr.mxu0 0.0
  %3402 = vmatpush1.msra.mxu0 0.0
  %3403 = vmatprep.subr.mxu0 0.0
  %3404 = vmatpush1.msra.mxu0 0.0
  %3405 = vmatprep.subr.mxu0 0.0
  %3406 = vmatpush1.msra.mxu0 0.0
  %3407 = vmatprep.subr.mxu0 0.0
  %3408 = vmatpush1.msra.mxu0 0.0
  %3409 = vmatprep.mubr.f32.mxu0 0.0
  %3410 = vmatmul.mubr.f32.gmra.mrb[0].mxu0 %v3298
  %v3411 = vpop.f32.mrb[0].mxu0
  %v3412 = vadd.f32 0.0, %v3411
  %v3413 = vpop.f32.mrb[0].mxu0
  %v3414 = vadd.f32 0.0, %v3413
  %3415 = vmatprep.mubr.f32.mxu0 0.0
  %3416 = vmatmul.mubr.f32.gmra.mrb[0].mxu0 %v3301
  %v3417 = vpop.f32.mrb[0].mxu0
  %v3418 = vadd.f32 0.0, %v3417
  %v3419 = vpop.f32.mrb[0].mxu0
  %v3420 = vadd.f32 0.0, %v3419
  %3421 = vmatprep.mubr.f32.mxu0 0.0
  %3422 = vmatmul.mubr.f32.gmra.mrb[0].mxu0 %v3304
  %v3423 = vpop.f32.mrb[0].mxu0
  %v3424 = vadd.f32 0.0, %v3423
  %v3425 = vpop.f32.mrb[0].mxu0
  %v3426 = vadd.f32 0.0, %v3425
  %3427 = vmatprep.mubr.f32.mxu0 0.0
  %3428 = vmatmul.mubr.f32.gmra.mrb[0].mxu0 %v3307
  %v3429 = vpop.f32.mrb[0].mxu0
  %v3430 = vadd.f32 0.0, %v3429
  %v3431 = vpop.f32.mrb[0].mxu0
  %v3432 = vadd.f32 0.0, %v3431
  %3433 = vmatprep.mubr.f32.mxu0 0.0
  %3434 = vmatmul.mubr.f32.gmra.mrb[0].mxu0 %v3310
  %v3435 = vpop.f32.mrb[0].mxu0
  %v3436 = vadd.f32 0.0, %v3435
  %v3437 = vpop.f32.mrb[0].mxu0
  %v3438 = vadd.f32 0.0, %v3437
  %3439 = vmatprep.mubr.f32.mxu0 0.0
  %3440 = vmatmul.mubr.f32.gmra.mrb[0].mxu0 %v3313
  %v3441 = vpop.f32.mrb[0].mxu0
  %v3442 = vadd.f32 0.0, %v3441
  %v3443 = vpop.f32.mrb[0].mxu0
  %v3444 = vadd.f32 0.0, %v3443
  %3445 = vmatprep.mubr.f32.mxu0 0.0
  %3446 = vmatmul.mubr.f32.gmra.mrb[0].mxu0 %v3316
  %v3447 = vpop.f32.mrb[0].mxu0
  %v3448 = vadd.f32 0.0, %v3447
  %v3449 = vpop.f32.mrb[0].mxu0
  %v3450 = vadd.f32 0.0, %v3449
  %3451 = vmatprep.mubr.f32.mxu0 0.0
  %3452 = vmatmul.mubr.f32.gmra.mrb[0].mxu0 %v3319
  %v3453 = vpop.f32.mrb[0].mxu0
  %v3454 = vadd.f32 0.0, %v3453
  %v3455 = vpop.f32.mrb[0].mxu0
  %v3456 = vadd.f32 0.0, %v3455
  %3457 = vmatprep.mubr.f32.mxu0 0.0
  %3458 = vmatmul.mubr.f32.gmra.mrb[0].mxu0 %v3322
  %v3459 = vpop.f32.mrb[0].mxu0
  %v3460 = vadd.f32 0.0, %v3459
  %v3461 = vpop.f32.mrb[0].mxu0
  %v3462 = vadd.f32 0.0, %v3461
  %3463 = vmatprep.mubr.f32.mxu0 0.0
  %3464 = vmatmul.mubr.f32.gmra.mrb[0].mxu0 %v3325
  %v3465 = vpop.f32.mrb[0].mxu0
  %v3466 = vadd.f32 0.0, %v3465
  %v3467 = vpop.f32.mrb[0].mxu0
  %v3468 = vadd.f32 0.0, %v3467
  %3469 = vmatprep.mubr.f32.mxu0 0.0
  %3470 = vmatmul.mubr.f32.gmra.mrb[0].mxu0 %v3328
  %v3471 = vpop.f32.mrb[0].mxu0
  %v3472 = vadd.f32 0.0, %v3471
  %v3473 = vpop.f32.mrb[0].mxu0
  %v3474 = vadd.f32 0.0, %v3473
  %3475 = vmatprep.mubr.f32.mxu0 0.0
  %3476 = vmatmul.mubr.f32.gmra.mrb[0].mxu0 %v3331
  %v3477 = vpop.f32.mrb[0].mxu0
  %v3478 = vadd.f32 0.0, %v3477
  %v3479 = vpop.f32.mrb[0].mxu0
  %v3480 = vadd.f32 0.0, %v3479
  %3481 = vmatprep.mubr.f32.mxu0 0.0
  %3482 = vmatmul.mubr.f32.gmra.mrb[0].mxu0 %v3334
  %v3483 = vpop.f32.mrb[0].mxu0
  %v3484 = vadd.f32 0.0, %v3483
  %v3485 = vpop.f32.mrb[0].mxu0
  %v3486 = vadd.f32 0.0, %v3485
  %3487 = vmatprep.mubr.f32.mxu0 0.0
  %3488 = vmatmul.mubr.f32.gmra.mrb[0].mxu0 %v3337
  %v3489 = vpop.f32.mrb[0].mxu0
  %v3490 = vadd.f32 0.0, %v3489
  %v3491 = vpop.f32.mrb[0].mxu0
  %v3492 = vadd.f32 0.0, %v3491
  %3493 = vmatprep.mubr.f32.mxu0 0.0
  %3494 = vmatmul.mubr.f32.gmra.mrb[0].mxu0 %v3340
  %v3495 = vpop.f32.mrb[0].mxu0
  %v3496 = vadd.f32 0.0, %v3495
  %v3497 = vpop.f32.mrb[0].mxu0
  %v3498 = vadd.f32 0.0, %v3497
  %3499 = vmatprep.mubr.f32.mxu0 0.0
  %3500 = vmatmul.mubr.f32.gmra.mrb[0].mxu0 %v3343
  %v3501 = vpop.f32.mrb[0].mxu0
  %v3502 = vadd.f32 0.0, %v3501
  %v3503 = vpop.f32.mrb[0].mxu0
  %v3504 = vadd.f32 0.0, %v3503
  %3505 = vdwg.mxu0
  %v3506 = vld [vmem:[%s8] sm:$0xff]
  %v3507 = vld [vmem:[%s8 + $0x8] sm:$0xff]
  %v3508 = vld [vmem:[%s8 + $0x10] sm:$0x1]
  %v3509 = vld [vmem:[%s8 + $0x18] sm:$0x1]
  %3510 = vst [vmem:[#allocation3 + $0x20] sm:$0xff] %v3412
  %3511 = vst [vmem:[#allocation3 + $0x28] sm:$0xff] %v3414
  %3512 = vst [vmem:[#allocation3 + $0x30] sm:$0xff] %v3418
  %3513 = vst [vmem:[#allocation3 + $0x38] sm:$0xff] %v3420
  %3514 = vst [vmem:[#allocation3 + $0x40] sm:$0xff] %v3424
  %3515 = vst [vmem:[#allocation3 + $0x48] sm:$0xff] %v3426
  %3516 = vst [vmem:[#allocation3 + $0x50] sm:$0xff] %v3430
  %3517 = vst [vmem:[#allocation3 + $0x58] sm:$0xff] %v3432
  %3518 = vst [vmem:[#allocation3 + $0x60] sm:$0xff] %v3436
  %3519 = vst [vmem:[#allocation3 + $0x68] sm:$0xff] %v3438
  %3520 = vst [vmem:[#allocation3 + $0x70] sm:$0xff] %v3442
  %3521 = vst [vmem:[#allocation3 + $0x78] sm:$0xff] %v3444
  %3522 = vst [vmem:[#allocation3 + $0x80] sm:$0xff] %v3448
  %3523 = vst [vmem:[#allocation3 + $0x88] sm:$0xff] %v3450
  %3524 = vst [vmem:[#allocation3 + $0x90] sm:$0xff] %v3454
  %3525 = vst [vmem:[#allocation3 + $0x98] sm:$0xff] %v3456
  %3526 = vst [vmem:[#allocation3 + $0xa0] sm:$0xff] %v3460
  %3527 = vst [vmem:[#allocation3 + $0xa8] sm:$0xff] %v3462
  %3528 = vst [vmem:[#allocation3 + $0xb0] sm:$0xff] %v3466
  %3529 = vst [vmem:[#allocation3 + $0xb8] sm:$0xff] %v3468
  %3530 = vst [vmem:[#allocation3 + $0xc0] sm:$0xff] %v3472
  %3531 = vst [vmem:[#allocation3 + $0xc8] sm:$0xff] %v3474
  %3532 = vst [vmem:[#allocation3 + $0xd0] sm:$0xff] %v3478
  %3533 = vst [vmem:[#allocation3 + $0xd8] sm:$0xff] %v3480
  %3534 = vst [vmem:[#allocation3 + $0xe0] sm:$0xff] %v3484
  %3535 = vst [vmem:[#allocation3 + $0xe8] sm:$0xff] %v3486
  %3536 = vst [vmem:[#allocation3 + $0xf0] sm:$0xff] %v3490
  %3537 = vst [vmem:[#allocation3 + $0xf8] sm:$0xff] %v3492
  %3538 = vst [vmem:[#allocation3 + $0x100] sm:$0xff] %v3496
  %3539 = vst [vmem:[#allocation3 + $0x108] sm:$0xff] %v3498
  %3540 = vst [vmem:[#allocation3 + $0x110] sm:$0xff] %v3502
  %3541 = vst [vmem:[#allocation3 + $0x118] sm:$0xff] %v3504
  %v3542 = vld [vmem:[#allocation3] sm:$0x80]
  %v3543 = vld [vmem:[#allocation3 + $0x8] sm:$0x80]
  %v3544 = vld [vmem:[#allocation3 + $0x10] sm:$0xff]
  %v3545 = vld [vmem:[#allocation3 + $0x18] sm:$0xff]
  %v3546 = vld [vmem:[#allocation3 + $0x20] sm:$0xff]
  %v3547 = vld [vmem:[#allocation3 + $0x28] sm:$0xff]
  %v3548 = vld [vmem:[#allocation3 + $0x30] sm:$0xff]
  %v3549 = vld [vmem:[#allocation3 + $0x38] sm:$0xff]
  %v3550 = vld [vmem:[#allocation3 + $0x40] sm:$0xff]
  %v3551 = vld [vmem:[#allocation3 + $0x48] sm:$0xff]
  %v3552 = vld [vmem:[#allocation3 + $0x50] sm:$0xff]
  %v3553 = vld [vmem:[#allocation3 + $0x58] sm:$0xff]
  %v3554 = vld [vmem:[#allocation3 + $0x60] sm:$0xff]
  %v3555 = vld [vmem:[#allocation3 + $0x68] sm:$0xff]
  %v3556 = vld [vmem:[#allocation3 + $0x70] sm:$0xff]
  %v3557 = vld [vmem:[#allocation3 + $0x78] sm:$0xff]
  %v3558 = vld [vmem:[#allocation3 + $0x80] sm:$0xff]
  %v3559 = vld [vmem:[#allocation3 + $0x88] sm:$0xff]
  %v3560 = vld [vmem:[#allocation3 + $0x90] sm:$0xff]
  %v3561 = vld [vmem:[#allocation3 + $0x98] sm:$0xff]
  %v3562 = vld [vmem:[#allocation3 + $0xa0] sm:$0xff]
  %v3563 = vld [vmem:[#allocation3 + $0xa8] sm:$0xff]
  %v3564 = vld [vmem:[#allocation3 + $0xb0] sm:$0xff]
  %v3565 = vld [vmem:[#allocation3 + $0xb8] sm:$0xff]
  %v3566 = vld [vmem:[#allocation3 + $0xc0] sm:$0xff]
  %v3567 = vld [vmem:[#allocation3 + $0xc8] sm:$0xff]
  %v3568 = vld [vmem:[#allocation3 + $0xd0] sm:$0xff]
  %v3569 = vld [vmem:[#allocation3 + $0xd8] sm:$0xff]
  %v3570 = vld [vmem:[#allocation3 + $0xe0] sm:$0xff]
  %v3571 = vld [vmem:[#allocation3 + $0xe8] sm:$0xff]
  %v3572 = vld [vmem:[#allocation3 + $0xf0] sm:$0xff]
  %v3573 = vld [vmem:[#allocation3 + $0xf8] sm:$0xff]
  %v3574 = vld [vmem:[#allocation3 + $0x100] sm:$0x7f]
  %v3575 = vld [vmem:[#allocation3 + $0x108] sm:$0x7f]
  %v3576 = vlaneseq
  %v3577 = vshrl.u32 %v3576, 7
  %v3578 = vsub.s32 0, %v3577
  %v3579 = vrot.slane %v3506, %v3578
  %v3580 = vlaneseq
  %v3581 = vshrl.u32 %v3580, 7
  %v3582 = vsub.s32 0, %v3581
  %v3583 = vrot.slane %v3507, %v3582
  %v3584 = vmul.f32 %v3542, %v3579
  %v3585 = vmul.f32 %v3543, %v3583
  %v3586 = vmul.f32 %v3544, %v3579
  %v3587 = vmul.f32 %v3545, %v3583
  %v3588 = vmul.f32 %v3546, %v3579
  %v3589 = vmul.f32 %v3547, %v3583
  %v3590 = vmul.f32 %v3548, %v3579
  %v3591 = vmul.f32 %v3549, %v3583
  %v3592 = vmul.f32 %v3550, %v3579
  %v3593 = vmul.f32 %v3551, %v3583
  %v3594 = vmul.f32 %v3552, %v3579
  %v3595 = vmul.f32 %v3553, %v3583
  %v3596 = vmul.f32 %v3554, %v3579
  %v3597 = vmul.f32 %v3555, %v3583
  %v3598 = vmul.f32 %v3556, %v3579
  %v3599 = vmul.f32 %v3557, %v3583
  %v3600 = vmul.f32 %v3558, %v3579
  %v3601 = vmul.f32 %v3559, %v3583
  %v3602 = vmul.f32 %v3560, %v3579
  %v3603 = vmul.f32 %v3561, %v3583
  %v3604 = vmul.f32 %v3562, %v3579
  %v3605 = vmul.f32 %v3563, %v3583
  %v3606 = vmul.f32 %v3564, %v3579
  %v3607 = vmul.f32 %v3565, %v3583
  %v3608 = vmul.f32 %v3566, %v3579
  %v3609 = vmul.f32 %v3567, %v3583
  %v3610 = vmul.f32 %v3568, %v3579
  %v3611 = vmul.f32 %v3569, %v3583
  %v3612 = vmul.f32 %v3570, %v3579
  %v3613 = vmul.f32 %v3571, %v3583
  %v3614 = vmul.f32 %v3572, %v3579
  %v3615 = vmul.f32 %v3573, %v3583
  %v3616 = vmul.f32 %v3574, %v3579
  %v3617 = vmul.f32 %v3575, %v3583
  %vm3618 = vcmask 1046528
  %v3619 = vrot.slane %v864, 1
  %v3620 = vrot.slane %v869, 1
  %v3621 = vsel %vm3618, %v3619, %v3620
  %v3622 = vrot.slane %v874, 1
  %v3623 = vsel %vm3618, %v3620, %v3622
  %v3624 = vrot.slane %v879, 1
  %v3625 = vsel %vm3618, %v3622, %v3624
  %v3626 = vrot.slane %v884, 1
  %v3627 = vsel %vm3618, %v3624, %v3626
  %v3628 = vrot.slane %v889, 1
  %v3629 = vsel %vm3618, %v3626, %v3628
  %v3630 = vrot.slane %v894, 1
  %v3631 = vsel %vm3618, %v3628, %v3630
  %v3632 = vrot.slane %v899, 1
  %v3633 = vsel %vm3618, %v3630, %v3632
  %v3634 = vrot.slane %v904, 1
  %v3635 = vsel %vm3618, %v3632, %v3634
  %v3636 = vrot.slane %v909, 1
  %v3637 = vsel %vm3618, %v3634, %v3636
  %v3638 = vrot.slane %v914, 1
  %v3639 = vsel %vm3618, %v3636, %v3638
  %v3640 = vrot.slane %v919, 1
  %v3641 = vsel %vm3618, %v3638, %v3640
  %v3642 = vrot.slane %v924, 1
  %v3643 = vsel %vm3618, %v3640, %v3642
  %v3644 = vrot.slane %v929, 1
  %v3645 = vsel %vm3618, %v3642, %v3644
  %v3646 = vrot.slane %v934, 1
  %v3647 = vsel %vm3618, %v3644, %v3646
  %v3648 = vrot.slane %v939, 1
  %v3649 = vsel %vm3618, %v3646, %v3648
  %v3667 = vmul.f32 %v3584, %v3619
  %v3668 = vmul.f32 %v3585, %v3619
  %v3669 = vmul.f32 %v3586, %v3621
  %v3670 = vmul.f32 %v3587, %v3621
  %v3671 = vmul.f32 %v3588, %v3623
  %v3672 = vmul.f32 %v3589, %v3623
  %v3673 = vmul.f32 %v3590, %v3625
  %v3674 = vmul.f32 %v3591, %v3625
  %v3675 = vmul.f32 %v3592, %v3627
  %v3676 = vmul.f32 %v3593, %v3627
  %v3677 = vmul.f32 %v3594, %v3629
  %v3678 = vmul.f32 %v3595, %v3629
  %v3679 = vmul.f32 %v3596, %v3631
  %v3680 = vmul.f32 %v3597, %v3631
  %v3681 = vmul.f32 %v3598, %v3633
  %v3682 = vmul.f32 %v3599, %v3633
  %v3683 = vmul.f32 %v3600, %v3635
  %v3684 = vmul.f32 %v3601, %v3635
  %v3685 = vmul.f32 %v3602, %v3637
  %v3686 = vmul.f32 %v3603, %v3637
  %v3687 = vmul.f32 %v3604, %v3639
  %v3688 = vmul.f32 %v3605, %v3639
  %v3689 = vmul.f32 %v3606, %v3641
  %v3690 = vmul.f32 %v3607, %v3641
  %v3691 = vmul.f32 %v3608, %v3643
  %v3692 = vmul.f32 %v3609, %v3643
  %v3693 = vmul.f32 %v3610, %v3645
  %v3694 = vmul.f32 %v3611, %v3645
  %v3695 = vmul.f32 %v3612, %v3647
  %v3696 = vmul.f32 %v3613, %v3647
  %v3697 = vmul.f32 %v3614, %v3649
  %v3698 = vmul.f32 %v3615, %v3649
  %v3699 = vmul.f32 %v3616, %v3648
  %v3700 = vmul.f32 %v3617, %v3648
  %v3701 = vadd.f32 %v3667, 0.0
  %v3702 = vadd.f32 %v3668, 0.0
  %v3703 = vadd.f32 %v3669, 0.0
  %v3704 = vadd.f32 %v3670, 0.0
  %v3705 = vadd.f32 %v3671, 0.0
  %v3706 = vadd.f32 %v3672, 0.0
  %v3707 = vadd.f32 %v3673, 0.0
  %v3708 = vadd.f32 %v3674, 0.0
  %v3709 = vadd.f32 %v3675, 0.0
  %v3710 = vadd.f32 %v3676, 0.0
  %v3711 = vadd.f32 %v3677, 0.0
  %v3712 = vadd.f32 %v3678, 0.0
  %v3713 = vadd.f32 %v3679, 0.0
  %v3714 = vadd.f32 %v3680, 0.0
  %v3715 = vadd.f32 %v3681, 0.0
  %v3716 = vadd.f32 %v3682, 0.0
  %v3717 = vadd.f32 %v3683, 0.0
  %v3718 = vadd.f32 %v3684, 0.0
  %v3719 = vadd.f32 %v3685, 0.0
  %v3720 = vadd.f32 %v3686, 0.0
  %v3721 = vadd.f32 %v3687, 0.0
  %v3722 = vadd.f32 %v3688, 0.0
  %v3723 = vadd.f32 %v3689, 0.0
  %v3724 = vadd.f32 %v3690, 0.0
  %v3725 = vadd.f32 %v3691, 0.0
  %v3726 = vadd.f32 %v3692, 0.0
  %v3727 = vadd.f32 %v3693, 0.0
  %v3728 = vadd.f32 %v3694, 0.0
  %v3729 = vadd.f32 %v3695, 0.0
  %v3730 = vadd.f32 %v3696, 0.0
  %v3731 = vadd.f32 %v3697, 0.0
  %v3732 = vadd.f32 %v3698, 0.0
  %v3733 = vadd.f32 %v3699, 0.0
  %v3734 = vadd.f32 %v3700, 0.0
  %v3735 = vld [vmem:[#allocation3 + $0x100] sm:$0xff]
  %v3736 = vld [vmem:[#allocation3 + $0x108] sm:$0xff]
  %v3737 = vlaneseq
  %v3738 = vshrl.u32 %v3737, 7
  %v3739 = vsub.s32 1, %v3738
  %v3740 = vrot.slane %v3506, %v3739
  %v3741 = vlaneseq
  %v3742 = vshrl.u32 %v3741, 7
  %v3743 = vsub.s32 1, %v3742
  %v3744 = vrot.slane %v3507, %v3743
  %v3745 = vmul.f32 %v3544, %v3740
  %v3746 = vmul.f32 %v3545, %v3744
  %v3747 = vmul.f32 %v3546, %v3740
  %v3748 = vmul.f32 %v3547, %v3744
  %v3749 = vmul.f32 %v3548, %v3740
  %v3750 = vmul.f32 %v3549, %v3744
  %v3751 = vmul.f32 %v3550, %v3740
  %v3752 = vmul.f32 %v3551, %v3744
  %v3753 = vmul.f32 %v3552, %v3740
  %v3754 = vmul.f32 %v3553, %v3744
  %v3755 = vmul.f32 %v3554, %v3740
  %v3756 = vmul.f32 %v3555, %v3744
  %v3757 = vmul.f32 %v3556, %v3740
  %v3758 = vmul.f32 %v3557, %v3744
  %v3759 = vmul.f32 %v3558, %v3740
  %v3760 = vmul.f32 %v3559, %v3744
  %v3761 = vmul.f32 %v3560, %v3740
  %v3762 = vmul.f32 %v3561, %v3744
  %v3763 = vmul.f32 %v3562, %v3740
  %v3764 = vmul.f32 %v3563, %v3744
  %v3765 = vmul.f32 %v3564, %v3740
  %v3766 = vmul.f32 %v3565, %v3744
  %v3767 = vmul.f32 %v3566, %v3740
  %v3768 = vmul.f32 %v3567, %v3744
  %v3769 = vmul.f32 %v3568, %v3740
  %v3770 = vmul.f32 %v3569, %v3744
  %v3771 = vmul.f32 %v3570, %v3740
  %v3772 = vmul.f32 %v3571, %v3744
  %v3773 = vmul.f32 %v3572, %v3740
  %v3774 = vmul.f32 %v3573, %v3744
  %v3775 = vmul.f32 %v3735, %v3740
  %v3776 = vmul.f32 %v3736, %v3744
  %v3777 = vmul.f32 %v3745, %v1011
  %v3778 = vmul.f32 %v3746, %v1011
  %v3779 = vmul.f32 %v3747, %v1015
  %v3780 = vmul.f32 %v3748, %v1015
  %v3781 = vmul.f32 %v3749, %v1019
  %v3782 = vmul.f32 %v3750, %v1019
  %v3783 = vmul.f32 %v3751, %v1023
  %v3784 = vmul.f32 %v3752, %v1023
  %v3785 = vmul.f32 %v3753, %v1027
  %v3786 = vmul.f32 %v3754, %v1027
  %v3787 = vmul.f32 %v3755, %v1031
  %v3788 = vmul.f32 %v3756, %v1031
  %v3789 = vmul.f32 %v3757, %v1035
  %v3790 = vmul.f32 %v3758, %v1035
  %v3791 = vmul.f32 %v3759, %v1039
  %v3792 = vmul.f32 %v3760, %v1039
  %v3793 = vmul.f32 %v3761, %v1043
  %v3794 = vmul.f32 %v3762, %v1043
  %v3795 = vmul.f32 %v3763, %v1047
  %v3796 = vmul.f32 %v3764, %v1047
  %v3797 = vmul.f32 %v3765, %v1051
  %v3798 = vmul.f32 %v3766, %v1051
  %v3799 = vmul.f32 %v3767, %v1055
  %v3800 = vmul.f32 %v3768, %v1055
  %v3801 = vmul.f32 %v3769, %v1059
  %v3802 = vmul.f32 %v3770, %v1059
  %v3803 = vmul.f32 %v3771, %v1063
  %v3804 = vmul.f32 %v3772, %v1063
  %v3805 = vmul.f32 %v3773, %v1067
  %v3806 = vmul.f32 %v3774, %v1067
  %v3807 = vmul.f32 %v3775, %v1071
  %v3808 = vmul.f32 %v3776, %v1071
  %v3841 = vrot.slane %v3777, 1
  %v3842 = vrot.slane %v3778, 1
  %v3843 = vrot.slane %v3779, 1
  %v3844 = vsel %vm3618, %v3841, %v3843
  %v3845 = vrot.slane %v3780, 1
  %v3846 = vsel %vm3618, %v3842, %v3845
  %v3847 = vrot.slane %v3781, 1
  %v3848 = vsel %vm3618, %v3843, %v3847
  %v3849 = vrot.slane %v3782, 1
  %v3850 = vsel %vm3618, %v3845, %v3849
  %v3851 = vrot.slane %v3783, 1
  %v3852 = vsel %vm3618, %v3847, %v3851
  %v3853 = vrot.slane %v3784, 1
  %v3854 = vsel %vm3618, %v3849, %v3853
  %v3855 = vrot.slane %v3785, 1
  %v3856 = vsel %vm3618, %v3851, %v3855
  %v3857 = vrot.slane %v3786, 1
  %v3858 = vsel %vm3618, %v3853, %v3857
  %v3859 = vrot.slane %v3787, 1
  %v3860 = vsel %vm3618, %v3855, %v3859
  %v3861 = vrot.slane %v3788, 1
  %v3862 = vsel %vm3618, %v3857, %v3861
  %v3863 = vrot.slane %v3789, 1
  %v3864 = vsel %vm3618, %v3859, %v3863
  %v3865 = vrot.slane %v3790, 1
  %v3866 = vsel %vm3618, %v3861, %v3865
  %v3867 = vrot.slane %v3791, 1
  %v3868 = vsel %vm3618, %v3863, %v3867
  %v3869 = vrot.slane %v3792, 1
  %v3870 = vsel %vm3618, %v3865, %v3869
  %v3871 = vrot.slane %v3793, 1
  %v3872 = vsel %vm3618, %v3867, %v3871
  %v3873 = vrot.slane %v3794, 1
  %v3874 = vsel %vm3618, %v3869, %v3873
  %v3875 = vrot.slane %v3795, 1
  %v3876 = vsel %vm3618, %v3871, %v3875
  %v3877 = vrot.slane %v3796, 1
  %v3878 = vsel %vm3618, %v3873, %v3877
  %v3879 = vrot.slane %v3797, 1
  %v3880 = vsel %vm3618, %v3875, %v3879
  %v3881 = vrot.slane %v3798, 1
  %v3882 = vsel %vm3618, %v3877, %v3881
  %v3883 = vrot.slane %v3799, 1
  %v3884 = vsel %vm3618, %v3879, %v3883
  %v3885 = vrot.slane %v3800, 1
  %v3886 = vsel %vm3618, %v3881, %v3885
  %v3887 = vrot.slane %v3801, 1
  %v3888 = vsel %vm3618, %v3883, %v3887
  %v3889 = vrot.slane %v3802, 1
  %v3890 = vsel %vm3618, %v3885, %v3889
  %v3891 = vrot.slane %v3803, 1
  %v3892 = vsel %vm3618, %v3887, %v3891
  %v3893 = vrot.slane %v3804, 1
  %v3894 = vsel %vm3618, %v3889, %v3893
  %v3895 = vrot.slane %v3805, 1
  %v3896 = vsel %vm3618, %v3891, %v3895
  %v3897 = vrot.slane %v3806, 1
  %v3898 = vsel %vm3618, %v3893, %v3897
  %v3899 = vrot.slane %v3807, 1
  %v3900 = vsel %vm3618, %v3895, %v3899
  %v3901 = vrot.slane %v3808, 1
  %v3902 = vsel %vm3618, %v3897, %v3901
  %v3937 = vadd.f32 %v3701, %v3841
  %v3938 = vadd.f32 %v3702, %v3842
  %v3939 = vadd.f32 %v3703, %v3844
  %v3940 = vadd.f32 %v3704, %v3846
  %v3941 = vadd.f32 %v3705, %v3848
  %v3942 = vadd.f32 %v3706, %v3850
  %v3943 = vadd.f32 %v3707, %v3852
  %v3944 = vadd.f32 %v3708, %v3854
  %v3945 = vadd.f32 %v3709, %v3856
  %v3946 = vadd.f32 %v3710, %v3858
  %v3947 = vadd.f32 %v3711, %v3860
  %v3948 = vadd.f32 %v3712, %v3862
  %v3949 = vadd.f32 %v3713, %v3864
  %v3950 = vadd.f32 %v3714, %v3866
  %v3951 = vadd.f32 %v3715, %v3868
  %v3952 = vadd.f32 %v3716, %v3870
  %v3953 = vadd.f32 %v3717, %v3872
  %v3954 = vadd.f32 %v3718, %v3874
  %v3955 = vadd.f32 %v3719, %v3876
  %v3956 = vadd.f32 %v3720, %v3878
  %v3957 = vadd.f32 %v3721, %v3880
  %v3958 = vadd.f32 %v3722, %v3882
  %v3959 = vadd.f32 %v3723, %v3884
  %v3960 = vadd.f32 %v3724, %v3886
  %v3961 = vadd.f32 %v3725, %v3888
  %v3962 = vadd.f32 %v3726, %v3890
  %v3963 = vadd.f32 %v3727, %v3892
  %v3964 = vadd.f32 %v3728, %v3894
  %v3965 = vadd.f32 %v3729, %v3896
  %v3966 = vadd.f32 %v3730, %v3898
  %v3967 = vadd.f32 %v3731, %v3900
  %v3968 = vadd.f32 %v3732, %v3902
  %v3969 = vadd.f32 %v3733, %v3899
  %v3970 = vadd.f32 %v3734, %v3901
  %v3971 = vld [vmem:[#allocation3 + $0x10] sm:$0xfe]
  %v3972 = vld [vmem:[#allocation3 + $0x18] sm:$0xfe]
  %v3973 = vld [vmem:[#allocation3 + $0x110] sm:$0x1]
  %v3974 = vld [vmem:[#allocation3 + $0x118] sm:$0x1]
  %v3975 = vlaneseq
  %v3976 = vshrl.u32 %v3975, 7
  %v3977 = vsub.s32 2, %v3976
  %v3978 = vrot.slane %v3506, %v3977
  %v3979 = vlaneseq
  %v3980 = vshrl.u32 %v3979, 7
  %v3981 = vsub.s32 2, %v3980
  %v3982 = vrot.slane %v3507, %v3981
  %v3983 = vmul.f32 %v3971, %v3978
  %v3984 = vmul.f32 %v3972, %v3982
  %v3985 = vmul.f32 %v3546, %v3978
  %v3986 = vmul.f32 %v3547, %v3982
  %v3987 = vmul.f32 %v3548, %v3978
  %v3988 = vmul.f32 %v3549, %v3982
  %v3989 = vmul.f32 %v3550, %v3978
  %v3990 = vmul.f32 %v3551, %v3982
  %v3991 = vmul.f32 %v3552, %v3978
  %v3992 = vmul.f32 %v3553, %v3982
  %v3993 = vmul.f32 %v3554, %v3978
  %v3994 = vmul.f32 %v3555, %v3982
  %v3995 = vmul.f32 %v3556, %v3978
  %v3996 = vmul.f32 %v3557, %v3982
  %v3997 = vmul.f32 %v3558, %v3978
  %v3998 = vmul.f32 %v3559, %v3982
  %v3999 = vmul.f32 %v3560, %v3978
  %v4000 = vmul.f32 %v3561, %v3982
  %v4001 = vmul.f32 %v3562, %v3978
  %v4002 = vmul.f32 %v3563, %v3982
  %v4003 = vmul.f32 %v3564, %v3978
  %v4004 = vmul.f32 %v3565, %v3982
  %v4005 = vmul.f32 %v3566, %v3978
  %v4006 = vmul.f32 %v3567, %v3982
  %v4007 = vmul.f32 %v3568, %v3978
  %v4008 = vmul.f32 %v3569, %v3982
  %v4009 = vmul.f32 %v3570, %v3978
  %v4010 = vmul.f32 %v3571, %v3982
  %v4011 = vmul.f32 %v3572, %v3978
  %v4012 = vmul.f32 %v3573, %v3982
  %v4013 = vmul.f32 %v3735, %v3978
  %v4014 = vmul.f32 %v3736, %v3982
  %v4015 = vmul.f32 %v3973, %v3978
  %v4016 = vmul.f32 %v3974, %v3982
  %vm4017 = vcmask 1040384
  %v4018 = vrot.slane %v1143, 7
  %v4019 = vrot.slane %v1147, 7
  %v4020 = vsel %vm4017, %v4018, %v4019
  %v4021 = vrot.slane %v1151, 7
  %v4022 = vsel %vm4017, %v4019, %v4021
  %v4023 = vrot.slane %v1155, 7
  %v4024 = vsel %vm4017, %v4021, %v4023
  %v4025 = vrot.slane %v1159, 7
  %v4026 = vsel %vm4017, %v4023, %v4025
  %v4027 = vrot.slane %v1163, 7
  %v4028 = vsel %vm4017, %v4025, %v4027
  %v4029 = vrot.slane %v1167, 7
  %v4030 = vsel %vm4017, %v4027, %v4029
  %v4031 = vrot.slane %v1171, 7
  %v4032 = vsel %vm4017, %v4029, %v4031
  %v4033 = vrot.slane %v1175, 7
  %v4034 = vsel %vm4017, %v4031, %v4033
  %v4035 = vrot.slane %v1179, 7
  %v4036 = vsel %vm4017, %v4033, %v4035
  %v4037 = vrot.slane %v1183, 7
  %v4038 = vsel %vm4017, %v4035, %v4037
  %v4039 = vrot.slane %v1187, 7
  %v4040 = vsel %vm4017, %v4037, %v4039
  %v4041 = vrot.slane %v1191, 7
  %v4042 = vsel %vm4017, %v4039, %v4041
  %v4043 = vrot.slane %v1195, 7
  %v4044 = vsel %vm4017, %v4041, %v4043
  %v4045 = vrot.slane %v1199, 7
  %v4046 = vsel %vm4017, %v4043, %v4045
  %v4047 = vrot.slane %v1203, 7
  %v4048 = vsel %vm4017, %v4045, %v4047
  %v4066 = vmul.f32 %v3983, %v4018
  %v4067 = vmul.f32 %v3984, %v4018
  %v4068 = vmul.f32 %v3985, %v4020
  %v4069 = vmul.f32 %v3986, %v4020
  %v4070 = vmul.f32 %v3987, %v4022
  %v4071 = vmul.f32 %v3988, %v4022
  %v4072 = vmul.f32 %v3989, %v4024
  %v4073 = vmul.f32 %v3990, %v4024
  %v4074 = vmul.f32 %v3991, %v4026
  %v4075 = vmul.f32 %v3992, %v4026
  %v4076 = vmul.f32 %v3993, %v4028
  %v4077 = vmul.f32 %v3994, %v4028
  %v4078 = vmul.f32 %v3995, %v4030
  %v4079 = vmul.f32 %v3996, %v4030
  %v4080 = vmul.f32 %v3997, %v4032
  %v4081 = vmul.f32 %v3998, %v4032
  %v4082 = vmul.f32 %v3999, %v4034
  %v4083 = vmul.f32 %v4000, %v4034
  %v4084 = vmul.f32 %v4001, %v4036
  %v4085 = vmul.f32 %v4002, %v4036
  %v4086 = vmul.f32 %v4003, %v4038
  %v4087 = vmul.f32 %v4004, %v4038
  %v4088 = vmul.f32 %v4005, %v4040
  %v4089 = vmul.f32 %v4006, %v4040
  %v4090 = vmul.f32 %v4007, %v4042
  %v4091 = vmul.f32 %v4008, %v4042
  %v4092 = vmul.f32 %v4009, %v4044
  %v4093 = vmul.f32 %v4010, %v4044
  %v4094 = vmul.f32 %v4011, %v4046
  %v4095 = vmul.f32 %v4012, %v4046
  %v4096 = vmul.f32 %v4013, %v4048
  %v4097 = vmul.f32 %v4014, %v4048
  %v4098 = vmul.f32 %v4015, %v4047
  %v4099 = vmul.f32 %v4016, %v4047
  %vm4134 = vcmask 1045504
  %v4135 = vrot.slane %v4066, 2
  %v4136 = vrot.slane %v4067, 2
  %v4137 = vrot.slane %v4068, 2
  %v4138 = vsel %vm4134, %v4135, %v4137
  %v4139 = vrot.slane %v4069, 2
  %v4140 = vsel %vm4134, %v4136, %v4139
  %v4141 = vrot.slane %v4070, 2
  %v4142 = vsel %vm4134, %v4137, %v4141
  %v4143 = vrot.slane %v4071, 2
  %v4144 = vsel %vm4134, %v4139, %v4143
  %v4145 = vrot.slane %v4072, 2
  %v4146 = vsel %vm4134, %v4141, %v4145
  %v4147 = vrot.slane %v4073, 2
  %v4148 = vsel %vm4134, %v4143, %v4147
  %v4149 = vrot.slane %v4074, 2
  %v4150 = vsel %vm4134, %v4145, %v4149
  %v4151 = vrot.slane %v4075, 2
  %v4152 = vsel %vm4134, %v4147, %v4151
  %v4153 = vrot.slane %v4076, 2
  %v4154 = vsel %vm4134, %v4149, %v4153
  %v4155 = vrot.slane %v4077, 2
  %v4156 = vsel %vm4134, %v4151, %v4155
  %v4157 = vrot.slane %v4078, 2
  %v4158 = vsel %vm4134, %v4153, %v4157
  %v4159 = vrot.slane %v4079, 2
  %v4160 = vsel %vm4134, %v4155, %v4159
  %v4161 = vrot.slane %v4080, 2
  %v4162 = vsel %vm4134, %v4157, %v4161
  %v4163 = vrot.slane %v4081, 2
  %v4164 = vsel %vm4134, %v4159, %v4163
  %v4165 = vrot.slane %v4082, 2
  %v4166 = vsel %vm4134, %v4161, %v4165
  %v4167 = vrot.slane %v4083, 2
  %v4168 = vsel %vm4134, %v4163, %v4167
  %v4169 = vrot.slane %v4084, 2
  %v4170 = vsel %vm4134, %v4165, %v4169
  %v4171 = vrot.slane %v4085, 2
  %v4172 = vsel %vm4134, %v4167, %v4171
  %v4173 = vrot.slane %v4086, 2
  %v4174 = vsel %vm4134, %v4169, %v4173
  %v4175 = vrot.slane %v4087, 2
  %v4176 = vsel %vm4134, %v4171, %v4175
  %v4177 = vrot.slane %v4088, 2
  %v4178 = vsel %vm4134, %v4173, %v4177
  %v4179 = vrot.slane %v4089, 2
  %v4180 = vsel %vm4134, %v4175, %v4179
  %v4181 = vrot.slane %v4090, 2
  %v4182 = vsel %vm4134, %v4177, %v4181
  %v4183 = vrot.slane %v4091, 2
  %v4184 = vsel %vm4134, %v4179, %v4183
  %v4185 = vrot.slane %v4092, 2
  %v4186 = vsel %vm4134, %v4181, %v4185
  %v4187 = vrot.slane %v4093, 2
  %v4188 = vsel %vm4134, %v4183, %v4187
  %v4189 = vrot.slane %v4094, 2
  %v4190 = vsel %vm4134, %v4185, %v4189
  %v4191 = vrot.slane %v4095, 2
  %v4192 = vsel %vm4134, %v4187, %v4191
  %v4193 = vrot.slane %v4096, 2
  %v4194 = vsel %vm4134, %v4189, %v4193
  %v4195 = vrot.slane %v4097, 2
  %v4196 = vsel %vm4134, %v4191, %v4195
  %v4197 = vrot.slane %v4098, 2
  %v4198 = vsel %vm4134, %v4193, %v4197
  %v4199 = vrot.slane %v4099, 2
  %v4200 = vsel %vm4134, %v4195, %v4199
  %v4235 = vadd.f32 %v3937, %v4135
  %v4236 = vadd.f32 %v3938, %v4136
  %v4237 = vadd.f32 %v3939, %v4138
  %v4238 = vadd.f32 %v3940, %v4140
  %v4239 = vadd.f32 %v3941, %v4142
  %v4240 = vadd.f32 %v3942, %v4144
  %v4241 = vadd.f32 %v3943, %v4146
  %v4242 = vadd.f32 %v3944, %v4148
  %v4243 = vadd.f32 %v3945, %v4150
  %v4244 = vadd.f32 %v3946, %v4152
  %v4245 = vadd.f32 %v3947, %v4154
  %v4246 = vadd.f32 %v3948, %v4156
  %v4247 = vadd.f32 %v3949, %v4158
  %v4248 = vadd.f32 %v3950, %v4160
  %v4249 = vadd.f32 %v3951, %v4162
  %v4250 = vadd.f32 %v3952, %v4164
  %v4251 = vadd.f32 %v3953, %v4166
  %v4252 = vadd.f32 %v3954, %v4168
  %v4253 = vadd.f32 %v3955, %v4170
  %v4254 = vadd.f32 %v3956, %v4172
  %v4255 = vadd.f32 %v3957, %v4174
  %v4256 = vadd.f32 %v3958, %v4176
  %v4257 = vadd.f32 %v3959, %v4178
  %v4258 = vadd.f32 %v3960, %v4180
  %v4259 = vadd.f32 %v3961, %v4182
  %v4260 = vadd.f32 %v3962, %v4184
  %v4261 = vadd.f32 %v3963, %v4186
  %v4262 = vadd.f32 %v3964, %v4188
  %v4263 = vadd.f32 %v3965, %v4190
  %v4264 = vadd.f32 %v3966, %v4192
  %v4265 = vadd.f32 %v3967, %v4194
  %v4266 = vadd.f32 %v3968, %v4196
  %v4267 = vadd.f32 %v3969, %v4198
  %v4268 = vadd.f32 %v3970, %v4200
  %v4269 = vld [vmem:[#allocation3 + $0x10] sm:$0x80]
  %v4270 = vld [vmem:[#allocation3 + $0x18] sm:$0x80]
  %v4271 = vld [vmem:[#allocation3 + $0x110] sm:$0x7f]
  %v4272 = vld [vmem:[#allocation3 + $0x118] sm:$0x7f]
  %v4273 = vlaneseq
  %v4274 = vshrl.u32 %v4273, 7
  %v4275 = vsub.s32 3, %v4274
  %v4276 = vrot.slane %v3506, %v4275
  %v4277 = vlaneseq
  %v4278 = vshrl.u32 %v4277, 7
  %v4279 = vsub.s32 3, %v4278
  %v4280 = vrot.slane %v3507, %v4279
  %v4281 = vmul.f32 %v4269, %v4276
  %v4282 = vmul.f32 %v4270, %v4280
  %v4283 = vmul.f32 %v3546, %v4276
  %v4284 = vmul.f32 %v3547, %v4280
  %v4285 = vmul.f32 %v3548, %v4276
  %v4286 = vmul.f32 %v3549, %v4280
  %v4287 = vmul.f32 %v3550, %v4276
  %v4288 = vmul.f32 %v3551, %v4280
  %v4289 = vmul.f32 %v3552, %v4276
  %v4290 = vmul.f32 %v3553, %v4280
  %v4291 = vmul.f32 %v3554, %v4276
  %v4292 = vmul.f32 %v3555, %v4280
  %v4293 = vmul.f32 %v3556, %v4276
  %v4294 = vmul.f32 %v3557, %v4280
  %v4295 = vmul.f32 %v3558, %v4276
  %v4296 = vmul.f32 %v3559, %v4280
  %v4297 = vmul.f32 %v3560, %v4276
  %v4298 = vmul.f32 %v3561, %v4280
  %v4299 = vmul.f32 %v3562, %v4276
  %v4300 = vmul.f32 %v3563, %v4280
  %v4301 = vmul.f32 %v3564, %v4276
  %v4302 = vmul.f32 %v3565, %v4280
  %v4303 = vmul.f32 %v3566, %v4276
  %v4304 = vmul.f32 %v3567, %v4280
  %v4305 = vmul.f32 %v3568, %v4276
  %v4306 = vmul.f32 %v3569, %v4280
  %v4307 = vmul.f32 %v3570, %v4276
  %v4308 = vmul.f32 %v3571, %v4280
  %v4309 = vmul.f32 %v3572, %v4276
  %v4310 = vmul.f32 %v3573, %v4280
  %v4311 = vmul.f32 %v3735, %v4276
  %v4312 = vmul.f32 %v3736, %v4280
  %v4313 = vmul.f32 %v4271, %v4276
  %v4314 = vmul.f32 %v4272, %v4280
  %v4315 = vrot.slane %v1275, 1
  %v4316 = vrot.slane %v1279, 1
  %v4317 = vsel %vm3618, %v4315, %v4316
  %v4318 = vrot.slane %v1283, 1
  %v4319 = vsel %vm3618, %v4316, %v4318
  %v4320 = vrot.slane %v1287, 1
  %v4321 = vsel %vm3618, %v4318, %v4320
  %v4322 = vrot.slane %v1291, 1
  %v4323 = vsel %vm3618, %v4320, %v4322
  %v4324 = vrot.slane %v1295, 1
  %v4325 = vsel %vm3618, %v4322, %v4324
  %v4326 = vrot.slane %v1299, 1
  %v4327 = vsel %vm3618, %v4324, %v4326
  %v4328 = vrot.slane %v1303, 1
  %v4329 = vsel %vm3618, %v4326, %v4328
  %v4330 = vrot.slane %v1307, 1
  %v4331 = vsel %vm3618, %v4328, %v4330
  %v4332 = vrot.slane %v1311, 1
  %v4333 = vsel %vm3618, %v4330, %v4332
  %v4334 = vrot.slane %v1315, 1
  %v4335 = vsel %vm3618, %v4332, %v4334
  %v4336 = vrot.slane %v1319, 1
  %v4337 = vsel %vm3618, %v4334, %v4336
  %v4338 = vrot.slane %v1323, 1
  %v4339 = vsel %vm3618, %v4336, %v4338
  %v4340 = vrot.slane %v1327, 1
  %v4341 = vsel %vm3618, %v4338, %v4340
  %v4342 = vrot.slane %v1331, 1
  %v4343 = vsel %vm3618, %v4340, %v4342
  %v4344 = vrot.slane %v1335, 1
  %v4345 = vsel %vm3618, %v4342, %v4344
  %v4363 = vmul.f32 %v4281, %v4315
  %v4364 = vmul.f32 %v4282, %v4315
  %v4365 = vmul.f32 %v4283, %v4317
  %v4366 = vmul.f32 %v4284, %v4317
  %v4367 = vmul.f32 %v4285, %v4319
  %v4368 = vmul.f32 %v4286, %v4319
  %v4369 = vmul.f32 %v4287, %v4321
  %v4370 = vmul.f32 %v4288, %v4321
  %v4371 = vmul.f32 %v4289, %v4323
  %v4372 = vmul.f32 %v4290, %v4323
  %v4373 = vmul.f32 %v4291, %v4325
  %v4374 = vmul.f32 %v4292, %v4325
  %v4375 = vmul.f32 %v4293, %v4327
  %v4376 = vmul.f32 %v4294, %v4327
  %v4377 = vmul.f32 %v4295, %v4329
  %v4378 = vmul.f32 %v4296, %v4329
  %v4379 = vmul.f32 %v4297, %v4331
  %v4380 = vmul.f32 %v4298, %v4331
  %v4381 = vmul.f32 %v4299, %v4333
  %v4382 = vmul.f32 %v4300, %v4333
  %v4383 = vmul.f32 %v4301, %v4335
  %v4384 = vmul.f32 %v4302, %v4335
  %v4385 = vmul.f32 %v4303, %v4337
  %v4386 = vmul.f32 %v4304, %v4337
  %v4387 = vmul.f32 %v4305, %v4339
  %v4388 = vmul.f32 %v4306, %v4339
  %v4389 = vmul.f32 %v4307, %v4341
  %v4390 = vmul.f32 %v4308, %v4341
  %v4391 = vmul.f32 %v4309, %v4343
  %v4392 = vmul.f32 %v4310, %v4343
  %v4393 = vmul.f32 %v4311, %v4345
  %v4394 = vmul.f32 %v4312, %v4345
  %v4395 = vmul.f32 %v4313, %v4344
  %v4396 = vmul.f32 %v4314, %v4344
  %v4397 = vadd.f32 %v4235, %v4363
  %v4398 = vadd.f32 %v4236, %v4364
  %v4399 = vadd.f32 %v4237, %v4365
  %v4400 = vadd.f32 %v4238, %v4366
  %v4401 = vadd.f32 %v4239, %v4367
  %v4402 = vadd.f32 %v4240, %v4368
  %v4403 = vadd.f32 %v4241, %v4369
  %v4404 = vadd.f32 %v4242, %v4370
  %v4405 = vadd.f32 %v4243, %v4371
  %v4406 = vadd.f32 %v4244, %v4372
  %v4407 = vadd.f32 %v4245, %v4373
  %v4408 = vadd.f32 %v4246, %v4374
  %v4409 = vadd.f32 %v4247, %v4375
  %v4410 = vadd.f32 %v4248, %v4376
  %v4411 = vadd.f32 %v4249, %v4377
  %v4412 = vadd.f32 %v4250, %v4378
  %v4413 = vadd.f32 %v4251, %v4379
  %v4414 = vadd.f32 %v4252, %v4380
  %v4415 = vadd.f32 %v4253, %v4381
  %v4416 = vadd.f32 %v4254, %v4382
  %v4417 = vadd.f32 %v4255, %v4383
  %v4418 = vadd.f32 %v4256, %v4384
  %v4419 = vadd.f32 %v4257, %v4385
  %v4420 = vadd.f32 %v4258, %v4386
  %v4421 = vadd.f32 %v4259, %v4387
  %v4422 = vadd.f32 %v4260, %v4388
  %v4423 = vadd.f32 %v4261, %v4389
  %v4424 = vadd.f32 %v4262, %v4390
  %v4425 = vadd.f32 %v4263, %v4391
  %v4426 = vadd.f32 %v4264, %v4392
  %v4427 = vadd.f32 %v4265, %v4393
  %v4428 = vadd.f32 %v4266, %v4394
  %v4429 = vadd.f32 %v4267, %v4395
  %v4430 = vadd.f32 %v4268, %v4396
  %v4431 = vld [vmem:[#allocation3 + $0x110] sm:$0xff]
  %v4432 = vld [vmem:[#allocation3 + $0x118] sm:$0xff]
  %v4433 = vlaneseq
  %v4434 = vshrl.u32 %v4433, 7
  %v4435 = vsub.s32 4, %v4434
  %v4436 = vrot.slane %v3506, %v4435
  %v4437 = vlaneseq
  %v4438 = vshrl.u32 %v4437, 7
  %v4439 = vsub.s32 4, %v4438
  %v4440 = vrot.slane %v3507, %v4439
  %v4441 = vmul.f32 %v3546, %v4436
  %v4442 = vmul.f32 %v3547, %v4440
  %v4443 = vmul.f32 %v3548, %v4436
  %v4444 = vmul.f32 %v3549, %v4440
  %v4445 = vmul.f32 %v3550, %v4436
  %v4446 = vmul.f32 %v3551, %v4440
  %v4447 = vmul.f32 %v3552, %v4436
  %v4448 = vmul.f32 %v3553, %v4440
  %v4449 = vmul.f32 %v3554, %v4436
  %v4450 = vmul.f32 %v3555, %v4440
  %v4451 = vmul.f32 %v3556, %v4436
  %v4452 = vmul.f32 %v3557, %v4440
  %v4453 = vmul.f32 %v3558, %v4436
  %v4454 = vmul.f32 %v3559, %v4440
  %v4455 = vmul.f32 %v3560, %v4436
  %v4456 = vmul.f32 %v3561, %v4440
  %v4457 = vmul.f32 %v3562, %v4436
  %v4458 = vmul.f32 %v3563, %v4440
  %v4459 = vmul.f32 %v3564, %v4436
  %v4460 = vmul.f32 %v3565, %v4440
  %v4461 = vmul.f32 %v3566, %v4436
  %v4462 = vmul.f32 %v3567, %v4440
  %v4463 = vmul.f32 %v3568, %v4436
  %v4464 = vmul.f32 %v3569, %v4440
  %v4465 = vmul.f32 %v3570, %v4436
  %v4466 = vmul.f32 %v3571, %v4440
  %v4467 = vmul.f32 %v3572, %v4436
  %v4468 = vmul.f32 %v3573, %v4440
  %v4469 = vmul.f32 %v3735, %v4436
  %v4470 = vmul.f32 %v3736, %v4440
  %v4471 = vmul.f32 %v4431, %v4436
  %v4472 = vmul.f32 %v4432, %v4440
  %v4505 = vrot.slane %v4441, 1
  %v4506 = vrot.slane %v4442, 1
  %v4507 = vrot.slane %v4443, 1
  %v4508 = vsel %vm3618, %v4505, %v4507
  %v4509 = vrot.slane %v4444, 1
  %v4510 = vsel %vm3618, %v4506, %v4509
  %v4511 = vrot.slane %v4445, 1
  %v4512 = vsel %vm3618, %v4507, %v4511
  %v4513 = vrot.slane %v4446, 1
  %v4514 = vsel %vm3618, %v4509, %v4513
  %v4515 = vrot.slane %v4447, 1
  %v4516 = vsel %vm3618, %v4511, %v4515
  %v4517 = vrot.slane %v4448, 1
  %v4518 = vsel %vm3618, %v4513, %v4517
  %v4519 = vrot.slane %v4449, 1
  %v4520 = vsel %vm3618, %v4515, %v4519
  %v4521 = vrot.slane %v4450, 1
  %v4522 = vsel %vm3618, %v4517, %v4521
  %v4523 = vrot.slane %v4451, 1
  %v4524 = vsel %vm3618, %v4519, %v4523
  %v4525 = vrot.slane %v4452, 1
  %v4526 = vsel %vm3618, %v4521, %v4525
  %v4527 = vrot.slane %v4453, 1
  %v4528 = vsel %vm3618, %v4523, %v4527
  %v4529 = vrot.slane %v4454, 1
  %v4530 = vsel %vm3618, %v4525, %v4529
  %v4531 = vrot.slane %v4455, 1
  %v4532 = vsel %vm3618, %v4527, %v4531
  %v4533 = vrot.slane %v4456, 1
  %v4534 = vsel %vm3618, %v4529, %v4533
  %v4535 = vrot.slane %v4457, 1
  %v4536 = vsel %vm3618, %v4531, %v4535
  %v4537 = vrot.slane %v4458, 1
  %v4538 = vsel %vm3618, %v4533, %v4537
  %v4539 = vrot.slane %v4459, 1
  %v4540 = vsel %vm3618, %v4535, %v4539
  %v4541 = vrot.slane %v4460, 1
  %v4542 = vsel %vm3618, %v4537, %v4541
  %v4543 = vrot.slane %v4461, 1
  %v4544 = vsel %vm3618, %v4539, %v4543
  %v4545 = vrot.slane %v4462, 1
  %v4546 = vsel %vm3618, %v4541, %v4545
  %v4547 = vrot.slane %v4463, 1
  %v4548 = vsel %vm3618, %v4543, %v4547
  %v4549 = vrot.slane %v4464, 1
  %v4550 = vsel %vm3618, %v4545, %v4549
  %v4551 = vrot.slane %v4465, 1
  %v4552 = vsel %vm3618, %v4547, %v4551
  %v4553 = vrot.slane %v4466, 1
  %v4554 = vsel %vm3618, %v4549, %v4553
  %v4555 = vrot.slane %v4467, 1
  %v4556 = vsel %vm3618, %v4551, %v4555
  %v4557 = vrot.slane %v4468, 1
  %v4558 = vsel %vm3618, %v4553, %v4557
  %v4559 = vrot.slane %v4469, 1
  %v4560 = vsel %vm3618, %v4555, %v4559
  %v4561 = vrot.slane %v4470, 1
  %v4562 = vsel %vm3618, %v4557, %v4561
  %v4563 = vrot.slane %v4471, 1
  %v4564 = vsel %vm3618, %v4559, %v4563
  %v4565 = vrot.slane %v4472, 1
  %v4566 = vsel %vm3618, %v4561, %v4565
  %v4601 = vadd.f32 %v4397, %v4505
  %v4602 = vadd.f32 %v4398, %v4506
  %v4603 = vadd.f32 %v4399, %v4508
  %v4604 = vadd.f32 %v4400, %v4510
  %v4605 = vadd.f32 %v4401, %v4512
  %v4606 = vadd.f32 %v4402, %v4514
  %v4607 = vadd.f32 %v4403, %v4516
  %v4608 = vadd.f32 %v4404, %v4518
  %v4609 = vadd.f32 %v4405, %v4520
  %v4610 = vadd.f32 %v4406, %v4522
  %v4611 = vadd.f32 %v4407, %v4524
  %v4612 = vadd.f32 %v4408, %v4526
  %v4613 = vadd.f32 %v4409, %v4528
  %v4614 = vadd.f32 %v4410, %v4530
  %v4615 = vadd.f32 %v4411, %v4532
  %v4616 = vadd.f32 %v4412, %v4534
  %v4617 = vadd.f32 %v4413, %v4536
  %v4618 = vadd.f32 %v4414, %v4538
  %v4619 = vadd.f32 %v4415, %v4540
  %v4620 = vadd.f32 %v4416, %v4542
  %v4621 = vadd.f32 %v4417, %v4544
  %v4622 = vadd.f32 %v4418, %v4546
  %v4623 = vadd.f32 %v4419, %v4548
  %v4624 = vadd.f32 %v4420, %v4550
  %v4625 = vadd.f32 %v4421, %v4552
  %v4626 = vadd.f32 %v4422, %v4554
  %v4627 = vadd.f32 %v4423, %v4556
  %v4628 = vadd.f32 %v4424, %v4558
  %v4629 = vadd.f32 %v4425, %v4560
  %v4630 = vadd.f32 %v4426, %v4562
  %v4631 = vadd.f32 %v4427, %v4564
  %v4632 = vadd.f32 %v4428, %v4566
  %v4633 = vadd.f32 %v4429, %v4563
  %v4634 = vadd.f32 %v4430, %v4565
  %v4635 = vld [vmem:[#allocation3 + $0x20] sm:$0xfe]
  %v4636 = vld [vmem:[#allocation3 + $0x28] sm:$0xfe]
  %v4637 = vld [vmem:[#allocation3 + $0x120] sm:$0x1]
  %v4638 = vld [vmem:[#allocation3 + $0x128] sm:$0x1]
  %v4639 = vlaneseq
  %v4640 = vshrl.u32 %v4639, 7
  %v4641 = vsub.s32 5, %v4640
  %v4642 = vrot.slane %v3506, %v4641
  %v4643 = vlaneseq
  %v4644 = vshrl.u32 %v4643, 7
  %v4645 = vsub.s32 5, %v4644
  %v4646 = vrot.slane %v3507, %v4645
  %v4647 = vmul.f32 %v4635, %v4642
  %v4648 = vmul.f32 %v4636, %v4646
  %v4649 = vmul.f32 %v3548, %v4642
  %v4650 = vmul.f32 %v3549, %v4646
  %v4651 = vmul.f32 %v3550, %v4642
  %v4652 = vmul.f32 %v3551, %v4646
  %v4653 = vmul.f32 %v3552, %v4642
  %v4654 = vmul.f32 %v3553, %v4646
  %v4655 = vmul.f32 %v3554, %v4642
  %v4656 = vmul.f32 %v3555, %v4646
  %v4657 = vmul.f32 %v3556, %v4642
  %v4658 = vmul.f32 %v3557, %v4646
  %v4659 = vmul.f32 %v3558, %v4642
  %v4660 = vmul.f32 %v3559, %v4646
  %v4661 = vmul.f32 %v3560, %v4642
  %v4662 = vmul.f32 %v3561, %v4646
  %v4663 = vmul.f32 %v3562, %v4642
  %v4664 = vmul.f32 %v3563, %v4646
  %v4665 = vmul.f32 %v3564, %v4642
  %v4666 = vmul.f32 %v3565, %v4646
  %v4667 = vmul.f32 %v3566, %v4642
  %v4668 = vmul.f32 %v3567, %v4646
  %v4669 = vmul.f32 %v3568, %v4642
  %v4670 = vmul.f32 %v3569, %v4646
  %v4671 = vmul.f32 %v3570, %v4642
  %v4672 = vmul.f32 %v3571, %v4646
  %v4673 = vmul.f32 %v3572, %v4642
  %v4674 = vmul.f32 %v3573, %v4646
  %v4675 = vmul.f32 %v3735, %v4642
  %v4676 = vmul.f32 %v3736, %v4646
  %v4677 = vmul.f32 %v4431, %v4642
  %v4678 = vmul.f32 %v4432, %v4646
  %v4679 = vmul.f32 %v4637, %v4642
  %v4680 = vmul.f32 %v4638, %v4646
  %v4681 = vrot.slane %v1459, 7
  %v4682 = vrot.slane %v1463, 7
  %v4683 = vsel %vm4017, %v4681, %v4682
  %v4684 = vrot.slane %v1467, 7
  %v4685 = vsel %vm4017, %v4682, %v4684
  %v4686 = vrot.slane %v1471, 7
  %v4687 = vsel %vm4017, %v4684, %v4686
  %v4688 = vrot.slane %v1475, 7
  %v4689 = vsel %vm4017, %v4686, %v4688
  %v4690 = vrot.slane %v1479, 7
  %v4691 = vsel %vm4017, %v4688, %v4690
  %v4692 = vrot.slane %v1483, 7
  %v4693 = vsel %vm4017, %v4690, %v4692
  %v4694 = vrot.slane %v1487, 7
  %v4695 = vsel %vm4017, %v4692, %v4694
  %v4696 = vrot.slane %v1491, 7
  %v4697 = vsel %vm4017, %v4694, %v4696
  %v4698 = vrot.slane %v1495, 7
  %v4699 = vsel %vm4017, %v4696, %v4698
  %v4700 = vrot.slane %v1499, 7
  %v4701 = vsel %vm4017, %v4698, %v4700
  %v4702 = vrot.slane %v1503, 7
  %v4703 = vsel %vm4017, %v4700, %v4702
  %v4704 = vrot.slane %v1507, 7
  %v4705 = vsel %vm4017, %v4702, %v4704
  %v4706 = vrot.slane %v1511, 7
  %v4707 = vsel %vm4017, %v4704, %v4706
  %v4708 = vrot.slane %v1515, 7
  %v4709 = vsel %vm4017, %v4706, %v4708
  %v4710 = vrot.slane %v1519, 7
  %v4711 = vsel %vm4017, %v4708, %v4710
  %v4729 = vmul.f32 %v4647, %v4681
  %v4730 = vmul.f32 %v4648, %v4681
  %v4731 = vmul.f32 %v4649, %v4683
  %v4732 = vmul.f32 %v4650, %v4683
  %v4733 = vmul.f32 %v4651, %v4685
  %v4734 = vmul.f32 %v4652, %v4685
  %v4735 = vmul.f32 %v4653, %v4687
  %v4736 = vmul.f32 %v4654, %v4687
  %v4737 = vmul.f32 %v4655, %v4689
  %v4738 = vmul.f32 %v4656, %v4689
  %v4739 = vmul.f32 %v4657, %v4691
  %v4740 = vmul.f32 %v4658, %v4691
  %v4741 = vmul.f32 %v4659, %v4693
  %v4742 = vmul.f32 %v4660, %v4693
  %v4743 = vmul.f32 %v4661, %v4695
  %v4744 = vmul.f32 %v4662, %v4695
  %v4745 = vmul.f32 %v4663, %v4697
  %v4746 = vmul.f32 %v4664, %v4697
  %v4747 = vmul.f32 %v4665, %v4699
  %v4748 = vmul.f32 %v4666, %v4699
  %v4749 = vmul.f32 %v4667, %v4701
  %v4750 = vmul.f32 %v4668, %v4701
  %v4751 = vmul.f32 %v4669, %v4703
  %v4752 = vmul.f32 %v4670, %v4703
  %v4753 = vmul.f32 %v4671, %v4705
  %v4754 = vmul.f32 %v4672, %v4705
  %v4755 = vmul.f32 %v4673, %v4707
  %v4756 = vmul.f32 %v4674, %v4707
  %v4757 = vmul.f32 %v4675, %v4709
  %v4758 = vmul.f32 %v4676, %v4709
  %v4759 = vmul.f32 %v4677, %v4711
  %v4760 = vmul.f32 %v4678, %v4711
  %v4761 = vmul.f32 %v4679, %v4710
  %v4762 = vmul.f32 %v4680, %v4710
  %v4797 = vrot.slane %v4729, 2
  %v4798 = vrot.slane %v4730, 2
  %v4799 = vrot.slane %v4731, 2
  %v4800 = vsel %vm4134, %v4797, %v4799
  %v4801 = vrot.slane %v4732, 2
  %v4802 = vsel %vm4134, %v4798, %v4801
  %v4803 = vrot.slane %v4733, 2
  %v4804 = vsel %vm4134, %v4799, %v4803
  %v4805 = vrot.slane %v4734, 2
  %v4806 = vsel %vm4134, %v4801, %v4805
  %v4807 = vrot.slane %v4735, 2
  %v4808 = vsel %vm4134, %v4803, %v4807
  %v4809 = vrot.slane %v4736, 2
  %v4810 = vsel %vm4134, %v4805, %v4809
  %v4811 = vrot.slane %v4737, 2
  %v4812 = vsel %vm4134, %v4807, %v4811
  %v4813 = vrot.slane %v4738, 2
  %v4814 = vsel %vm4134, %v4809, %v4813
  %v4815 = vrot.slane %v4739, 2
  %v4816 = vsel %vm4134, %v4811, %v4815
  %v4817 = vrot.slane %v4740, 2
  %v4818 = vsel %vm4134, %v4813, %v4817
  %v4819 = vrot.slane %v4741, 2
  %v4820 = vsel %vm4134, %v4815, %v4819
  %v4821 = vrot.slane %v4742, 2
  %v4822 = vsel %vm4134, %v4817, %v4821
  %v4823 = vrot.slane %v4743, 2
  %v4824 = vsel %vm4134, %v4819, %v4823
  %v4825 = vrot.slane %v4744, 2
  %v4826 = vsel %vm4134, %v4821, %v4825
  %v4827 = vrot.slane %v4745, 2
  %v4828 = vsel %vm4134, %v4823, %v4827
  %v4829 = vrot.slane %v4746, 2
  %v4830 = vsel %vm4134, %v4825, %v4829
  %v4831 = vrot.slane %v4747, 2
  %v4832 = vsel %vm4134, %v4827, %v4831
  %v4833 = vrot.slane %v4748, 2
  %v4834 = vsel %vm4134, %v4829, %v4833
  %v4835 = vrot.slane %v4749, 2
  %v4836 = vsel %vm4134, %v4831, %v4835
  %v4837 = vrot.slane %v4750, 2
  %v4838 = vsel %vm4134, %v4833, %v4837
  %v4839 = vrot.slane %v4751, 2
  %v4840 = vsel %vm4134, %v4835, %v4839
  %v4841 = vrot.slane %v4752, 2
  %v4842 = vsel %vm4134, %v4837, %v4841
  %v4843 = vrot.slane %v4753, 2
  %v4844 = vsel %vm4134, %v4839, %v4843
  %v4845 = vrot.slane %v4754, 2
  %v4846 = vsel %vm4134, %v4841, %v4845
  %v4847 = vrot.slane %v4755, 2
  %v4848 = vsel %vm4134, %v4843, %v4847
  %v4849 = vrot.slane %v4756, 2
  %v4850 = vsel %vm4134, %v4845, %v4849
  %v4851 = vrot.slane %v4757, 2
  %v4852 = vsel %vm4134, %v4847, %v4851
  %v4853 = vrot.slane %v4758, 2
  %v4854 = vsel %vm4134, %v4849, %v4853
  %v4855 = vrot.slane %v4759, 2
  %v4856 = vsel %vm4134, %v4851, %v4855
  %v4857 = vrot.slane %v4760, 2
  %v4858 = vsel %vm4134, %v4853, %v4857
  %v4859 = vrot.slane %v4761, 2
  %v4860 = vsel %vm4134, %v4855, %v4859
  %v4861 = vrot.slane %v4762, 2
  %v4862 = vsel %vm4134, %v4857, %v4861
  %v4897 = vadd.f32 %v4601, %v4797
  %v4898 = vadd.f32 %v4602, %v4798
  %v4899 = vadd.f32 %v4603, %v4800
  %v4900 = vadd.f32 %v4604, %v4802
  %v4901 = vadd.f32 %v4605, %v4804
  %v4902 = vadd.f32 %v4606, %v4806
  %v4903 = vadd.f32 %v4607, %v4808
  %v4904 = vadd.f32 %v4608, %v4810
  %v4905 = vadd.f32 %v4609, %v4812
  %v4906 = vadd.f32 %v4610, %v4814
  %v4907 = vadd.f32 %v4611, %v4816
  %v4908 = vadd.f32 %v4612, %v4818
  %v4909 = vadd.f32 %v4613, %v4820
  %v4910 = vadd.f32 %v4614, %v4822
  %v4911 = vadd.f32 %v4615, %v4824
  %v4912 = vadd.f32 %v4616, %v4826
  %v4913 = vadd.f32 %v4617, %v4828
  %v4914 = vadd.f32 %v4618, %v4830
  %v4915 = vadd.f32 %v4619, %v4832
  %v4916 = vadd.f32 %v4620, %v4834
  %v4917 = vadd.f32 %v4621, %v4836
  %v4918 = vadd.f32 %v4622, %v4838
  %v4919 = vadd.f32 %v4623, %v4840
  %v4920 = vadd.f32 %v4624, %v4842
  %v4921 = vadd.f32 %v4625, %v4844
  %v4922 = vadd.f32 %v4626, %v4846
  %v4923 = vadd.f32 %v4627, %v4848
  %v4924 = vadd.f32 %v4628, %v4850
  %v4925 = vadd.f32 %v4629, %v4852
  %v4926 = vadd.f32 %v4630, %v4854
  %v4927 = vadd.f32 %v4631, %v4856
  %v4928 = vadd.f32 %v4632, %v4858
  %v4929 = vadd.f32 %v4633, %v4860
  %v4930 = vadd.f32 %v4634, %v4862
  %v4931 = vld [vmem:[#allocation3 + $0x20] sm:$0x80]
  %v4932 = vld [vmem:[#allocation3 + $0x28] sm:$0x80]
  %v4933 = vld [vmem:[#allocation3 + $0x120] sm:$0x7f]
  %v4934 = vld [vmem:[#allocation3 + $0x128] sm:$0x7f]
  %v4935 = vlaneseq
  %v4936 = vshrl.u32 %v4935, 7
  %v4937 = vsub.s32 6, %v4936
  %v4938 = vrot.slane %v3506, %v4937
  %v4939 = vlaneseq
  %v4940 = vshrl.u32 %v4939, 7
  %v4941 = vsub.s32 6, %v4940
  %v4942 = vrot.slane %v3507, %v4941
  %v4943 = vmul.f32 %v4931, %v4938
  %v4944 = vmul.f32 %v4932, %v4942
  %v4945 = vmul.f32 %v3548, %v4938
  %v4946 = vmul.f32 %v3549, %v4942
  %v4947 = vmul.f32 %v3550, %v4938
  %v4948 = vmul.f32 %v3551, %v4942
  %v4949 = vmul.f32 %v3552, %v4938
  %v4950 = vmul.f32 %v3553, %v4942
  %v4951 = vmul.f32 %v3554, %v4938
  %v4952 = vmul.f32 %v3555, %v4942
  %v4953 = vmul.f32 %v3556, %v4938
  %v4954 = vmul.f32 %v3557, %v4942
  %v4955 = vmul.f32 %v3558, %v4938
  %v4956 = vmul.f32 %v3559, %v4942
  %v4957 = vmul.f32 %v3560, %v4938
  %v4958 = vmul.f32 %v3561, %v4942
  %v4959 = vmul.f32 %v3562, %v4938
  %v4960 = vmul.f32 %v3563, %v4942
  %v4961 = vmul.f32 %v3564, %v4938
  %v4962 = vmul.f32 %v3565, %v4942
  %v4963 = vmul.f32 %v3566, %v4938
  %v4964 = vmul.f32 %v3567, %v4942
  %v4965 = vmul.f32 %v3568, %v4938
  %v4966 = vmul.f32 %v3569, %v4942
  %v4967 = vmul.f32 %v3570, %v4938
  %v4968 = vmul.f32 %v3571, %v4942
  %v4969 = vmul.f32 %v3572, %v4938
  %v4970 = vmul.f32 %v3573, %v4942
  %v4971 = vmul.f32 %v3735, %v4938
  %v4972 = vmul.f32 %v3736, %v4942
  %v4973 = vmul.f32 %v4431, %v4938
  %v4974 = vmul.f32 %v4432, %v4942
  %v4975 = vmul.f32 %v4933, %v4938
  %v4976 = vmul.f32 %v4934, %v4942
  %v4977 = vrot.slane %v1591, 1
  %v4978 = vrot.slane %v1595, 1
  %v4979 = vsel %vm3618, %v4977, %v4978
  %v4980 = vrot.slane %v1599, 1
  %v4981 = vsel %vm3618, %v4978, %v4980
  %v4982 = vrot.slane %v1603, 1
  %v4983 = vsel %vm3618, %v4980, %v4982
  %v4984 = vrot.slane %v1607, 1
  %v4985 = vsel %vm3618, %v4982, %v4984
  %v4986 = vrot.slane %v1611, 1
  %v4987 = vsel %vm3618, %v4984, %v4986
  %v4988 = vrot.slane %v1615, 1
  %v4989 = vsel %vm3618, %v4986, %v4988
  %v4990 = vrot.slane %v1619, 1
  %v4991 = vsel %vm3618, %v4988, %v4990
  %v4992 = vrot.slane %v1623, 1
  %v4993 = vsel %vm3618, %v4990, %v4992
  %v4994 = vrot.slane %v1627, 1
  %v4995 = vsel %vm3618, %v4992, %v4994
  %v4996 = vrot.slane %v1631, 1
  %v4997 = vsel %vm3618, %v4994, %v4996
  %v4998 = vrot.slane %v1635, 1
  %v4999 = vsel %vm3618, %v4996, %v4998
  %v5000 = vrot.slane %v1639, 1
  %v5001 = vsel %vm3618, %v4998, %v5000
  %v5002 = vrot.slane %v1643, 1
  %v5003 = vsel %vm3618, %v5000, %v5002
  %v5004 = vrot.slane %v1647, 1
  %v5005 = vsel %vm3618, %v5002, %v5004
  %v5006 = vrot.slane %v1651, 1
  %v5007 = vsel %vm3618, %v5004, %v5006
  %v5025 = vmul.f32 %v4943, %v4977
  %v5026 = vmul.f32 %v4944, %v4977
  %v5027 = vmul.f32 %v4945, %v4979
  %v5028 = vmul.f32 %v4946, %v4979
  %v5029 = vmul.f32 %v4947, %v4981
  %v5030 = vmul.f32 %v4948, %v4981
  %v5031 = vmul.f32 %v4949, %v4983
  %v5032 = vmul.f32 %v4950, %v4983
  %v5033 = vmul.f32 %v4951, %v4985
  %v5034 = vmul.f32 %v4952, %v4985
  %v5035 = vmul.f32 %v4953, %v4987
  %v5036 = vmul.f32 %v4954, %v4987
  %v5037 = vmul.f32 %v4955, %v4989
  %v5038 = vmul.f32 %v4956, %v4989
  %v5039 = vmul.f32 %v4957, %v4991
  %v5040 = vmul.f32 %v4958, %v4991
  %v5041 = vmul.f32 %v4959, %v4993
  %v5042 = vmul.f32 %v4960, %v4993
  %v5043 = vmul.f32 %v4961, %v4995
  %v5044 = vmul.f32 %v4962, %v4995
  %v5045 = vmul.f32 %v4963, %v4997
  %v5046 = vmul.f32 %v4964, %v4997
  %v5047 = vmul.f32 %v4965, %v4999
  %v5048 = vmul.f32 %v4966, %v4999
  %v5049 = vmul.f32 %v4967, %v5001
  %v5050 = vmul.f32 %v4968, %v5001
  %v5051 = vmul.f32 %v4969, %v5003
  %v5052 = vmul.f32 %v4970, %v5003
  %v5053 = vmul.f32 %v4971, %v5005
  %v5054 = vmul.f32 %v4972, %v5005
  %v5055 = vmul.f32 %v4973, %v5007
  %v5056 = vmul.f32 %v4974, %v5007
  %v5057 = vmul.f32 %v4975, %v5006
  %v5058 = vmul.f32 %v4976, %v5006
  %v5059 = vadd.f32 %v4897, %v5025
  %v5060 = vadd.f32 %v4898, %v5026
  %v5061 = vadd.f32 %v4899, %v5027
  %v5062 = vadd.f32 %v4900, %v5028
  %v5063 = vadd.f32 %v4901, %v5029
  %v5064 = vadd.f32 %v4902, %v5030
  %v5065 = vadd.f32 %v4903, %v5031
  %v5066 = vadd.f32 %v4904, %v5032
  %v5067 = vadd.f32 %v4905, %v5033
  %v5068 = vadd.f32 %v4906, %v5034
  %v5069 = vadd.f32 %v4907, %v5035
  %v5070 = vadd.f32 %v4908, %v5036
  %v5071 = vadd.f32 %v4909, %v5037
  %v5072 = vadd.f32 %v4910, %v5038
  %v5073 = vadd.f32 %v4911, %v5039
  %v5074 = vadd.f32 %v4912, %v5040
  %v5075 = vadd.f32 %v4913, %v5041
  %v5076 = vadd.f32 %v4914, %v5042
  %v5077 = vadd.f32 %v4915, %v5043
  %v5078 = vadd.f32 %v4916, %v5044
  %v5079 = vadd.f32 %v4917, %v5045
  %v5080 = vadd.f32 %v4918, %v5046
  %v5081 = vadd.f32 %v4919, %v5047
  %v5082 = vadd.f32 %v4920, %v5048
  %v5083 = vadd.f32 %v4921, %v5049
  %v5084 = vadd.f32 %v4922, %v5050
  %v5085 = vadd.f32 %v4923, %v5051
  %v5086 = vadd.f32 %v4924, %v5052
  %v5087 = vadd.f32 %v4925, %v5053
  %v5088 = vadd.f32 %v4926, %v5054
  %v5089 = vadd.f32 %v4927, %v5055
  %v5090 = vadd.f32 %v4928, %v5056
  %v5091 = vadd.f32 %v4929, %v5057
  %v5092 = vadd.f32 %v4930, %v5058
  %v5093 = vld [vmem:[#allocation3 + $0x120] sm:$0xff]
  %v5094 = vld [vmem:[#allocation3 + $0x128] sm:$0xff]
  %v5095 = vlaneseq
  %v5096 = vshrl.u32 %v5095, 7
  %v5097 = vsub.s32 7, %v5096
  %v5098 = vrot.slane %v3506, %v5097
  %v5099 = vlaneseq
  %v5100 = vshrl.u32 %v5099, 7
  %v5101 = vsub.s32 7, %v5100
  %v5102 = vrot.slane %v3507, %v5101
  %v5103 = vmul.f32 %v3548, %v5098
  %v5104 = vmul.f32 %v3549, %v5102
  %v5105 = vmul.f32 %v3550, %v5098
  %v5106 = vmul.f32 %v3551, %v5102
  %v5107 = vmul.f32 %v3552, %v5098
  %v5108 = vmul.f32 %v3553, %v5102
  %v5109 = vmul.f32 %v3554, %v5098
  %v5110 = vmul.f32 %v3555, %v5102
  %v5111 = vmul.f32 %v3556, %v5098
  %v5112 = vmul.f32 %v3557, %v5102
  %v5113 = vmul.f32 %v3558, %v5098
  %v5114 = vmul.f32 %v3559, %v5102
  %v5115 = vmul.f32 %v3560, %v5098
  %v5116 = vmul.f32 %v3561, %v5102
  %v5117 = vmul.f32 %v3562, %v5098
  %v5118 = vmul.f32 %v3563, %v5102
  %v5119 = vmul.f32 %v3564, %v5098
  %v5120 = vmul.f32 %v3565, %v5102
  %v5121 = vmul.f32 %v3566, %v5098
  %v5122 = vmul.f32 %v3567, %v5102
  %v5123 = vmul.f32 %v3568, %v5098
  %v5124 = vmul.f32 %v3569, %v5102
  %v5125 = vmul.f32 %v3570, %v5098
  %v5126 = vmul.f32 %v3571, %v5102
  %v5127 = vmul.f32 %v3572, %v5098
  %v5128 = vmul.f32 %v3573, %v5102
  %v5129 = vmul.f32 %v3735, %v5098
  %v5130 = vmul.f32 %v3736, %v5102
  %v5131 = vmul.f32 %v4431, %v5098
  %v5132 = vmul.f32 %v4432, %v5102
  %v5133 = vmul.f32 %v5093, %v5098
  %v5134 = vmul.f32 %v5094, %v5102
  %v5135 = vmul.f32 %v5103, %v1723
  %v5136 = vmul.f32 %v5104, %v1723
  %v5137 = vmul.f32 %v5105, %v1727
  %v5138 = vmul.f32 %v5106, %v1727
  %v5139 = vmul.f32 %v5107, %v1731
  %v5140 = vmul.f32 %v5108, %v1731
  %v5141 = vmul.f32 %v5109, %v1735
  %v5142 = vmul.f32 %v5110, %v1735
  %v5143 = vmul.f32 %v5111, %v1739
  %v5144 = vmul.f32 %v5112, %v1739
  %v5145 = vmul.f32 %v5113, %v1743
  %v5146 = vmul.f32 %v5114, %v1743
  %v5147 = vmul.f32 %v5115, %v1747
  %v5148 = vmul.f32 %v5116, %v1747
  %v5149 = vmul.f32 %v5117, %v1751
  %v5150 = vmul.f32 %v5118, %v1751
  %v5151 = vmul.f32 %v5119, %v1755
  %v5152 = vmul.f32 %v5120, %v1755
  %v5153 = vmul.f32 %v5121, %v1759
  %v5154 = vmul.f32 %v5122, %v1759
  %v5155 = vmul.f32 %v5123, %v1763
  %v5156 = vmul.f32 %v5124, %v1763
  %v5157 = vmul.f32 %v5125, %v1767
  %v5158 = vmul.f32 %v5126, %v1767
  %v5159 = vmul.f32 %v5127, %v1771
  %v5160 = vmul.f32 %v5128, %v1771
  %v5161 = vmul.f32 %v5129, %v1775
  %v5162 = vmul.f32 %v5130, %v1775
  %v5163 = vmul.f32 %v5131, %v1779
  %v5164 = vmul.f32 %v5132, %v1779
  %v5165 = vmul.f32 %v5133, %v1783
  %v5166 = vmul.f32 %v5134, %v1783
  %v5199 = vrot.slane %v5135, 1
  %v5200 = vrot.slane %v5136, 1
  %v5201 = vrot.slane %v5137, 1
  %v5202 = vsel %vm3618, %v5199, %v5201
  %v5203 = vrot.slane %v5138, 1
  %v5204 = vsel %vm3618, %v5200, %v5203
  %v5205 = vrot.slane %v5139, 1
  %v5206 = vsel %vm3618, %v5201, %v5205
  %v5207 = vrot.slane %v5140, 1
  %v5208 = vsel %vm3618, %v5203, %v5207
  %v5209 = vrot.slane %v5141, 1
  %v5210 = vsel %vm3618, %v5205, %v5209
  %v5211 = vrot.slane %v5142, 1
  %v5212 = vsel %vm3618, %v5207, %v5211
  %v5213 = vrot.slane %v5143, 1
  %v5214 = vsel %vm3618, %v5209, %v5213
  %v5215 = vrot.slane %v5144, 1
  %v5216 = vsel %vm3618, %v5211, %v5215
  %v5217 = vrot.slane %v5145, 1
  %v5218 = vsel %vm3618, %v5213, %v5217
  %v5219 = vrot.slane %v5146, 1
  %v5220 = vsel %vm3618, %v5215, %v5219
  %v5221 = vrot.slane %v5147, 1
  %v5222 = vsel %vm3618, %v5217, %v5221
  %v5223 = vrot.slane %v5148, 1
  %v5224 = vsel %vm3618, %v5219, %v5223
  %v5225 = vrot.slane %v5149, 1
  %v5226 = vsel %vm3618, %v5221, %v5225
  %v5227 = vrot.slane %v5150, 1
  %v5228 = vsel %vm3618, %v5223, %v5227
  %v5229 = vrot.slane %v5151, 1
  %v5230 = vsel %vm3618, %v5225, %v5229
  %v5231 = vrot.slane %v5152, 1
  %v5232 = vsel %vm3618, %v5227, %v5231
  %v5233 = vrot.slane %v5153, 1
  %v5234 = vsel %vm3618, %v5229, %v5233
  %v5235 = vrot.slane %v5154, 1
  %v5236 = vsel %vm3618, %v5231, %v5235
  %v5237 = vrot.slane %v5155, 1
  %v5238 = vsel %vm3618, %v5233, %v5237
  %v5239 = vrot.slane %v5156, 1
  %v5240 = vsel %vm3618, %v5235, %v5239
  %v5241 = vrot.slane %v5157, 1
  %v5242 = vsel %vm3618, %v5237, %v5241
  %v5243 = vrot.slane %v5158, 1
  %v5244 = vsel %vm3618, %v5239, %v5243
  %v5245 = vrot.slane %v5159, 1
  %v5246 = vsel %vm3618, %v5241, %v5245
  %v5247 = vrot.slane %v5160, 1
  %v5248 = vsel %vm3618, %v5243, %v5247
  %v5249 = vrot.slane %v5161, 1
  %v5250 = vsel %vm3618, %v5245, %v5249
  %v5251 = vrot.slane %v5162, 1
  %v5252 = vsel %vm3618, %v5247, %v5251
  %v5253 = vrot.slane %v5163, 1
  %v5254 = vsel %vm3618, %v5249, %v5253
  %v5255 = vrot.slane %v5164, 1
  %v5256 = vsel %vm3618, %v5251, %v5255
  %v5257 = vrot.slane %v5165, 1
  %v5258 = vsel %vm3618, %v5253, %v5257
  %v5259 = vrot.slane %v5166, 1
  %v5260 = vsel %vm3618, %v5255, %v5259
  %v5295 = vadd.f32 %v5059, %v5199
  %v5296 = vadd.f32 %v5060, %v5200
  %v5297 = vadd.f32 %v5061, %v5202
  %v5298 = vadd.f32 %v5062, %v5204
  %v5299 = vadd.f32 %v5063, %v5206
  %v5300 = vadd.f32 %v5064, %v5208
  %v5301 = vadd.f32 %v5065, %v5210
  %v5302 = vadd.f32 %v5066, %v5212
  %v5303 = vadd.f32 %v5067, %v5214
  %v5304 = vadd.f32 %v5068, %v5216
  %v5305 = vadd.f32 %v5069, %v5218
  %v5306 = vadd.f32 %v5070, %v5220
  %v5307 = vadd.f32 %v5071, %v5222
  %v5308 = vadd.f32 %v5072, %v5224
  %v5309 = vadd.f32 %v5073, %v5226
  %v5310 = vadd.f32 %v5074, %v5228
  %v5311 = vadd.f32 %v5075, %v5230
  %v5312 = vadd.f32 %v5076, %v5232
  %v5313 = vadd.f32 %v5077, %v5234
  %v5314 = vadd.f32 %v5078, %v5236
  %v5315 = vadd.f32 %v5079, %v5238
  %v5316 = vadd.f32 %v5080, %v5240
  %v5317 = vadd.f32 %v5081, %v5242
  %v5318 = vadd.f32 %v5082, %v5244
  %v5319 = vadd.f32 %v5083, %v5246
  %v5320 = vadd.f32 %v5084, %v5248
  %v5321 = vadd.f32 %v5085, %v5250
  %v5322 = vadd.f32 %v5086, %v5252
  %v5323 = vadd.f32 %v5087, %v5254
  %v5324 = vadd.f32 %v5088, %v5256
  %v5325 = vadd.f32 %v5089, %v5258
  %v5326 = vadd.f32 %v5090, %v5260
  %v5327 = vadd.f32 %v5091, %v5257
  %v5328 = vadd.f32 %v5092, %v5259
  %v5329 = vld [vmem:[#allocation3 + $0x30] sm:$0xfe]
  %v5330 = vld [vmem:[#allocation3 + $0x38] sm:$0xfe]
  %v5331 = vld [vmem:[#allocation3 + $0x40] sm:$0xff]
  %v5332 = vld [vmem:[#allocation3 + $0x48] sm:$0xff]
  %v5333 = vld [vmem:[#allocation3 + $0x50] sm:$0xff]
  %v5334 = vld [vmem:[#allocation3 + $0x58] sm:$0xff]
  %v5335 = vld [vmem:[#allocation3 + $0x60] sm:$0xff]
  %v5336 = vld [vmem:[#allocation3 + $0x68] sm:$0xff]
  %v5337 = vld [vmem:[#allocation3 + $0x70] sm:$0xff]
  %v5338 = vld [vmem:[#allocation3 + $0x78] sm:$0xff]
  %v5339 = vld [vmem:[#allocation3 + $0x80] sm:$0xff]
  %v5340 = vld [vmem:[#allocation3 + $0x88] sm:$0xff]
  %v5341 = vld [vmem:[#allocation3 + $0x90] sm:$0xff]
  %v5342 = vld [vmem:[#allocation3 + $0x98] sm:$0xff]
  %v5343 = vld [vmem:[#allocation3 + $0xa0] sm:$0xff]
  %v5344 = vld [vmem:[#allocation3 + $0xa8] sm:$0xff]
  %v5345 = vld [vmem:[#allocation3 + $0xb0] sm:$0xff]
  %v5346 = vld [vmem:[#allocation3 + $0xb8] sm:$0xff]
  %v5347 = vld [vmem:[#allocation3 + $0xc0] sm:$0xff]
  %v5348 = vld [vmem:[#allocation3 + $0xc8] sm:$0xff]
  %v5349 = vld [vmem:[#allocation3 + $0xd0] sm:$0xff]
  %v5350 = vld [vmem:[#allocation3 + $0xd8] sm:$0xff]
  %v5351 = vld [vmem:[#allocation3 + $0xe0] sm:$0xff]
  %v5352 = vld [vmem:[#allocation3 + $0xe8] sm:$0xff]
  %v5353 = vld [vmem:[#allocation3 + $0xf0] sm:$0xff]
  %v5354 = vld [vmem:[#allocation3 + $0xf8] sm:$0xff]
  %v5355 = vld [vmem:[#allocation3 + $0x100] sm:$0xff]
  %v5356 = vld [vmem:[#allocation3 + $0x108] sm:$0xff]
  %v5357 = vld [vmem:[#allocation3 + $0x110] sm:$0xff]
  %v5358 = vld [vmem:[#allocation3 + $0x118] sm:$0xff]
  %v5359 = vld [vmem:[#allocation3 + $0x120] sm:$0xff]
  %v5360 = vld [vmem:[#allocation3 + $0x128] sm:$0xff]
  %v5361 = vld [vmem:[#allocation3 + $0x130] sm:$0x1]
  %v5362 = vld [vmem:[#allocation3 + $0x138] sm:$0x1]
  %v5363 = vlaneseq
  %v5364 = vshrl.u32 %v5363, 7
  %v5365 = vsub.s32 0, %v5364
  %v5366 = vrot.slane %v3508, %v5365
  %v5367 = vlaneseq
  %v5368 = vshrl.u32 %v5367, 7
  %v5369 = vsub.s32 0, %v5368
  %v5370 = vrot.slane %v3509, %v5369
  %v5371 = vmul.f32 %v5329, %v5366
  %v5372 = vmul.f32 %v5330, %v5370
  %v5373 = vmul.f32 %v5331, %v5366
  %v5374 = vmul.f32 %v5332, %v5370
  %v5375 = vmul.f32 %v5333, %v5366
  %v5376 = vmul.f32 %v5334, %v5370
  %v5377 = vmul.f32 %v5335, %v5366
  %v5378 = vmul.f32 %v5336, %v5370
  %v5379 = vmul.f32 %v5337, %v5366
  %v5380 = vmul.f32 %v5338, %v5370
  %v5381 = vmul.f32 %v5339, %v5366
  %v5382 = vmul.f32 %v5340, %v5370
  %v5383 = vmul.f32 %v5341, %v5366
  %v5384 = vmul.f32 %v5342, %v5370
  %v5385 = vmul.f32 %v5343, %v5366
  %v5386 = vmul.f32 %v5344, %v5370
  %v5387 = vmul.f32 %v5345, %v5366
  %v5388 = vmul.f32 %v5346, %v5370
  %v5389 = vmul.f32 %v5347, %v5366
  %v5390 = vmul.f32 %v5348, %v5370
  %v5391 = vmul.f32 %v5349, %v5366
  %v5392 = vmul.f32 %v5350, %v5370
  %v5393 = vmul.f32 %v5351, %v5366
  %v5394 = vmul.f32 %v5352, %v5370
  %v5395 = vmul.f32 %v5353, %v5366
  %v5396 = vmul.f32 %v5354, %v5370
  %v5397 = vmul.f32 %v5355, %v5366
  %v5398 = vmul.f32 %v5356, %v5370
  %v5399 = vmul.f32 %v5357, %v5366
  %v5400 = vmul.f32 %v5358, %v5370
  %v5401 = vmul.f32 %v5359, %v5366
  %v5402 = vmul.f32 %v5360, %v5370
  %v5403 = vmul.f32 %v5361, %v5366
  %v5404 = vmul.f32 %v5362, %v5370
  %v5405 = vrot.slane %v1855, 7
  %v5406 = vrot.slane %v1859, 7
  %v5407 = vsel %vm4017, %v5405, %v5406
  %v5408 = vrot.slane %v1863, 7
  %v5409 = vsel %vm4017, %v5406, %v5408
  %v5410 = vrot.slane %v1867, 7
  %v5411 = vsel %vm4017, %v5408, %v5410
  %v5412 = vrot.slane %v1871, 7
  %v5413 = vsel %vm4017, %v5410, %v5412
  %v5414 = vrot.slane %v1875, 7
  %v5415 = vsel %vm4017, %v5412, %v5414
  %v5416 = vrot.slane %v1879, 7
  %v5417 = vsel %vm4017, %v5414, %v5416
  %v5418 = vrot.slane %v1883, 7
  %v5419 = vsel %vm4017, %v5416, %v5418
  %v5420 = vrot.slane %v1887, 7
  %v5421 = vsel %vm4017, %v5418, %v5420
  %v5422 = vrot.slane %v1891, 7
  %v5423 = vsel %vm4017, %v5420, %v5422
  %v5424 = vrot.slane %v1895, 7
  %v5425 = vsel %vm4017, %v5422, %v5424
  %v5426 = vrot.slane %v1899, 7
  %v5427 = vsel %vm4017, %v5424, %v5426
  %v5428 = vrot.slane %v1903, 7
  %v5429 = vsel %vm4017, %v5426, %v5428
  %v5430 = vrot.slane %v1907, 7
  %v5431 = vsel %vm4017, %v5428, %v5430
  %v5432 = vrot.slane %v1911, 7
  %v5433 = vsel %vm4017, %v5430, %v5432
  %v5434 = vrot.slane %v1915, 7
  %v5435 = vsel %vm4017, %v5432, %v5434
  %v5453 = vmul.f32 %v5371, %v5405
  %v5454 = vmul.f32 %v5372, %v5405
  %v5455 = vmul.f32 %v5373, %v5407
  %v5456 = vmul.f32 %v5374, %v5407
  %v5457 = vmul.f32 %v5375, %v5409
  %v5458 = vmul.f32 %v5376, %v5409
  %v5459 = vmul.f32 %v5377, %v5411
  %v5460 = vmul.f32 %v5378, %v5411
  %v5461 = vmul.f32 %v5379, %v5413
  %v5462 = vmul.f32 %v5380, %v5413
  %v5463 = vmul.f32 %v5381, %v5415
  %v5464 = vmul.f32 %v5382, %v5415
  %v5465 = vmul.f32 %v5383, %v5417
  %v5466 = vmul.f32 %v5384, %v5417
  %v5467 = vmul.f32 %v5385, %v5419
  %v5468 = vmul.f32 %v5386, %v5419
  %v5469 = vmul.f32 %v5387, %v5421
  %v5470 = vmul.f32 %v5388, %v5421
  %v5471 = vmul.f32 %v5389, %v5423
  %v5472 = vmul.f32 %v5390, %v5423
  %v5473 = vmul.f32 %v5391, %v5425
  %v5474 = vmul.f32 %v5392, %v5425
  %v5475 = vmul.f32 %v5393, %v5427
  %v5476 = vmul.f32 %v5394, %v5427
  %v5477 = vmul.f32 %v5395, %v5429
  %v5478 = vmul.f32 %v5396, %v5429
  %v5479 = vmul.f32 %v5397, %v5431
  %v5480 = vmul.f32 %v5398, %v5431
  %v5481 = vmul.f32 %v5399, %v5433
  %v5482 = vmul.f32 %v5400, %v5433
  %v5483 = vmul.f32 %v5401, %v5435
  %v5484 = vmul.f32 %v5402, %v5435
  %v5485 = vmul.f32 %v5403, %v5434
  %v5486 = vmul.f32 %v5404, %v5434
  %v5521 = vrot.slane %v5453, 2
  %v5522 = vrot.slane %v5454, 2
  %v5523 = vrot.slane %v5455, 2
  %v5524 = vsel %vm4134, %v5521, %v5523
  %v5525 = vrot.slane %v5456, 2
  %v5526 = vsel %vm4134, %v5522, %v5525
  %v5527 = vrot.slane %v5457, 2
  %v5528 = vsel %vm4134, %v5523, %v5527
  %v5529 = vrot.slane %v5458, 2
  %v5530 = vsel %vm4134, %v5525, %v5529
  %v5531 = vrot.slane %v5459, 2
  %v5532 = vsel %vm4134, %v5527, %v5531
  %v5533 = vrot.slane %v5460, 2
  %v5534 = vsel %vm4134, %v5529, %v5533
  %v5535 = vrot.slane %v5461, 2
  %v5536 = vsel %vm4134, %v5531, %v5535
  %v5537 = vrot.slane %v5462, 2
  %v5538 = vsel %vm4134, %v5533, %v5537
  %v5539 = vrot.slane %v5463, 2
  %v5540 = vsel %vm4134, %v5535, %v5539
  %v5541 = vrot.slane %v5464, 2
  %v5542 = vsel %vm4134, %v5537, %v5541
  %v5543 = vrot.slane %v5465, 2
  %v5544 = vsel %vm4134, %v5539, %v5543
  %v5545 = vrot.slane %v5466, 2
  %v5546 = vsel %vm4134, %v5541, %v5545
  %v5547 = vrot.slane %v5467, 2
  %v5548 = vsel %vm4134, %v5543, %v5547
  %v5549 = vrot.slane %v5468, 2
  %v5550 = vsel %vm4134, %v5545, %v5549
  %v5551 = vrot.slane %v5469, 2
  %v5552 = vsel %vm4134, %v5547, %v5551
  %v5553 = vrot.slane %v5470, 2
  %v5554 = vsel %vm4134, %v5549, %v5553
  %v5555 = vrot.slane %v5471, 2
  %v5556 = vsel %vm4134, %v5551, %v5555
  %v5557 = vrot.slane %v5472, 2
  %v5558 = vsel %vm4134, %v5553, %v5557
  %v5559 = vrot.slane %v5473, 2
  %v5560 = vsel %vm4134, %v5555, %v5559
  %v5561 = vrot.slane %v5474, 2
  %v5562 = vsel %vm4134, %v5557, %v5561
  %v5563 = vrot.slane %v5475, 2
  %v5564 = vsel %vm4134, %v5559, %v5563
  %v5565 = vrot.slane %v5476, 2
  %v5566 = vsel %vm4134, %v5561, %v5565
  %v5567 = vrot.slane %v5477, 2
  %v5568 = vsel %vm4134, %v5563, %v5567
  %v5569 = vrot.slane %v5478, 2
  %v5570 = vsel %vm4134, %v5565, %v5569
  %v5571 = vrot.slane %v5479, 2
  %v5572 = vsel %vm4134, %v5567, %v5571
  %v5573 = vrot.slane %v5480, 2
  %v5574 = vsel %vm4134, %v5569, %v5573
  %v5575 = vrot.slane %v5481, 2
  %v5576 = vsel %vm4134, %v5571, %v5575
  %v5577 = vrot.slane %v5482, 2
  %v5578 = vsel %vm4134, %v5573, %v5577
  %v5579 = vrot.slane %v5483, 2
  %v5580 = vsel %vm4134, %v5575, %v5579
  %v5581 = vrot.slane %v5484, 2
  %v5582 = vsel %vm4134, %v5577, %v5581
  %v5583 = vrot.slane %v5485, 2
  %v5584 = vsel %vm4134, %v5579, %v5583
  %v5585 = vrot.slane %v5486, 2
  %v5586 = vsel %vm4134, %v5581, %v5585
  %v5621 = vadd.f32 %v5295, %v5521
  %v5622 = vadd.f32 %v5296, %v5522
  %v5623 = vadd.f32 %v5297, %v5524
  %v5624 = vadd.f32 %v5298, %v5526
  %v5625 = vadd.f32 %v5299, %v5528
  %v5626 = vadd.f32 %v5300, %v5530
  %v5627 = vadd.f32 %v5301, %v5532
  %v5628 = vadd.f32 %v5302, %v5534
  %v5629 = vadd.f32 %v5303, %v5536
  %v5630 = vadd.f32 %v5304, %v5538
  %v5631 = vadd.f32 %v5305, %v5540
  %v5632 = vadd.f32 %v5306, %v5542
  %v5633 = vadd.f32 %v5307, %v5544
  %v5634 = vadd.f32 %v5308, %v5546
  %v5635 = vadd.f32 %v5309, %v5548
  %v5636 = vadd.f32 %v5310, %v5550
  %v5637 = vadd.f32 %v5311, %v5552
  %v5638 = vadd.f32 %v5312, %v5554
  %v5639 = vadd.f32 %v5313, %v5556
  %v5640 = vadd.f32 %v5314, %v5558
  %v5641 = vadd.f32 %v5315, %v5560
  %v5642 = vadd.f32 %v5316, %v5562
  %v5643 = vadd.f32 %v5317, %v5564
  %v5644 = vadd.f32 %v5318, %v5566
  %v5645 = vadd.f32 %v5319, %v5568
  %v5646 = vadd.f32 %v5320, %v5570
  %v5647 = vadd.f32 %v5321, %v5572
  %v5648 = vadd.f32 %v5322, %v5574
  %v5649 = vadd.f32 %v5323, %v5576
  %v5650 = vadd.f32 %v5324, %v5578
  %v5651 = vadd.f32 %v5325, %v5580
  %v5652 = vadd.f32 %v5326, %v5582
  %v5653 = vadd.f32 %v5327, %v5584
  %v5654 = vadd.f32 %v5328, %v5586
  %v5655 = vmul.f32 %v5621, 0.5
  %v5656 = vmul.f32 %v5623, 0.5
  %v5657 = vmul.f32 %v5625, 0.5
  %v5658 = vmul.f32 %v5627, 0.5
  %v5659 = vmul.f32 %v5629, 0.5
  %v5660 = vmul.f32 %v5631, 0.5
  %v5661 = vmul.f32 %v5633, 0.5
  %v5662 = vmul.f32 %v5635, 0.5
  %v5663 = vmul.f32 %v5637, 0.5
  %v5664 = vmul.f32 %v5639, 0.5
  %v5665 = vmul.f32 %v5641, 0.5
  %v5666 = vmul.f32 %v5643, 0.5
  %v5667 = vmul.f32 %v5645, 0.5
  %v5668 = vmul.f32 %v5647, 0.5
  %v5669 = vmul.f32 %v5649, 0.5
  %v5670 = vmul.f32 %v5651, 0.5
  %v5671 = vmul.f32 %v5653, 0.5
  %v5672 = vmul.f32 %v5621, 0.70710677
  %v5673 = vmul.f32 %v5623, 0.70710677
  %v5674 = vmul.f32 %v5625, 0.70710677
  %v5675 = vmul.f32 %v5627, 0.70710677
  %v5676 = vmul.f32 %v5629, 0.70710677
  %v5677 = vmul.f32 %v5631, 0.70710677
  %v5678 = vmul.f32 %v5633, 0.70710677
  %v5679 = vmul.f32 %v5635, 0.70710677
  %v5680 = vmul.f32 %v5637, 0.70710677
  %v5681 = vmul.f32 %v5639, 0.70710677
  %v5682 = vmul.f32 %v5641, 0.70710677
  %v5683 = vmul.f32 %v5643, 0.70710677
  %v5684 = vmul.f32 %v5645, 0.70710677
  %v5685 = vmul.f32 %v5647, 0.70710677
  %v5686 = vmul.f32 %v5649, 0.70710677
  %v5687 = vmul.f32 %v5651, 0.70710677
  %v5688 = vmul.f32 %v5653, 0.70710677
  %vm5689 = vcmp.ge.f32.partialorder %v5672, 0.0
  %vm5690 = vcmp.ge.f32.partialorder %v5673, 0.0
  %vm5691 = vcmp.ge.f32.partialorder %v5674, 0.0
  %vm5692 = vcmp.ge.f32.partialorder %v5675, 0.0
  %vm5693 = vcmp.ge.f32.partialorder %v5676, 0.0
  %vm5694 = vcmp.ge.f32.partialorder %v5677, 0.0
  %vm5695 = vcmp.ge.f32.partialorder %v5678, 0.0
  %vm5696 = vcmp.ge.f32.partialorder %v5679, 0.0
  %vm5697 = vcmp.ge.f32.partialorder %v5680, 0.0
  %vm5698 = vcmp.ge.f32.partialorder %v5681, 0.0
  %vm5699 = vcmp.ge.f32.partialorder %v5682, 0.0
  %vm5700 = vcmp.ge.f32.partialorder %v5683, 0.0
  %vm5701 = vcmp.ge.f32.partialorder %v5684, 0.0
  %vm5702 = vcmp.ge.f32.partialorder %v5685, 0.0
  %vm5703 = vcmp.ge.f32.partialorder %v5686, 0.0
  %vm5704 = vcmp.ge.f32.partialorder %v5687, 0.0
  %vm5705 = vcmp.ge.f32.partialorder %v5688, 0.0
  %v5706 = vsel %vm5689, 1.0, -1.0
  %v5707 = vsel %vm5690, 1.0, -1.0
  %v5708 = vsel %vm5691, 1.0, -1.0
  %v5709 = vsel %vm5692, 1.0, -1.0
  %v5710 = vsel %vm5693, 1.0, -1.0
  %v5711 = vsel %vm5694, 1.0, -1.0
  %v5712 = vsel %vm5695, 1.0, -1.0
  %v5713 = vsel %vm5696, 1.0, -1.0
  %v5714 = vsel %vm5697, 1.0, -1.0
  %v5715 = vsel %vm5698, 1.0, -1.0
  %v5716 = vsel %vm5699, 1.0, -1.0
  %v5717 = vsel %vm5700, 1.0, -1.0
  %v5718 = vsel %vm5701, 1.0, -1.0
  %v5719 = vsel %vm5702, 1.0, -1.0
  %v5720 = vsel %vm5703, 1.0, -1.0
  %v5721 = vsel %vm5704, 1.0, -1.0
  %v5722 = vsel %vm5705, 1.0, -1.0
  %v5723 = vand.u32 2147483647, %v5672
  %v5724 = vand.u32 2147483647, %v5673
  %v5725 = vand.u32 2147483647, %v5674
  %v5726 = vand.u32 2147483647, %v5675
  %v5727 = vand.u32 2147483647, %v5676
  %v5728 = vand.u32 2147483647, %v5677
  %v5729 = vand.u32 2147483647, %v5678
  %v5730 = vand.u32 2147483647, %v5679
  %v5731 = vand.u32 2147483647, %v5680
  %v5732 = vand.u32 2147483647, %v5681
  %v5733 = vand.u32 2147483647, %v5682
  %v5734 = vand.u32 2147483647, %v5683
  %v5735 = vand.u32 2147483647, %v5684
  %v5736 = vand.u32 2147483647, %v5685
  %v5737 = vand.u32 2147483647, %v5686
  %v5738 = vand.u32 2147483647, %v5687
  %v5739 = vand.u32 2147483647, %v5688
  %v5740 = vmul.f32 %v5723, 0.3275911
  %v5741 = vmul.f32 %v5724, 0.3275911
  %v5742 = vmul.f32 %v5725, 0.3275911
  %v5743 = vmul.f32 %v5726, 0.3275911
  %v5744 = vmul.f32 %v5727, 0.3275911
  %v5745 = vmul.f32 %v5728, 0.3275911
  %v5746 = vmul.f32 %v5729, 0.3275911
  %v5747 = vmul.f32 %v5730, 0.3275911
  %v5748 = vmul.f32 %v5731, 0.3275911
  %v5749 = vmul.f32 %v5732, 0.3275911
  %v5750 = vmul.f32 %v5733, 0.3275911
  %v5751 = vmul.f32 %v5734, 0.3275911
  %v5752 = vmul.f32 %v5735, 0.3275911
  %v5753 = vmul.f32 %v5736, 0.3275911
  %v5754 = vmul.f32 %v5737, 0.3275911
  %v5755 = vmul.f32 %v5738, 0.3275911
  %v5756 = vmul.f32 %v5739, 0.3275911
  %v5757 = vadd.f32 %v5740, 1.0
  %v5758 = vadd.f32 %v5741, 1.0
  %v5759 = vadd.f32 %v5742, 1.0
  %v5760 = vadd.f32 %v5743, 1.0
  %v5761 = vadd.f32 %v5744, 1.0
  %v5762 = vadd.f32 %v5745, 1.0
  %v5763 = vadd.f32 %v5746, 1.0
  %v5764 = vadd.f32 %v5747, 1.0
  %v5765 = vadd.f32 %v5748, 1.0
  %v5766 = vadd.f32 %v5749, 1.0
  %v5767 = vadd.f32 %v5750, 1.0
  %v5768 = vadd.f32 %v5751, 1.0
  %v5769 = vadd.f32 %v5752, 1.0
  %v5770 = vadd.f32 %v5753, 1.0
  %v5771 = vadd.f32 %v5754, 1.0
  %v5772 = vadd.f32 %v5755, 1.0
  %v5773 = vadd.f32 %v5756, 1.0
  %v5774 = vrcp.pop %v5757
  %v5775 = vmul.f32 1.0, %v5774
  %v5776 = vrcp.pop %v5758
  %v5777 = vmul.f32 1.0, %v5776
  %v5778 = vrcp.pop %v5759
  %v5779 = vmul.f32 1.0, %v5778
  %v5780 = vrcp.pop %v5760
  %v5781 = vmul.f32 1.0, %v5780
  %v5782 = vrcp.pop %v5761
  %v5783 = vmul.f32 1.0, %v5782
  %v5784 = vrcp.pop %v5762
  %v5785 = vmul.f32 1.0, %v5784
  %v5786 = vrcp.pop %v5763
  %v5787 = vmul.f32 1.0, %v5786
  %v5788 = vrcp.pop %v5764
  %v5789 = vmul.f32 1.0, %v5788
  %v5790 = vrcp.pop %v5765
  %v5791 = vmul.f32 1.0, %v5790
  %v5792 = vrcp.pop %v5766
  %v5793 = vmul.f32 1.0, %v5792
  %v5794 = vrcp.pop %v5767
  %v5795 = vmul.f32 1.0, %v5794
  %v5796 = vrcp.pop %v5768
  %v5797 = vmul.f32 1.0, %v5796
  %v5798 = vrcp.pop %v5769
  %v5799 = vmul.f32 1.0, %v5798
  %v5800 = vrcp.pop %v5770
  %v5801 = vmul.f32 1.0, %v5800
  %v5802 = vrcp.pop %v5771
  %v5803 = vmul.f32 1.0, %v5802
  %v5804 = vrcp.pop %v5772
  %v5805 = vmul.f32 1.0, %v5804
  %v5806 = vrcp.pop %v5773
  %v5807 = vmul.f32 1.0, %v5806
  %v5808 = vmul.f32 %v5775, 1.0614054
  %v5809 = vmul.f32 %v5777, 1.0614054
  %v5810 = vmul.f32 %v5779, 1.0614054
  %v5811 = vmul.f32 %v5781, 1.0614054
  %v5812 = vmul.f32 %v5783, 1.0614054
  %v5813 = vmul.f32 %v5785, 1.0614054
  %v5814 = vmul.f32 %v5787, 1.0614054
  %v5815 = vmul.f32 %v5789, 1.0614054
  %v5816 = vmul.f32 %v5791, 1.0614054
  %v5817 = vmul.f32 %v5793, 1.0614054
  %v5818 = vmul.f32 %v5795, 1.0614054
  %v5819 = vmul.f32 %v5797, 1.0614054
  %v5820 = vmul.f32 %v5799, 1.0614054
  %v5821 = vmul.f32 %v5801, 1.0614054
  %v5822 = vmul.f32 %v5803, 1.0614054
  %v5823 = vmul.f32 %v5805, 1.0614054
  %v5824 = vmul.f32 %v5807, 1.0614054
  %v5825 = vadd.f32 %v5808, -1.4531521
  %v5826 = vadd.f32 %v5809, -1.4531521
  %v5827 = vadd.f32 %v5810, -1.4531521
  %v5828 = vadd.f32 %v5811, -1.4531521
  %v5829 = vadd.f32 %v5812, -1.4531521
  %v5830 = vadd.f32 %v5813, -1.4531521
  %v5831 = vadd.f32 %v5814, -1.4531521
  %v5832 = vadd.f32 %v5815, -1.4531521
  %v5833 = vadd.f32 %v5816, -1.4531521
  %v5834 = vadd.f32 %v5817, -1.4531521
  %v5835 = vadd.f32 %v5818, -1.4531521
  %v5836 = vadd.f32 %v5819, -1.4531521
  %v5837 = vadd.f32 %v5820, -1.4531521
  %v5838 = vadd.f32 %v5821, -1.4531521
  %v5839 = vadd.f32 %v5822, -1.4531521
  %v5840 = vadd.f32 %v5823, -1.4531521
  %v5841 = vadd.f32 %v5824, -1.4531521
  %v5842 = vmul.f32 %v5825, %v5775
  %v5843 = vmul.f32 %v5826, %v5777
  %v5844 = vmul.f32 %v5827, %v5779
  %v5845 = vmul.f32 %v5828, %v5781
  %v5846 = vmul.f32 %v5829, %v5783
  %v5847 = vmul.f32 %v5830, %v5785
  %v5848 = vmul.f32 %v5831, %v5787
  %v5849 = vmul.f32 %v5832, %v5789
  %v5850 = vmul.f32 %v5833, %v5791
  %v5851 = vmul.f32 %v5834, %v5793
  %v5852 = vmul.f32 %v5835, %v5795
  %v5853 = vmul.f32 %v5836, %v5797
  %v5854 = vmul.f32 %v5837, %v5799
  %v5855 = vmul.f32 %v5838, %v5801
  %v5856 = vmul.f32 %v5839, %v5803
  %v5857 = vmul.f32 %v5840, %v5805
  %v5858 = vmul.f32 %v5841, %v5807
  %v5859 = vadd.f32 %v5842, 1.4214138
  %v5860 = vadd.f32 %v5843, 1.4214138
  %v5861 = vadd.f32 %v5844, 1.4214138
  %v5862 = vadd.f32 %v5845, 1.4214138
  %v5863 = vadd.f32 %v5846, 1.4214138
  %v5864 = vadd.f32 %v5847, 1.4214138
  %v5865 = vadd.f32 %v5848, 1.4214138
  %v5866 = vadd.f32 %v5849, 1.4214138
  %v5867 = vadd.f32 %v5850, 1.4214138
  %v5868 = vadd.f32 %v5851, 1.4214138
  %v5869 = vadd.f32 %v5852, 1.4214138
  %v5870 = vadd.f32 %v5853, 1.4214138
  %v5871 = vadd.f32 %v5854, 1.4214138
  %v5872 = vadd.f32 %v5855, 1.4214138
  %v5873 = vadd.f32 %v5856, 1.4214138
  %v5874 = vadd.f32 %v5857, 1.4214138
  %v5875 = vadd.f32 %v5858, 1.4214138
  %v5876 = vmul.f32 %v5859, %v5775
  %v5877 = vmul.f32 %v5860, %v5777
  %v5878 = vmul.f32 %v5861, %v5779
  %v5879 = vmul.f32 %v5862, %v5781
  %v5880 = vmul.f32 %v5863, %v5783
  %v5881 = vmul.f32 %v5864, %v5785
  %v5882 = vmul.f32 %v5865, %v5787
  %v5883 = vmul.f32 %v5866, %v5789
  %v5884 = vmul.f32 %v5867, %v5791
  %v5885 = vmul.f32 %v5868, %v5793
  %v5886 = vmul.f32 %v5869, %v5795
  %v5887 = vmul.f32 %v5870, %v5797
  %v5888 = vmul.f32 %v5871, %v5799
  %v5889 = vmul.f32 %v5872, %v5801
  %v5890 = vmul.f32 %v5873, %v5803
  %v5891 = vmul.f32 %v5874, %v5805
  %v5892 = vmul.f32 %v5875, %v5807
  %v5893 = vadd.f32 %v5876, -0.28449672
  %v5894 = vadd.f32 %v5877, -0.28449672
  %v5895 = vadd.f32 %v5878, -0.28449672
  %v5896 = vadd.f32 %v5879, -0.28449672
  %v5897 = vadd.f32 %v5880, -0.28449672
  %v5898 = vadd.f32 %v5881, -0.28449672
  %v5899 = vadd.f32 %v5882, -0.28449672
  %v5900 = vadd.f32 %v5883, -0.28449672
  %v5901 = vadd.f32 %v5884, -0.28449672
  %v5902 = vadd.f32 %v5885, -0.28449672
  %v5903 = vadd.f32 %v5886, -0.28449672
  %v5904 = vadd.f32 %v5887, -0.28449672
  %v5905 = vadd.f32 %v5888, -0.28449672
  %v5906 = vadd.f32 %v5889, -0.28449672
  %v5907 = vadd.f32 %v5890, -0.28449672
  %v5908 = vadd.f32 %v5891, -0.28449672
  %v5909 = vadd.f32 %v5892, -0.28449672
  %v5910 = vmul.f32 %v5893, %v5775
  %v5911 = vmul.f32 %v5894, %v5777
  %v5912 = vmul.f32 %v5895, %v5779
  %v5913 = vmul.f32 %v5896, %v5781
  %v5914 = vmul.f32 %v5897, %v5783
  %v5915 = vmul.f32 %v5898, %v5785
  %v5916 = vmul.f32 %v5899, %v5787
  %v5917 = vmul.f32 %v5900, %v5789
  %v5918 = vmul.f32 %v5901, %v5791
  %v5919 = vmul.f32 %v5902, %v5793
  %v5920 = vmul.f32 %v5903, %v5795
  %v5921 = vmul.f32 %v5904, %v5797
  %v5922 = vmul.f32 %v5905, %v5799
  %v5923 = vmul.f32 %v5906, %v5801
  %v5924 = vmul.f32 %v5907, %v5803
  %v5925 = vmul.f32 %v5908, %v5805
  %v5926 = vmul.f32 %v5909, %v5807
  %v5927 = vadd.f32 %v5910, 0.2548296
  %v5928 = vadd.f32 %v5911, 0.2548296
  %v5929 = vadd.f32 %v5912, 0.2548296
  %v5930 = vadd.f32 %v5913, 0.2548296
  %v5931 = vadd.f32 %v5914, 0.2548296
  %v5932 = vadd.f32 %v5915, 0.2548296
  %v5933 = vadd.f32 %v5916, 0.2548296
  %v5934 = vadd.f32 %v5917, 0.2548296
  %v5935 = vadd.f32 %v5918, 0.2548296
  %v5936 = vadd.f32 %v5919, 0.2548296
  %v5937 = vadd.f32 %v5920, 0.2548296
  %v5938 = vadd.f32 %v5921, 0.2548296
  %v5939 = vadd.f32 %v5922, 0.2548296
  %v5940 = vadd.f32 %v5923, 0.2548296
  %v5941 = vadd.f32 %v5924, 0.2548296
  %v5942 = vadd.f32 %v5925, 0.2548296
  %v5943 = vadd.f32 %v5926, 0.2548296
  %v5944 = vmul.f32 %v5927, %v5775
  %v5945 = vmul.f32 %v5928, %v5777
  %v5946 = vmul.f32 %v5929, %v5779
  %v5947 = vmul.f32 %v5930, %v5781
  %v5948 = vmul.f32 %v5931, %v5783
  %v5949 = vmul.f32 %v5932, %v5785
  %v5950 = vmul.f32 %v5933, %v5787
  %v5951 = vmul.f32 %v5934, %v5789
  %v5952 = vmul.f32 %v5935, %v5791
  %v5953 = vmul.f32 %v5936, %v5793
  %v5954 = vmul.f32 %v5937, %v5795
  %v5955 = vmul.f32 %v5938, %v5797
  %v5956 = vmul.f32 %v5939, %v5799
  %v5957 = vmul.f32 %v5940, %v5801
  %v5958 = vmul.f32 %v5941, %v5803
  %v5959 = vmul.f32 %v5942, %v5805
  %v5960 = vmul.f32 %v5943, %v5807
  %v5961 = vsub.f32 0.0, %v5723
  %v5962 = vsub.f32 0.0, %v5724
  %v5963 = vsub.f32 0.0, %v5725
  %v5964 = vsub.f32 0.0, %v5726
  %v5965 = vsub.f32 0.0, %v5727
  %v5966 = vsub.f32 0.0, %v5728
  %v5967 = vsub.f32 0.0, %v5729
  %v5968 = vsub.f32 0.0, %v5730
  %v5969 = vsub.f32 0.0, %v5731
  %v5970 = vsub.f32 0.0, %v5732
  %v5971 = vsub.f32 0.0, %v5733
  %v5972 = vsub.f32 0.0, %v5734
  %v5973 = vsub.f32 0.0, %v5735
  %v5974 = vsub.f32 0.0, %v5736
  %v5975 = vsub.f32 0.0, %v5737
  %v5976 = vsub.f32 0.0, %v5738
  %v5977 = vsub.f32 0.0, %v5739
  %v5978 = vmul.f32 %v5961, %v5723
  %v5979 = vmul.f32 %v5962, %v5724
  %v5980 = vmul.f32 %v5963, %v5725
  %v5981 = vmul.f32 %v5964, %v5726
  %v5982 = vmul.f32 %v5965, %v5727
  %v5983 = vmul.f32 %v5966, %v5728
  %v5984 = vmul.f32 %v5967, %v5729
  %v5985 = vmul.f32 %v5968, %v5730
  %v5986 = vmul.f32 %v5969, %v5731
  %v5987 = vmul.f32 %v5970, %v5732
  %v5988 = vmul.f32 %v5971, %v5733
  %v5989 = vmul.f32 %v5972, %v5734
  %v5990 = vmul.f32 %v5973, %v5735
  %v5991 = vmul.f32 %v5974, %v5736
  %v5992 = vmul.f32 %v5975, %v5737
  %v5993 = vmul.f32 %v5976, %v5738
  %v5994 = vmul.f32 %v5977, %v5739
  %v5995 = vmul.f32 %v5978, 1.442695
  %v5996 = vpow.pop %v5995
  %v5997 = vmul.f32 %v5979, 1.442695
  %v5998 = vpow.pop %v5997
  %v5999 = vmul.f32 %v5980, 1.442695
  %v6000 = vpow.pop %v5999
  %v6001 = vmul.f32 %v5981, 1.442695
  %v6002 = vpow.pop %v6001
  %v6003 = vmul.f32 %v5982, 1.442695
  %v6004 = vpow.pop %v6003
  %v6005 = vmul.f32 %v5983, 1.442695
  %v6006 = vpow.pop %v6005
  %v6007 = vmul.f32 %v5984, 1.442695
  %v6008 = vpow.pop %v6007
  %v6009 = vmul.f32 %v5985, 1.442695
  %v6010 = vpow.pop %v6009
  %v6011 = vmul.f32 %v5986, 1.442695
  %v6012 = vpow.pop %v6011
  %v6013 = vmul.f32 %v5987, 1.442695
  %v6014 = vpow.pop %v6013
  %v6015 = vmul.f32 %v5988, 1.442695
  %v6016 = vpow.pop %v6015
  %v6017 = vmul.f32 %v5989, 1.442695
  %v6018 = vpow.pop %v6017
  %v6019 = vmul.f32 %v5990, 1.442695
  %v6020 = vpow.pop %v6019
  %v6021 = vmul.f32 %v5991, 1.442695
  %v6022 = vpow.pop %v6021
  %v6023 = vmul.f32 %v5992, 1.442695
  %v6024 = vpow.pop %v6023
  %v6025 = vmul.f32 %v5993, 1.442695
  %v6026 = vpow.pop %v6025
  %v6027 = vmul.f32 %v5994, 1.442695
  %v6028 = vpow.pop %v6027
  %v6029 = vmul.f32 %v5944, %v5996
  %v6030 = vmul.f32 %v5945, %v5998
  %v6031 = vmul.f32 %v5946, %v6000
  %v6032 = vmul.f32 %v5947, %v6002
  %v6033 = vmul.f32 %v5948, %v6004
  %v6034 = vmul.f32 %v5949, %v6006
  %v6035 = vmul.f32 %v5950, %v6008
  %v6036 = vmul.f32 %v5951, %v6010
  %v6037 = vmul.f32 %v5952, %v6012
  %v6038 = vmul.f32 %v5953, %v6014
  %v6039 = vmul.f32 %v5954, %v6016
  %v6040 = vmul.f32 %v5955, %v6018
  %v6041 = vmul.f32 %v5956, %v6020
  %v6042 = vmul.f32 %v5957, %v6022
  %v6043 = vmul.f32 %v5958, %v6024
  %v6044 = vmul.f32 %v5959, %v6026
  %v6045 = vmul.f32 %v5960, %v6028
  %v6046 = vsub.f32 1.0, %v6029
  %v6047 = vsub.f32 1.0, %v6030
  %v6048 = vsub.f32 1.0, %v6031
  %v6049 = vsub.f32 1.0, %v6032
  %v6050 = vsub.f32 1.0, %v6033
  %v6051 = vsub.f32 1.0, %v6034
  %v6052 = vsub.f32 1.0, %v6035
  %v6053 = vsub.f32 1.0, %v6036
  %v6054 = vsub.f32 1.0, %v6037
  %v6055 = vsub.f32 1.0, %v6038
  %v6056 = vsub.f32 1.0, %v6039
  %v6057 = vsub.f32 1.0, %v6040
  %v6058 = vsub.f32 1.0, %v6041
  %v6059 = vsub.f32 1.0, %v6042
  %v6060 = vsub.f32 1.0, %v6043
  %v6061 = vsub.f32 1.0, %v6044
  %v6062 = vsub.f32 1.0, %v6045
  %v6063 = vmul.f32 %v5706, %v6046
  %v6064 = vmul.f32 %v5707, %v6047
  %v6065 = vmul.f32 %v5708, %v6048
  %v6066 = vmul.f32 %v5709, %v6049
  %v6067 = vmul.f32 %v5710, %v6050
  %v6068 = vmul.f32 %v5711, %v6051
  %v6069 = vmul.f32 %v5712, %v6052
  %v6070 = vmul.f32 %v5713, %v6053
  %v6071 = vmul.f32 %v5714, %v6054
  %v6072 = vmul.f32 %v5715, %v6055
  %v6073 = vmul.f32 %v5716, %v6056
  %v6074 = vmul.f32 %v5717, %v6057
  %v6075 = vmul.f32 %v5718, %v6058
  %v6076 = vmul.f32 %v5719, %v6059
  %v6077 = vmul.f32 %v5720, %v6060
  %v6078 = vmul.f32 %v5721, %v6061
  %v6079 = vmul.f32 %v5722, %v6062
  %v6080 = vadd.f32 %v6063, 1.0
  %v6081 = vadd.f32 %v6064, 1.0
  %v6082 = vadd.f32 %v6065, 1.0
  %v6083 = vadd.f32 %v6066, 1.0
  %v6084 = vadd.f32 %v6067, 1.0
  %v6085 = vadd.f32 %v6068, 1.0
  %v6086 = vadd.f32 %v6069, 1.0
  %v6087 = vadd.f32 %v6070, 1.0
  %v6088 = vadd.f32 %v6071, 1.0
  %v6089 = vadd.f32 %v6072, 1.0
  %v6090 = vadd.f32 %v6073, 1.0
  %v6091 = vadd.f32 %v6074, 1.0
  %v6092 = vadd.f32 %v6075, 1.0
  %v6093 = vadd.f32 %v6076, 1.0
  %v6094 = vadd.f32 %v6077, 1.0
  %v6095 = vadd.f32 %v6078, 1.0
  %v6096 = vadd.f32 %v6079, 1.0
  %v6097 = vmul.f32 %v5655, %v6080
  %v6098 = vmul.f32 %v5656, %v6081
  %v6099 = vmul.f32 %v5657, %v6082
  %v6100 = vmul.f32 %v5658, %v6083
  %v6101 = vmul.f32 %v5659, %v6084
  %v6102 = vmul.f32 %v5660, %v6085
  %v6103 = vmul.f32 %v5661, %v6086
  %v6104 = vmul.f32 %v5662, %v6087
  %v6105 = vmul.f32 %v5663, %v6088
  %v6106 = vmul.f32 %v5664, %v6089
  %v6107 = vmul.f32 %v5665, %v6090
  %v6108 = vmul.f32 %v5666, %v6091
  %v6109 = vmul.f32 %v5667, %v6092
  %v6110 = vmul.f32 %v5668, %v6093
  %v6111 = vmul.f32 %v5669, %v6094
  %v6112 = vmul.f32 %v5670, %v6095
  %v6113 = vmul.f32 %v5671, %v6096
  %v6114 = vmul.f32 %v6097, %v5622
  %v6115 = vmul.f32 %v6098, %v5624
  %v6116 = vmul.f32 %v6099, %v5626
  %v6117 = vmul.f32 %v6100, %v5628
  %v6118 = vmul.f32 %v6101, %v5630
  %v6119 = vmul.f32 %v6102, %v5632
  %v6120 = vmul.f32 %v6103, %v5634
  %v6121 = vmul.f32 %v6104, %v5636
  %v6122 = vmul.f32 %v6105, %v5638
  %v6123 = vmul.f32 %v6106, %v5640
  %v6124 = vmul.f32 %v6107, %v5642
  %v6125 = vmul.f32 %v6108, %v5644
  %v6126 = vmul.f32 %v6109, %v5646
  %v6127 = vmul.f32 %v6110, %v5648
  %v6128 = vmul.f32 %v6111, %v5650
  %v6129 = vmul.f32 %v6112, %v5652
  %v6130 = vmul.f32 %v6113, %v5654
  %v6131 = vld [vmem:[%s9] sm:$0xff]
  %v6132 = vld [vmem:[%s9 + $0x8] sm:$0xff]
  %v6133 = vld [vmem:[%s9 + $0x10] sm:$0xff]
  %v6134 = vld [vmem:[%s9 + $0x18] sm:$0xff]
  %v6135 = vld [vmem:[%s9 + $0x20] sm:$0xff]
  %v6136 = vld [vmem:[%s9 + $0x28] sm:$0xff]
  %v6137 = vld [vmem:[%s9 + $0x30] sm:$0xff]
  %v6138 = vld [vmem:[%s9 + $0x38] sm:$0xff]
  %v6139 = vld [vmem:[%s9 + $0x40] sm:$0xff]
  %v6140 = vld [vmem:[%s9 + $0x48] sm:$0xff]
  %v6141 = vld [vmem:[%s9 + $0x50] sm:$0xff]
  %v6142 = vld [vmem:[%s9 + $0x58] sm:$0xff]
  %v6143 = vld [vmem:[%s9 + $0x60] sm:$0xff]
  %v6144 = vld [vmem:[%s9 + $0x68] sm:$0xff]
  %v6145 = vld [vmem:[%s9 + $0x70] sm:$0xff]
  %v6146 = vld [vmem:[%s9 + $0x78] sm:$0xff]
  %v6164 = vrot.slane %v6114, 7
  %v6165 = vrot.slane %v6115, 7
  %v6166 = vsel %vm4017, %v6164, %v6165
  %v6167 = vrot.slane %v6116, 7
  %v6168 = vsel %vm4017, %v6165, %v6167
  %v6169 = vrot.slane %v6117, 7
  %v6170 = vsel %vm4017, %v6167, %v6169
  %v6171 = vrot.slane %v6118, 7
  %v6172 = vsel %vm4017, %v6169, %v6171
  %v6173 = vrot.slane %v6119, 7
  %v6174 = vsel %vm4017, %v6171, %v6173
  %v6175 = vrot.slane %v6120, 7
  %v6176 = vsel %vm4017, %v6173, %v6175
  %v6177 = vrot.slane %v6121, 7
  %v6178 = vsel %vm4017, %v6175, %v6177
  %v6179 = vrot.slane %v6122, 7
  %v6180 = vsel %vm4017, %v6177, %v6179
  %v6181 = vrot.slane %v6123, 7
  %v6182 = vsel %vm4017, %v6179, %v6181
  %v6183 = vrot.slane %v6124, 7
  %v6184 = vsel %vm4017, %v6181, %v6183
  %v6185 = vrot.slane %v6125, 7
  %v6186 = vsel %vm4017, %v6183, %v6185
  %v6187 = vrot.slane %v6126, 7
  %v6188 = vsel %vm4017, %v6185, %v6187
  %v6189 = vrot.slane %v6127, 7
  %v6190 = vsel %vm4017, %v6187, %v6189
  %v6191 = vrot.slane %v6128, 7
  %v6192 = vsel %vm4017, %v6189, %v6191
  %v6193 = vrot.slane %v6129, 7
  %v6194 = vsel %vm4017, %v6191, %v6193
  %v6195 = vrot.slane %v6130, 7
  %v6196 = vsel %vm4017, %v6193, %v6195
  %6213 = vmatprep.subr.mxu0 0.0
  %6214 = vmatpush1.msra.mxu0 %v6131
  %6215 = vmatprep.subr.mxu0 0.0
  %6216 = vmatpush1.msra.mxu0 %v6132
  %6217 = vmatprep.subr.mxu0 0.0
  %6218 = vmatpush1.msra.mxu0 %v6133
  %6219 = vmatprep.subr.mxu0 0.0
  %6220 = vmatpush1.msra.mxu0 %v6134
  %6221 = vmatprep.subr.mxu0 0.0
  %6222 = vmatpush1.msra.mxu0 %v6135
  %6223 = vmatprep.subr.mxu0 0.0
  %6224 = vmatpush1.msra.mxu0 %v6136
  %6225 = vmatprep.subr.mxu0 0.0
  %6226 = vmatpush1.msra.mxu0 %v6137
  %6227 = vmatprep.subr.mxu0 0.0
  %6228 = vmatpush1.msra.mxu0 %v6138
  %6229 = vmatprep.subr.mxu0 0.0
  %6230 = vmatpush1.msra.mxu0 %v6139
  %6231 = vmatprep.subr.mxu0 0.0
  %6232 = vmatpush1.msra.mxu0 %v6140
  %6233 = vmatprep.subr.mxu0 0.0
  %6234 = vmatpush1.msra.mxu0 %v6141
  %6235 = vmatprep.subr.mxu0 0.0
  %6236 = vmatpush1.msra.mxu0 %v6142
  %6237 = vmatprep.subr.mxu0 0.0
  %6238 = vmatpush1.msra.mxu0 %v6143
  %6239 = vmatprep.subr.mxu0 0.0
  %6240 = vmatpush1.msra.mxu0 %v6144
  %6241 = vmatprep.subr.mxu0 0.0
  %6242 = vmatpush1.msra.mxu0 %v6145
  %6243 = vmatprep.subr.mxu0 0.0
  %6244 = vmatpush1.msra.mxu0 %v6146
  %6245 = vmatprep.subr.mxu0 0.0
  %6246 = vmatpush1.msra.mxu0 0.0
  %6247 = vmatprep.subr.mxu0 0.0
  %6248 = vmatpush1.msra.mxu0 0.0
  %6249 = vmatprep.subr.mxu0 0.0
  %6250 = vmatpush1.msra.mxu0 0.0
  %6251 = vmatprep.subr.mxu0 0.0
  %6252 = vmatpush1.msra.mxu0 0.0
  %6253 = vmatprep.subr.mxu0 0.0
  %6254 = vmatpush1.msra.mxu0 0.0
  %6255 = vmatprep.subr.mxu0 0.0
  %6256 = vmatpush1.msra.mxu0 0.0
  %6257 = vmatprep.subr.mxu0 0.0
  %6258 = vmatpush1.msra.mxu0 0.0
  %6259 = vmatprep.subr.mxu0 0.0
  %6260 = vmatpush1.msra.mxu0 0.0
  %6261 = vmatprep.subr.mxu0 0.0
  %6262 = vmatpush1.msra.mxu0 0.0
  %6263 = vmatprep.subr.mxu0 0.0
  %6264 = vmatpush1.msra.mxu0 0.0
  %6265 = vmatprep.subr.mxu0 0.0
  %6266 = vmatpush1.msra.mxu0 0.0
  %6267 = vmatprep.subr.mxu0 0.0
  %6268 = vmatpush1.msra.mxu0 0.0
  %6269 = vmatprep.subr.mxu0 0.0
  %6270 = vmatpush1.msra.mxu0 0.0
  %6271 = vmatprep.subr.mxu0 0.0
  %6272 = vmatpush1.msra.mxu0 0.0
  %6273 = vmatprep.subr.mxu0 0.0
  %6274 = vmatpush1.msra.mxu0 0.0
  %6275 = vmatprep.subr.mxu0 0.0
  %6276 = vmatpush1.msra.mxu0 0.0
  %6277 = vmatprep.mubr.f32.mxu0 0.0
  %6278 = vmatmul.mubr.f32.gmra.mrb[0].mxu0 %v6166
  %v6279 = vpop.f32.mrb[0].mxu0
  %v6280 = vadd.f32 0.0, %v6279
  %v6281 = vpop.f32.mrb[0].mxu0
  %6282 = vmatprep.mubr.f32.mxu0 0.0
  %6283 = vmatmul.mubr.f32.gmra.mrb[0].mxu0 %v6168
  %v6284 = vpop.f32.mrb[0].mxu0
  %v6285 = vadd.f32 0.0, %v6284
  %v6286 = vpop.f32.mrb[0].mxu0
  %6287 = vmatprep.mubr.f32.mxu0 0.0
  %6288 = vmatmul.mubr.f32.gmra.mrb[0].mxu0 %v6170
  %v6289 = vpop.f32.mrb[0].mxu0
  %v6290 = vadd.f32 0.0, %v6289
  %v6291 = vpop.f32.mrb[0].mxu0
  %6292 = vmatprep.mubr.f32.mxu0 0.0
  %6293 = vmatmul.mubr.f32.gmra.mrb[0].mxu0 %v6172
  %v6294 = vpop.f32.mrb[0].mxu0
  %v6295 = vadd.f32 0.0, %v6294
  %v6296 = vpop.f32.mrb[0].mxu0
  %6297 = vmatprep.mubr.f32.mxu0 0.0
  %6298 = vmatmul.mubr.f32.gmra.mrb[0].mxu0 %v6174
  %v6299 = vpop.f32.mrb[0].mxu0
  %v6300 = vadd.f32 0.0, %v6299
  %v6301 = vpop.f32.mrb[0].mxu0
  %6302 = vmatprep.mubr.f32.mxu0 0.0
  %6303 = vmatmul.mubr.f32.gmra.mrb[0].mxu0 %v6176
  %v6304 = vpop.f32.mrb[0].mxu0
  %v6305 = vadd.f32 0.0, %v6304
  %v6306 = vpop.f32.mrb[0].mxu0
  %6307 = vmatprep.mubr.f32.mxu0 0.0
  %6308 = vmatmul.mubr.f32.gmra.mrb[0].mxu0 %v6178
  %v6309 = vpop.f32.mrb[0].mxu0
  %v6310 = vadd.f32 0.0, %v6309
  %v6311 = vpop.f32.mrb[0].mxu0
  %6312 = vmatprep.mubr.f32.mxu0 0.0
  %6313 = vmatmul.mubr.f32.gmra.mrb[0].mxu0 %v6180
  %v6314 = vpop.f32.mrb[0].mxu0
  %v6315 = vadd.f32 0.0, %v6314
  %v6316 = vpop.f32.mrb[0].mxu0
  %6317 = vmatprep.mubr.f32.mxu0 0.0
  %6318 = vmatmul.mubr.f32.gmra.mrb[0].mxu0 %v6182
  %v6319 = vpop.f32.mrb[0].mxu0
  %v6320 = vadd.f32 0.0, %v6319
  %v6321 = vpop.f32.mrb[0].mxu0
  %6322 = vmatprep.mubr.f32.mxu0 0.0
  %6323 = vmatmul.mubr.f32.gmra.mrb[0].mxu0 %v6184
  %v6324 = vpop.f32.mrb[0].mxu0
  %v6325 = vadd.f32 0.0, %v6324
  %v6326 = vpop.f32.mrb[0].mxu0
  %6327 = vmatprep.mubr.f32.mxu0 0.0
  %6328 = vmatmul.mubr.f32.gmra.mrb[0].mxu0 %v6186
  %v6329 = vpop.f32.mrb[0].mxu0
  %v6330 = vadd.f32 0.0, %v6329
  %v6331 = vpop.f32.mrb[0].mxu0
  %6332 = vmatprep.mubr.f32.mxu0 0.0
  %6333 = vmatmul.mubr.f32.gmra.mrb[0].mxu0 %v6188
  %v6334 = vpop.f32.mrb[0].mxu0
  %v6335 = vadd.f32 0.0, %v6334
  %v6336 = vpop.f32.mrb[0].mxu0
  %6337 = vmatprep.mubr.f32.mxu0 0.0
  %6338 = vmatmul.mubr.f32.gmra.mrb[0].mxu0 %v6190
  %v6339 = vpop.f32.mrb[0].mxu0
  %v6340 = vadd.f32 0.0, %v6339
  %v6341 = vpop.f32.mrb[0].mxu0
  %6342 = vmatprep.mubr.f32.mxu0 0.0
  %6343 = vmatmul.mubr.f32.gmra.mrb[0].mxu0 %v6192
  %v6344 = vpop.f32.mrb[0].mxu0
  %v6345 = vadd.f32 0.0, %v6344
  %v6346 = vpop.f32.mrb[0].mxu0
  %6347 = vmatprep.mubr.f32.mxu0 0.0
  %6348 = vmatmul.mubr.f32.gmra.mrb[0].mxu0 %v6194
  %v6349 = vpop.f32.mrb[0].mxu0
  %v6350 = vadd.f32 0.0, %v6349
  %v6351 = vpop.f32.mrb[0].mxu0
  %6352 = vmatprep.mubr.f32.mxu0 0.0
  %6353 = vmatmul.mubr.f32.gmra.mrb[0].mxu0 %v6196
  %v6354 = vpop.f32.mrb[0].mxu0
  %v6355 = vadd.f32 0.0, %v6354
  %v6356 = vpop.f32.mrb[0].mxu0
  %6357 = vdwg.mxu0
  %v6358 = vadd.f32 %v3025, %v6280
  %v6359 = vadd.f32 %v3026, %v6285
  %v6360 = vadd.f32 %v3027, %v6290
  %v6361 = vadd.f32 %v3028, %v6295
  %v6362 = vadd.f32 %v3029, %v6300
  %v6363 = vadd.f32 %v3030, %v6305
  %v6364 = vadd.f32 %v3031, %v6310
  %v6365 = vadd.f32 %v3032, %v6315
  %v6366 = vadd.f32 %v3033, %v6320
  %v6367 = vadd.f32 %v3034, %v6325
  %v6368 = vadd.f32 %v3035, %v6330
  %v6369 = vadd.f32 %v3036, %v6335
  %v6370 = vadd.f32 %v3037, %v6340
  %v6371 = vadd.f32 %v3038, %v6345
  %v6372 = vadd.f32 %v3039, %v6350
  %v6373 = vadd.f32 %v3040, %v6355
  %s6374 = scalar_lea.vmem %s2, 8
  %v6375 = vld [vmem:[%s6374] sm:$0xff]
  %v6376 = vsel %vm360, %v6358, 0.0
  %6377 = vadd.xlane.f32.xlu0 %v6376
  %v6378 = vpop.xlane.xlu0 %6377
  %v6379 = vsel %vm360, %v6359, 0.0
  %6380 = vadd.xlane.f32.xlu0 %v6379
  %v6381 = vpop.xlane.xlu0 %6380
  %v6382 = vsel %vm360, %v6360, 0.0
  %6383 = vadd.xlane.f32.xlu0 %v6382
  %v6384 = vpop.xlane.xlu0 %6383
  %v6385 = vsel %vm360, %v6361, 0.0
  %6386 = vadd.xlane.f32.xlu0 %v6385
  %v6387 = vpop.xlane.xlu0 %6386
  %v6388 = vsel %vm360, %v6362, 0.0
  %6389 = vadd.xlane.f32.xlu0 %v6388
  %v6390 = vpop.xlane.xlu0 %6389
  %v6391 = vsel %vm360, %v6363, 0.0
  %6392 = vadd.xlane.f32.xlu0 %v6391
  %v6393 = vpop.xlane.xlu0 %6392
  %v6394 = vsel %vm360, %v6364, 0.0
  %6395 = vadd.xlane.f32.xlu0 %v6394
  %v6396 = vpop.xlane.xlu0 %6395
  %v6397 = vsel %vm360, %v6365, 0.0
  %6398 = vadd.xlane.f32.xlu0 %v6397
  %v6399 = vpop.xlane.xlu0 %6398
  %v6400 = vsel %vm360, %v6366, 0.0
  %6401 = vadd.xlane.f32.xlu0 %v6400
  %v6402 = vpop.xlane.xlu0 %6401
  %v6403 = vsel %vm360, %v6367, 0.0
  %6404 = vadd.xlane.f32.xlu0 %v6403
  %v6405 = vpop.xlane.xlu0 %6404
  %v6406 = vsel %vm360, %v6368, 0.0
  %6407 = vadd.xlane.f32.xlu0 %v6406
  %v6408 = vpop.xlane.xlu0 %6407
  %v6409 = vsel %vm360, %v6369, 0.0
  %6410 = vadd.xlane.f32.xlu0 %v6409
  %v6411 = vpop.xlane.xlu0 %6410
  %v6412 = vsel %vm360, %v6370, 0.0
  %6413 = vadd.xlane.f32.xlu0 %v6412
  %v6414 = vpop.xlane.xlu0 %6413
  %v6415 = vsel %vm360, %v6371, 0.0
  %6416 = vadd.xlane.f32.xlu0 %v6415
  %v6417 = vpop.xlane.xlu0 %6416
  %v6418 = vsel %vm360, %v6372, 0.0
  %6419 = vadd.xlane.f32.xlu0 %v6418
  %v6420 = vpop.xlane.xlu0 %6419
  %v6421 = vsel %vm360, %v6373, 0.0
  %6422 = vadd.xlane.f32.xlu0 %v6421
  %v6423 = vpop.xlane.xlu0 %6422
  %v6424 = vmul.f32 %v6378, %v409
  %v6425 = vmul.f32 %v6381, %v409
  %v6426 = vmul.f32 %v6384, %v409
  %v6427 = vmul.f32 %v6387, %v409
  %v6428 = vmul.f32 %v6390, %v409
  %v6429 = vmul.f32 %v6393, %v409
  %v6430 = vmul.f32 %v6396, %v409
  %v6431 = vmul.f32 %v6399, %v409
  %v6432 = vmul.f32 %v6402, %v409
  %v6433 = vmul.f32 %v6405, %v409
  %v6434 = vmul.f32 %v6408, %v409
  %v6435 = vmul.f32 %v6411, %v409
  %v6436 = vmul.f32 %v6414, %v409
  %v6437 = vmul.f32 %v6417, %v409
  %v6438 = vmul.f32 %v6420, %v409
  %v6439 = vmul.f32 %v6423, %v409
  %v6440 = vsub.f32 %v6358, %v6424
  %v6441 = vsub.f32 %v6359, %v6425
  %v6442 = vsub.f32 %v6360, %v6426
  %v6443 = vsub.f32 %v6361, %v6427
  %v6444 = vsub.f32 %v6362, %v6428
  %v6445 = vsub.f32 %v6363, %v6429
  %v6446 = vsub.f32 %v6364, %v6430
  %v6447 = vsub.f32 %v6365, %v6431
  %v6448 = vsub.f32 %v6366, %v6432
  %v6449 = vsub.f32 %v6367, %v6433
  %v6450 = vsub.f32 %v6368, %v6434
  %v6451 = vsub.f32 %v6369, %v6435
  %v6452 = vsub.f32 %v6370, %v6436
  %v6453 = vsub.f32 %v6371, %v6437
  %v6454 = vsub.f32 %v6372, %v6438
  %v6455 = vsub.f32 %v6373, %v6439
  %v6456 = vmul.f32 %v6440, %v6440
  %v6457 = vmul.f32 %v6441, %v6441
  %v6458 = vmul.f32 %v6442, %v6442
  %v6459 = vmul.f32 %v6443, %v6443
  %v6460 = vmul.f32 %v6444, %v6444
  %v6461 = vmul.f32 %v6445, %v6445
  %v6462 = vmul.f32 %v6446, %v6446
  %v6463 = vmul.f32 %v6447, %v6447
  %v6464 = vmul.f32 %v6448, %v6448
  %v6465 = vmul.f32 %v6449, %v6449
  %v6466 = vmul.f32 %v6450, %v6450
  %v6467 = vmul.f32 %v6451, %v6451
  %v6468 = vmul.f32 %v6452, %v6452
  %v6469 = vmul.f32 %v6453, %v6453
  %v6470 = vmul.f32 %v6454, %v6454
  %v6471 = vmul.f32 %v6455, %v6455
  %v6472 = vsel %vm360, %v6456, 0.0
  %6473 = vadd.xlane.f32.xlu0 %v6472
  %v6474 = vpop.xlane.xlu0 %6473
  %v6475 = vsel %vm360, %v6457, 0.0
  %6476 = vadd.xlane.f32.xlu0 %v6475
  %v6477 = vpop.xlane.xlu0 %6476
  %v6478 = vsel %vm360, %v6458, 0.0
  %6479 = vadd.xlane.f32.xlu0 %v6478
  %v6480 = vpop.xlane.xlu0 %6479
  %v6481 = vsel %vm360, %v6459, 0.0
  %6482 = vadd.xlane.f32.xlu0 %v6481
  %v6483 = vpop.xlane.xlu0 %6482
  %v6484 = vsel %vm360, %v6460, 0.0
  %6485 = vadd.xlane.f32.xlu0 %v6484
  %v6486 = vpop.xlane.xlu0 %6485
  %v6487 = vsel %vm360, %v6461, 0.0
  %6488 = vadd.xlane.f32.xlu0 %v6487
  %v6489 = vpop.xlane.xlu0 %6488
  %v6490 = vsel %vm360, %v6462, 0.0
  %6491 = vadd.xlane.f32.xlu0 %v6490
  %v6492 = vpop.xlane.xlu0 %6491
  %v6493 = vsel %vm360, %v6463, 0.0
  %6494 = vadd.xlane.f32.xlu0 %v6493
  %v6495 = vpop.xlane.xlu0 %6494
  %v6496 = vsel %vm360, %v6464, 0.0
  %6497 = vadd.xlane.f32.xlu0 %v6496
  %v6498 = vpop.xlane.xlu0 %6497
  %v6499 = vsel %vm360, %v6465, 0.0
  %6500 = vadd.xlane.f32.xlu0 %v6499
  %v6501 = vpop.xlane.xlu0 %6500
  %v6502 = vsel %vm360, %v6466, 0.0
  %6503 = vadd.xlane.f32.xlu0 %v6502
  %v6504 = vpop.xlane.xlu0 %6503
  %v6505 = vsel %vm360, %v6467, 0.0
  %6506 = vadd.xlane.f32.xlu0 %v6505
  %v6507 = vpop.xlane.xlu0 %6506
  %v6508 = vsel %vm360, %v6468, 0.0
  %6509 = vadd.xlane.f32.xlu0 %v6508
  %v6510 = vpop.xlane.xlu0 %6509
  %v6511 = vsel %vm360, %v6469, 0.0
  %6512 = vadd.xlane.f32.xlu0 %v6511
  %v6513 = vpop.xlane.xlu0 %6512
  %v6514 = vsel %vm360, %v6470, 0.0
  %6515 = vadd.xlane.f32.xlu0 %v6514
  %v6516 = vpop.xlane.xlu0 %6515
  %v6517 = vsel %vm360, %v6471, 0.0
  %6518 = vadd.xlane.f32.xlu0 %v6517
  %v6519 = vpop.xlane.xlu0 %6518
  %v6520 = vmul.f32 %v6474, %v409
  %v6521 = vmul.f32 %v6477, %v409
  %v6522 = vmul.f32 %v6480, %v409
  %v6523 = vmul.f32 %v6483, %v409
  %v6524 = vmul.f32 %v6486, %v409
  %v6525 = vmul.f32 %v6489, %v409
  %v6526 = vmul.f32 %v6492, %v409
  %v6527 = vmul.f32 %v6495, %v409
  %v6528 = vmul.f32 %v6498, %v409
  %v6529 = vmul.f32 %v6501, %v409
  %v6530 = vmul.f32 %v6504, %v409
  %v6531 = vmul.f32 %v6507, %v409
  %v6532 = vmul.f32 %v6510, %v409
  %v6533 = vmul.f32 %v6513, %v409
  %v6534 = vmul.f32 %v6516, %v409
  %v6535 = vmul.f32 %v6519, %v409
  %v6536 = vadd.f32 %v6520, 1e-05
  %v6537 = vadd.f32 %v6521, 1e-05
  %v6538 = vadd.f32 %v6522, 1e-05
  %v6539 = vadd.f32 %v6523, 1e-05
  %v6540 = vadd.f32 %v6524, 1e-05
  %v6541 = vadd.f32 %v6525, 1e-05
  %v6542 = vadd.f32 %v6526, 1e-05
  %v6543 = vadd.f32 %v6527, 1e-05
  %v6544 = vadd.f32 %v6528, 1e-05
  %v6545 = vadd.f32 %v6529, 1e-05
  %v6546 = vadd.f32 %v6530, 1e-05
  %v6547 = vadd.f32 %v6531, 1e-05
  %v6548 = vadd.f32 %v6532, 1e-05
  %v6549 = vadd.f32 %v6533, 1e-05
  %v6550 = vadd.f32 %v6534, 1e-05
  %v6551 = vadd.f32 %v6535, 1e-05
  %v6552 = vrsqrt.pop %v6536
  %v6553 = vrsqrt.pop %v6537
  %v6554 = vrsqrt.pop %v6538
  %v6555 = vrsqrt.pop %v6539
  %v6556 = vrsqrt.pop %v6540
  %v6557 = vrsqrt.pop %v6541
  %v6558 = vrsqrt.pop %v6542
  %v6559 = vrsqrt.pop %v6543
  %v6560 = vrsqrt.pop %v6544
  %v6561 = vrsqrt.pop %v6545
  %v6562 = vrsqrt.pop %v6546
  %v6563 = vrsqrt.pop %v6547
  %v6564 = vrsqrt.pop %v6548
  %v6565 = vrsqrt.pop %v6549
  %v6566 = vrsqrt.pop %v6550
  %v6567 = vrsqrt.pop %v6551
  %v6568 = vmul.f32 %v6440, %v6552
  %v6569 = vmul.f32 %v6441, %v6553
  %v6570 = vmul.f32 %v6442, %v6554
  %v6571 = vmul.f32 %v6443, %v6555
  %v6572 = vmul.f32 %v6444, %v6556
  %v6573 = vmul.f32 %v6445, %v6557
  %v6574 = vmul.f32 %v6446, %v6558
  %v6575 = vmul.f32 %v6447, %v6559
  %v6576 = vmul.f32 %v6448, %v6560
  %v6577 = vmul.f32 %v6449, %v6561
  %v6578 = vmul.f32 %v6450, %v6562
  %v6579 = vmul.f32 %v6451, %v6563
  %v6580 = vmul.f32 %v6452, %v6564
  %v6581 = vmul.f32 %v6453, %v6565
  %v6582 = vmul.f32 %v6454, %v6566
  %v6583 = vmul.f32 %v6455, %v6567
  %v6584 = vlaneseq
  %v6585 = vshrl.u32 %v6584, 7
  %v6586 = vsub.s32 0, %v6585
  %v6587 = vrot.slane %v6375, %v6586
  %v6588 = vmul.f32 %v6568, %v6587
  %v6589 = vmul.f32 %v6569, %v6587
  %v6590 = vmul.f32 %v6570, %v6587
  %v6591 = vmul.f32 %v6571, %v6587
  %v6592 = vmul.f32 %v6572, %v6587
  %v6593 = vmul.f32 %v6573, %v6587
  %v6594 = vmul.f32 %v6574, %v6587
  %v6595 = vmul.f32 %v6575, %v6587
  %v6596 = vmul.f32 %v6576, %v6587
  %v6597 = vmul.f32 %v6577, %v6587
  %v6598 = vmul.f32 %v6578, %v6587
  %v6599 = vmul.f32 %v6579, %v6587
  %v6600 = vmul.f32 %v6580, %v6587
  %v6601 = vmul.f32 %v6581, %v6587
  %v6602 = vmul.f32 %v6582, %v6587
  %v6603 = vmul.f32 %v6583, %v6587
  %v6604 = vlaneseq
  %v6605 = vshrl.u32 %v6604, 7
  %v6606 = vsub.s32 1, %v6605
  %v6607 = vrot.slane %v6375, %v6606
  %v6608 = vadd.f32 %v6588, %v6607
  %v6609 = vadd.f32 %v6589, %v6607
  %v6610 = vadd.f32 %v6590, %v6607
  %v6611 = vadd.f32 %v6591, %v6607
  %v6612 = vadd.f32 %v6592, %v6607
  %v6613 = vadd.f32 %v6593, %v6607
  %v6614 = vadd.f32 %v6594, %v6607
  %v6615 = vadd.f32 %v6595, %v6607
  %v6616 = vadd.f32 %v6596, %v6607
  %v6617 = vadd.f32 %v6597, %v6607
  %v6618 = vadd.f32 %v6598, %v6607
  %v6619 = vadd.f32 %v6599, %v6607
  %v6620 = vadd.f32 %v6600, %v6607
  %v6621 = vadd.f32 %v6601, %v6607
  %v6622 = vadd.f32 %v6602, %v6607
  %v6623 = vadd.f32 %v6603, %v6607
  %s6624 = scalar_lea.vmem %s4, 32
  %v6625 = vld [vmem:[%s6624] sm:$0xff]
  %v6626 = vld [vmem:[%s6624 + $0x8] sm:$0xff]
  %v6627 = vld [vmem:[%s6624 + $0x10] sm:$0xff]
  %v6628 = vld [vmem:[%s6624 + $0x18] sm:$0xff]
  %v6630 = vsel %vm360, %v6608, 0
  %v6633 = vsel %vm360, %v6609, 0
  %v6636 = vsel %vm360, %v6610, 0
  %v6639 = vsel %vm360, %v6611, 0
  %v6642 = vsel %vm360, %v6612, 0
  %v6645 = vsel %vm360, %v6613, 0
  %v6648 = vsel %vm360, %v6614, 0
  %v6651 = vsel %vm360, %v6615, 0
  %v6654 = vsel %vm360, %v6616, 0
  %v6657 = vsel %vm360, %v6617, 0
  %v6660 = vsel %vm360, %v6618, 0
  %v6663 = vsel %vm360, %v6619, 0
  %v6666 = vsel %vm360, %v6620, 0
  %v6669 = vsel %vm360, %v6621, 0
  %v6672 = vsel %vm360, %v6622, 0
  %v6675 = vsel %vm360, %v6623, 0
  %6677 = vmatprep.subr.mxu0 0.0
  %6678 = vmatpush1.msra.mxu0 %v6625
  %6679 = vmatprep.subr.mxu0 0.0
  %6680 = vmatpush1.msra.mxu0 %v6626
  %6681 = vmatprep.subr.mxu0 0.0
  %6682 = vmatpush1.msra.mxu0 %v6627
  %6683 = vmatprep.subr.mxu0 0.0
  %6684 = vmatpush1.msra.mxu0 %v6628
  %6685 = vmatprep.subr.mxu0 0.0
  %6686 = vmatpush1.msra.mxu0 0.0
  %6687 = vmatprep.subr.mxu0 0.0
  %6688 = vmatpush1.msra.mxu0 0.0
  %6689 = vmatprep.subr.mxu0 0.0
  %6690 = vmatpush1.msra.mxu0 0.0
  %6691 = vmatprep.subr.mxu0 0.0
  %6692 = vmatpush1.msra.mxu0 0.0
  %6693 = vmatprep.subr.mxu0 0.0
  %6694 = vmatpush1.msra.mxu0 0.0
  %6695 = vmatprep.subr.mxu0 0.0
  %6696 = vmatpush1.msra.mxu0 0.0
  %6697 = vmatprep.subr.mxu0 0.0
  %6698 = vmatpush1.msra.mxu0 0.0
  %6699 = vmatprep.subr.mxu0 0.0
  %6700 = vmatpush1.msra.mxu0 0.0
  %6701 = vmatprep.subr.mxu0 0.0
  %6702 = vmatpush1.msra.mxu0 0.0
  %6703 = vmatprep.subr.mxu0 0.0
  %6704 = vmatpush1.msra.mxu0 0.0
  %6705 = vmatprep.subr.mxu0 0.0
  %6706 = vmatpush1.msra.mxu0 0.0
  %6707 = vmatprep.subr.mxu0 0.0
  %6708 = vmatpush1.msra.mxu0 0.0
  %6709 = vmatprep.subr.mxu0 0.0
  %6710 = vmatpush1.msra.mxu0 0.0
  %6711 = vmatprep.subr.mxu0 0.0
  %6712 = vmatpush1.msra.mxu0 0.0
  %6713 = vmatprep.subr.mxu0 0.0
  %6714 = vmatpush1.msra.mxu0 0.0
  %6715 = vmatprep.subr.mxu0 0.0
  %6716 = vmatpush1.msra.mxu0 0.0
  %6717 = vmatprep.subr.mxu0 0.0
  %6718 = vmatpush1.msra.mxu0 0.0
  %6719 = vmatprep.subr.mxu0 0.0
  %6720 = vmatpush1.msra.mxu0 0.0
  %6721 = vmatprep.subr.mxu0 0.0
  %6722 = vmatpush1.msra.mxu0 0.0
  %6723 = vmatprep.subr.mxu0 0.0
  %6724 = vmatpush1.msra.mxu0 0.0
  %6725 = vmatprep.subr.mxu0 0.0
  %6726 = vmatpush1.msra.mxu0 0.0
  %6727 = vmatprep.subr.mxu0 0.0
  %6728 = vmatpush1.msra.mxu0 0.0
  %6729 = vmatprep.subr.mxu0 0.0
  %6730 = vmatpush1.msra.mxu0 0.0
  %6731 = vmatprep.subr.mxu0 0.0
  %6732 = vmatpush1.msra.mxu0 0.0
  %6733 = vmatprep.subr.mxu0 0.0
  %6734 = vmatpush1.msra.mxu0 0.0
  %6735 = vmatprep.subr.mxu0 0.0
  %6736 = vmatpush1.msra.mxu0 0.0
  %6737 = vmatprep.subr.mxu0 0.0
  %6738 = vmatpush1.msra.mxu0 0.0
  %6739 = vmatprep.subr.mxu0 0.0
  %6740 = vmatpush1.msra.mxu0 0.0
  %6741 = vmatprep.mubr.f32.mxu0 0.0
  %6742 = vmatmul.mubr.f32.gmra.mrb[0].mxu0 %v6630
  %v6743 = vpop.f32.mrb[0].mxu0
  %v6744 = vadd.f32 0.0, %v6743
  %v6745 = vpop.f32.mrb[0].mxu0
  %6746 = vmatprep.mubr.f32.mxu0 0.0
  %6747 = vmatmul.mubr.f32.gmra.mrb[0].mxu0 %v6633
  %v6748 = vpop.f32.mrb[0].mxu0
  %v6749 = vadd.f32 0.0, %v6748
  %v6750 = vpop.f32.mrb[0].mxu0
  %6751 = vmatprep.mubr.f32.mxu0 0.0
  %6752 = vmatmul.mubr.f32.gmra.mrb[0].mxu0 %v6636
  %v6753 = vpop.f32.mrb[0].mxu0
  %v6754 = vadd.f32 0.0, %v6753
  %v6755 = vpop.f32.mrb[0].mxu0
  %6756 = vmatprep.mubr.f32.mxu0 0.0
  %6757 = vmatmul.mubr.f32.gmra.mrb[0].mxu0 %v6639
  %v6758 = vpop.f32.mrb[0].mxu0
  %v6759 = vadd.f32 0.0, %v6758
  %v6760 = vpop.f32.mrb[0].mxu0
  %6761 = vmatprep.mubr.f32.mxu0 0.0
  %6762 = vmatmul.mubr.f32.gmra.mrb[0].mxu0 %v6642
  %v6763 = vpop.f32.mrb[0].mxu0
  %v6764 = vadd.f32 0.0, %v6763
  %v6765 = vpop.f32.mrb[0].mxu0
  %6766 = vmatprep.mubr.f32.mxu0 0.0
  %6767 = vmatmul.mubr.f32.gmra.mrb[0].mxu0 %v6645
  %v6768 = vpop.f32.mrb[0].mxu0
  %v6769 = vadd.f32 0.0, %v6768
  %v6770 = vpop.f32.mrb[0].mxu0
  %6771 = vmatprep.mubr.f32.mxu0 0.0
  %6772 = vmatmul.mubr.f32.gmra.mrb[0].mxu0 %v6648
  %v6773 = vpop.f32.mrb[0].mxu0
  %v6774 = vadd.f32 0.0, %v6773
  %v6775 = vpop.f32.mrb[0].mxu0
  %6776 = vmatprep.mubr.f32.mxu0 0.0
  %6777 = vmatmul.mubr.f32.gmra.mrb[0].mxu0 %v6651
  %v6778 = vpop.f32.mrb[0].mxu0
  %v6779 = vadd.f32 0.0, %v6778
  %v6780 = vpop.f32.mrb[0].mxu0
  %6781 = vmatprep.mubr.f32.mxu0 0.0
  %6782 = vmatmul.mubr.f32.gmra.mrb[0].mxu0 %v6654
  %v6783 = vpop.f32.mrb[0].mxu0
  %v6784 = vadd.f32 0.0, %v6783
  %v6785 = vpop.f32.mrb[0].mxu0
  %6786 = vmatprep.mubr.f32.mxu0 0.0
  %6787 = vmatmul.mubr.f32.gmra.mrb[0].mxu0 %v6657
  %v6788 = vpop.f32.mrb[0].mxu0
  %v6789 = vadd.f32 0.0, %v6788
  %v6790 = vpop.f32.mrb[0].mxu0
  %6791 = vmatprep.mubr.f32.mxu0 0.0
  %6792 = vmatmul.mubr.f32.gmra.mrb[0].mxu0 %v6660
  %v6793 = vpop.f32.mrb[0].mxu0
  %v6794 = vadd.f32 0.0, %v6793
  %v6795 = vpop.f32.mrb[0].mxu0
  %6796 = vmatprep.mubr.f32.mxu0 0.0
  %6797 = vmatmul.mubr.f32.gmra.mrb[0].mxu0 %v6663
  %v6798 = vpop.f32.mrb[0].mxu0
  %v6799 = vadd.f32 0.0, %v6798
  %v6800 = vpop.f32.mrb[0].mxu0
  %6801 = vmatprep.mubr.f32.mxu0 0.0
  %6802 = vmatmul.mubr.f32.gmra.mrb[0].mxu0 %v6666
  %v6803 = vpop.f32.mrb[0].mxu0
  %v6804 = vadd.f32 0.0, %v6803
  %v6805 = vpop.f32.mrb[0].mxu0
  %6806 = vmatprep.mubr.f32.mxu0 0.0
  %6807 = vmatmul.mubr.f32.gmra.mrb[0].mxu0 %v6669
  %v6808 = vpop.f32.mrb[0].mxu0
  %v6809 = vadd.f32 0.0, %v6808
  %v6810 = vpop.f32.mrb[0].mxu0
  %6811 = vmatprep.mubr.f32.mxu0 0.0
  %6812 = vmatmul.mubr.f32.gmra.mrb[0].mxu0 %v6672
  %v6813 = vpop.f32.mrb[0].mxu0
  %v6814 = vadd.f32 0.0, %v6813
  %v6815 = vpop.f32.mrb[0].mxu0
  %6816 = vmatprep.mubr.f32.mxu0 0.0
  %6817 = vmatmul.mubr.f32.gmra.mrb[0].mxu0 %v6675
  %v6818 = vpop.f32.mrb[0].mxu0
  %v6819 = vadd.f32 0.0, %v6818
  %v6820 = vpop.f32.mrb[0].mxu0
  %6821 = vdwg.mxu0
  %s6822 = scalar_lea.vmem %s5, 16
  %v6823 = vld [vmem:[%s6822] sm:$0xff]
  %v6824 = vld [vmem:[%s6822 + $0x8] sm:$0x1]
  %6825 = vst.msk [vmem:[#allocation2 + $0x10] sm:$0xff] %vm62, %v6744
  %6826 = vst.msk [vmem:[#allocation2 + $0x18] sm:$0xff] %vm62, %v6749
  %6827 = vst.msk [vmem:[#allocation2 + $0x20] sm:$0xff] %vm62, %v6754
  %6828 = vst.msk [vmem:[#allocation2 + $0x28] sm:$0xff] %vm62, %v6759
  %6829 = vst.msk [vmem:[#allocation2 + $0x30] sm:$0xff] %vm62, %v6764
  %6830 = vst.msk [vmem:[#allocation2 + $0x38] sm:$0xff] %vm62, %v6769
  %6831 = vst.msk [vmem:[#allocation2 + $0x40] sm:$0xff] %vm62, %v6774
  %6832 = vst.msk [vmem:[#allocation2 + $0x48] sm:$0xff] %vm62, %v6779
  %6833 = vst.msk [vmem:[#allocation2 + $0x50] sm:$0xff] %vm62, %v6784
  %6834 = vst.msk [vmem:[#allocation2 + $0x58] sm:$0xff] %vm62, %v6789
  %6835 = vst.msk [vmem:[#allocation2 + $0x60] sm:$0xff] %vm62, %v6794
  %6836 = vst.msk [vmem:[#allocation2 + $0x68] sm:$0xff] %vm62, %v6799
  %6837 = vst.msk [vmem:[#allocation2 + $0x70] sm:$0xff] %vm62, %v6804
  %6838 = vst.msk [vmem:[#allocation2 + $0x78] sm:$0xff] %vm62, %v6809
  %6839 = vst.msk [vmem:[#allocation2 + $0x80] sm:$0xff] %vm62, %v6814
  %6840 = vst.msk [vmem:[#allocation2 + $0x88] sm:$0xff] %vm62, %v6819
  %v6841 = vld [vmem:[#allocation2 + $0x7] sm:$0xff]
  %v6842 = vld [vmem:[#allocation2 + $0xf] sm:$0xff]
  %v6843 = vld [vmem:[#allocation2 + $0x17] sm:$0xff]
  %v6844 = vld [vmem:[#allocation2 + $0x1f] sm:$0xff]
  %v6845 = vld [vmem:[#allocation2 + $0x27] sm:$0xff]
  %v6846 = vld [vmem:[#allocation2 + $0x2f] sm:$0xff]
  %v6847 = vld [vmem:[#allocation2 + $0x37] sm:$0xff]
  %v6848 = vld [vmem:[#allocation2 + $0x3f] sm:$0xff]
  %v6849 = vld [vmem:[#allocation2 + $0x47] sm:$0xff]
  %v6850 = vld [vmem:[#allocation2 + $0x4f] sm:$0xff]
  %v6851 = vld [vmem:[#allocation2 + $0x57] sm:$0xff]
  %v6852 = vld [vmem:[#allocation2 + $0x5f] sm:$0xff]
  %v6853 = vld [vmem:[#allocation2 + $0x67] sm:$0xff]
  %v6854 = vld [vmem:[#allocation2 + $0x6f] sm:$0xff]
  %v6855 = vld [vmem:[#allocation2 + $0x77] sm:$0xff]
  %v6856 = vld [vmem:[#allocation2 + $0x7f] sm:$0xff]
  %v6857 = vlaneseq
  %v6858 = vshrl.u32 %v6857, 7
  %v6859 = vsub.s32 0, %v6858
  %v6860 = vrot.slane %v6823, %v6859
  %v6861 = vmul.f32 %v6841, %v6860
  %v6862 = vmul.f32 %v6842, %v6860
  %v6863 = vmul.f32 %v6843, %v6860
  %v6864 = vmul.f32 %v6844, %v6860
  %v6865 = vmul.f32 %v6845, %v6860
  %v6866 = vmul.f32 %v6846, %v6860
  %v6867 = vmul.f32 %v6847, %v6860
  %v6868 = vmul.f32 %v6848, %v6860
  %v6869 = vmul.f32 %v6849, %v6860
  %v6870 = vmul.f32 %v6850, %v6860
  %v6871 = vmul.f32 %v6851, %v6860
  %v6872 = vmul.f32 %v6852, %v6860
  %v6873 = vmul.f32 %v6853, %v6860
  %v6874 = vmul.f32 %v6854, %v6860
  %v6875 = vmul.f32 %v6855, %v6860
  %v6876 = vmul.f32 %v6856, %v6860
  %v6877 = vmul.f32 %v6861, %v864
  %v6878 = vmul.f32 %v6862, %v869
  %v6879 = vmul.f32 %v6863, %v874
  %v6880 = vmul.f32 %v6864, %v879
  %v6881 = vmul.f32 %v6865, %v884
  %v6882 = vmul.f32 %v6866, %v889
  %v6883 = vmul.f32 %v6867, %v894
  %v6884 = vmul.f32 %v6868, %v899
  %v6885 = vmul.f32 %v6869, %v904
  %v6886 = vmul.f32 %v6870, %v909
  %v6887 = vmul.f32 %v6871, %v914
  %v6888 = vmul.f32 %v6872, %v919
  %v6889 = vmul.f32 %v6873, %v924
  %v6890 = vmul.f32 %v6874, %v929
  %v6891 = vmul.f32 %v6875, %v934
  %v6892 = vmul.f32 %v6876, %v939
  %v6893 = vadd.f32 %v6877, 0.0
  %v6894 = vadd.f32 %v6878, 0.0
  %v6895 = vadd.f32 %v6879, 0.0
  %v6896 = vadd.f32 %v6880, 0.0
  %v6897 = vadd.f32 %v6881, 0.0
  %v6898 = vadd.f32 %v6882, 0.0
  %v6899 = vadd.f32 %v6883, 0.0
  %v6900 = vadd.f32 %v6884, 0.0
  %v6901 = vadd.f32 %v6885, 0.0
  %v6902 = vadd.f32 %v6886, 0.0
  %v6903 = vadd.f32 %v6887, 0.0
  %v6904 = vadd.f32 %v6888, 0.0
  %v6905 = vadd.f32 %v6889, 0.0
  %v6906 = vadd.f32 %v6890, 0.0
  %v6907 = vadd.f32 %v6891, 0.0
  %v6908 = vadd.f32 %v6892, 0.0
  %v6909 = vld [vmem:[#allocation2 + $0x8] sm:$0xff]
  %v6910 = vld [vmem:[#allocation2 + $0x10] sm:$0xff]
  %v6911 = vld [vmem:[#allocation2 + $0x18] sm:$0xff]
  %v6912 = vld [vmem:[#allocation2 + $0x20] sm:$0xff]
  %v6913 = vld [vmem:[#allocation2 + $0x28] sm:$0xff]
  %v6914 = vld [vmem:[#allocation2 + $0x30] sm:$0xff]
  %v6915 = vld [vmem:[#allocation2 + $0x38] sm:$0xff]
  %v6916 = vld [vmem:[#allocation2 + $0x40] sm:$0xff]
  %v6917 = vld [vmem:[#allocation2 + $0x48] sm:$0xff]
  %v6918 = vld [vmem:[#allocation2 + $0x50] sm:$0xff]
  %v6919 = vld [vmem:[#allocation2 + $0x58] sm:$0xff]
  %v6920 = vld [vmem:[#allocation2 + $0x60] sm:$0xff]
  %v6921 = vld [vmem:[#allocation2 + $0x68] sm:$0xff]
  %v6922 = vld [vmem:[#allocation2 + $0x70] sm:$0xff]
  %v6923 = vld [vmem:[#allocation2 + $0x78] sm:$0xff]
  %v6924 = vld [vmem:[#allocation2 + $0x80] sm:$0xff]
  %v6925 = vlaneseq
  %v6926 = vshrl.u32 %v6925, 7
  %v6927 = vsub.s32 1, %v6926
  %v6928 = vrot.slane %v6823, %v6927
  %v6929 = vmul.f32 %v6909, %v6928
  %v6930 = vmul.f32 %v6910, %v6928
  %v6931 = vmul.f32 %v6911, %v6928
  %v6932 = vmul.f32 %v6912, %v6928
  %v6933 = vmul.f32 %v6913, %v6928
  %v6934 = vmul.f32 %v6914, %v6928
  %v6935 = vmul.f32 %v6915, %v6928
  %v6936 = vmul.f32 %v6916, %v6928
  %v6937 = vmul.f32 %v6917, %v6928
  %v6938 = vmul.f32 %v6918, %v6928
  %v6939 = vmul.f32 %v6919, %v6928
  %v6940 = vmul.f32 %v6920, %v6928
  %v6941 = vmul.f32 %v6921, %v6928
  %v6942 = vmul.f32 %v6922, %v6928
  %v6943 = vmul.f32 %v6923, %v6928
  %v6944 = vmul.f32 %v6924, %v6928
  %v6945 = vmul.f32 %v6929, %v1011
  %v6946 = vmul.f32 %v6930, %v1015
  %v6947 = vmul.f32 %v6931, %v1019
  %v6948 = vmul.f32 %v6932, %v1023
  %v6949 = vmul.f32 %v6933, %v1027
  %v6950 = vmul.f32 %v6934, %v1031
  %v6951 = vmul.f32 %v6935, %v1035
  %v6952 = vmul.f32 %v6936, %v1039
  %v6953 = vmul.f32 %v6937, %v1043
  %v6954 = vmul.f32 %v6938, %v1047
  %v6955 = vmul.f32 %v6939, %v1051
  %v6956 = vmul.f32 %v6940, %v1055
  %v6957 = vmul.f32 %v6941, %v1059
  %v6958 = vmul.f32 %v6942, %v1063
  %v6959 = vmul.f32 %v6943, %v1067
  %v6960 = vmul.f32 %v6944, %v1071
  %v6961 = vadd.f32 %v6893, %v6945
  %v6962 = vadd.f32 %v6894, %v6946
  %v6963 = vadd.f32 %v6895, %v6947
  %v6964 = vadd.f32 %v6896, %v6948
  %v6965 = vadd.f32 %v6897, %v6949
  %v6966 = vadd.f32 %v6898, %v6950
  %v6967 = vadd.f32 %v6899, %v6951
  %v6968 = vadd.f32 %v6900, %v6952
  %v6969 = vadd.f32 %v6901, %v6953
  %v6970 = vadd.f32 %v6902, %v6954
  %v6971 = vadd.f32 %v6903, %v6955
  %v6972 = vadd.f32 %v6904, %v6956
  %v6973 = vadd.f32 %v6905, %v6957
  %v6974 = vadd.f32 %v6906, %v6958
  %v6975 = vadd.f32 %v6907, %v6959
  %v6976 = vadd.f32 %v6908, %v6960
  %v6977 = vld [vmem:[#allocation2 + $0x9] sm:$0xff]
  %v6978 = vld [vmem:[#allocation2 + $0x11] sm:$0xff]
  %v6979 = vld [vmem:[#allocation2 + $0x19] sm:$0xff]
  %v6980 = vld [vmem:[#allocation2 + $0x21] sm:$0xff]
  %v6981 = vld [vmem:[#allocation2 + $0x29] sm:$0xff]
  %v6982 = vld [vmem:[#allocation2 + $0x31] sm:$0xff]
  %v6983 = vld [vmem:[#allocation2 + $0x39] sm:$0xff]
  %v6984 = vld [vmem:[#allocation2 + $0x41] sm:$0xff]
  %v6985 = vld [vmem:[#allocation2 + $0x49] sm:$0xff]
  %v6986 = vld [vmem:[#allocation2 + $0x51] sm:$0xff]
  %v6987 = vld [vmem:[#allocation2 + $0x59] sm:$0xff]
  %v6988 = vld [vmem:[#allocation2 + $0x61] sm:$0xff]
  %v6989 = vld [vmem:[#allocation2 + $0x69] sm:$0xff]
  %v6990 = vld [vmem:[#allocation2 + $0x71] sm:$0xff]
  %v6991 = vld [vmem:[#allocation2 + $0x79] sm:$0xff]
  %v6992 = vld [vmem:[#allocation2 + $0x81] sm:$0xff]
  %v6993 = vlaneseq
  %v6994 = vshrl.u32 %v6993, 7
  %v6995 = vsub.s32 2, %v6994
  %v6996 = vrot.slane %v6823, %v6995
  %v6997 = vmul.f32 %v6977, %v6996
  %v6998 = vmul.f32 %v6978, %v6996
  %v6999 = vmul.f32 %v6979, %v6996
  %v7000 = vmul.f32 %v6980, %v6996
  %v7001 = vmul.f32 %v6981, %v6996
  %v7002 = vmul.f32 %v6982, %v6996
  %v7003 = vmul.f32 %v6983, %v6996
  %v7004 = vmul.f32 %v6984, %v6996
  %v7005 = vmul.f32 %v6985, %v6996
  %v7006 = vmul.f32 %v6986, %v6996
  %v7007 = vmul.f32 %v6987, %v6996
  %v7008 = vmul.f32 %v6988, %v6996
  %v7009 = vmul.f32 %v6989, %v6996
  %v7010 = vmul.f32 %v6990, %v6996
  %v7011 = vmul.f32 %v6991, %v6996
  %v7012 = vmul.f32 %v6992, %v6996
  %v7013 = vmul.f32 %v6997, %v1143
  %v7014 = vmul.f32 %v6998, %v1147
  %v7015 = vmul.f32 %v6999, %v1151
  %v7016 = vmul.f32 %v7000, %v1155
  %v7017 = vmul.f32 %v7001, %v1159
  %v7018 = vmul.f32 %v7002, %v1163
  %v7019 = vmul.f32 %v7003, %v1167
  %v7020 = vmul.f32 %v7004, %v1171
  %v7021 = vmul.f32 %v7005, %v1175
  %v7022 = vmul.f32 %v7006, %v1179
  %v7023 = vmul.f32 %v7007, %v1183
  %v7024 = vmul.f32 %v7008, %v1187
  %v7025 = vmul.f32 %v7009, %v1191
  %v7026 = vmul.f32 %v7010, %v1195
  %v7027 = vmul.f32 %v7011, %v1199
  %v7028 = vmul.f32 %v7012, %v1203
  %v7029 = vadd.f32 %v6961, %v7013
  %v7030 = vadd.f32 %v6962, %v7014
  %v7031 = vadd.f32 %v6963, %v7015
  %v7032 = vadd.f32 %v6964, %v7016
  %v7033 = vadd.f32 %v6965, %v7017
  %v7034 = vadd.f32 %v6966, %v7018
  %v7035 = vadd.f32 %v6967, %v7019
  %v7036 = vadd.f32 %v6968, %v7020
  %v7037 = vadd.f32 %v6969, %v7021
  %v7038 = vadd.f32 %v6970, %v7022
  %v7039 = vadd.f32 %v6971, %v7023
  %v7040 = vadd.f32 %v6972, %v7024
  %v7041 = vadd.f32 %v6973, %v7025
  %v7042 = vadd.f32 %v6974, %v7026
  %v7043 = vadd.f32 %v6975, %v7027
  %v7044 = vadd.f32 %v6976, %v7028
  %v7045 = vld [vmem:[#allocation2 + $0x87] sm:$0xff]
  %v7046 = vlaneseq
  %v7047 = vshrl.u32 %v7046, 7
  %v7048 = vsub.s32 3, %v7047
  %v7049 = vrot.slane %v6823, %v7048
  %v7050 = vmul.f32 %v6842, %v7049
  %v7051 = vmul.f32 %v6843, %v7049
  %v7052 = vmul.f32 %v6844, %v7049
  %v7053 = vmul.f32 %v6845, %v7049
  %v7054 = vmul.f32 %v6846, %v7049
  %v7055 = vmul.f32 %v6847, %v7049
  %v7056 = vmul.f32 %v6848, %v7049
  %v7057 = vmul.f32 %v6849, %v7049
  %v7058 = vmul.f32 %v6850, %v7049
  %v7059 = vmul.f32 %v6851, %v7049
  %v7060 = vmul.f32 %v6852, %v7049
  %v7061 = vmul.f32 %v6853, %v7049
  %v7062 = vmul.f32 %v6854, %v7049
  %v7063 = vmul.f32 %v6855, %v7049
  %v7064 = vmul.f32 %v6856, %v7049
  %v7065 = vmul.f32 %v7045, %v7049
  %v7066 = vmul.f32 %v7050, %v1275
  %v7067 = vmul.f32 %v7051, %v1279
  %v7068 = vmul.f32 %v7052, %v1283
  %v7069 = vmul.f32 %v7053, %v1287
  %v7070 = vmul.f32 %v7054, %v1291
  %v7071 = vmul.f32 %v7055, %v1295
  %v7072 = vmul.f32 %v7056, %v1299
  %v7073 = vmul.f32 %v7057, %v1303
  %v7074 = vmul.f32 %v7058, %v1307
  %v7075 = vmul.f32 %v7059, %v1311
  %v7076 = vmul.f32 %v7060, %v1315
  %v7077 = vmul.f32 %v7061, %v1319
  %v7078 = vmul.f32 %v7062, %v1323
  %v7079 = vmul.f32 %v7063, %v1327
  %v7080 = vmul.f32 %v7064, %v1331
  %v7081 = vmul.f32 %v7065, %v1335
  %v7082 = vadd.f32 %v7029, %v7066
  %v7083 = vadd.f32 %v7030, %v7067
  %v7084 = vadd.f32 %v7031, %v7068
  %v7085 = vadd.f32 %v7032, %v7069
  %v7086 = vadd.f32 %v7033, %v7070
  %v7087 = vadd.f32 %v7034, %v7071
  %v7088 = vadd.f32 %v7035, %v7072
  %v7089 = vadd.f32 %v7036, %v7073
  %v7090 = vadd.f32 %v7037, %v7074
  %v7091 = vadd.f32 %v7038, %v7075
  %v7092 = vadd.f32 %v7039, %v7076
  %v7093 = vadd.f32 %v7040, %v7077
  %v7094 = vadd.f32 %v7041, %v7078
  %v7095 = vadd.f32 %v7042, %v7079
  %v7096 = vadd.f32 %v7043, %v7080
  %v7097 = vadd.f32 %v7044, %v7081
  %v7098 = vld [vmem:[#allocation2 + $0x88] sm:$0xff]
  %v7099 = vlaneseq
  %v7100 = vshrl.u32 %v7099, 7
  %v7101 = vsub.s32 4, %v7100
  %v7102 = vrot.slane %v6823, %v7101
  %v7103 = vmul.f32 %v6910, %v7102
  %v7104 = vmul.f32 %v6911, %v7102
  %v7105 = vmul.f32 %v6912, %v7102
  %v7106 = vmul.f32 %v6913, %v7102
  %v7107 = vmul.f32 %v6914, %v7102
  %v7108 = vmul.f32 %v6915, %v7102
  %v7109 = vmul.f32 %v6916, %v7102
  %v7110 = vmul.f32 %v6917, %v7102
  %v7111 = vmul.f32 %v6918, %v7102
  %v7112 = vmul.f32 %v6919, %v7102
  %v7113 = vmul.f32 %v6920, %v7102
  %v7114 = vmul.f32 %v6921, %v7102
  %v7115 = vmul.f32 %v6922, %v7102
  %v7116 = vmul.f32 %v6923, %v7102
  %v7117 = vmul.f32 %v6924, %v7102
  %v7118 = vmul.f32 %v7098, %v7102
  %v7119 = vadd.f32 %v7082, %v7103
  %v7120 = vadd.f32 %v7083, %v7104
  %v7121 = vadd.f32 %v7084, %v7105
  %v7122 = vadd.f32 %v7085, %v7106
  %v7123 = vadd.f32 %v7086, %v7107
  %v7124 = vadd.f32 %v7087, %v7108
  %v7125 = vadd.f32 %v7088, %v7109
  %v7126 = vadd.f32 %v7089, %v7110
  %v7127 = vadd.f32 %v7090, %v7111
  %v7128 = vadd.f32 %v7091, %v7112
  %v7129 = vadd.f32 %v7092, %v7113
  %v7130 = vadd.f32 %v7093, %v7114
  %v7131 = vadd.f32 %v7094, %v7115
  %v7132 = vadd.f32 %v7095, %v7116
  %v7133 = vadd.f32 %v7096, %v7117
  %v7134 = vadd.f32 %v7097, %v7118
  %v7135 = vld [vmem:[#allocation2 + $0x89] sm:$0xff]
  %v7136 = vlaneseq
  %v7137 = vshrl.u32 %v7136, 7
  %v7138 = vsub.s32 5, %v7137
  %v7139 = vrot.slane %v6823, %v7138
  %v7140 = vmul.f32 %v6978, %v7139
  %v7141 = vmul.f32 %v6979, %v7139
  %v7142 = vmul.f32 %v6980, %v7139
  %v7143 = vmul.f32 %v6981, %v7139
  %v7144 = vmul.f32 %v6982, %v7139
  %v7145 = vmul.f32 %v6983, %v7139
  %v7146 = vmul.f32 %v6984, %v7139
  %v7147 = vmul.f32 %v6985, %v7139
  %v7148 = vmul.f32 %v6986, %v7139
  %v7149 = vmul.f32 %v6987, %v7139
  %v7150 = vmul.f32 %v6988, %v7139
  %v7151 = vmul.f32 %v6989, %v7139
  %v7152 = vmul.f32 %v6990, %v7139
  %v7153 = vmul.f32 %v6991, %v7139
  %v7154 = vmul.f32 %v6992, %v7139
  %v7155 = vmul.f32 %v7135, %v7139
  %v7156 = vmul.f32 %v7140, %v1459
  %v7157 = vmul.f32 %v7141, %v1463
  %v7158 = vmul.f32 %v7142, %v1467
  %v7159 = vmul.f32 %v7143, %v1471
  %v7160 = vmul.f32 %v7144, %v1475
  %v7161 = vmul.f32 %v7145, %v1479
  %v7162 = vmul.f32 %v7146, %v1483
  %v7163 = vmul.f32 %v7147, %v1487
  %v7164 = vmul.f32 %v7148, %v1491
  %v7165 = vmul.f32 %v7149, %v1495
  %v7166 = vmul.f32 %v7150, %v1499
  %v7167 = vmul.f32 %v7151, %v1503
  %v7168 = vmul.f32 %v7152, %v1507
  %v7169 = vmul.f32 %v7153, %v1511
  %v7170 = vmul.f32 %v7154, %v1515
  %v7171 = vmul.f32 %v7155, %v1519
  %v7172 = vadd.f32 %v7119, %v7156
  %v7173 = vadd.f32 %v7120, %v7157
  %v7174 = vadd.f32 %v7121, %v7158
  %v7175 = vadd.f32 %v7122, %v7159
  %v7176 = vadd.f32 %v7123, %v7160
  %v7177 = vadd.f32 %v7124, %v7161
  %v7178 = vadd.f32 %v7125, %v7162
  %v7179 = vadd.f32 %v7126, %v7163
  %v7180 = vadd.f32 %v7127, %v7164
  %v7181 = vadd.f32 %v7128, %v7165
  %v7182 = vadd.f32 %v7129, %v7166
  %v7183 = vadd.f32 %v7130, %v7167
  %v7184 = vadd.f32 %v7131, %v7168
  %v7185 = vadd.f32 %v7132, %v7169
  %v7186 = vadd.f32 %v7133, %v7170
  %v7187 = vadd.f32 %v7134, %v7171
  %v7188 = vld [vmem:[#allocation2 + $0x8f] sm:$0xff]
  %v7189 = vlaneseq
  %v7190 = vshrl.u32 %v7189, 7
  %v7191 = vsub.s32 6, %v7190
  %v7192 = vrot.slane %v6823, %v7191
  %v7193 = vmul.f32 %v6843, %v7192
  %v7194 = vmul.f32 %v6844, %v7192
  %v7195 = vmul.f32 %v6845, %v7192
  %v7196 = vmul.f32 %v6846, %v7192
  %v7197 = vmul.f32 %v6847, %v7192
  %v7198 = vmul.f32 %v6848, %v7192
  %v7199 = vmul.f32 %v6849, %v7192
  %v7200 = vmul.f32 %v6850, %v7192
  %v7201 = vmul.f32 %v6851, %v7192
  %v7202 = vmul.f32 %v6852, %v7192
  %v7203 = vmul.f32 %v6853, %v7192
  %v7204 = vmul.f32 %v6854, %v7192
  %v7205 = vmul.f32 %v6855, %v7192
  %v7206 = vmul.f32 %v6856, %v7192
  %v7207 = vmul.f32 %v7045, %v7192
  %v7208 = vmul.f32 %v7188, %v7192
  %v7209 = vmul.f32 %v7193, %v1591
  %v7210 = vmul.f32 %v7194, %v1595
  %v7211 = vmul.f32 %v7195, %v1599
  %v7212 = vmul.f32 %v7196, %v1603
  %v7213 = vmul.f32 %v7197, %v1607
  %v7214 = vmul.f32 %v7198, %v1611
  %v7215 = vmul.f32 %v7199, %v1615
  %v7216 = vmul.f32 %v7200, %v1619
  %v7217 = vmul.f32 %v7201, %v1623
  %v7218 = vmul.f32 %v7202, %v1627
  %v7219 = vmul.f32 %v7203, %v1631
  %v7220 = vmul.f32 %v7204, %v1635
  %v7221 = vmul.f32 %v7205, %v1639
  %v7222 = vmul.f32 %v7206, %v1643
  %v7223 = vmul.f32 %v7207, %v1647
  %v7224 = vmul.f32 %v7208, %v1651
  %v7225 = vadd.f32 %v7172, %v7209
  %v7226 = vadd.f32 %v7173, %v7210
  %v7227 = vadd.f32 %v7174, %v7211
  %v7228 = vadd.f32 %v7175, %v7212
  %v7229 = vadd.f32 %v7176, %v7213
  %v7230 = vadd.f32 %v7177, %v7214
  %v7231 = vadd.f32 %v7178, %v7215
  %v7232 = vadd.f32 %v7179, %v7216
  %v7233 = vadd.f32 %v7180, %v7217
  %v7234 = vadd.f32 %v7181, %v7218
  %v7235 = vadd.f32 %v7182, %v7219
  %v7236 = vadd.f32 %v7183, %v7220
  %v7237 = vadd.f32 %v7184, %v7221
  %v7238 = vadd.f32 %v7185, %v7222
  %v7239 = vadd.f32 %v7186, %v7223
  %v7240 = vadd.f32 %v7187, %v7224
  %v7241 = vld [vmem:[#allocation2 + $0x90] sm:$0xff]
  %v7242 = vlaneseq
  %v7243 = vshrl.u32 %v7242, 7
  %v7244 = vsub.s32 7, %v7243
  %v7245 = vrot.slane %v6823, %v7244
  %v7246 = vmul.f32 %v6911, %v7245
  %v7247 = vmul.f32 %v6912, %v7245
  %v7248 = vmul.f32 %v6913, %v7245
  %v7249 = vmul.f32 %v6914, %v7245
  %v7250 = vmul.f32 %v6915, %v7245
  %v7251 = vmul.f32 %v6916, %v7245
  %v7252 = vmul.f32 %v6917, %v7245
  %v7253 = vmul.f32 %v6918, %v7245
  %v7254 = vmul.f32 %v6919, %v7245
  %v7255 = vmul.f32 %v6920, %v7245
  %v7256 = vmul.f32 %v6921, %v7245
  %v7257 = vmul.f32 %v6922, %v7245
  %v7258 = vmul.f32 %v6923, %v7245
  %v7259 = vmul.f32 %v6924, %v7245
  %v7260 = vmul.f32 %v7098, %v7245
  %v7261 = vmul.f32 %v7241, %v7245
  %v7262 = vmul.f32 %v7246, %v1723
  %v7263 = vmul.f32 %v7247, %v1727
  %v7264 = vmul.f32 %v7248, %v1731
  %v7265 = vmul.f32 %v7249, %v1735
  %v7266 = vmul.f32 %v7250, %v1739
  %v7267 = vmul.f32 %v7251, %v1743
  %v7268 = vmul.f32 %v7252, %v1747
  %v7269 = vmul.f32 %v7253, %v1751
  %v7270 = vmul.f32 %v7254, %v1755
  %v7271 = vmul.f32 %v7255, %v1759
  %v7272 = vmul.f32 %v7256, %v1763
  %v7273 = vmul.f32 %v7257, %v1767
  %v7274 = vmul.f32 %v7258, %v1771
  %v7275 = vmul.f32 %v7259, %v1775
  %v7276 = vmul.f32 %v7260, %v1779
  %v7277 = vmul.f32 %v7261, %v1783
  %v7278 = vadd.f32 %v7225, %v7262
  %v7279 = vadd.f32 %v7226, %v7263
  %v7280 = vadd.f32 %v7227, %v7264
  %v7281 = vadd.f32 %v7228, %v7265
  %v7282 = vadd.f32 %v7229, %v7266
  %v7283 = vadd.f32 %v7230, %v7267
  %v7284 = vadd.f32 %v7231, %v7268
  %v7285 = vadd.f32 %v7232, %v7269
  %v7286 = vadd.f32 %v7233, %v7270
  %v7287 = vadd.f32 %v7234, %v7271
  %v7288 = vadd.f32 %v7235, %v7272
  %v7289 = vadd.f32 %v7236, %v7273
  %v7290 = vadd.f32 %v7237, %v7274
  %v7291 = vadd.f32 %v7238, %v7275
  %v7292 = vadd.f32 %v7239, %v7276
  %v7293 = vadd.f32 %v7240, %v7277
  %v7294 = vld [vmem:[#allocation2 + $0x91] sm:$0xff]
  %v7295 = vlaneseq
  %v7296 = vshrl.u32 %v7295, 7
  %v7297 = vsub.s32 0, %v7296
  %v7298 = vrot.slane %v6824, %v7297
  %v7299 = vmul.f32 %v6979, %v7298
  %v7300 = vmul.f32 %v6980, %v7298
  %v7301 = vmul.f32 %v6981, %v7298
  %v7302 = vmul.f32 %v6982, %v7298
  %v7303 = vmul.f32 %v6983, %v7298
  %v7304 = vmul.f32 %v6984, %v7298
  %v7305 = vmul.f32 %v6985, %v7298
  %v7306 = vmul.f32 %v6986, %v7298
  %v7307 = vmul.f32 %v6987, %v7298
  %v7308 = vmul.f32 %v6988, %v7298
  %v7309 = vmul.f32 %v6989, %v7298
  %v7310 = vmul.f32 %v6990, %v7298
  %v7311 = vmul.f32 %v6991, %v7298
  %v7312 = vmul.f32 %v6992, %v7298
  %v7313 = vmul.f32 %v7135, %v7298
  %v7314 = vmul.f32 %v7294, %v7298
  %v7315 = vmul.f32 %v7299, %v1855
  %v7316 = vmul.f32 %v7300, %v1859
  %v7317 = vmul.f32 %v7301, %v1863
  %v7318 = vmul.f32 %v7302, %v1867
  %v7319 = vmul.f32 %v7303, %v1871
  %v7320 = vmul.f32 %v7304, %v1875
  %v7321 = vmul.f32 %v7305, %v1879
  %v7322 = vmul.f32 %v7306, %v1883
  %v7323 = vmul.f32 %v7307, %v1887
  %v7324 = vmul.f32 %v7308, %v1891
  %v7325 = vmul.f32 %v7309, %v1895
  %v7326 = vmul.f32 %v7310, %v1899
  %v7327 = vmul.f32 %v7311, %v1903
  %v7328 = vmul.f32 %v7312, %v1907
  %v7329 = vmul.f32 %v7313, %v1911
  %v7330 = vmul.f32 %v7314, %v1915
  %v7331 = vadd.f32 %v7278, %v7315
  %v7332 = vadd.f32 %v7279, %v7316
  %v7333 = vadd.f32 %v7280, %v7317
  %v7334 = vadd.f32 %v7281, %v7318
  %v7335 = vadd.f32 %v7282, %v7319
  %v7336 = vadd.f32 %v7283, %v7320
  %v7337 = vadd.f32 %v7284, %v7321
  %v7338 = vadd.f32 %v7285, %v7322
  %v7339 = vadd.f32 %v7286, %v7323
  %v7340 = vadd.f32 %v7287, %v7324
  %v7341 = vadd.f32 %v7288, %v7325
  %v7342 = vadd.f32 %v7289, %v7326
  %v7343 = vadd.f32 %v7290, %v7327
  %v7344 = vadd.f32 %v7291, %v7328
  %v7345 = vadd.f32 %v7292, %v7329
  %v7346 = vadd.f32 %v7293, %v7330
  %v7347 = vmul.f32 %v7331, %v7331
  %v7348 = vmul.f32 %v7332, %v7332
  %v7349 = vmul.f32 %v7333, %v7333
  %v7350 = vmul.f32 %v7334, %v7334
  %v7351 = vmul.f32 %v7335, %v7335
  %v7352 = vmul.f32 %v7336, %v7336
  %v7353 = vmul.f32 %v7337, %v7337
  %v7354 = vmul.f32 %v7338, %v7338
  %v7355 = vsel %vm360, %v7347, 0.0
  %v7356 = vsel %vm360, %v7348, 0.0
  %v7357 = vadd.f32 %v7355, %v7356
  %v7358 = vsel %vm360, %v7349, 0.0
  %v7359 = vadd.f32 %v7357, %v7358
  %v7360 = vsel %vm360, %v7350, 0.0
  %v7361 = vadd.f32 %v7359, %v7360
  %v7362 = vsel %vm360, %v7351, 0.0
  %v7363 = vadd.f32 %v7361, %v7362
  %v7364 = vsel %vm360, %v7352, 0.0
  %v7365 = vadd.f32 %v7363, %v7364
  %v7366 = vsel %vm360, %v7353, 0.0
  %v7367 = vadd.f32 %v7365, %v7366
  %v7368 = vsel %vm360, %v7354, 0.0
  %v7369 = vadd.f32 %v7367, %v7368
  %v7370 = vrot.slane %v7369, 4
  %v7371 = vadd.f32 %v7369, %v7370
  %v7372 = vrot.slane %v7371, 2
  %v7373 = vadd.f32 %v7371, %v7372
  %v7374 = vrot.slane %v7373, 1
  %v7375 = vadd.f32 %v7373, %v7374
  %v7376 = vmax.f32 %v7375, 1e-24
  %v7377 = vrsqrt.pop %v7376
  %v7378 = vmul.f32 %v7377, %v6375
  %v7379 = vlaneseq
  %v7380 = vshrl.u32 %v7379, 7
  %v7381 = vsub.s32 4, %v7380
  %v7382 = vrot.slane %v7378, %v7381
  %v7383 = vmul.f32 %v7331, %v7382
  %v7384 = vmul.f32 %v7332, %v7382
  %v7385 = vmul.f32 %v7333, %v7382
  %v7386 = vmul.f32 %v7334, %v7382
  %v7387 = vmul.f32 %v7335, %v7382
  %v7388 = vmul.f32 %v7336, %v7382
  %v7389 = vmul.f32 %v7337, %v7382
  %v7390 = vmul.f32 %v7338, %v7382
  %v7391 = vsel %vm1993, %v7347, 0.0
  %v7392 = vsel %vm1993, %v7348, 0.0
  %v7393 = vadd.f32 %v7391, %v7392
  %v7394 = vsel %vm1993, %v7349, 0.0
  %v7395 = vadd.f32 %v7393, %v7394
  %v7396 = vsel %vm1993, %v7350, 0.0
  %v7397 = vadd.f32 %v7395, %v7396
  %v7398 = vsel %vm1993, %v7351, 0.0
  %v7399 = vadd.f32 %v7397, %v7398
  %v7400 = vsel %vm1993, %v7352, 0.0
  %v7401 = vadd.f32 %v7399, %v7400
  %v7402 = vsel %vm1993, %v7353, 0.0
  %v7403 = vadd.f32 %v7401, %v7402
  %v7404 = vsel %vm1993, %v7354, 0.0
  %v7405 = vadd.f32 %v7403, %v7404
  %v7406 = vrot.slane %v7405, 4
  %v7407 = vadd.f32 %v7405, %v7406
  %v7408 = vrot.slane %v7407, 2
  %v7409 = vadd.f32 %v7407, %v7408
  %v7410 = vrot.slane %v7409, 1
  %v7411 = vadd.f32 %v7409, %v7410
  %v7412 = vmax.f32 %v7411, 1e-24
  %v7413 = vrsqrt.pop %v7412
  %v7414 = vmul.f32 %v7331, %v7413
  %v7415 = vmul.f32 %v7332, %v7413
  %v7416 = vmul.f32 %v7333, %v7413
  %v7417 = vmul.f32 %v7334, %v7413
  %v7418 = vmul.f32 %v7335, %v7413
  %v7419 = vmul.f32 %v7336, %v7413
  %v7420 = vmul.f32 %v7337, %v7413
  %v7421 = vmul.f32 %v7338, %v7413
  %v7422 = vld [vmem:[%s3] sm:$0xff]
  %v7423 = vld [vmem:[%s3 + $0x8] sm:$0xff]
  %v7424 = vld [vmem:[%s3 + $0x10] sm:$0xff]
  %v7425 = vld [vmem:[%s3 + $0x18] sm:$0xff]
  %7426 = vxpose.xlu0.b32.start [1/16] %v7383, 128
  %7427 = vxpose.xlu0.b32.cont [2/16] %v7384, 128
  %7428 = vxpose.xlu0.b32.cont [3/16] %v7385, 128
  %7429 = vxpose.xlu0.b32.cont [4/16] %v7386, 128
  %7430 = vxpose.xlu0.b32.cont [5/16] %v7387, 128
  %7431 = vxpose.xlu0.b32.cont [6/16] %v7388, 128
  %7432 = vxpose.xlu0.b32.cont [7/16] %v7389, 128
  %7433 = vxpose.xlu0.b32.cont [8/16] %v7390, 128
  %7434 = vxpose.xlu0.b32.cont [9/16] 0.0, 128
  %7435 = vxpose.xlu0.b32.cont [10/16] 0.0, 128
  %7436 = vxpose.xlu0.b32.cont [11/16] 0.0, 128
  %7437 = vxpose.xlu0.b32.cont [12/16] 0.0, 128
  %7438 = vxpose.xlu0.b32.cont [13/16] 0.0, 128
  %7439 = vxpose.xlu0.b32.cont [14/16] 0.0, 128
  %7440 = vxpose.xlu0.b32.cont [15/16] 0.0, 128
  %7441 = vxpose.xlu0.b32.end [16/16] 0.0, 128
  %v7442 = vpop.trf.xlu0
  %v7443 = vpop.trf.xlu0
  %v7444 = vpop.trf.xlu0
  %v7445 = vpop.trf.xlu0
  %v7446 = vpop.trf.xlu0
  %v7447 = vpop.trf.xlu0
  %v7448 = vpop.trf.xlu0
  %v7449 = vpop.trf.xlu0
  %v7450 = vpop.trf.xlu0
  %v7451 = vpop.trf.xlu0
  %v7452 = vpop.trf.xlu0
  %v7453 = vpop.trf.xlu0
  %v7454 = vpop.trf.xlu0
  %v7455 = vpop.trf.xlu0
  %v7456 = vpop.trf.xlu0
  %v7457 = vpop.trf.xlu0
  %7466 = vrot.lane.b32.xlu0 %v7414, 96
  %v7467 = vpop.permute.xlu0 %7466
  %7468 = vrot.lane.b32.xlu0 %v7415, 96
  %v7469 = vpop.permute.xlu0 %7468
  %7470 = vrot.lane.b32.xlu0 %v7416, 96
  %v7471 = vpop.permute.xlu0 %7470
  %7472 = vrot.lane.b32.xlu0 %v7417, 96
  %v7473 = vpop.permute.xlu0 %7472
  %7474 = vrot.lane.b32.xlu0 %v7418, 96
  %v7475 = vpop.permute.xlu0 %7474
  %7476 = vrot.lane.b32.xlu0 %v7419, 96
  %v7477 = vpop.permute.xlu0 %7476
  %7478 = vrot.lane.b32.xlu0 %v7420, 96
  %v7479 = vpop.permute.xlu0 %7478
  %7480 = vrot.lane.b32.xlu0 %v7421, 96
  %v7481 = vpop.permute.xlu0 %7480
  %v7491 = vsel %vm95, %v7442, 0
  %v7494 = vsel %vm95, %v7443, 0
  %v7497 = vsel %vm95, %v7444, 0
  %v7500 = vsel %vm95, %v7445, 0
  %7502 = vmatprep.subr.mxu0 0.0
  %7503 = vmatpush1.msra.mxu0 %v7467
  %7504 = vmatprep.subr.mxu0 0.0
  %7505 = vmatpush1.msra.mxu0 %v7469
  %7506 = vmatprep.subr.mxu0 0.0
  %7507 = vmatpush1.msra.mxu0 %v7471
  %7508 = vmatprep.subr.mxu0 0.0
  %7509 = vmatpush1.msra.mxu0 %v7473
  %7510 = vmatprep.subr.mxu0 0.0
  %7511 = vmatpush1.msra.mxu0 %v7475
  %7512 = vmatprep.subr.mxu0 0.0
  %7513 = vmatpush1.msra.mxu0 %v7477
  %7514 = vmatprep.subr.mxu0 0.0
  %7515 = vmatpush1.msra.mxu0 %v7479
  %7516 = vmatprep.subr.mxu0 0.0
  %7517 = vmatpush1.msra.mxu0 %v7481
  %7518 = vmatprep.subr.mxu0 0.0
  %7519 = vmatpush1.msra.mxu0 0.0
  %7520 = vmatprep.subr.mxu0 0.0
  %7521 = vmatpush1.msra.mxu0 0.0
  %7522 = vmatprep.subr.mxu0 0.0
  %7523 = vmatpush1.msra.mxu0 0.0
  %7524 = vmatprep.subr.mxu0 0.0
  %7525 = vmatpush1.msra.mxu0 0.0
  %7526 = vmatprep.subr.mxu0 0.0
  %7527 = vmatpush1.msra.mxu0 0.0
  %7528 = vmatprep.subr.mxu0 0.0
  %7529 = vmatpush1.msra.mxu0 0.0
  %7530 = vmatprep.subr.mxu0 0.0
  %7531 = vmatpush1.msra.mxu0 0.0
  %7532 = vmatprep.subr.mxu0 0.0
  %7533 = vmatpush1.msra.mxu0 0.0
  %7534 = vmatprep.subr.mxu0 0.0
  %7535 = vmatpush1.msra.mxu0 0.0
  %7536 = vmatprep.subr.mxu0 0.0
  %7537 = vmatpush1.msra.mxu0 0.0
  %7538 = vmatprep.subr.mxu0 0.0
  %7539 = vmatpush1.msra.mxu0 0.0
  %7540 = vmatprep.subr.mxu0 0.0
  %7541 = vmatpush1.msra.mxu0 0.0
  %7542 = vmatprep.subr.mxu0 0.0
  %7543 = vmatpush1.msra.mxu0 0.0
  %7544 = vmatprep.subr.mxu0 0.0
  %7545 = vmatpush1.msra.mxu0 0.0
  %7546 = vmatprep.subr.mxu0 0.0
  %7547 = vmatpush1.msra.mxu0 0.0
  %7548 = vmatprep.subr.mxu0 0.0
  %7549 = vmatpush1.msra.mxu0 0.0
  %7550 = vmatprep.subr.mxu0 0.0
  %7551 = vmatpush1.msra.mxu0 0.0
  %7552 = vmatprep.subr.mxu0 0.0
  %7553 = vmatpush1.msra.mxu0 0.0
  %7554 = vmatprep.subr.mxu0 0.0
  %7555 = vmatpush1.msra.mxu0 0.0
  %7556 = vmatprep.subr.mxu0 0.0
  %7557 = vmatpush1.msra.mxu0 0.0
  %7558 = vmatprep.subr.mxu0 0.0
  %7559 = vmatpush1.msra.mxu0 0.0
  %7560 = vmatprep.subr.mxu0 0.0
  %7561 = vmatpush1.msra.mxu0 0.0
  %7562 = vmatprep.subr.mxu0 0.0
  %7563 = vmatpush1.msra.mxu0 0.0
  %7564 = vmatprep.subr.mxu0 0.0
  %7565 = vmatpush1.msra.mxu0 0.0
  %7566 = vmatprep.mubr.f32.mxu0 0.0
  %7567 = vmatmul.mubr.f32.gmra.mrb[0].mxu0 %v7491
  %v7568 = vpop.f32.mrb[0].mxu0
  %v7569 = vadd.f32 %v7422, %v7568
  %v7570 = vpop.f32.mrb[0].mxu0
  %7571 = vmatprep.mubr.f32.mxu0 0.0
  %7572 = vmatmul.mubr.f32.gmra.mrb[0].mxu0 %v7494
  %v7573 = vpop.f32.mrb[0].mxu0
  %v7574 = vadd.f32 %v7423, %v7573
  %v7575 = vpop.f32.mrb[0].mxu0
  %7576 = vmatprep.mubr.f32.mxu0 0.0
  %7577 = vmatmul.mubr.f32.gmra.mrb[0].mxu0 %v7497
  %v7578 = vpop.f32.mrb[0].mxu0
  %v7579 = vadd.f32 %v7424, %v7578
  %v7580 = vpop.f32.mrb[0].mxu0
  %7581 = vmatprep.mubr.f32.mxu0 0.0
  %7582 = vmatmul.mubr.f32.gmra.mrb[0].mxu0 %v7500
  %v7583 = vpop.f32.mrb[0].mxu0
  %v7584 = vadd.f32 %v7425, %v7583
  %v7585 = vpop.f32.mrb[0].mxu0
  %7586 = vdwg.mxu0
  %v7587 = vsel %vm360, %v7569, -inf
  %7588 = vmax.xlane.f32.xlu0 %v7587
  %v7589 = vpop.xlane.xlu0 %7588
  %v7590 = vsel %vm360, %v7574, -inf
  %7591 = vmax.xlane.f32.xlu0 %v7590
  %v7592 = vpop.xlane.xlu0 %7591
  %v7593 = vsel %vm360, %v7579, -inf
  %7594 = vmax.xlane.f32.xlu0 %v7593
  %v7595 = vpop.xlane.xlu0 %7594
  %v7596 = vsel %vm360, %v7584, -inf
  %7597 = vmax.xlane.f32.xlu0 %v7596
  %v7598 = vpop.xlane.xlu0 %7597
  %v7599 = vsub.f32 %v7569, %v7589
  %v7600 = vsub.f32 %v7574, %v7592
  %v7601 = vsub.f32 %v7579, %v7595
  %v7602 = vsub.f32 %v7584, %v7598
  %v7603 = vmul.f32 %v7599, 1.442695
  %v7604 = vpow.pop %v7603
  %v7605 = vmul.f32 %v7600, 1.442695
  %v7606 = vpow.pop %v7605
  %v7607 = vmul.f32 %v7601, 1.442695
  %v7608 = vpow.pop %v7607
  %v7609 = vmul.f32 %v7602, 1.442695
  %v7610 = vpow.pop %v7609
  %v7611 = vsel %vm360, %v7604, 0.0
  %7612 = vadd.xlane.f32.xlu0 %v7611
  %v7613 = vpop.xlane.xlu0 %7612
  %v7614 = vsel %vm360, %v7606, 0.0
  %7615 = vadd.xlane.f32.xlu0 %v7614
  %v7616 = vpop.xlane.xlu0 %7615
  %v7617 = vsel %vm360, %v7608, 0.0
  %7618 = vadd.xlane.f32.xlu0 %v7617
  %v7619 = vpop.xlane.xlu0 %7618
  %v7620 = vsel %vm360, %v7610, 0.0
  %7621 = vadd.xlane.f32.xlu0 %v7620
  %v7622 = vpop.xlane.xlu0 %7621
  %v7623 = vrcp.pop %v7613
  %v7624 = vrcp.pop %v7616
  %v7625 = vrcp.pop %v7619
  %v7626 = vrcp.pop %v7622
  %v7627 = vmul.f32 %v7604, %v7623
  %v7628 = vmul.f32 %v7606, %v7624
  %v7629 = vmul.f32 %v7608, %v7625
  %v7630 = vmul.f32 %v7610, %v7626
  %7639 = vrot.lane.b32.xlu0 %v7331, 64
  %v7640 = vpop.permute.xlu0 %7639
  %7641 = vrot.lane.b32.xlu0 %v7332, 64
  %v7642 = vpop.permute.xlu0 %7641
  %7643 = vrot.lane.b32.xlu0 %v7333, 64
  %v7644 = vpop.permute.xlu0 %7643
  %7645 = vrot.lane.b32.xlu0 %v7334, 64
  %v7646 = vpop.permute.xlu0 %7645
  %7647 = vrot.lane.b32.xlu0 %v7335, 64
  %v7648 = vpop.permute.xlu0 %7647
  %7649 = vrot.lane.b32.xlu0 %v7336, 64
  %v7650 = vpop.permute.xlu0 %7649
  %7651 = vrot.lane.b32.xlu0 %v7337, 64
  %v7652 = vpop.permute.xlu0 %7651
  %7653 = vrot.lane.b32.xlu0 %v7338, 64
  %v7654 = vpop.permute.xlu0 %7653
  %v7655 = vsel %vm360, %v7640, 0
  %v7657 = vsel %vm360, %v7642, 0
  %v7659 = vsel %vm360, %v7644, 0
  %v7661 = vsel %vm360, %v7646, 0
  %v7663 = vsel %vm360, %v7648, 0
  %v7665 = vsel %vm360, %v7650, 0
  %v7667 = vsel %vm360, %v7652, 0
  %v7669 = vsel %vm360, %v7654, 0
  %v7672 = vsel %vm360, %v7627, 0
  %v7675 = vsel %vm360, %v7628, 0
  %v7678 = vsel %vm360, %v7629, 0
  %v7681 = vsel %vm360, %v7630, 0
  %7683 = vmatprep.subr.mxu0 0.0
  %7684 = vmatpush1.xpose.msra.mxu0 %v7672
  %7685 = vmatprep.subr.mxu0 0.0
  %7686 = vmatpush1.xpose.msra.mxu0 %v7675
  %7687 = vmatprep.subr.mxu0 0.0
  %7688 = vmatpush1.xpose.msra.mxu0 %v7678
  %7689 = vmatprep.subr.mxu0 0.0
  %7690 = vmatpush1.xpose.msra.mxu0 %v7681
  %7691 = vmatprep.subr.mxu0 0.0
  %7692 = vmatpush1.xpose.msra.mxu0 0.0
  %7693 = vmatprep.subr.mxu0 0.0
  %7694 = vmatpush1.xpose.msra.mxu0 0.0
  %7695 = vmatprep.subr.mxu0 0.0
  %7696 = vmatpush1.xpose.msra.mxu0 0.0
  %7697 = vmatprep.subr.mxu0 0.0
  %7698 = vmatpush1.xpose.msra.mxu0 0.0
  %7699 = vmatprep.subr.mxu0 0.0
  %7700 = vmatpush1.xpose.msra.mxu0 0.0
  %7701 = vmatprep.subr.mxu0 0.0
  %7702 = vmatpush1.xpose.msra.mxu0 0.0
  %7703 = vmatprep.subr.mxu0 0.0
  %7704 = vmatpush1.xpose.msra.mxu0 0.0
  %7705 = vmatprep.subr.mxu0 0.0
  %7706 = vmatpush1.xpose.msra.mxu0 0.0
  %7707 = vmatprep.subr.mxu0 0.0
  %7708 = vmatpush1.xpose.msra.mxu0 0.0
  %7709 = vmatprep.subr.mxu0 0.0
  %7710 = vmatpush1.xpose.msra.mxu0 0.0
  %7711 = vmatprep.subr.mxu0 0.0
  %7712 = vmatpush1.xpose.msra.mxu0 0.0
  %7713 = vmatprep.subr.mxu0 0.0
  %7714 = vmatpush1.xpose.msra.mxu0 0.0
  %7715 = vmatprep.subr.mxu0 0.0
  %7716 = vmatpush1.xpose.msra.mxu0 0.0
  %7717 = vmatprep.subr.mxu0 0.0
  %7718 = vmatpush1.xpose.msra.mxu0 0.0
  %7719 = vmatprep.subr.mxu0 0.0
  %7720 = vmatpush1.xpose.msra.mxu0 0.0
  %7721 = vmatprep.subr.mxu0 0.0
  %7722 = vmatpush1.xpose.msra.mxu0 0.0
  %7723 = vmatprep.subr.mxu0 0.0
  %7724 = vmatpush1.xpose.msra.mxu0 0.0
  %7725 = vmatprep.subr.mxu0 0.0
  %7726 = vmatpush1.xpose.msra.mxu0 0.0
  %7727 = vmatprep.subr.mxu0 0.0
  %7728 = vmatpush1.xpose.msra.mxu0 0.0
  %7729 = vmatprep.subr.mxu0 0.0
  %7730 = vmatpush1.xpose.msra.mxu0 0.0
  %7731 = vmatprep.subr.mxu0 0.0
  %7732 = vmatpush1.xpose.msra.mxu0 0.0
  %7733 = vmatprep.subr.mxu0 0.0
  %7734 = vmatpush1.xpose.msra.mxu0 0.0
  %7735 = vmatprep.subr.mxu0 0.0
  %7736 = vmatpush1.xpose.msra.mxu0 0.0
  %7737 = vmatprep.subr.mxu0 0.0
  %7738 = vmatpush1.xpose.msra.mxu0 0.0
  %7739 = vmatprep.subr.mxu0 0.0
  %7740 = vmatpush1.xpose.msra.mxu0 0.0
  %7741 = vmatprep.subr.mxu0 0.0
  %7742 = vmatpush1.xpose.msra.mxu0 0.0
  %7743 = vmatprep.subr.mxu0 0.0
  %7744 = vmatpush1.xpose.msra.mxu0 0.0
  %7745 = vmatprep.subr.mxu0 0.0
  %7746 = vmatpush1.xpose.msra.mxu0 0.0
  %7747 = vmatprep.mubr.f32.mxu0 0.0
  %7748 = vmatmul.mubr.f32.gmra.mrb[0].mxu0 %v7655
  %v7749 = vpop.f32.mrb[0].mxu0
  %v7750 = vadd.f32 0.0, %v7749
  %v7751 = vpop.f32.mrb[0].mxu0
  %7752 = vmatprep.mubr.f32.mxu0 0.0
  %7753 = vmatmul.mubr.f32.gmra.mrb[0].mxu0 %v7657
  %v7754 = vpop.f32.mrb[0].mxu0
  %v7755 = vadd.f32 0.0, %v7754
  %v7756 = vpop.f32.mrb[0].mxu0
  %7757 = vmatprep.mubr.f32.mxu0 0.0
  %7758 = vmatmul.mubr.f32.gmra.mrb[0].mxu0 %v7659
  %v7759 = vpop.f32.mrb[0].mxu0
  %v7760 = vadd.f32 0.0, %v7759
  %v7761 = vpop.f32.mrb[0].mxu0
  %7762 = vmatprep.mubr.f32.mxu0 0.0
  %7763 = vmatmul.mubr.f32.gmra.mrb[0].mxu0 %v7661
  %v7764 = vpop.f32.mrb[0].mxu0
  %v7765 = vadd.f32 0.0, %v7764
  %v7766 = vpop.f32.mrb[0].mxu0
  %7767 = vmatprep.mubr.f32.mxu0 0.0
  %7768 = vmatmul.mubr.f32.gmra.mrb[0].mxu0 %v7663
  %v7769 = vpop.f32.mrb[0].mxu0
  %v7770 = vadd.f32 0.0, %v7769
  %v7771 = vpop.f32.mrb[0].mxu0
  %7772 = vmatprep.mubr.f32.mxu0 0.0
  %7773 = vmatmul.mubr.f32.gmra.mrb[0].mxu0 %v7665
  %v7774 = vpop.f32.mrb[0].mxu0
  %v7775 = vadd.f32 0.0, %v7774
  %v7776 = vpop.f32.mrb[0].mxu0
  %7777 = vmatprep.mubr.f32.mxu0 0.0
  %7778 = vmatmul.mubr.f32.gmra.mrb[0].mxu0 %v7667
  %v7779 = vpop.f32.mrb[0].mxu0
  %v7780 = vadd.f32 0.0, %v7779
  %v7781 = vpop.f32.mrb[0].mxu0
  %7782 = vmatprep.mubr.f32.mxu0 0.0
  %7783 = vmatmul.mubr.f32.gmra.mrb[0].mxu0 %v7669
  %v7784 = vpop.f32.mrb[0].mxu0
  %v7785 = vadd.f32 0.0, %v7784
  %v7786 = vpop.f32.mrb[0].mxu0
  %7787 = vdwg.mxu0
  %v7788 = vmul.f32 %v7339, %v7339
  %v7789 = vmul.f32 %v7340, %v7340
  %v7790 = vmul.f32 %v7341, %v7341
  %v7791 = vmul.f32 %v7342, %v7342
  %v7792 = vmul.f32 %v7343, %v7343
  %v7793 = vmul.f32 %v7344, %v7344
  %v7794 = vmul.f32 %v7345, %v7345
  %v7795 = vmul.f32 %v7346, %v7346
  %v7796 = vsel %vm360, %v7788, 0.0
  %v7797 = vsel %vm360, %v7789, 0.0
  %v7798 = vadd.f32 %v7796, %v7797
  %v7799 = vsel %vm360, %v7790, 0.0
  %v7800 = vadd.f32 %v7798, %v7799
  %v7801 = vsel %vm360, %v7791, 0.0
  %v7802 = vadd.f32 %v7800, %v7801
  %v7803 = vsel %vm360, %v7792, 0.0
  %v7804 = vadd.f32 %v7802, %v7803
  %v7805 = vsel %vm360, %v7793, 0.0
  %v7806 = vadd.f32 %v7804, %v7805
  %v7807 = vsel %vm360, %v7794, 0.0
  %v7808 = vadd.f32 %v7806, %v7807
  %v7809 = vsel %vm360, %v7795, 0.0
  %v7810 = vadd.f32 %v7808, %v7809
  %v7811 = vrot.slane %v7810, 4
  %v7812 = vadd.f32 %v7810, %v7811
  %v7813 = vrot.slane %v7812, 2
  %v7814 = vadd.f32 %v7812, %v7813
  %v7815 = vrot.slane %v7814, 1
  %v7816 = vadd.f32 %v7814, %v7815
  %v7817 = vmax.f32 %v7816, 1e-24
  %v7818 = vrsqrt.pop %v7817
  %v7819 = vmul.f32 %v7818, %v6375
  %v7820 = vlaneseq
  %v7821 = vshrl.u32 %v7820, 7
  %v7822 = vsub.s32 4, %v7821
  %v7823 = vrot.slane %v7819, %v7822
  %v7824 = vmul.f32 %v7339, %v7823
  %v7825 = vmul.f32 %v7340, %v7823
  %v7826 = vmul.f32 %v7341, %v7823
  %v7827 = vmul.f32 %v7342, %v7823
  %v7828 = vmul.f32 %v7343, %v7823
  %v7829 = vmul.f32 %v7344, %v7823
  %v7830 = vmul.f32 %v7345, %v7823
  %v7831 = vmul.f32 %v7346, %v7823
  %v7832 = vsel %vm1993, %v7788, 0.0
  %v7833 = vsel %vm1993, %v7789, 0.0
  %v7834 = vadd.f32 %v7832, %v7833
  %v7835 = vsel %vm1993, %v7790, 0.0
  %v7836 = vadd.f32 %v7834, %v7835
  %v7837 = vsel %vm1993, %v7791, 0.0
  %v7838 = vadd.f32 %v7836, %v7837
  %v7839 = vsel %vm1993, %v7792, 0.0
  %v7840 = vadd.f32 %v7838, %v7839
  %v7841 = vsel %vm1993, %v7793, 0.0
  %v7842 = vadd.f32 %v7840, %v7841
  %v7843 = vsel %vm1993, %v7794, 0.0
  %v7844 = vadd.f32 %v7842, %v7843
  %v7845 = vsel %vm1993, %v7795, 0.0
  %v7846 = vadd.f32 %v7844, %v7845
  %v7847 = vrot.slane %v7846, 4
  %v7848 = vadd.f32 %v7846, %v7847
  %v7849 = vrot.slane %v7848, 2
  %v7850 = vadd.f32 %v7848, %v7849
  %v7851 = vrot.slane %v7850, 1
  %v7852 = vadd.f32 %v7850, %v7851
  %v7853 = vmax.f32 %v7852, 1e-24
  %v7854 = vrsqrt.pop %v7853
  %v7855 = vmul.f32 %v7339, %v7854
  %v7856 = vmul.f32 %v7340, %v7854
  %v7857 = vmul.f32 %v7341, %v7854
  %v7858 = vmul.f32 %v7342, %v7854
  %v7859 = vmul.f32 %v7343, %v7854
  %v7860 = vmul.f32 %v7344, %v7854
  %v7861 = vmul.f32 %v7345, %v7854
  %v7862 = vmul.f32 %v7346, %v7854
  %7863 = vxpose.xlu0.b32.start [1/16] %v7824, 128
  %7864 = vxpose.xlu0.b32.cont [2/16] %v7825, 128
  %7865 = vxpose.xlu0.b32.cont [3/16] %v7826, 128
  %7866 = vxpose.xlu0.b32.cont [4/16] %v7827, 128
  %7867 = vxpose.xlu0.b32.cont [5/16] %v7828, 128
  %7868 = vxpose.xlu0.b32.cont [6/16] %v7829, 128
  %7869 = vxpose.xlu0.b32.cont [7/16] %v7830, 128
  %7870 = vxpose.xlu0.b32.cont [8/16] %v7831, 128
  %7871 = vxpose.xlu0.b32.cont [9/16] 0.0, 128
  %7872 = vxpose.xlu0.b32.cont [10/16] 0.0, 128
  %7873 = vxpose.xlu0.b32.cont [11/16] 0.0, 128
  %7874 = vxpose.xlu0.b32.cont [12/16] 0.0, 128
  %7875 = vxpose.xlu0.b32.cont [13/16] 0.0, 128
  %7876 = vxpose.xlu0.b32.cont [14/16] 0.0, 128
  %7877 = vxpose.xlu0.b32.cont [15/16] 0.0, 128
  %7878 = vxpose.xlu0.b32.end [16/16] 0.0, 128
  %v7879 = vpop.trf.xlu0
  %v7880 = vpop.trf.xlu0
  %v7881 = vpop.trf.xlu0
  %v7882 = vpop.trf.xlu0
  %v7883 = vpop.trf.xlu0
  %v7884 = vpop.trf.xlu0
  %v7885 = vpop.trf.xlu0
  %v7886 = vpop.trf.xlu0
  %v7887 = vpop.trf.xlu0
  %v7888 = vpop.trf.xlu0
  %v7889 = vpop.trf.xlu0
  %v7890 = vpop.trf.xlu0
  %v7891 = vpop.trf.xlu0
  %v7892 = vpop.trf.xlu0
  %v7893 = vpop.trf.xlu0
  %v7894 = vpop.trf.xlu0
  %7903 = vrot.lane.b32.xlu0 %v7855, 96
  %v7904 = vpop.permute.xlu0 %7903
  %7905 = vrot.lane.b32.xlu0 %v7856, 96
  %v7906 = vpop.permute.xlu0 %7905
  %7907 = vrot.lane.b32.xlu0 %v7857, 96
  %v7908 = vpop.permute.xlu0 %7907
  %7909 = vrot.lane.b32.xlu0 %v7858, 96
  %v7910 = vpop.permute.xlu0 %7909
  %7911 = vrot.lane.b32.xlu0 %v7859, 96
  %v7912 = vpop.permute.xlu0 %7911
  %7913 = vrot.lane.b32.xlu0 %v7860, 96
  %v7914 = vpop.permute.xlu0 %7913
  %7915 = vrot.lane.b32.xlu0 %v7861, 96
  %v7916 = vpop.permute.xlu0 %7915
  %7917 = vrot.lane.b32.xlu0 %v7862, 96
  %v7918 = vpop.permute.xlu0 %7917
  %v7928 = vsel %vm95, %v7879, 0
  %v7931 = vsel %vm95, %v7880, 0
  %v7934 = vsel %vm95, %v7881, 0
  %v7937 = vsel %vm95, %v7882, 0
  %7939 = vmatprep.subr.mxu0 0.0
  %7940 = vmatpush1.msra.mxu0 %v7904
  %7941 = vmatprep.subr.mxu0 0.0
  %7942 = vmatpush1.msra.mxu0 %v7906
  %7943 = vmatprep.subr.mxu0 0.0
  %7944 = vmatpush1.msra.mxu0 %v7908
  %7945 = vmatprep.subr.mxu0 0.0
  %7946 = vmatpush1.msra.mxu0 %v7910
  %7947 = vmatprep.subr.mxu0 0.0
  %7948 = vmatpush1.msra.mxu0 %v7912
  %7949 = vmatprep.subr.mxu0 0.0
  %7950 = vmatpush1.msra.mxu0 %v7914
  %7951 = vmatprep.subr.mxu0 0.0
  %7952 = vmatpush1.msra.mxu0 %v7916
  %7953 = vmatprep.subr.mxu0 0.0
  %7954 = vmatpush1.msra.mxu0 %v7918
  %7955 = vmatprep.subr.mxu0 0.0
  %7956 = vmatpush1.msra.mxu0 0.0
  %7957 = vmatprep.subr.mxu0 0.0
  %7958 = vmatpush1.msra.mxu0 0.0
  %7959 = vmatprep.subr.mxu0 0.0
  %7960 = vmatpush1.msra.mxu0 0.0
  %7961 = vmatprep.subr.mxu0 0.0
  %7962 = vmatpush1.msra.mxu0 0.0
  %7963 = vmatprep.subr.mxu0 0.0
  %7964 = vmatpush1.msra.mxu0 0.0
  %7965 = vmatprep.subr.mxu0 0.0
  %7966 = vmatpush1.msra.mxu0 0.0
  %7967 = vmatprep.subr.mxu0 0.0
  %7968 = vmatpush1.msra.mxu0 0.0
  %7969 = vmatprep.subr.mxu0 0.0
  %7970 = vmatpush1.msra.mxu0 0.0
  %7971 = vmatprep.subr.mxu0 0.0
  %7972 = vmatpush1.msra.mxu0 0.0
  %7973 = vmatprep.subr.mxu0 0.0
  %7974 = vmatpush1.msra.mxu0 0.0
  %7975 = vmatprep.subr.mxu0 0.0
  %7976 = vmatpush1.msra.mxu0 0.0
  %7977 = vmatprep.subr.mxu0 0.0
  %7978 = vmatpush1.msra.mxu0 0.0
  %7979 = vmatprep.subr.mxu0 0.0
  %7980 = vmatpush1.msra.mxu0 0.0
  %7981 = vmatprep.subr.mxu0 0.0
  %7982 = vmatpush1.msra.mxu0 0.0
  %7983 = vmatprep.subr.mxu0 0.0
  %7984 = vmatpush1.msra.mxu0 0.0
  %7985 = vmatprep.subr.mxu0 0.0
  %7986 = vmatpush1.msra.mxu0 0.0
  %7987 = vmatprep.subr.mxu0 0.0
  %7988 = vmatpush1.msra.mxu0 0.0
  %7989 = vmatprep.subr.mxu0 0.0
  %7990 = vmatpush1.msra.mxu0 0.0
  %7991 = vmatprep.subr.mxu0 0.0
  %7992 = vmatpush1.msra.mxu0 0.0
  %7993 = vmatprep.subr.mxu0 0.0
  %7994 = vmatpush1.msra.mxu0 0.0
  %7995 = vmatprep.subr.mxu0 0.0
  %7996 = vmatpush1.msra.mxu0 0.0
  %7997 = vmatprep.subr.mxu0 0.0
  %7998 = vmatpush1.msra.mxu0 0.0
  %7999 = vmatprep.subr.mxu0 0.0
  %8000 = vmatpush1.msra.mxu0 0.0
  %8001 = vmatprep.subr.mxu0 0.0
  %8002 = vmatpush1.msra.mxu0 0.0
  %8003 = vmatprep.mubr.f32.mxu0 0.0
  %8004 = vmatmul.mubr.f32.gmra.mrb[0].mxu0 %v7928
  %v8005 = vpop.f32.mrb[0].mxu0
  %v8006 = vadd.f32 %v7422, %v8005
  %v8007 = vpop.f32.mrb[0].mxu0
  %8008 = vmatprep.mubr.f32.mxu0 0.0
  %8009 = vmatmul.mubr.f32.gmra.mrb[0].mxu0 %v7931
  %v8010 = vpop.f32.mrb[0].mxu0
  %v8011 = vadd.f32 %v7423, %v8010
  %v8012 = vpop.f32.mrb[0].mxu0
  %8013 = vmatprep.mubr.f32.mxu0 0.0
  %8014 = vmatmul.mubr.f32.gmra.mrb[0].mxu0 %v7934
  %v8015 = vpop.f32.mrb[0].mxu0
  %v8016 = vadd.f32 %v7424, %v8015
  %v8017 = vpop.f32.mrb[0].mxu0
  %8018 = vmatprep.mubr.f32.mxu0 0.0
  %8019 = vmatmul.mubr.f32.gmra.mrb[0].mxu0 %v7937
  %v8020 = vpop.f32.mrb[0].mxu0
  %v8021 = vadd.f32 %v7425, %v8020
  %v8022 = vpop.f32.mrb[0].mxu0
  %8023 = vdwg.mxu0
  %v8024 = vsel %vm360, %v8006, -inf
  %8025 = vmax.xlane.f32.xlu0 %v8024
  %v8026 = vpop.xlane.xlu0 %8025
  %v8027 = vsel %vm360, %v8011, -inf
  %8028 = vmax.xlane.f32.xlu0 %v8027
  %v8029 = vpop.xlane.xlu0 %8028
  %v8030 = vsel %vm360, %v8016, -inf
  %8031 = vmax.xlane.f32.xlu0 %v8030
  %v8032 = vpop.xlane.xlu0 %8031
  %v8033 = vsel %vm360, %v8021, -inf
  %8034 = vmax.xlane.f32.xlu0 %v8033
  %v8035 = vpop.xlane.xlu0 %8034
  %v8036 = vsub.f32 %v8006, %v8026
  %v8037 = vsub.f32 %v8011, %v8029
  %v8038 = vsub.f32 %v8016, %v8032
  %v8039 = vsub.f32 %v8021, %v8035
  %v8040 = vmul.f32 %v8036, 1.442695
  %v8041 = vpow.pop %v8040
  %v8042 = vmul.f32 %v8037, 1.442695
  %v8043 = vpow.pop %v8042
  %v8044 = vmul.f32 %v8038, 1.442695
  %v8045 = vpow.pop %v8044
  %v8046 = vmul.f32 %v8039, 1.442695
  %v8047 = vpow.pop %v8046
  %v8048 = vsel %vm360, %v8041, 0.0
  %8049 = vadd.xlane.f32.xlu0 %v8048
  %v8050 = vpop.xlane.xlu0 %8049
  %v8051 = vsel %vm360, %v8043, 0.0
  %8052 = vadd.xlane.f32.xlu0 %v8051
  %v8053 = vpop.xlane.xlu0 %8052
  %v8054 = vsel %vm360, %v8045, 0.0
  %8055 = vadd.xlane.f32.xlu0 %v8054
  %v8056 = vpop.xlane.xlu0 %8055
  %v8057 = vsel %vm360, %v8047, 0.0
  %8058 = vadd.xlane.f32.xlu0 %v8057
  %v8059 = vpop.xlane.xlu0 %8058
  %v8060 = vrcp.pop %v8050
  %v8061 = vrcp.pop %v8053
  %v8062 = vrcp.pop %v8056
  %v8063 = vrcp.pop %v8059
  %v8064 = vmul.f32 %v8041, %v8060
  %v8065 = vmul.f32 %v8043, %v8061
  %v8066 = vmul.f32 %v8045, %v8062
  %v8067 = vmul.f32 %v8047, %v8063
  %8076 = vrot.lane.b32.xlu0 %v7339, 64
  %v8077 = vpop.permute.xlu0 %8076
  %8078 = vrot.lane.b32.xlu0 %v7340, 64
  %v8079 = vpop.permute.xlu0 %8078
  %8080 = vrot.lane.b32.xlu0 %v7341, 64
  %v8081 = vpop.permute.xlu0 %8080
  %8082 = vrot.lane.b32.xlu0 %v7342, 64
  %v8083 = vpop.permute.xlu0 %8082
  %8084 = vrot.lane.b32.xlu0 %v7343, 64
  %v8085 = vpop.permute.xlu0 %8084
  %8086 = vrot.lane.b32.xlu0 %v7344, 64
  %v8087 = vpop.permute.xlu0 %8086
  %8088 = vrot.lane.b32.xlu0 %v7345, 64
  %v8089 = vpop.permute.xlu0 %8088
  %8090 = vrot.lane.b32.xlu0 %v7346, 64
  %v8091 = vpop.permute.xlu0 %8090
  %v8092 = vsel %vm360, %v8077, 0
  %v8094 = vsel %vm360, %v8079, 0
  %v8096 = vsel %vm360, %v8081, 0
  %v8098 = vsel %vm360, %v8083, 0
  %v8100 = vsel %vm360, %v8085, 0
  %v8102 = vsel %vm360, %v8087, 0
  %v8104 = vsel %vm360, %v8089, 0
  %v8106 = vsel %vm360, %v8091, 0
  %v8109 = vsel %vm360, %v8064, 0
  %v8112 = vsel %vm360, %v8065, 0
  %v8115 = vsel %vm360, %v8066, 0
  %v8118 = vsel %vm360, %v8067, 0
  %8120 = vmatprep.subr.mxu0 0.0
  %8121 = vmatpush1.xpose.msra.mxu0 %v8109
  %8122 = vmatprep.subr.mxu0 0.0
  %8123 = vmatpush1.xpose.msra.mxu0 %v8112
  %8124 = vmatprep.subr.mxu0 0.0
  %8125 = vmatpush1.xpose.msra.mxu0 %v8115
  %8126 = vmatprep.subr.mxu0 0.0
  %8127 = vmatpush1.xpose.msra.mxu0 %v8118
  %8128 = vmatprep.subr.mxu0 0.0
  %8129 = vmatpush1.xpose.msra.mxu0 0.0
  %8130 = vmatprep.subr.mxu0 0.0
  %8131 = vmatpush1.xpose.msra.mxu0 0.0
  %8132 = vmatprep.subr.mxu0 0.0
  %8133 = vmatpush1.xpose.msra.mxu0 0.0
  %8134 = vmatprep.subr.mxu0 0.0
  %8135 = vmatpush1.xpose.msra.mxu0 0.0
  %8136 = vmatprep.subr.mxu0 0.0
  %8137 = vmatpush1.xpose.msra.mxu0 0.0
  %8138 = vmatprep.subr.mxu0 0.0
  %8139 = vmatpush1.xpose.msra.mxu0 0.0
  %8140 = vmatprep.subr.mxu0 0.0
  %8141 = vmatpush1.xpose.msra.mxu0 0.0
  %8142 = vmatprep.subr.mxu0 0.0
  %8143 = vmatpush1.xpose.msra.mxu0 0.0
  %8144 = vmatprep.subr.mxu0 0.0
  %8145 = vmatpush1.xpose.msra.mxu0 0.0
  %8146 = vmatprep.subr.mxu0 0.0
  %8147 = vmatpush1.xpose.msra.mxu0 0.0
  %8148 = vmatprep.subr.mxu0 0.0
  %8149 = vmatpush1.xpose.msra.mxu0 0.0
  %8150 = vmatprep.subr.mxu0 0.0
  %8151 = vmatpush1.xpose.msra.mxu0 0.0
  %8152 = vmatprep.subr.mxu0 0.0
  %8153 = vmatpush1.xpose.msra.mxu0 0.0
  %8154 = vmatprep.subr.mxu0 0.0
  %8155 = vmatpush1.xpose.msra.mxu0 0.0
  %8156 = vmatprep.subr.mxu0 0.0
  %8157 = vmatpush1.xpose.msra.mxu0 0.0
  %8158 = vmatprep.subr.mxu0 0.0
  %8159 = vmatpush1.xpose.msra.mxu0 0.0
  %8160 = vmatprep.subr.mxu0 0.0
  %8161 = vmatpush1.xpose.msra.mxu0 0.0
  %8162 = vmatprep.subr.mxu0 0.0
  %8163 = vmatpush1.xpose.msra.mxu0 0.0
  %8164 = vmatprep.subr.mxu0 0.0
  %8165 = vmatpush1.xpose.msra.mxu0 0.0
  %8166 = vmatprep.subr.mxu0 0.0
  %8167 = vmatpush1.xpose.msra.mxu0 0.0
  %8168 = vmatprep.subr.mxu0 0.0
  %8169 = vmatpush1.xpose.msra.mxu0 0.0
  %8170 = vmatprep.subr.mxu0 0.0
  %8171 = vmatpush1.xpose.msra.mxu0 0.0
  %8172 = vmatprep.subr.mxu0 0.0
  %8173 = vmatpush1.xpose.msra.mxu0 0.0
  %8174 = vmatprep.subr.mxu0 0.0
  %8175 = vmatpush1.xpose.msra.mxu0 0.0
  %8176 = vmatprep.subr.mxu0 0.0
  %8177 = vmatpush1.xpose.msra.mxu0 0.0
  %8178 = vmatprep.subr.mxu0 0.0
  %8179 = vmatpush1.xpose.msra.mxu0 0.0
  %8180 = vmatprep.subr.mxu0 0.0
  %8181 = vmatpush1.xpose.msra.mxu0 0.0
  %8182 = vmatprep.subr.mxu0 0.0
  %8183 = vmatpush1.xpose.msra.mxu0 0.0
  %8184 = vmatprep.mubr.f32.mxu0 0.0
  %8185 = vmatmul.mubr.f32.gmra.mrb[0].mxu0 %v8092
  %v8186 = vpop.f32.mrb[0].mxu0
  %v8187 = vadd.f32 0.0, %v8186
  %v8188 = vpop.f32.mrb[0].mxu0
  %8189 = vmatprep.mubr.f32.mxu0 0.0
  %8190 = vmatmul.mubr.f32.gmra.mrb[0].mxu0 %v8094
  %v8191 = vpop.f32.mrb[0].mxu0
  %v8192 = vadd.f32 0.0, %v8191
  %v8193 = vpop.f32.mrb[0].mxu0
  %8194 = vmatprep.mubr.f32.mxu0 0.0
  %8195 = vmatmul.mubr.f32.gmra.mrb[0].mxu0 %v8096
  %v8196 = vpop.f32.mrb[0].mxu0
  %v8197 = vadd.f32 0.0, %v8196
  %v8198 = vpop.f32.mrb[0].mxu0
  %8199 = vmatprep.mubr.f32.mxu0 0.0
  %8200 = vmatmul.mubr.f32.gmra.mrb[0].mxu0 %v8098
  %v8201 = vpop.f32.mrb[0].mxu0
  %v8202 = vadd.f32 0.0, %v8201
  %v8203 = vpop.f32.mrb[0].mxu0
  %8204 = vmatprep.mubr.f32.mxu0 0.0
  %8205 = vmatmul.mubr.f32.gmra.mrb[0].mxu0 %v8100
  %v8206 = vpop.f32.mrb[0].mxu0
  %v8207 = vadd.f32 0.0, %v8206
  %v8208 = vpop.f32.mrb[0].mxu0
  %8209 = vmatprep.mubr.f32.mxu0 0.0
  %8210 = vmatmul.mubr.f32.gmra.mrb[0].mxu0 %v8102
  %v8211 = vpop.f32.mrb[0].mxu0
  %v8212 = vadd.f32 0.0, %v8211
  %v8213 = vpop.f32.mrb[0].mxu0
  %8214 = vmatprep.mubr.f32.mxu0 0.0
  %8215 = vmatmul.mubr.f32.gmra.mrb[0].mxu0 %v8104
  %v8216 = vpop.f32.mrb[0].mxu0
  %v8217 = vadd.f32 0.0, %v8216
  %v8218 = vpop.f32.mrb[0].mxu0
  %8219 = vmatprep.mubr.f32.mxu0 0.0
  %8220 = vmatmul.mubr.f32.gmra.mrb[0].mxu0 %v8106
  %v8221 = vpop.f32.mrb[0].mxu0
  %v8222 = vadd.f32 0.0, %v8221
  %v8223 = vpop.f32.mrb[0].mxu0
  %8224 = vdwg.mxu0
  %s8225 = scalar_lea.vmem %s6, 32
  %v8226 = vld [vmem:[%s8225] sm:$0xff]
  %v8227 = vld [vmem:[%s8225 + $0x8] sm:$0xff]
  %v8228 = vld [vmem:[%s8225 + $0x10] sm:$0xff]
  %v8229 = vld [vmem:[%s8225 + $0x18] sm:$0xff]
  %v8231 = vsel %vm360, %v7750, 0
  %v8234 = vsel %vm360, %v7755, 0
  %v8237 = vsel %vm360, %v7760, 0
  %v8240 = vsel %vm360, %v7765, 0
  %v8243 = vsel %vm360, %v7770, 0
  %v8246 = vsel %vm360, %v7775, 0
  %v8249 = vsel %vm360, %v7780, 0
  %v8252 = vsel %vm360, %v7785, 0
  %v8255 = vsel %vm360, %v8187, 0
  %v8258 = vsel %vm360, %v8192, 0
  %v8261 = vsel %vm360, %v8197, 0
  %v8264 = vsel %vm360, %v8202, 0
  %v8267 = vsel %vm360, %v8207, 0
  %v8270 = vsel %vm360, %v8212, 0
  %v8273 = vsel %vm360, %v8217, 0
  %v8276 = vsel %vm360, %v8222, 0
  %8278 = vmatprep.subr.mxu0 0.0
  %8279 = vmatpush1.msra.mxu0 %v8226
  %8280 = vmatprep.subr.mxu0 0.0
  %8281 = vmatpush1.msra.mxu0 %v8227
  %8282 = vmatprep.subr.mxu0 0.0
  %8283 = vmatpush1.msra.mxu0 %v8228
  %8284 = vmatprep.subr.mxu0 0.0
  %8285 = vmatpush1.msra.mxu0 %v8229
  %8286 = vmatprep.subr.mxu0 0.0
  %8287 = vmatpush1.msra.mxu0 0.0
  %8288 = vmatprep.subr.mxu0 0.0
  %8289 = vmatpush1.msra.mxu0 0.0
  %8290 = vmatprep.subr.mxu0 0.0
  %8291 = vmatpush1.msra.mxu0 0.0
  %8292 = vmatprep.subr.mxu0 0.0
  %8293 = vmatpush1.msra.mxu0 0.0
  %8294 = vmatprep.subr.mxu0 0.0
  %8295 = vmatpush1.msra.mxu0 0.0
  %8296 = vmatprep.subr.mxu0 0.0
  %8297 = vmatpush1.msra.mxu0 0.0
  %8298 = vmatprep.subr.mxu0 0.0
  %8299 = vmatpush1.msra.mxu0 0.0
  %8300 = vmatprep.subr.mxu0 0.0
  %8301 = vmatpush1.msra.mxu0 0.0
  %8302 = vmatprep.subr.mxu0 0.0
  %8303 = vmatpush1.msra.mxu0 0.0
  %8304 = vmatprep.subr.mxu0 0.0
  %8305 = vmatpush1.msra.mxu0 0.0
  %8306 = vmatprep.subr.mxu0 0.0
  %8307 = vmatpush1.msra.mxu0 0.0
  %8308 = vmatprep.subr.mxu0 0.0
  %8309 = vmatpush1.msra.mxu0 0.0
  %8310 = vmatprep.subr.mxu0 0.0
  %8311 = vmatpush1.msra.mxu0 0.0
  %8312 = vmatprep.subr.mxu0 0.0
  %8313 = vmatpush1.msra.mxu0 0.0
  %8314 = vmatprep.subr.mxu0 0.0
  %8315 = vmatpush1.msra.mxu0 0.0
  %8316 = vmatprep.subr.mxu0 0.0
  %8317 = vmatpush1.msra.mxu0 0.0
  %8318 = vmatprep.subr.mxu0 0.0
  %8319 = vmatpush1.msra.mxu0 0.0
  %8320 = vmatprep.subr.mxu0 0.0
  %8321 = vmatpush1.msra.mxu0 0.0
  %8322 = vmatprep.subr.mxu0 0.0
  %8323 = vmatpush1.msra.mxu0 0.0
  %8324 = vmatprep.subr.mxu0 0.0
  %8325 = vmatpush1.msra.mxu0 0.0
  %8326 = vmatprep.subr.mxu0 0.0
  %8327 = vmatpush1.msra.mxu0 0.0
  %8328 = vmatprep.subr.mxu0 0.0
  %8329 = vmatpush1.msra.mxu0 0.0
  %8330 = vmatprep.subr.mxu0 0.0
  %8331 = vmatpush1.msra.mxu0 0.0
  %8332 = vmatprep.subr.mxu0 0.0
  %8333 = vmatpush1.msra.mxu0 0.0
  %8334 = vmatprep.subr.mxu0 0.0
  %8335 = vmatpush1.msra.mxu0 0.0
  %8336 = vmatprep.subr.mxu0 0.0
  %8337 = vmatpush1.msra.mxu0 0.0
  %8338 = vmatprep.subr.mxu0 0.0
  %8339 = vmatpush1.msra.mxu0 0.0
  %8340 = vmatprep.subr.mxu0 0.0
  %8341 = vmatpush1.msra.mxu0 0.0
  %8342 = vmatprep.mubr.f32.mxu0 0.0
  %8343 = vmatmul.mubr.f32.gmra.mrb[0].mxu0 %v8231
  %v8344 = vpop.f32.mrb[0].mxu0
  %v8345 = vadd.f32 0.0, %v8344
  %v8346 = vpop.f32.mrb[0].mxu0
  %8347 = vmatprep.mubr.f32.mxu0 0.0
  %8348 = vmatmul.mubr.f32.gmra.mrb[0].mxu0 %v8234
  %v8349 = vpop.f32.mrb[0].mxu0
  %v8350 = vadd.f32 0.0, %v8349
  %v8351 = vpop.f32.mrb[0].mxu0
  %8352 = vmatprep.mubr.f32.mxu0 0.0
  %8353 = vmatmul.mubr.f32.gmra.mrb[0].mxu0 %v8237
  %v8354 = vpop.f32.mrb[0].mxu0
  %v8355 = vadd.f32 0.0, %v8354
  %v8356 = vpop.f32.mrb[0].mxu0
  %8357 = vmatprep.mubr.f32.mxu0 0.0
  %8358 = vmatmul.mubr.f32.gmra.mrb[0].mxu0 %v8240
  %v8359 = vpop.f32.mrb[0].mxu0
  %v8360 = vadd.f32 0.0, %v8359
  %v8361 = vpop.f32.mrb[0].mxu0
  %8362 = vmatprep.mubr.f32.mxu0 0.0
  %8363 = vmatmul.mubr.f32.gmra.mrb[0].mxu0 %v8243
  %v8364 = vpop.f32.mrb[0].mxu0
  %v8365 = vadd.f32 0.0, %v8364
  %v8366 = vpop.f32.mrb[0].mxu0
  %8367 = vmatprep.mubr.f32.mxu0 0.0
  %8368 = vmatmul.mubr.f32.gmra.mrb[0].mxu0 %v8246
  %v8369 = vpop.f32.mrb[0].mxu0
  %v8370 = vadd.f32 0.0, %v8369
  %v8371 = vpop.f32.mrb[0].mxu0
  %8372 = vmatprep.mubr.f32.mxu0 0.0
  %8373 = vmatmul.mubr.f32.gmra.mrb[0].mxu0 %v8249
  %v8374 = vpop.f32.mrb[0].mxu0
  %v8375 = vadd.f32 0.0, %v8374
  %v8376 = vpop.f32.mrb[0].mxu0
  %8377 = vmatprep.mubr.f32.mxu0 0.0
  %8378 = vmatmul.mubr.f32.gmra.mrb[0].mxu0 %v8252
  %v8379 = vpop.f32.mrb[0].mxu0
  %v8380 = vadd.f32 0.0, %v8379
  %v8381 = vpop.f32.mrb[0].mxu0
  %8382 = vmatprep.mubr.f32.mxu0 0.0
  %8383 = vmatmul.mubr.f32.gmra.mrb[0].mxu0 %v8255
  %v8384 = vpop.f32.mrb[0].mxu0
  %v8385 = vadd.f32 0.0, %v8384
  %v8386 = vpop.f32.mrb[0].mxu0
  %8387 = vmatprep.mubr.f32.mxu0 0.0
  %8388 = vmatmul.mubr.f32.gmra.mrb[0].mxu0 %v8258
  %v8389 = vpop.f32.mrb[0].mxu0
  %v8390 = vadd.f32 0.0, %v8389
  %v8391 = vpop.f32.mrb[0].mxu0
  %8392 = vmatprep.mubr.f32.mxu0 0.0
  %8393 = vmatmul.mubr.f32.gmra.mrb[0].mxu0 %v8261
  %v8394 = vpop.f32.mrb[0].mxu0
  %v8395 = vadd.f32 0.0, %v8394
  %v8396 = vpop.f32.mrb[0].mxu0
  %8397 = vmatprep.mubr.f32.mxu0 0.0
  %8398 = vmatmul.mubr.f32.gmra.mrb[0].mxu0 %v8264
  %v8399 = vpop.f32.mrb[0].mxu0
  %v8400 = vadd.f32 0.0, %v8399
  %v8401 = vpop.f32.mrb[0].mxu0
  %8402 = vmatprep.mubr.f32.mxu0 0.0
  %8403 = vmatmul.mubr.f32.gmra.mrb[0].mxu0 %v8267
  %v8404 = vpop.f32.mrb[0].mxu0
  %v8405 = vadd.f32 0.0, %v8404
  %v8406 = vpop.f32.mrb[0].mxu0
  %8407 = vmatprep.mubr.f32.mxu0 0.0
  %8408 = vmatmul.mubr.f32.gmra.mrb[0].mxu0 %v8270
  %v8409 = vpop.f32.mrb[0].mxu0
  %v8410 = vadd.f32 0.0, %v8409
  %v8411 = vpop.f32.mrb[0].mxu0
  %8412 = vmatprep.mubr.f32.mxu0 0.0
  %8413 = vmatmul.mubr.f32.gmra.mrb[0].mxu0 %v8273
  %v8414 = vpop.f32.mrb[0].mxu0
  %v8415 = vadd.f32 0.0, %v8414
  %v8416 = vpop.f32.mrb[0].mxu0
  %8417 = vmatprep.mubr.f32.mxu0 0.0
  %8418 = vmatmul.mubr.f32.gmra.mrb[0].mxu0 %v8276
  %v8419 = vpop.f32.mrb[0].mxu0
  %v8420 = vadd.f32 0.0, %v8419
  %v8421 = vpop.f32.mrb[0].mxu0
  %8422 = vdwg.mxu0
  %v8423 = vadd.f32 %v6358, %v8345
  %v8424 = vadd.f32 %v6359, %v8350
  %v8425 = vadd.f32 %v6360, %v8355
  %v8426 = vadd.f32 %v6361, %v8360
  %v8427 = vadd.f32 %v6362, %v8365
  %v8428 = vadd.f32 %v6363, %v8370
  %v8429 = vadd.f32 %v6364, %v8375
  %v8430 = vadd.f32 %v6365, %v8380
  %v8431 = vadd.f32 %v6366, %v8385
  %v8432 = vadd.f32 %v6367, %v8390
  %v8433 = vadd.f32 %v6368, %v8395
  %v8434 = vadd.f32 %v6369, %v8400
  %v8435 = vadd.f32 %v6370, %v8405
  %v8436 = vadd.f32 %v6371, %v8410
  %v8437 = vadd.f32 %v6372, %v8415
  %v8438 = vadd.f32 %v6373, %v8420
  %v8439 = vsel %vm360, %v8423, 0.0
  %8440 = vadd.xlane.f32.xlu0 %v8439
  %v8441 = vpop.xlane.xlu0 %8440
  %v8442 = vsel %vm360, %v8424, 0.0
  %8443 = vadd.xlane.f32.xlu0 %v8442
  %v8444 = vpop.xlane.xlu0 %8443
  %v8445 = vsel %vm360, %v8425, 0.0
  %8446 = vadd.xlane.f32.xlu0 %v8445
  %v8447 = vpop.xlane.xlu0 %8446
  %v8448 = vsel %vm360, %v8426, 0.0
  %8449 = vadd.xlane.f32.xlu0 %v8448
  %v8450 = vpop.xlane.xlu0 %8449
  %v8451 = vsel %vm360, %v8427, 0.0
  %8452 = vadd.xlane.f32.xlu0 %v8451
  %v8453 = vpop.xlane.xlu0 %8452
  %v8454 = vsel %vm360, %v8428, 0.0
  %8455 = vadd.xlane.f32.xlu0 %v8454
  %v8456 = vpop.xlane.xlu0 %8455
  %v8457 = vsel %vm360, %v8429, 0.0
  %8458 = vadd.xlane.f32.xlu0 %v8457
  %v8459 = vpop.xlane.xlu0 %8458
  %v8460 = vsel %vm360, %v8430, 0.0
  %8461 = vadd.xlane.f32.xlu0 %v8460
  %v8462 = vpop.xlane.xlu0 %8461
  %v8463 = vsel %vm360, %v8431, 0.0
  %8464 = vadd.xlane.f32.xlu0 %v8463
  %v8465 = vpop.xlane.xlu0 %8464
  %v8466 = vsel %vm360, %v8432, 0.0
  %8467 = vadd.xlane.f32.xlu0 %v8466
  %v8468 = vpop.xlane.xlu0 %8467
  %v8469 = vsel %vm360, %v8433, 0.0
  %8470 = vadd.xlane.f32.xlu0 %v8469
  %v8471 = vpop.xlane.xlu0 %8470
  %v8472 = vsel %vm360, %v8434, 0.0
  %8473 = vadd.xlane.f32.xlu0 %v8472
  %v8474 = vpop.xlane.xlu0 %8473
  %v8475 = vsel %vm360, %v8435, 0.0
  %8476 = vadd.xlane.f32.xlu0 %v8475
  %v8477 = vpop.xlane.xlu0 %8476
  %v8478 = vsel %vm360, %v8436, 0.0
  %8479 = vadd.xlane.f32.xlu0 %v8478
  %v8480 = vpop.xlane.xlu0 %8479
  %v8481 = vsel %vm360, %v8437, 0.0
  %8482 = vadd.xlane.f32.xlu0 %v8481
  %v8483 = vpop.xlane.xlu0 %8482
  %v8484 = vsel %vm360, %v8438, 0.0
  %8485 = vadd.xlane.f32.xlu0 %v8484
  %v8486 = vpop.xlane.xlu0 %8485
  %v8487 = vmul.f32 %v8441, %v409
  %v8488 = vmul.f32 %v8444, %v409
  %v8489 = vmul.f32 %v8447, %v409
  %v8490 = vmul.f32 %v8450, %v409
  %v8491 = vmul.f32 %v8453, %v409
  %v8492 = vmul.f32 %v8456, %v409
  %v8493 = vmul.f32 %v8459, %v409
  %v8494 = vmul.f32 %v8462, %v409
  %v8495 = vmul.f32 %v8465, %v409
  %v8496 = vmul.f32 %v8468, %v409
  %v8497 = vmul.f32 %v8471, %v409
  %v8498 = vmul.f32 %v8474, %v409
  %v8499 = vmul.f32 %v8477, %v409
  %v8500 = vmul.f32 %v8480, %v409
  %v8501 = vmul.f32 %v8483, %v409
  %v8502 = vmul.f32 %v8486, %v409
  %v8503 = vsub.f32 %v8423, %v8487
  %v8504 = vsub.f32 %v8424, %v8488
  %v8505 = vsub.f32 %v8425, %v8489
  %v8506 = vsub.f32 %v8426, %v8490
  %v8507 = vsub.f32 %v8427, %v8491
  %v8508 = vsub.f32 %v8428, %v8492
  %v8509 = vsub.f32 %v8429, %v8493
  %v8510 = vsub.f32 %v8430, %v8494
  %v8511 = vsub.f32 %v8431, %v8495
  %v8512 = vsub.f32 %v8432, %v8496
  %v8513 = vsub.f32 %v8433, %v8497
  %v8514 = vsub.f32 %v8434, %v8498
  %v8515 = vsub.f32 %v8435, %v8499
  %v8516 = vsub.f32 %v8436, %v8500
  %v8517 = vsub.f32 %v8437, %v8501
  %v8518 = vsub.f32 %v8438, %v8502
  %v8519 = vmul.f32 %v8503, %v8503
  %v8520 = vmul.f32 %v8504, %v8504
  %v8521 = vmul.f32 %v8505, %v8505
  %v8522 = vmul.f32 %v8506, %v8506
  %v8523 = vmul.f32 %v8507, %v8507
  %v8524 = vmul.f32 %v8508, %v8508
  %v8525 = vmul.f32 %v8509, %v8509
  %v8526 = vmul.f32 %v8510, %v8510
  %v8527 = vmul.f32 %v8511, %v8511
  %v8528 = vmul.f32 %v8512, %v8512
  %v8529 = vmul.f32 %v8513, %v8513
  %v8530 = vmul.f32 %v8514, %v8514
  %v8531 = vmul.f32 %v8515, %v8515
  %v8532 = vmul.f32 %v8516, %v8516
  %v8533 = vmul.f32 %v8517, %v8517
  %v8534 = vmul.f32 %v8518, %v8518
  %v8535 = vsel %vm360, %v8519, 0.0
  %8536 = vadd.xlane.f32.xlu0 %v8535
  %v8537 = vpop.xlane.xlu0 %8536
  %v8538 = vsel %vm360, %v8520, 0.0
  %8539 = vadd.xlane.f32.xlu0 %v8538
  %v8540 = vpop.xlane.xlu0 %8539
  %v8541 = vsel %vm360, %v8521, 0.0
  %8542 = vadd.xlane.f32.xlu0 %v8541
  %v8543 = vpop.xlane.xlu0 %8542
  %v8544 = vsel %vm360, %v8522, 0.0
  %8545 = vadd.xlane.f32.xlu0 %v8544
  %v8546 = vpop.xlane.xlu0 %8545
  %v8547 = vsel %vm360, %v8523, 0.0
  %8548 = vadd.xlane.f32.xlu0 %v8547
  %v8549 = vpop.xlane.xlu0 %8548
  %v8550 = vsel %vm360, %v8524, 0.0
  %8551 = vadd.xlane.f32.xlu0 %v8550
  %v8552 = vpop.xlane.xlu0 %8551
  %v8553 = vsel %vm360, %v8525, 0.0
  %8554 = vadd.xlane.f32.xlu0 %v8553
  %v8555 = vpop.xlane.xlu0 %8554
  %v8556 = vsel %vm360, %v8526, 0.0
  %8557 = vadd.xlane.f32.xlu0 %v8556
  %v8558 = vpop.xlane.xlu0 %8557
  %v8559 = vsel %vm360, %v8527, 0.0
  %8560 = vadd.xlane.f32.xlu0 %v8559
  %v8561 = vpop.xlane.xlu0 %8560
  %v8562 = vsel %vm360, %v8528, 0.0
  %8563 = vadd.xlane.f32.xlu0 %v8562
  %v8564 = vpop.xlane.xlu0 %8563
  %v8565 = vsel %vm360, %v8529, 0.0
  %8566 = vadd.xlane.f32.xlu0 %v8565
  %v8567 = vpop.xlane.xlu0 %8566
  %v8568 = vsel %vm360, %v8530, 0.0
  %8569 = vadd.xlane.f32.xlu0 %v8568
  %v8570 = vpop.xlane.xlu0 %8569
  %v8571 = vsel %vm360, %v8531, 0.0
  %8572 = vadd.xlane.f32.xlu0 %v8571
  %v8573 = vpop.xlane.xlu0 %8572
  %v8574 = vsel %vm360, %v8532, 0.0
  %8575 = vadd.xlane.f32.xlu0 %v8574
  %v8576 = vpop.xlane.xlu0 %8575
  %v8577 = vsel %vm360, %v8533, 0.0
  %8578 = vadd.xlane.f32.xlu0 %v8577
  %v8579 = vpop.xlane.xlu0 %8578
  %v8580 = vsel %vm360, %v8534, 0.0
  %8581 = vadd.xlane.f32.xlu0 %v8580
  %v8582 = vpop.xlane.xlu0 %8581
  %v8583 = vmul.f32 %v8537, %v409
  %v8584 = vmul.f32 %v8540, %v409
  %v8585 = vmul.f32 %v8543, %v409
  %v8586 = vmul.f32 %v8546, %v409
  %v8587 = vmul.f32 %v8549, %v409
  %v8588 = vmul.f32 %v8552, %v409
  %v8589 = vmul.f32 %v8555, %v409
  %v8590 = vmul.f32 %v8558, %v409
  %v8591 = vmul.f32 %v8561, %v409
  %v8592 = vmul.f32 %v8564, %v409
  %v8593 = vmul.f32 %v8567, %v409
  %v8594 = vmul.f32 %v8570, %v409
  %v8595 = vmul.f32 %v8573, %v409
  %v8596 = vmul.f32 %v8576, %v409
  %v8597 = vmul.f32 %v8579, %v409
  %v8598 = vmul.f32 %v8582, %v409
  %v8599 = vadd.f32 %v8583, 1e-05
  %v8600 = vadd.f32 %v8584, 1e-05
  %v8601 = vadd.f32 %v8585, 1e-05
  %v8602 = vadd.f32 %v8586, 1e-05
  %v8603 = vadd.f32 %v8587, 1e-05
  %v8604 = vadd.f32 %v8588, 1e-05
  %v8605 = vadd.f32 %v8589, 1e-05
  %v8606 = vadd.f32 %v8590, 1e-05
  %v8607 = vadd.f32 %v8591, 1e-05
  %v8608 = vadd.f32 %v8592, 1e-05
  %v8609 = vadd.f32 %v8593, 1e-05
  %v8610 = vadd.f32 %v8594, 1e-05
  %v8611 = vadd.f32 %v8595, 1e-05
  %v8612 = vadd.f32 %v8596, 1e-05
  %v8613 = vadd.f32 %v8597, 1e-05
  %v8614 = vadd.f32 %v8598, 1e-05
  %v8615 = vrsqrt.pop %v8599
  %v8616 = vrsqrt.pop %v8600
  %v8617 = vrsqrt.pop %v8601
  %v8618 = vrsqrt.pop %v8602
  %v8619 = vrsqrt.pop %v8603
  %v8620 = vrsqrt.pop %v8604
  %v8621 = vrsqrt.pop %v8605
  %v8622 = vrsqrt.pop %v8606
  %v8623 = vrsqrt.pop %v8607
  %v8624 = vrsqrt.pop %v8608
  %v8625 = vrsqrt.pop %v8609
  %v8626 = vrsqrt.pop %v8610
  %v8627 = vrsqrt.pop %v8611
  %v8628 = vrsqrt.pop %v8612
  %v8629 = vrsqrt.pop %v8613
  %v8630 = vrsqrt.pop %v8614
  %v8631 = vmul.f32 %v8503, %v8615
  %v8632 = vmul.f32 %v8504, %v8616
  %v8633 = vmul.f32 %v8505, %v8617
  %v8634 = vmul.f32 %v8506, %v8618
  %v8635 = vmul.f32 %v8507, %v8619
  %v8636 = vmul.f32 %v8508, %v8620
  %v8637 = vmul.f32 %v8509, %v8621
  %v8638 = vmul.f32 %v8510, %v8622
  %v8639 = vmul.f32 %v8511, %v8623
  %v8640 = vmul.f32 %v8512, %v8624
  %v8641 = vmul.f32 %v8513, %v8625
  %v8642 = vmul.f32 %v8514, %v8626
  %v8643 = vmul.f32 %v8515, %v8627
  %v8644 = vmul.f32 %v8516, %v8628
  %v8645 = vmul.f32 %v8517, %v8629
  %v8646 = vmul.f32 %v8518, %v8630
  %v8647 = vlaneseq
  %v8648 = vshrl.u32 %v8647, 7
  %v8649 = vsub.s32 2, %v8648
  %v8650 = vrot.slane %v6375, %v8649
  %v8651 = vmul.f32 %v8631, %v8650
  %v8652 = vmul.f32 %v8632, %v8650
  %v8653 = vmul.f32 %v8633, %v8650
  %v8654 = vmul.f32 %v8634, %v8650
  %v8655 = vmul.f32 %v8635, %v8650
  %v8656 = vmul.f32 %v8636, %v8650
  %v8657 = vmul.f32 %v8637, %v8650
  %v8658 = vmul.f32 %v8638, %v8650
  %v8659 = vmul.f32 %v8639, %v8650
  %v8660 = vmul.f32 %v8640, %v8650
  %v8661 = vmul.f32 %v8641, %v8650
  %v8662 = vmul.f32 %v8642, %v8650
  %v8663 = vmul.f32 %v8643, %v8650
  %v8664 = vmul.f32 %v8644, %v8650
  %v8665 = vmul.f32 %v8645, %v8650
  %v8666 = vmul.f32 %v8646, %v8650
  %v8667 = vlaneseq
  %v8668 = vshrl.u32 %v8667, 7
  %v8669 = vsub.s32 3, %v8668
  %v8670 = vrot.slane %v6375, %v8669
  %v8671 = vadd.f32 %v8651, %v8670
  %v8672 = vadd.f32 %v8652, %v8670
  %v8673 = vadd.f32 %v8653, %v8670
  %v8674 = vadd.f32 %v8654, %v8670
  %v8675 = vadd.f32 %v8655, %v8670
  %v8676 = vadd.f32 %v8656, %v8670
  %v8677 = vadd.f32 %v8657, %v8670
  %v8678 = vadd.f32 %v8658, %v8670
  %v8679 = vadd.f32 %v8659, %v8670
  %v8680 = vadd.f32 %v8660, %v8670
  %v8681 = vadd.f32 %v8661, %v8670
  %v8682 = vadd.f32 %v8662, %v8670
  %v8683 = vadd.f32 %v8663, %v8670
  %v8684 = vadd.f32 %v8664, %v8670
  %v8685 = vadd.f32 %v8665, %v8670
  %v8686 = vadd.f32 %v8666, %v8670
  %s8687 = scalar_lea.vmem %s7, 64
  %v8688 = vld [vmem:[%s8687] sm:$0xff]
  %v8689 = vld [vmem:[%s8687 + $0x8] sm:$0xff]
  %v8690 = vld [vmem:[%s8687 + $0x10] sm:$0xff]
  %v8691 = vld [vmem:[%s8687 + $0x18] sm:$0xff]
  %v8692 = vld [vmem:[%s8687 + $0x20] sm:$0xff]
  %v8693 = vld [vmem:[%s8687 + $0x28] sm:$0xff]
  %v8694 = vld [vmem:[%s8687 + $0x30] sm:$0xff]
  %v8695 = vld [vmem:[%s8687 + $0x38] sm:$0xff]
  %v8697 = vsel %vm360, %v8671, 0
  %v8700 = vsel %vm360, %v8672, 0
  %v8703 = vsel %vm360, %v8673, 0
  %v8706 = vsel %vm360, %v8674, 0
  %v8709 = vsel %vm360, %v8675, 0
  %v8712 = vsel %vm360, %v8676, 0
  %v8715 = vsel %vm360, %v8677, 0
  %v8718 = vsel %vm360, %v8678, 0
  %v8721 = vsel %vm360, %v8679, 0
  %v8724 = vsel %vm360, %v8680, 0
  %v8727 = vsel %vm360, %v8681, 0
  %v8730 = vsel %vm360, %v8682, 0
  %v8733 = vsel %vm360, %v8683, 0
  %v8736 = vsel %vm360, %v8684, 0
  %v8739 = vsel %vm360, %v8685, 0
  %v8742 = vsel %vm360, %v8686, 0
  %8744 = vmatprep.subr.mxu0 %v8689
  %8745 = vmatpush1.msra.mxu0 %v8688
  %8746 = vmatprep.subr.mxu0 %v8691
  %8747 = vmatpush1.msra.mxu0 %v8690
  %8748 = vmatprep.subr.mxu0 %v8693
  %8749 = vmatpush1.msra.mxu0 %v8692
  %8750 = vmatprep.subr.mxu0 %v8695
  %8751 = vmatpush1.msra.mxu0 %v8694
  %8752 = vmatprep.subr.mxu0 0.0
  %8753 = vmatpush1.msra.mxu0 0.0
  %8754 = vmatprep.subr.mxu0 0.0
  %8755 = vmatpush1.msra.mxu0 0.0
  %8756 = vmatprep.subr.mxu0 0.0
  %8757 = vmatpush1.msra.mxu0 0.0
  %8758 = vmatprep.subr.mxu0 0.0
  %8759 = vmatpush1.msra.mxu0 0.0
  %8760 = vmatprep.subr.mxu0 0.0
  %8761 = vmatpush1.msra.mxu0 0.0
  %8762 = vmatprep.subr.mxu0 0.0
  %8763 = vmatpush1.msra.mxu0 0.0
  %8764 = vmatprep.subr.mxu0 0.0
  %8765 = vmatpush1.msra.mxu0 0.0
  %8766 = vmatprep.subr.mxu0 0.0
  %8767 = vmatpush1.msra.mxu0 0.0
  %8768 = vmatprep.subr.mxu0 0.0
  %8769 = vmatpush1.msra.mxu0 0.0
  %8770 = vmatprep.subr.mxu0 0.0
  %8771 = vmatpush1.msra.mxu0 0.0
  %8772 = vmatprep.subr.mxu0 0.0
  %8773 = vmatpush1.msra.mxu0 0.0
  %8774 = vmatprep.subr.mxu0 0.0
  %8775 = vmatpush1.msra.mxu0 0.0
  %8776 = vmatprep.subr.mxu0 0.0
  %8777 = vmatpush1.msra.mxu0 0.0
  %8778 = vmatprep.subr.mxu0 0.0
  %8779 = vmatpush1.msra.mxu0 0.0
  %8780 = vmatprep.subr.mxu0 0.0
  %8781 = vmatpush1.msra.mxu0 0.0
  %8782 = vmatprep.subr.mxu0 0.0
  %8783 = vmatpush1.msra.mxu0 0.0
  %8784 = vmatprep.subr.mxu0 0.0
  %8785 = vmatpush1.msra.mxu0 0.0
  %8786 = vmatprep.subr.mxu0 0.0
  %8787 = vmatpush1.msra.mxu0 0.0
  %8788 = vmatprep.subr.mxu0 0.0
  %8789 = vmatpush1.msra.mxu0 0.0
  %8790 = vmatprep.subr.mxu0 0.0
  %8791 = vmatpush1.msra.mxu0 0.0
  %8792 = vmatprep.subr.mxu0 0.0
  %8793 = vmatpush1.msra.mxu0 0.0
  %8794 = vmatprep.subr.mxu0 0.0
  %8795 = vmatpush1.msra.mxu0 0.0
  %8796 = vmatprep.subr.mxu0 0.0
  %8797 = vmatpush1.msra.mxu0 0.0
  %8798 = vmatprep.subr.mxu0 0.0
  %8799 = vmatpush1.msra.mxu0 0.0
  %8800 = vmatprep.subr.mxu0 0.0
  %8801 = vmatpush1.msra.mxu0 0.0
  %8802 = vmatprep.subr.mxu0 0.0
  %8803 = vmatpush1.msra.mxu0 0.0
  %8804 = vmatprep.subr.mxu0 0.0
  %8805 = vmatpush1.msra.mxu0 0.0
  %8806 = vmatprep.subr.mxu0 0.0
  %8807 = vmatpush1.msra.mxu0 0.0
  %8808 = vmatprep.mubr.f32.mxu0 0.0
  %8809 = vmatmul.mubr.f32.gmra.mrb[0].mxu0 %v8697
  %v8810 = vpop.f32.mrb[0].mxu0
  %v8811 = vadd.f32 0.0, %v8810
  %v8812 = vpop.f32.mrb[0].mxu0
  %v8813 = vadd.f32 0.0, %v8812
  %8814 = vmatprep.mubr.f32.mxu0 0.0
  %8815 = vmatmul.mubr.f32.gmra.mrb[0].mxu0 %v8700
  %v8816 = vpop.f32.mrb[0].mxu0
  %v8817 = vadd.f32 0.0, %v8816
  %v8818 = vpop.f32.mrb[0].mxu0
  %v8819 = vadd.f32 0.0, %v8818
  %8820 = vmatprep.mubr.f32.mxu0 0.0
  %8821 = vmatmul.mubr.f32.gmra.mrb[0].mxu0 %v8703
  %v8822 = vpop.f32.mrb[0].mxu0
  %v8823 = vadd.f32 0.0, %v8822
  %v8824 = vpop.f32.mrb[0].mxu0
  %v8825 = vadd.f32 0.0, %v8824
  %8826 = vmatprep.mubr.f32.mxu0 0.0
  %8827 = vmatmul.mubr.f32.gmra.mrb[0].mxu0 %v8706
  %v8828 = vpop.f32.mrb[0].mxu0
  %v8829 = vadd.f32 0.0, %v8828
  %v8830 = vpop.f32.mrb[0].mxu0
  %v8831 = vadd.f32 0.0, %v8830
  %8832 = vmatprep.mubr.f32.mxu0 0.0
  %8833 = vmatmul.mubr.f32.gmra.mrb[0].mxu0 %v8709
  %v8834 = vpop.f32.mrb[0].mxu0
  %v8835 = vadd.f32 0.0, %v8834
  %v8836 = vpop.f32.mrb[0].mxu0
  %v8837 = vadd.f32 0.0, %v8836
  %8838 = vmatprep.mubr.f32.mxu0 0.0
  %8839 = vmatmul.mubr.f32.gmra.mrb[0].mxu0 %v8712
  %v8840 = vpop.f32.mrb[0].mxu0
  %v8841 = vadd.f32 0.0, %v8840
  %v8842 = vpop.f32.mrb[0].mxu0
  %v8843 = vadd.f32 0.0, %v8842
  %8844 = vmatprep.mubr.f32.mxu0 0.0
  %8845 = vmatmul.mubr.f32.gmra.mrb[0].mxu0 %v8715
  %v8846 = vpop.f32.mrb[0].mxu0
  %v8847 = vadd.f32 0.0, %v8846
  %v8848 = vpop.f32.mrb[0].mxu0
  %v8849 = vadd.f32 0.0, %v8848
  %8850 = vmatprep.mubr.f32.mxu0 0.0
  %8851 = vmatmul.mubr.f32.gmra.mrb[0].mxu0 %v8718
  %v8852 = vpop.f32.mrb[0].mxu0
  %v8853 = vadd.f32 0.0, %v8852
  %v8854 = vpop.f32.mrb[0].mxu0
  %v8855 = vadd.f32 0.0, %v8854
  %8856 = vmatprep.mubr.f32.mxu0 0.0
  %8857 = vmatmul.mubr.f32.gmra.mrb[0].mxu0 %v8721
  %v8858 = vpop.f32.mrb[0].mxu0
  %v8859 = vadd.f32 0.0, %v8858
  %v8860 = vpop.f32.mrb[0].mxu0
  %v8861 = vadd.f32 0.0, %v8860
  %8862 = vmatprep.mubr.f32.mxu0 0.0
  %8863 = vmatmul.mubr.f32.gmra.mrb[0].mxu0 %v8724
  %v8864 = vpop.f32.mrb[0].mxu0
  %v8865 = vadd.f32 0.0, %v8864
  %v8866 = vpop.f32.mrb[0].mxu0
  %v8867 = vadd.f32 0.0, %v8866
  %8868 = vmatprep.mubr.f32.mxu0 0.0
  %8869 = vmatmul.mubr.f32.gmra.mrb[0].mxu0 %v8727
  %v8870 = vpop.f32.mrb[0].mxu0
  %v8871 = vadd.f32 0.0, %v8870
  %v8872 = vpop.f32.mrb[0].mxu0
  %v8873 = vadd.f32 0.0, %v8872
  %8874 = vmatprep.mubr.f32.mxu0 0.0
  %8875 = vmatmul.mubr.f32.gmra.mrb[0].mxu0 %v8730
  %v8876 = vpop.f32.mrb[0].mxu0
  %v8877 = vadd.f32 0.0, %v8876
  %v8878 = vpop.f32.mrb[0].mxu0
  %v8879 = vadd.f32 0.0, %v8878
  %8880 = vmatprep.mubr.f32.mxu0 0.0
  %8881 = vmatmul.mubr.f32.gmra.mrb[0].mxu0 %v8733
  %v8882 = vpop.f32.mrb[0].mxu0
  %v8883 = vadd.f32 0.0, %v8882
  %v8884 = vpop.f32.mrb[0].mxu0
  %v8885 = vadd.f32 0.0, %v8884
  %8886 = vmatprep.mubr.f32.mxu0 0.0
  %8887 = vmatmul.mubr.f32.gmra.mrb[0].mxu0 %v8736
  %v8888 = vpop.f32.mrb[0].mxu0
  %v8889 = vadd.f32 0.0, %v8888
  %v8890 = vpop.f32.mrb[0].mxu0
  %v8891 = vadd.f32 0.0, %v8890
  %8892 = vmatprep.mubr.f32.mxu0 0.0
  %8893 = vmatmul.mubr.f32.gmra.mrb[0].mxu0 %v8739
  %v8894 = vpop.f32.mrb[0].mxu0
  %v8895 = vadd.f32 0.0, %v8894
  %v8896 = vpop.f32.mrb[0].mxu0
  %v8897 = vadd.f32 0.0, %v8896
  %8898 = vmatprep.mubr.f32.mxu0 0.0
  %8899 = vmatmul.mubr.f32.gmra.mrb[0].mxu0 %v8742
  %v8900 = vpop.f32.mrb[0].mxu0
  %v8901 = vadd.f32 0.0, %v8900
  %v8902 = vpop.f32.mrb[0].mxu0
  %v8903 = vadd.f32 0.0, %v8902
  %8904 = vdwg.mxu0
  %s8905 = scalar_lea.vmem %s8, 32
  %v8906 = vld [vmem:[%s8905] sm:$0xff]
  %v8907 = vld [vmem:[%s8905 + $0x8] sm:$0xff]
  %v8908 = vld [vmem:[%s8905 + $0x10] sm:$0x1]
  %v8909 = vld [vmem:[%s8905 + $0x18] sm:$0x1]
  %8910 = vst [vmem:[#allocation3 + $0x20] sm:$0xff] %v8811
  %8911 = vst [vmem:[#allocation3 + $0x28] sm:$0xff] %v8813
  %8912 = vst [vmem:[#allocation3 + $0x30] sm:$0xff] %v8817
  %8913 = vst [vmem:[#allocation3 + $0x38] sm:$0xff] %v8819
  %8914 = vst [vmem:[#allocation3 + $0x40] sm:$0xff] %v8823
  %8915 = vst [vmem:[#allocation3 + $0x48] sm:$0xff] %v8825
  %8916 = vst [vmem:[#allocation3 + $0x50] sm:$0xff] %v8829
  %8917 = vst [vmem:[#allocation3 + $0x58] sm:$0xff] %v8831
  %8918 = vst [vmem:[#allocation3 + $0x60] sm:$0xff] %v8835
  %8919 = vst [vmem:[#allocation3 + $0x68] sm:$0xff] %v8837
  %8920 = vst [vmem:[#allocation3 + $0x70] sm:$0xff] %v8841
  %8921 = vst [vmem:[#allocation3 + $0x78] sm:$0xff] %v8843
  %8922 = vst [vmem:[#allocation3 + $0x80] sm:$0xff] %v8847
  %8923 = vst [vmem:[#allocation3 + $0x88] sm:$0xff] %v8849
  %8924 = vst [vmem:[#allocation3 + $0x90] sm:$0xff] %v8853
  %8925 = vst [vmem:[#allocation3 + $0x98] sm:$0xff] %v8855
  %8926 = vst [vmem:[#allocation3 + $0xa0] sm:$0xff] %v8859
  %8927 = vst [vmem:[#allocation3 + $0xa8] sm:$0xff] %v8861
  %8928 = vst [vmem:[#allocation3 + $0xb0] sm:$0xff] %v8865
  %8929 = vst [vmem:[#allocation3 + $0xb8] sm:$0xff] %v8867
  %8930 = vst [vmem:[#allocation3 + $0xc0] sm:$0xff] %v8871
  %8931 = vst [vmem:[#allocation3 + $0xc8] sm:$0xff] %v8873
  %8932 = vst [vmem:[#allocation3 + $0xd0] sm:$0xff] %v8877
  %8933 = vst [vmem:[#allocation3 + $0xd8] sm:$0xff] %v8879
  %8934 = vst [vmem:[#allocation3 + $0xe0] sm:$0xff] %v8883
  %8935 = vst [vmem:[#allocation3 + $0xe8] sm:$0xff] %v8885
  %8936 = vst [vmem:[#allocation3 + $0xf0] sm:$0xff] %v8889
  %8937 = vst [vmem:[#allocation3 + $0xf8] sm:$0xff] %v8891
  %8938 = vst [vmem:[#allocation3 + $0x100] sm:$0xff] %v8895
  %8939 = vst [vmem:[#allocation3 + $0x108] sm:$0xff] %v8897
  %8940 = vst [vmem:[#allocation3 + $0x110] sm:$0xff] %v8901
  %8941 = vst [vmem:[#allocation3 + $0x118] sm:$0xff] %v8903
  %v8942 = vld [vmem:[#allocation3] sm:$0x80]
  %v8943 = vld [vmem:[#allocation3 + $0x8] sm:$0x80]
  %v8944 = vld [vmem:[#allocation3 + $0x10] sm:$0xff]
  %v8945 = vld [vmem:[#allocation3 + $0x18] sm:$0xff]
  %v8946 = vld [vmem:[#allocation3 + $0x20] sm:$0xff]
  %v8947 = vld [vmem:[#allocation3 + $0x28] sm:$0xff]
  %v8948 = vld [vmem:[#allocation3 + $0x30] sm:$0xff]
  %v8949 = vld [vmem:[#allocation3 + $0x38] sm:$0xff]
  %v8950 = vld [vmem:[#allocation3 + $0x40] sm:$0xff]
  %v8951 = vld [vmem:[#allocation3 + $0x48] sm:$0xff]
  %v8952 = vld [vmem:[#allocation3 + $0x50] sm:$0xff]
  %v8953 = vld [vmem:[#allocation3 + $0x58] sm:$0xff]
  %v8954 = vld [vmem:[#allocation3 + $0x60] sm:$0xff]
  %v8955 = vld [vmem:[#allocation3 + $0x68] sm:$0xff]
  %v8956 = vld [vmem:[#allocation3 + $0x70] sm:$0xff]
  %v8957 = vld [vmem:[#allocation3 + $0x78] sm:$0xff]
  %v8958 = vld [vmem:[#allocation3 + $0x80] sm:$0xff]
  %v8959 = vld [vmem:[#allocation3 + $0x88] sm:$0xff]
  %v8960 = vld [vmem:[#allocation3 + $0x90] sm:$0xff]
  %v8961 = vld [vmem:[#allocation3 + $0x98] sm:$0xff]
  %v8962 = vld [vmem:[#allocation3 + $0xa0] sm:$0xff]
  %v8963 = vld [vmem:[#allocation3 + $0xa8] sm:$0xff]
  %v8964 = vld [vmem:[#allocation3 + $0xb0] sm:$0xff]
  %v8965 = vld [vmem:[#allocation3 + $0xb8] sm:$0xff]
  %v8966 = vld [vmem:[#allocation3 + $0xc0] sm:$0xff]
  %v8967 = vld [vmem:[#allocation3 + $0xc8] sm:$0xff]
  %v8968 = vld [vmem:[#allocation3 + $0xd0] sm:$0xff]
  %v8969 = vld [vmem:[#allocation3 + $0xd8] sm:$0xff]
  %v8970 = vld [vmem:[#allocation3 + $0xe0] sm:$0xff]
  %v8971 = vld [vmem:[#allocation3 + $0xe8] sm:$0xff]
  %v8972 = vld [vmem:[#allocation3 + $0xf0] sm:$0xff]
  %v8973 = vld [vmem:[#allocation3 + $0xf8] sm:$0xff]
  %v8974 = vld [vmem:[#allocation3 + $0x100] sm:$0x7f]
  %v8975 = vld [vmem:[#allocation3 + $0x108] sm:$0x7f]
  %v8976 = vlaneseq
  %v8977 = vshrl.u32 %v8976, 7
  %v8978 = vsub.s32 0, %v8977
  %v8979 = vrot.slane %v8906, %v8978
  %v8980 = vlaneseq
  %v8981 = vshrl.u32 %v8980, 7
  %v8982 = vsub.s32 0, %v8981
  %v8983 = vrot.slane %v8907, %v8982
  %v8984 = vmul.f32 %v8942, %v8979
  %v8985 = vmul.f32 %v8943, %v8983
  %v8986 = vmul.f32 %v8944, %v8979
  %v8987 = vmul.f32 %v8945, %v8983
  %v8988 = vmul.f32 %v8946, %v8979
  %v8989 = vmul.f32 %v8947, %v8983
  %v8990 = vmul.f32 %v8948, %v8979
  %v8991 = vmul.f32 %v8949, %v8983
  %v8992 = vmul.f32 %v8950, %v8979
  %v8993 = vmul.f32 %v8951, %v8983
  %v8994 = vmul.f32 %v8952, %v8979
  %v8995 = vmul.f32 %v8953, %v8983
  %v8996 = vmul.f32 %v8954, %v8979
  %v8997 = vmul.f32 %v8955, %v8983
  %v8998 = vmul.f32 %v8956, %v8979
  %v8999 = vmul.f32 %v8957, %v8983
  %v9000 = vmul.f32 %v8958, %v8979
  %v9001 = vmul.f32 %v8959, %v8983
  %v9002 = vmul.f32 %v8960, %v8979
  %v9003 = vmul.f32 %v8961, %v8983
  %v9004 = vmul.f32 %v8962, %v8979
  %v9005 = vmul.f32 %v8963, %v8983
  %v9006 = vmul.f32 %v8964, %v8979
  %v9007 = vmul.f32 %v8965, %v8983
  %v9008 = vmul.f32 %v8966, %v8979
  %v9009 = vmul.f32 %v8967, %v8983
  %v9010 = vmul.f32 %v8968, %v8979
  %v9011 = vmul.f32 %v8969, %v8983
  %v9012 = vmul.f32 %v8970, %v8979
  %v9013 = vmul.f32 %v8971, %v8983
  %v9014 = vmul.f32 %v8972, %v8979
  %v9015 = vmul.f32 %v8973, %v8983
  %v9016 = vmul.f32 %v8974, %v8979
  %v9017 = vmul.f32 %v8975, %v8983
  %v9018 = vmul.f32 %v8984, %v3619
  %v9019 = vmul.f32 %v8985, %v3619
  %v9020 = vmul.f32 %v8986, %v3621
  %v9021 = vmul.f32 %v8987, %v3621
  %v9022 = vmul.f32 %v8988, %v3623
  %v9023 = vmul.f32 %v8989, %v3623
  %v9024 = vmul.f32 %v8990, %v3625
  %v9025 = vmul.f32 %v8991, %v3625
  %v9026 = vmul.f32 %v8992, %v3627
  %v9027 = vmul.f32 %v8993, %v3627
  %v9028 = vmul.f32 %v8994, %v3629
  %v9029 = vmul.f32 %v8995, %v3629
  %v9030 = vmul.f32 %v8996, %v3631
  %v9031 = vmul.f32 %v8997, %v3631
  %v9032 = vmul.f32 %v8998, %v3633
  %v9033 = vmul.f32 %v8999, %v3633
  %v9034 = vmul.f32 %v9000, %v3635
  %v9035 = vmul.f32 %v9001, %v3635
  %v9036 = vmul.f32 %v9002, %v3637
  %v9037 = vmul.f32 %v9003, %v3637
  %v9038 = vmul.f32 %v9004, %v3639
  %v9039 = vmul.f32 %v9005, %v3639
  %v9040 = vmul.f32 %v9006, %v3641
  %v9041 = vmul.f32 %v9007, %v3641
  %v9042 = vmul.f32 %v9008, %v3643
  %v9043 = vmul.f32 %v9009, %v3643
  %v9044 = vmul.f32 %v9010, %v3645
  %v9045 = vmul.f32 %v9011, %v3645
  %v9046 = vmul.f32 %v9012, %v3647
  %v9047 = vmul.f32 %v9013, %v3647
  %v9048 = vmul.f32 %v9014, %v3649
  %v9049 = vmul.f32 %v9015, %v3649
  %v9050 = vmul.f32 %v9016, %v3648
  %v9051 = vmul.f32 %v9017, %v3648
  %v9052 = vadd.f32 %v9018, 0.0
  %v9053 = vadd.f32 %v9019, 0.0
  %v9054 = vadd.f32 %v9020, 0.0
  %v9055 = vadd.f32 %v9021, 0.0
  %v9056 = vadd.f32 %v9022, 0.0
  %v9057 = vadd.f32 %v9023, 0.0
  %v9058 = vadd.f32 %v9024, 0.0
  %v9059 = vadd.f32 %v9025, 0.0
  %v9060 = vadd.f32 %v9026, 0.0
  %v9061 = vadd.f32 %v9027, 0.0
  %v9062 = vadd.f32 %v9028, 0.0
  %v9063 = vadd.f32 %v9029, 0.0
  %v9064 = vadd.f32 %v9030, 0.0
  %v9065 = vadd.f32 %v9031, 0.0
  %v9066 = vadd.f32 %v9032, 0.0
  %v9067 = vadd.f32 %v9033, 0.0
  %v9068 = vadd.f32 %v9034, 0.0
  %v9069 = vadd.f32 %v9035, 0.0
  %v9070 = vadd.f32 %v9036, 0.0
  %v9071 = vadd.f32 %v9037, 0.0
  %v9072 = vadd.f32 %v9038, 0.0
  %v9073 = vadd.f32 %v9039, 0.0
  %v9074 = vadd.f32 %v9040, 0.0
  %v9075 = vadd.f32 %v9041, 0.0
  %v9076 = vadd.f32 %v9042, 0.0
  %v9077 = vadd.f32 %v9043, 0.0
  %v9078 = vadd.f32 %v9044, 0.0
  %v9079 = vadd.f32 %v9045, 0.0
  %v9080 = vadd.f32 %v9046, 0.0
  %v9081 = vadd.f32 %v9047, 0.0
  %v9082 = vadd.f32 %v9048, 0.0
  %v9083 = vadd.f32 %v9049, 0.0
  %v9084 = vadd.f32 %v9050, 0.0
  %v9085 = vadd.f32 %v9051, 0.0
  %v9086 = vld [vmem:[#allocation3 + $0x100] sm:$0xff]
  %v9087 = vld [vmem:[#allocation3 + $0x108] sm:$0xff]
  %v9088 = vlaneseq
  %v9089 = vshrl.u32 %v9088, 7
  %v9090 = vsub.s32 1, %v9089
  %v9091 = vrot.slane %v8906, %v9090
  %v9092 = vlaneseq
  %v9093 = vshrl.u32 %v9092, 7
  %v9094 = vsub.s32 1, %v9093
  %v9095 = vrot.slane %v8907, %v9094
  %v9096 = vmul.f32 %v8944, %v9091
  %v9097 = vmul.f32 %v8945, %v9095
  %v9098 = vmul.f32 %v8946, %v9091
  %v9099 = vmul.f32 %v8947, %v9095
  %v9100 = vmul.f32 %v8948, %v9091
  %v9101 = vmul.f32 %v8949, %v9095
  %v9102 = vmul.f32 %v8950, %v9091
  %v9103 = vmul.f32 %v8951, %v9095
  %v9104 = vmul.f32 %v8952, %v9091
  %v9105 = vmul.f32 %v8953, %v9095
  %v9106 = vmul.f32 %v8954, %v9091
  %v9107 = vmul.f32 %v8955, %v9095
  %v9108 = vmul.f32 %v8956, %v9091
  %v9109 = vmul.f32 %v8957, %v9095
  %v9110 = vmul.f32 %v8958, %v9091
  %v9111 = vmul.f32 %v8959, %v9095
  %v9112 = vmul.f32 %v8960, %v9091
  %v9113 = vmul.f32 %v8961, %v9095
  %v9114 = vmul.f32 %v8962, %v9091
  %v9115 = vmul.f32 %v8963, %v9095
  %v9116 = vmul.f32 %v8964, %v9091
  %v9117 = vmul.f32 %v8965, %v9095
  %v9118 = vmul.f32 %v8966, %v9091
  %v9119 = vmul.f32 %v8967, %v9095
  %v9120 = vmul.f32 %v8968, %v9091
  %v9121 = vmul.f32 %v8969, %v9095
  %v9122 = vmul.f32 %v8970, %v9091
  %v9123 = vmul.f32 %v8971, %v9095
  %v9124 = vmul.f32 %v8972, %v9091
  %v9125 = vmul.f32 %v8973, %v9095
  %v9126 = vmul.f32 %v9086, %v9091
  %v9127 = vmul.f32 %v9087, %v9095
  %v9128 = vmul.f32 %v9096, %v1011
  %v9129 = vmul.f32 %v9097, %v1011
  %v9130 = vmul.f32 %v9098, %v1015
  %v9131 = vmul.f32 %v9099, %v1015
  %v9132 = vmul.f32 %v9100, %v1019
  %v9133 = vmul.f32 %v9101, %v1019
  %v9134 = vmul.f32 %v9102, %v1023
  %v9135 = vmul.f32 %v9103, %v1023
  %v9136 = vmul.f32 %v9104, %v1027
  %v9137 = vmul.f32 %v9105, %v1027
  %v9138 = vmul.f32 %v9106, %v1031
  %v9139 = vmul.f32 %v9107, %v1031
  %v9140 = vmul.f32 %v9108, %v1035
  %v9141 = vmul.f32 %v9109, %v1035
  %v9142 = vmul.f32 %v9110, %v1039
  %v9143 = vmul.f32 %v9111, %v1039
  %v9144 = vmul.f32 %v9112, %v1043
  %v9145 = vmul.f32 %v9113, %v1043
  %v9146 = vmul.f32 %v9114, %v1047
  %v9147 = vmul.f32 %v9115, %v1047
  %v9148 = vmul.f32 %v9116, %v1051
  %v9149 = vmul.f32 %v9117, %v1051
  %v9150 = vmul.f32 %v9118, %v1055
  %v9151 = vmul.f32 %v9119, %v1055
  %v9152 = vmul.f32 %v9120, %v1059
  %v9153 = vmul.f32 %v9121, %v1059
  %v9154 = vmul.f32 %v9122, %v1063
  %v9155 = vmul.f32 %v9123, %v1063
  %v9156 = vmul.f32 %v9124, %v1067
  %v9157 = vmul.f32 %v9125, %v1067
  %v9158 = vmul.f32 %v9126, %v1071
  %v9159 = vmul.f32 %v9127, %v1071
  %v9192 = vrot.slane %v9128, 1
  %v9193 = vrot.slane %v9129, 1
  %v9194 = vrot.slane %v9130, 1
  %v9195 = vsel %vm3618, %v9192, %v9194
  %v9196 = vrot.slane %v9131, 1
  %v9197 = vsel %vm3618, %v9193, %v9196
  %v9198 = vrot.slane %v9132, 1
  %v9199 = vsel %vm3618, %v9194, %v9198
  %v9200 = vrot.slane %v9133, 1
  %v9201 = vsel %vm3618, %v9196, %v9200
  %v9202 = vrot.slane %v9134, 1
  %v9203 = vsel %vm3618, %v9198, %v9202
  %v9204 = vrot.slane %v9135, 1
  %v9205 = vsel %vm3618, %v9200, %v9204
  %v9206 = vrot.slane %v9136, 1
  %v9207 = vsel %vm3618, %v9202, %v9206
  %v9208 = vrot.slane %v9137, 1
  %v9209 = vsel %vm3618, %v9204, %v9208
  %v9210 = vrot.slane %v9138, 1
  %v9211 = vsel %vm3618, %v9206, %v9210
  %v9212 = vrot.slane %v9139, 1
  %v9213 = vsel %vm3618, %v9208, %v9212
  %v9214 = vrot.slane %v9140, 1
  %v9215 = vsel %vm3618, %v9210, %v9214
  %v9216 = vrot.slane %v9141, 1
  %v9217 = vsel %vm3618, %v9212, %v9216
  %v9218 = vrot.slane %v9142, 1
  %v9219 = vsel %vm3618, %v9214, %v9218
  %v9220 = vrot.slane %v9143, 1
  %v9221 = vsel %vm3618, %v9216, %v9220
  %v9222 = vrot.slane %v9144, 1
  %v9223 = vsel %vm3618, %v9218, %v9222
  %v9224 = vrot.slane %v9145, 1
  %v9225 = vsel %vm3618, %v9220, %v9224
  %v9226 = vrot.slane %v9146, 1
  %v9227 = vsel %vm3618, %v9222, %v9226
  %v9228 = vrot.slane %v9147, 1
  %v9229 = vsel %vm3618, %v9224, %v9228
  %v9230 = vrot.slane %v9148, 1
  %v9231 = vsel %vm3618, %v9226, %v9230
  %v9232 = vrot.slane %v9149, 1
  %v9233 = vsel %vm3618, %v9228, %v9232
  %v9234 = vrot.slane %v9150, 1
  %v9235 = vsel %vm3618, %v9230, %v9234
  %v9236 = vrot.slane %v9151, 1
  %v9237 = vsel %vm3618, %v9232, %v9236
  %v9238 = vrot.slane %v9152, 1
  %v9239 = vsel %vm3618, %v9234, %v9238
  %v9240 = vrot.slane %v9153, 1
  %v9241 = vsel %vm3618, %v9236, %v9240
  %v9242 = vrot.slane %v9154, 1
  %v9243 = vsel %vm3618, %v9238, %v9242
  %v9244 = vrot.slane %v9155, 1
  %v9245 = vsel %vm3618, %v9240, %v9244
  %v9246 = vrot.slane %v9156, 1
  %v9247 = vsel %vm3618, %v9242, %v9246
  %v9248 = vrot.slane %v9157, 1
  %v9249 = vsel %vm3618, %v9244, %v9248
  %v9250 = vrot.slane %v9158, 1
  %v9251 = vsel %vm3618, %v9246, %v9250
  %v9252 = vrot.slane %v9159, 1
  %v9253 = vsel %vm3618, %v9248, %v9252
  %v9288 = vadd.f32 %v9052, %v9192
  %v9289 = vadd.f32 %v9053, %v9193
  %v9290 = vadd.f32 %v9054, %v9195
  %v9291 = vadd.f32 %v9055, %v9197
  %v9292 = vadd.f32 %v9056, %v9199
  %v9293 = vadd.f32 %v9057, %v9201
  %v9294 = vadd.f32 %v9058, %v9203
  %v9295 = vadd.f32 %v9059, %v9205
  %v9296 = vadd.f32 %v9060, %v9207
  %v9297 = vadd.f32 %v9061, %v9209
  %v9298 = vadd.f32 %v9062, %v9211
  %v9299 = vadd.f32 %v9063, %v9213
  %v9300 = vadd.f32 %v9064, %v9215
  %v9301 = vadd.f32 %v9065, %v9217
  %v9302 = vadd.f32 %v9066, %v9219
  %v9303 = vadd.f32 %v9067, %v9221
  %v9304 = vadd.f32 %v9068, %v9223
  %v9305 = vadd.f32 %v9069, %v9225
  %v9306 = vadd.f32 %v9070, %v9227
  %v9307 = vadd.f32 %v9071, %v9229
  %v9308 = vadd.f32 %v9072, %v9231
  %v9309 = vadd.f32 %v9073, %v9233
  %v9310 = vadd.f32 %v9074, %v9235
  %v9311 = vadd.f32 %v9075, %v9237
  %v9312 = vadd.f32 %v9076, %v9239
  %v9313 = vadd.f32 %v9077, %v9241
  %v9314 = vadd.f32 %v9078, %v9243
  %v9315 = vadd.f32 %v9079, %v9245
  %v9316 = vadd.f32 %v9080, %v9247
  %v9317 = vadd.f32 %v9081, %v9249
  %v9318 = vadd.f32 %v9082, %v9251
  %v9319 = vadd.f32 %v9083, %v9253
  %v9320 = vadd.f32 %v9084, %v9250
  %v9321 = vadd.f32 %v9085, %v9252
  %v9322 = vld [vmem:[#allocation3 + $0x10] sm:$0xfe]
  %v9323 = vld [vmem:[#allocation3 + $0x18] sm:$0xfe]
  %v9324 = vld [vmem:[#allocation3 + $0x110] sm:$0x1]
  %v9325 = vld [vmem:[#allocation3 + $0x118] sm:$0x1]
  %v9326 = vlaneseq
  %v9327 = vshrl.u32 %v9326, 7
  %v9328 = vsub.s32 2, %v9327
  %v9329 = vrot.slane %v8906, %v9328
  %v9330 = vlaneseq
  %v9331 = vshrl.u32 %v9330, 7
  %v9332 = vsub.s32 2, %v9331
  %v9333 = vrot.slane %v8907, %v9332
  %v9334 = vmul.f32 %v9322, %v9329
  %v9335 = vmul.f32 %v9323, %v9333
  %v9336 = vmul.f32 %v8946, %v9329
  %v9337 = vmul.f32 %v8947, %v9333
  %v9338 = vmul.f32 %v8948, %v9329
  %v9339 = vmul.f32 %v8949, %v9333
  %v9340 = vmul.f32 %v8950, %v9329
  %v9341 = vmul.f32 %v8951, %v9333
  %v9342 = vmul.f32 %v8952, %v9329
  %v9343 = vmul.f32 %v8953, %v9333
  %v9344 = vmul.f32 %v8954, %v9329
  %v9345 = vmul.f32 %v8955, %v9333
  %v9346 = vmul.f32 %v8956, %v9329
  %v9347 = vmul.f32 %v8957, %v9333
  %v9348 = vmul.f32 %v8958, %v9329
  %v9349 = vmul.f32 %v8959, %v9333
  %v9350 = vmul.f32 %v8960, %v9329
  %v9351 = vmul.f32 %v8961, %v9333
  %v9352 = vmul.f32 %v8962, %v9329
  %v9353 = vmul.f32 %v8963, %v9333
  %v9354 = vmul.f32 %v8964, %v9329
  %v9355 = vmul.f32 %v8965, %v9333
  %v9356 = vmul.f32 %v8966, %v9329
  %v9357 = vmul.f32 %v8967, %v9333
  %v9358 = vmul.f32 %v8968, %v9329
  %v9359 = vmul.f32 %v8969, %v9333
  %v9360 = vmul.f32 %v8970, %v9329
  %v9361 = vmul.f32 %v8971, %v9333
  %v9362 = vmul.f32 %v8972, %v9329
  %v9363 = vmul.f32 %v8973, %v9333
  %v9364 = vmul.f32 %v9086, %v9329
  %v9365 = vmul.f32 %v9087, %v9333
  %v9366 = vmul.f32 %v9324, %v9329
  %v9367 = vmul.f32 %v9325, %v9333
  %v9368 = vmul.f32 %v9334, %v4018
  %v9369 = vmul.f32 %v9335, %v4018
  %v9370 = vmul.f32 %v9336, %v4020
  %v9371 = vmul.f32 %v9337, %v4020
  %v9372 = vmul.f32 %v9338, %v4022
  %v9373 = vmul.f32 %v9339, %v4022
  %v9374 = vmul.f32 %v9340, %v4024
  %v9375 = vmul.f32 %v9341, %v4024
  %v9376 = vmul.f32 %v9342, %v4026
  %v9377 = vmul.f32 %v9343, %v4026
  %v9378 = vmul.f32 %v9344, %v4028
  %v9379 = vmul.f32 %v9345, %v4028
  %v9380 = vmul.f32 %v9346, %v4030
  %v9381 = vmul.f32 %v9347, %v4030
  %v9382 = vmul.f32 %v9348, %v4032
  %v9383 = vmul.f32 %v9349, %v4032
  %v9384 = vmul.f32 %v9350, %v4034
  %v9385 = vmul.f32 %v9351, %v4034
  %v9386 = vmul.f32 %v9352, %v4036
  %v9387 = vmul.f32 %v9353, %v4036
  %v9388 = vmul.f32 %v9354, %v4038
  %v9389 = vmul.f32 %v9355, %v4038
  %v9390 = vmul.f32 %v9356, %v4040
  %v9391 = vmul.f32 %v9357, %v4040
  %v9392 = vmul.f32 %v9358, %v4042
  %v9393 = vmul.f32 %v9359, %v4042
  %v9394 = vmul.f32 %v9360, %v4044
  %v9395 = vmul.f32 %v9361, %v4044
  %v9396 = vmul.f32 %v9362, %v4046
  %v9397 = vmul.f32 %v9363, %v4046
  %v9398 = vmul.f32 %v9364, %v4048
  %v9399 = vmul.f32 %v9365, %v4048
  %v9400 = vmul.f32 %v9366, %v4047
  %v9401 = vmul.f32 %v9367, %v4047
  %v9436 = vrot.slane %v9368, 2
  %v9437 = vrot.slane %v9369, 2
  %v9438 = vrot.slane %v9370, 2
  %v9439 = vsel %vm4134, %v9436, %v9438
  %v9440 = vrot.slane %v9371, 2
  %v9441 = vsel %vm4134, %v9437, %v9440
  %v9442 = vrot.slane %v9372, 2
  %v9443 = vsel %vm4134, %v9438, %v9442
  %v9444 = vrot.slane %v9373, 2
  %v9445 = vsel %vm4134, %v9440, %v9444
  %v9446 = vrot.slane %v9374, 2
  %v9447 = vsel %vm4134, %v9442, %v9446
  %v9448 = vrot.slane %v9375, 2
  %v9449 = vsel %vm4134, %v9444, %v9448
  %v9450 = vrot.slane %v9376, 2
  %v9451 = vsel %vm4134, %v9446, %v9450
  %v9452 = vrot.slane %v9377, 2
  %v9453 = vsel %vm4134, %v9448, %v9452
  %v9454 = vrot.slane %v9378, 2
  %v9455 = vsel %vm4134, %v9450, %v9454
  %v9456 = vrot.slane %v9379, 2
  %v9457 = vsel %vm4134, %v9452, %v9456
  %v9458 = vrot.slane %v9380, 2
  %v9459 = vsel %vm4134, %v9454, %v9458
  %v9460 = vrot.slane %v9381, 2
  %v9461 = vsel %vm4134, %v9456, %v9460
  %v9462 = vrot.slane %v9382, 2
  %v9463 = vsel %vm4134, %v9458, %v9462
  %v9464 = vrot.slane %v9383, 2
  %v9465 = vsel %vm4134, %v9460, %v9464
  %v9466 = vrot.slane %v9384, 2
  %v9467 = vsel %vm4134, %v9462, %v9466
  %v9468 = vrot.slane %v9385, 2
  %v9469 = vsel %vm4134, %v9464, %v9468
  %v9470 = vrot.slane %v9386, 2
  %v9471 = vsel %vm4134, %v9466, %v9470
  %v9472 = vrot.slane %v9387, 2
  %v9473 = vsel %vm4134, %v9468, %v9472
  %v9474 = vrot.slane %v9388, 2
  %v9475 = vsel %vm4134, %v9470, %v9474
  %v9476 = vrot.slane %v9389, 2
  %v9477 = vsel %vm4134, %v9472, %v9476
  %v9478 = vrot.slane %v9390, 2
  %v9479 = vsel %vm4134, %v9474, %v9478
  %v9480 = vrot.slane %v9391, 2
  %v9481 = vsel %vm4134, %v9476, %v9480
  %v9482 = vrot.slane %v9392, 2
  %v9483 = vsel %vm4134, %v9478, %v9482
  %v9484 = vrot.slane %v9393, 2
  %v9485 = vsel %vm4134, %v9480, %v9484
  %v9486 = vrot.slane %v9394, 2
  %v9487 = vsel %vm4134, %v9482, %v9486
  %v9488 = vrot.slane %v9395, 2
  %v9489 = vsel %vm4134, %v9484, %v9488
  %v9490 = vrot.slane %v9396, 2
  %v9491 = vsel %vm4134, %v9486, %v9490
  %v9492 = vrot.slane %v9397, 2
  %v9493 = vsel %vm4134, %v9488, %v9492
  %v9494 = vrot.slane %v9398, 2
  %v9495 = vsel %vm4134, %v9490, %v9494
  %v9496 = vrot.slane %v9399, 2
  %v9497 = vsel %vm4134, %v9492, %v9496
  %v9498 = vrot.slane %v9400, 2
  %v9499 = vsel %vm4134, %v9494, %v9498
  %v9500 = vrot.slane %v9401, 2
  %v9501 = vsel %vm4134, %v9496, %v9500
  %v9536 = vadd.f32 %v9288, %v9436
  %v9537 = vadd.f32 %v9289, %v9437
  %v9538 = vadd.f32 %v9290, %v9439
  %v9539 = vadd.f32 %v9291, %v9441
  %v9540 = vadd.f32 %v9292, %v9443
  %v9541 = vadd.f32 %v9293, %v9445
  %v9542 = vadd.f32 %v9294, %v9447
  %v9543 = vadd.f32 %v9295, %v9449
  %v9544 = vadd.f32 %v9296, %v9451
  %v9545 = vadd.f32 %v9297, %v9453
  %v9546 = vadd.f32 %v9298, %v9455
  %v9547 = vadd.f32 %v9299, %v9457
  %v9548 = vadd.f32 %v9300, %v9459
  %v9549 = vadd.f32 %v9301, %v9461
  %v9550 = vadd.f32 %v9302, %v9463
  %v9551 = vadd.f32 %v9303, %v9465
  %v9552 = vadd.f32 %v9304, %v9467
  %v9553 = vadd.f32 %v9305, %v9469
  %v9554 = vadd.f32 %v9306, %v9471
  %v9555 = vadd.f32 %v9307, %v9473
  %v9556 = vadd.f32 %v9308, %v9475
  %v9557 = vadd.f32 %v9309, %v9477
  %v9558 = vadd.f32 %v9310, %v9479
  %v9559 = vadd.f32 %v9311, %v9481
  %v9560 = vadd.f32 %v9312, %v9483
  %v9561 = vadd.f32 %v9313, %v9485
  %v9562 = vadd.f32 %v9314, %v9487
  %v9563 = vadd.f32 %v9315, %v9489
  %v9564 = vadd.f32 %v9316, %v9491
  %v9565 = vadd.f32 %v9317, %v9493
  %v9566 = vadd.f32 %v9318, %v9495
  %v9567 = vadd.f32 %v9319, %v9497
  %v9568 = vadd.f32 %v9320, %v9499
  %v9569 = vadd.f32 %v9321, %v9501
  %v9570 = vld [vmem:[#allocation3 + $0x10] sm:$0x80]
  %v9571 = vld [vmem:[#allocation3 + $0x18] sm:$0x80]
  %v9572 = vld [vmem:[#allocation3 + $0x110] sm:$0x7f]
  %v9573 = vld [vmem:[#allocation3 + $0x118] sm:$0x7f]
  %v9574 = vlaneseq
  %v9575 = vshrl.u32 %v9574, 7
  %v9576 = vsub.s32 3, %v9575
  %v9577 = vrot.slane %v8906, %v9576
  %v9578 = vlaneseq
  %v9579 = vshrl.u32 %v9578, 7
  %v9580 = vsub.s32 3, %v9579
  %v9581 = vrot.slane %v8907, %v9580
  %v9582 = vmul.f32 %v9570, %v9577
  %v9583 = vmul.f32 %v9571, %v9581
  %v9584 = vmul.f32 %v8946, %v9577
  %v9585 = vmul.f32 %v8947, %v9581
  %v9586 = vmul.f32 %v8948, %v9577
  %v9587 = vmul.f32 %v8949, %v9581
  %v9588 = vmul.f32 %v8950, %v9577
  %v9589 = vmul.f32 %v8951, %v9581
  %v9590 = vmul.f32 %v8952, %v9577
  %v9591 = vmul.f32 %v8953, %v9581
  %v9592 = vmul.f32 %v8954, %v9577
  %v9593 = vmul.f32 %v8955, %v9581
  %v9594 = vmul.f32 %v8956, %v9577
  %v9595 = vmul.f32 %v8957, %v9581
  %v9596 = vmul.f32 %v8958, %v9577
  %v9597 = vmul.f32 %v8959, %v9581
  %v9598 = vmul.f32 %v8960, %v9577
  %v9599 = vmul.f32 %v8961, %v9581
  %v9600 = vmul.f32 %v8962, %v9577
  %v9601 = vmul.f32 %v8963, %v9581
  %v9602 = vmul.f32 %v8964, %v9577
  %v9603 = vmul.f32 %v8965, %v9581
  %v9604 = vmul.f32 %v8966, %v9577
  %v9605 = vmul.f32 %v8967, %v9581
  %v9606 = vmul.f32 %v8968, %v9577
  %v9607 = vmul.f32 %v8969, %v9581
  %v9608 = vmul.f32 %v8970, %v9577
  %v9609 = vmul.f32 %v8971, %v9581
  %v9610 = vmul.f32 %v8972, %v9577
  %v9611 = vmul.f32 %v8973, %v9581
  %v9612 = vmul.f32 %v9086, %v9577
  %v9613 = vmul.f32 %v9087, %v9581
  %v9614 = vmul.f32 %v9572, %v9577
  %v9615 = vmul.f32 %v9573, %v9581
  %v9616 = vmul.f32 %v9582, %v4315
  %v9617 = vmul.f32 %v9583, %v4315
  %v9618 = vmul.f32 %v9584, %v4317
  %v9619 = vmul.f32 %v9585, %v4317
  %v9620 = vmul.f32 %v9586, %v4319
  %v9621 = vmul.f32 %v9587, %v4319
  %v9622 = vmul.f32 %v9588, %v4321
  %v9623 = vmul.f32 %v9589, %v4321
  %v9624 = vmul.f32 %v9590, %v4323
  %v9625 = vmul.f32 %v9591, %v4323
  %v9626 = vmul.f32 %v9592, %v4325
  %v9627 = vmul.f32 %v9593, %v4325
  %v9628 = vmul.f32 %v9594, %v4327
  %v9629 = vmul.f32 %v9595, %v4327
  %v9630 = vmul.f32 %v9596, %v4329
  %v9631 = vmul.f32 %v9597, %v4329
  %v9632 = vmul.f32 %v9598, %v4331
  %v9633 = vmul.f32 %v9599, %v4331
  %v9634 = vmul.f32 %v9600, %v4333
  %v9635 = vmul.f32 %v9601, %v4333
  %v9636 = vmul.f32 %v9602, %v4335
  %v9637 = vmul.f32 %v9603, %v4335
  %v9638 = vmul.f32 %v9604, %v4337
  %v9639 = vmul.f32 %v9605, %v4337
  %v9640 = vmul.f32 %v9606, %v4339
  %v9641 = vmul.f32 %v9607, %v4339
  %v9642 = vmul.f32 %v9608, %v4341
  %v9643 = vmul.f32 %v9609, %v4341
  %v9644 = vmul.f32 %v9610, %v4343
  %v9645 = vmul.f32 %v9611, %v4343
  %v9646 = vmul.f32 %v9612, %v4345
  %v9647 = vmul.f32 %v9613, %v4345
  %v9648 = vmul.f32 %v9614, %v4344
  %v9649 = vmul.f32 %v9615, %v4344
  %v9650 = vadd.f32 %v9536, %v9616
  %v9651 = vadd.f32 %v9537, %v9617
  %v9652 = vadd.f32 %v9538, %v9618
  %v9653 = vadd.f32 %v9539, %v9619
  %v9654 = vadd.f32 %v9540, %v9620
  %v9655 = vadd.f32 %v9541, %v9621
  %v9656 = vadd.f32 %v9542, %v9622
  %v9657 = vadd.f32 %v9543, %v9623
  %v9658 = vadd.f32 %v9544, %v9624
  %v9659 = vadd.f32 %v9545, %v9625
  %v9660 = vadd.f32 %v9546, %v9626
  %v9661 = vadd.f32 %v9547, %v9627
  %v9662 = vadd.f32 %v9548, %v9628
  %v9663 = vadd.f32 %v9549, %v9629
  %v9664 = vadd.f32 %v9550, %v9630
  %v9665 = vadd.f32 %v9551, %v9631
  %v9666 = vadd.f32 %v9552, %v9632
  %v9667 = vadd.f32 %v9553, %v9633
  %v9668 = vadd.f32 %v9554, %v9634
  %v9669 = vadd.f32 %v9555, %v9635
  %v9670 = vadd.f32 %v9556, %v9636
  %v9671 = vadd.f32 %v9557, %v9637
  %v9672 = vadd.f32 %v9558, %v9638
  %v9673 = vadd.f32 %v9559, %v9639
  %v9674 = vadd.f32 %v9560, %v9640
  %v9675 = vadd.f32 %v9561, %v9641
  %v9676 = vadd.f32 %v9562, %v9642
  %v9677 = vadd.f32 %v9563, %v9643
  %v9678 = vadd.f32 %v9564, %v9644
  %v9679 = vadd.f32 %v9565, %v9645
  %v9680 = vadd.f32 %v9566, %v9646
  %v9681 = vadd.f32 %v9567, %v9647
  %v9682 = vadd.f32 %v9568, %v9648
  %v9683 = vadd.f32 %v9569, %v9649
  %v9684 = vld [vmem:[#allocation3 + $0x110] sm:$0xff]
  %v9685 = vld [vmem:[#allocation3 + $0x118] sm:$0xff]
  %v9686 = vlaneseq
  %v9687 = vshrl.u32 %v9686, 7
  %v9688 = vsub.s32 4, %v9687
  %v9689 = vrot.slane %v8906, %v9688
  %v9690 = vlaneseq
  %v9691 = vshrl.u32 %v9690, 7
  %v9692 = vsub.s32 4, %v9691
  %v9693 = vrot.slane %v8907, %v9692
  %v9694 = vmul.f32 %v8946, %v9689
  %v9695 = vmul.f32 %v8947, %v9693
  %v9696 = vmul.f32 %v8948, %v9689
  %v9697 = vmul.f32 %v8949, %v9693
  %v9698 = vmul.f32 %v8950, %v9689
  %v9699 = vmul.f32 %v8951, %v9693
  %v9700 = vmul.f32 %v8952, %v9689
  %v9701 = vmul.f32 %v8953, %v9693
  %v9702 = vmul.f32 %v8954, %v9689
  %v9703 = vmul.f32 %v8955, %v9693
  %v9704 = vmul.f32 %v8956, %v9689
  %v9705 = vmul.f32 %v8957, %v9693
  %v9706 = vmul.f32 %v8958, %v9689
  %v9707 = vmul.f32 %v8959, %v9693
  %v9708 = vmul.f32 %v8960, %v9689
  %v9709 = vmul.f32 %v8961, %v9693
  %v9710 = vmul.f32 %v8962, %v9689
  %v9711 = vmul.f32 %v8963, %v9693
  %v9712 = vmul.f32 %v8964, %v9689
  %v9713 = vmul.f32 %v8965, %v9693
  %v9714 = vmul.f32 %v8966, %v9689
  %v9715 = vmul.f32 %v8967, %v9693
  %v9716 = vmul.f32 %v8968, %v9689
  %v9717 = vmul.f32 %v8969, %v9693
  %v9718 = vmul.f32 %v8970, %v9689
  %v9719 = vmul.f32 %v8971, %v9693
  %v9720 = vmul.f32 %v8972, %v9689
  %v9721 = vmul.f32 %v8973, %v9693
  %v9722 = vmul.f32 %v9086, %v9689
  %v9723 = vmul.f32 %v9087, %v9693
  %v9724 = vmul.f32 %v9684, %v9689
  %v9725 = vmul.f32 %v9685, %v9693
  %v9758 = vrot.slane %v9694, 1
  %v9759 = vrot.slane %v9695, 1
  %v9760 = vrot.slane %v9696, 1
  %v9761 = vsel %vm3618, %v9758, %v9760
  %v9762 = vrot.slane %v9697, 1
  %v9763 = vsel %vm3618, %v9759, %v9762
  %v9764 = vrot.slane %v9698, 1
  %v9765 = vsel %vm3618, %v9760, %v9764
  %v9766 = vrot.slane %v9699, 1
  %v9767 = vsel %vm3618, %v9762, %v9766
  %v9768 = vrot.slane %v9700, 1
  %v9769 = vsel %vm3618, %v9764, %v9768
  %v9770 = vrot.slane %v9701, 1
  %v9771 = vsel %vm3618, %v9766, %v9770
  %v9772 = vrot.slane %v9702, 1
  %v9773 = vsel %vm3618, %v9768, %v9772
  %v9774 = vrot.slane %v9703, 1
  %v9775 = vsel %vm3618, %v9770, %v9774
  %v9776 = vrot.slane %v9704, 1
  %v9777 = vsel %vm3618, %v9772, %v9776
  %v9778 = vrot.slane %v9705, 1
  %v9779 = vsel %vm3618, %v9774, %v9778
  %v9780 = vrot.slane %v9706, 1
  %v9781 = vsel %vm3618, %v9776, %v9780
  %v9782 = vrot.slane %v9707, 1
  %v9783 = vsel %vm3618, %v9778, %v9782
  %v9784 = vrot.slane %v9708, 1
  %v9785 = vsel %vm3618, %v9780, %v9784
  %v9786 = vrot.slane %v9709, 1
  %v9787 = vsel %vm3618, %v9782, %v9786
  %v9788 = vrot.slane %v9710, 1
  %v9789 = vsel %vm3618, %v9784, %v9788
  %v9790 = vrot.slane %v9711, 1
  %v9791 = vsel %vm3618, %v9786, %v9790
  %v9792 = vrot.slane %v9712, 1
  %v9793 = vsel %vm3618, %v9788, %v9792
  %v9794 = vrot.slane %v9713, 1
  %v9795 = vsel %vm3618, %v9790, %v9794
  %v9796 = vrot.slane %v9714, 1
  %v9797 = vsel %vm3618, %v9792, %v9796
  %v9798 = vrot.slane %v9715, 1
  %v9799 = vsel %vm3618, %v9794, %v9798
  %v9800 = vrot.slane %v9716, 1
  %v9801 = vsel %vm3618, %v9796, %v9800
  %v9802 = vrot.slane %v9717, 1
  %v9803 = vsel %vm3618, %v9798, %v9802
  %v9804 = vrot.slane %v9718, 1
  %v9805 = vsel %vm3618, %v9800, %v9804
  %v9806 = vrot.slane %v9719, 1
  %v9807 = vsel %vm3618, %v9802, %v9806
  %v9808 = vrot.slane %v9720, 1
  %v9809 = vsel %vm3618, %v9804, %v9808
  %v9810 = vrot.slane %v9721, 1
  %v9811 = vsel %vm3618, %v9806, %v9810
  %v9812 = vrot.slane %v9722, 1
  %v9813 = vsel %vm3618, %v9808, %v9812
  %v9814 = vrot.slane %v9723, 1
  %v9815 = vsel %vm3618, %v9810, %v9814
  %v9816 = vrot.slane %v9724, 1
  %v9817 = vsel %vm3618, %v9812, %v9816
  %v9818 = vrot.slane %v9725, 1
  %v9819 = vsel %vm3618, %v9814, %v9818
  %v9854 = vadd.f32 %v9650, %v9758
  %v9855 = vadd.f32 %v9651, %v9759
  %v9856 = vadd.f32 %v9652, %v9761
  %v9857 = vadd.f32 %v9653, %v9763
  %v9858 = vadd.f32 %v9654, %v9765
  %v9859 = vadd.f32 %v9655, %v9767
  %v9860 = vadd.f32 %v9656, %v9769
  %v9861 = vadd.f32 %v9657, %v9771
  %v9862 = vadd.f32 %v9658, %v9773
  %v9863 = vadd.f32 %v9659, %v9775
  %v9864 = vadd.f32 %v9660, %v9777
  %v9865 = vadd.f32 %v9661, %v9779
  %v9866 = vadd.f32 %v9662, %v9781
  %v9867 = vadd.f32 %v9663, %v9783
  %v9868 = vadd.f32 %v9664, %v9785
  %v9869 = vadd.f32 %v9665, %v9787
  %v9870 = vadd.f32 %v9666, %v9789
  %v9871 = vadd.f32 %v9667, %v9791
  %v9872 = vadd.f32 %v9668, %v9793
  %v9873 = vadd.f32 %v9669, %v9795
  %v9874 = vadd.f32 %v9670, %v9797
  %v9875 = vadd.f32 %v9671, %v9799
  %v9876 = vadd.f32 %v9672, %v9801
  %v9877 = vadd.f32 %v9673, %v9803
  %v9878 = vadd.f32 %v9674, %v9805
  %v9879 = vadd.f32 %v9675, %v9807
  %v9880 = vadd.f32 %v9676, %v9809
  %v9881 = vadd.f32 %v9677, %v9811
  %v9882 = vadd.f32 %v9678, %v9813
  %v9883 = vadd.f32 %v9679, %v9815
  %v9884 = vadd.f32 %v9680, %v9817
  %v9885 = vadd.f32 %v9681, %v9819
  %v9886 = vadd.f32 %v9682, %v9816
  %v9887 = vadd.f32 %v9683, %v9818
  %v9888 = vld [vmem:[#allocation3 + $0x20] sm:$0xfe]
  %v9889 = vld [vmem:[#allocation3 + $0x28] sm:$0xfe]
  %v9890 = vld [vmem:[#allocation3 + $0x120] sm:$0x1]
  %v9891 = vld [vmem:[#allocation3 + $0x128] sm:$0x1]
  %v9892 = vlaneseq
  %v9893 = vshrl.u32 %v9892, 7
  %v9894 = vsub.s32 5, %v9893
  %v9895 = vrot.slane %v8906, %v9894
  %v9896 = vlaneseq
  %v9897 = vshrl.u32 %v9896, 7
  %v9898 = vsub.s32 5, %v9897
  %v9899 = vrot.slane %v8907, %v9898
  %v9900 = vmul.f32 %v9888, %v9895
  %v9901 = vmul.f32 %v9889, %v9899
  %v9902 = vmul.f32 %v8948, %v9895
  %v9903 = vmul.f32 %v8949, %v9899
  %v9904 = vmul.f32 %v8950, %v9895
  %v9905 = vmul.f32 %v8951, %v9899
  %v9906 = vmul.f32 %v8952, %v9895
  %v9907 = vmul.f32 %v8953, %v9899
  %v9908 = vmul.f32 %v8954, %v9895
  %v9909 = vmul.f32 %v8955, %v9899
  %v9910 = vmul.f32 %v8956, %v9895
  %v9911 = vmul.f32 %v8957, %v9899
  %v9912 = vmul.f32 %v8958, %v9895
  %v9913 = vmul.f32 %v8959, %v9899
  %v9914 = vmul.f32 %v8960, %v9895
  %v9915 = vmul.f32 %v8961, %v9899
  %v9916 = vmul.f32 %v8962, %v9895
  %v9917 = vmul.f32 %v8963, %v9899
  %v9918 = vmul.f32 %v8964, %v9895
  %v9919 = vmul.f32 %v8965, %v9899
  %v9920 = vmul.f32 %v8966, %v9895
  %v9921 = vmul.f32 %v8967, %v9899
  %v9922 = vmul.f32 %v8968, %v9895
  %v9923 = vmul.f32 %v8969, %v9899
  %v9924 = vmul.f32 %v8970, %v9895
  %v9925 = vmul.f32 %v8971, %v9899
  %v9926 = vmul.f32 %v8972, %v9895
  %v9927 = vmul.f32 %v8973, %v9899
  %v9928 = vmul.f32 %v9086, %v9895
  %v9929 = vmul.f32 %v9087, %v9899
  %v9930 = vmul.f32 %v9684, %v9895
  %v9931 = vmul.f32 %v9685, %v9899
  %v9932 = vmul.f32 %v9890, %v9895
  %v9933 = vmul.f32 %v9891, %v9899
  %v9934 = vmul.f32 %v9900, %v4681
  %v9935 = vmul.f32 %v9901, %v4681
  %v9936 = vmul.f32 %v9902, %v4683
  %v9937 = vmul.f32 %v9903, %v4683
  %v9938 = vmul.f32 %v9904, %v4685
  %v9939 = vmul.f32 %v9905, %v4685
  %v9940 = vmul.f32 %v9906, %v4687
  %v9941 = vmul.f32 %v9907, %v4687
  %v9942 = vmul.f32 %v9908, %v4689
  %v9943 = vmul.f32 %v9909, %v4689
  %v9944 = vmul.f32 %v9910, %v4691
  %v9945 = vmul.f32 %v9911, %v4691
  %v9946 = vmul.f32 %v9912, %v4693
  %v9947 = vmul.f32 %v9913, %v4693
  %v9948 = vmul.f32 %v9914, %v4695
  %v9949 = vmul.f32 %v9915, %v4695
  %v9950 = vmul.f32 %v9916, %v4697
  %v9951 = vmul.f32 %v9917, %v4697
  %v9952 = vmul.f32 %v9918, %v4699
  %v9953 = vmul.f32 %v9919, %v4699
  %v9954 = vmul.f32 %v9920, %v4701
  %v9955 = vmul.f32 %v9921, %v4701
  %v9956 = vmul.f32 %v9922, %v4703
  %v9957 = vmul.f32 %v9923, %v4703
  %v9958 = vmul.f32 %v9924, %v4705
  %v9959 = vmul.f32 %v9925, %v4705
  %v9960 = vmul.f32 %v9926, %v4707
  %v9961 = vmul.f32 %v9927, %v4707
  %v9962 = vmul.f32 %v9928, %v4709
  %v9963 = vmul.f32 %v9929, %v4709
  %v9964 = vmul.f32 %v9930, %v4711
  %v9965 = vmul.f32 %v9931, %v4711
  %v9966 = vmul.f32 %v9932, %v4710
  %v9967 = vmul.f32 %v9933, %v4710
  %v10002 = vrot.slane %v9934, 2
  %v10003 = vrot.slane %v9935, 2
  %v10004 = vrot.slane %v9936, 2
  %v10005 = vsel %vm4134, %v10002, %v10004
  %v10006 = vrot.slane %v9937, 2
  %v10007 = vsel %vm4134, %v10003, %v10006
  %v10008 = vrot.slane %v9938, 2
  %v10009 = vsel %vm4134, %v10004, %v10008
  %v10010 = vrot.slane %v9939, 2
  %v10011 = vsel %vm4134, %v10006, %v10010
  %v10012 = vrot.slane %v9940, 2
  %v10013 = vsel %vm4134, %v10008, %v10012
  %v10014 = vrot.slane %v9941, 2
  %v10015 = vsel %vm4134, %v10010, %v10014
  %v10016 = vrot.slane %v9942, 2
  %v10017 = vsel %vm4134, %v10012, %v10016
  %v10018 = vrot.slane %v9943, 2
  %v10019 = vsel %vm4134, %v10014, %v10018
  %v10020 = vrot.slane %v9944, 2
  %v10021 = vsel %vm4134, %v10016, %v10020
  %v10022 = vrot.slane %v9945, 2
  %v10023 = vsel %vm4134, %v10018, %v10022
  %v10024 = vrot.slane %v9946, 2
  %v10025 = vsel %vm4134, %v10020, %v10024
  %v10026 = vrot.slane %v9947, 2
  %v10027 = vsel %vm4134, %v10022, %v10026
  %v10028 = vrot.slane %v9948, 2
  %v10029 = vsel %vm4134, %v10024, %v10028
  %v10030 = vrot.slane %v9949, 2
  %v10031 = vsel %vm4134, %v10026, %v10030
  %v10032 = vrot.slane %v9950, 2
  %v10033 = vsel %vm4134, %v10028, %v10032
  %v10034 = vrot.slane %v9951, 2
  %v10035 = vsel %vm4134, %v10030, %v10034
  %v10036 = vrot.slane %v9952, 2
  %v10037 = vsel %vm4134, %v10032, %v10036
  %v10038 = vrot.slane %v9953, 2
  %v10039 = vsel %vm4134, %v10034, %v10038
  %v10040 = vrot.slane %v9954, 2
  %v10041 = vsel %vm4134, %v10036, %v10040
  %v10042 = vrot.slane %v9955, 2
  %v10043 = vsel %vm4134, %v10038, %v10042
  %v10044 = vrot.slane %v9956, 2
  %v10045 = vsel %vm4134, %v10040, %v10044
  %v10046 = vrot.slane %v9957, 2
  %v10047 = vsel %vm4134, %v10042, %v10046
  %v10048 = vrot.slane %v9958, 2
  %v10049 = vsel %vm4134, %v10044, %v10048
  %v10050 = vrot.slane %v9959, 2
  %v10051 = vsel %vm4134, %v10046, %v10050
  %v10052 = vrot.slane %v9960, 2
  %v10053 = vsel %vm4134, %v10048, %v10052
  %v10054 = vrot.slane %v9961, 2
  %v10055 = vsel %vm4134, %v10050, %v10054
  %v10056 = vrot.slane %v9962, 2
  %v10057 = vsel %vm4134, %v10052, %v10056
  %v10058 = vrot.slane %v9963, 2
  %v10059 = vsel %vm4134, %v10054, %v10058
  %v10060 = vrot.slane %v9964, 2
  %v10061 = vsel %vm4134, %v10056, %v10060
  %v10062 = vrot.slane %v9965, 2
  %v10063 = vsel %vm4134, %v10058, %v10062
  %v10064 = vrot.slane %v9966, 2
  %v10065 = vsel %vm4134, %v10060, %v10064
  %v10066 = vrot.slane %v9967, 2
  %v10067 = vsel %vm4134, %v10062, %v10066
  %v10102 = vadd.f32 %v9854, %v10002
  %v10103 = vadd.f32 %v9855, %v10003
  %v10104 = vadd.f32 %v9856, %v10005
  %v10105 = vadd.f32 %v9857, %v10007
  %v10106 = vadd.f32 %v9858, %v10009
  %v10107 = vadd.f32 %v9859, %v10011
  %v10108 = vadd.f32 %v9860, %v10013
  %v10109 = vadd.f32 %v9861, %v10015
  %v10110 = vadd.f32 %v9862, %v10017
  %v10111 = vadd.f32 %v9863, %v10019
  %v10112 = vadd.f32 %v9864, %v10021
  %v10113 = vadd.f32 %v9865, %v10023
  %v10114 = vadd.f32 %v9866, %v10025
  %v10115 = vadd.f32 %v9867, %v10027
  %v10116 = vadd.f32 %v9868, %v10029
  %v10117 = vadd.f32 %v9869, %v10031
  %v10118 = vadd.f32 %v9870, %v10033
  %v10119 = vadd.f32 %v9871, %v10035
  %v10120 = vadd.f32 %v9872, %v10037
  %v10121 = vadd.f32 %v9873, %v10039
  %v10122 = vadd.f32 %v9874, %v10041
  %v10123 = vadd.f32 %v9875, %v10043
  %v10124 = vadd.f32 %v9876, %v10045
  %v10125 = vadd.f32 %v9877, %v10047
  %v10126 = vadd.f32 %v9878, %v10049
  %v10127 = vadd.f32 %v9879, %v10051
  %v10128 = vadd.f32 %v9880, %v10053
  %v10129 = vadd.f32 %v9881, %v10055
  %v10130 = vadd.f32 %v9882, %v10057
  %v10131 = vadd.f32 %v9883, %v10059
  %v10132 = vadd.f32 %v9884, %v10061
  %v10133 = vadd.f32 %v9885, %v10063
  %v10134 = vadd.f32 %v9886, %v10065
  %v10135 = vadd.f32 %v9887, %v10067
  %v10136 = vld [vmem:[#allocation3 + $0x20] sm:$0x80]
  %v10137 = vld [vmem:[#allocation3 + $0x28] sm:$0x80]
  %v10138 = vld [vmem:[#allocation3 + $0x120] sm:$0x7f]
  %v10139 = vld [vmem:[#allocation3 + $0x128] sm:$0x7f]
  %v10140 = vlaneseq
  %v10141 = vshrl.u32 %v10140, 7
  %v10142 = vsub.s32 6, %v10141
  %v10143 = vrot.slane %v8906, %v10142
  %v10144 = vlaneseq
  %v10145 = vshrl.u32 %v10144, 7
  %v10146 = vsub.s32 6, %v10145
  %v10147 = vrot.slane %v8907, %v10146
  %v10148 = vmul.f32 %v10136, %v10143
  %v10149 = vmul.f32 %v10137, %v10147
  %v10150 = vmul.f32 %v8948, %v10143
  %v10151 = vmul.f32 %v8949, %v10147
  %v10152 = vmul.f32 %v8950, %v10143
  %v10153 = vmul.f32 %v8951, %v10147
  %v10154 = vmul.f32 %v8952, %v10143
  %v10155 = vmul.f32 %v8953, %v10147
  %v10156 = vmul.f32 %v8954, %v10143
  %v10157 = vmul.f32 %v8955, %v10147
  %v10158 = vmul.f32 %v8956, %v10143
  %v10159 = vmul.f32 %v8957, %v10147
  %v10160 = vmul.f32 %v8958, %v10143
  %v10161 = vmul.f32 %v8959, %v10147
  %v10162 = vmul.f32 %v8960, %v10143
  %v10163 = vmul.f32 %v8961, %v10147
  %v10164 = vmul.f32 %v8962, %v10143
  %v10165 = vmul.f32 %v8963, %v10147
  %v10166 = vmul.f32 %v8964, %v10143
  %v10167 = vmul.f32 %v8965, %v10147
  %v10168 = vmul.f32 %v8966, %v10143
  %v10169 = vmul.f32 %v8967, %v10147
  %v10170 = vmul.f32 %v8968, %v10143
  %v10171 = vmul.f32 %v8969, %v10147
  %v10172 = vmul.f32 %v8970, %v10143
  %v10173 = vmul.f32 %v8971, %v10147
  %v10174 = vmul.f32 %v8972, %v10143
  %v10175 = vmul.f32 %v8973, %v10147
  %v10176 = vmul.f32 %v9086, %v10143
  %v10177 = vmul.f32 %v9087, %v10147
  %v10178 = vmul.f32 %v9684, %v10143
  %v10179 = vmul.f32 %v9685, %v10147
  %v10180 = vmul.f32 %v10138, %v10143
  %v10181 = vmul.f32 %v10139, %v10147
  %v10182 = vmul.f32 %v10148, %v4977
  %v10183 = vmul.f32 %v10149, %v4977
  %v10184 = vmul.f32 %v10150, %v4979
  %v10185 = vmul.f32 %v10151, %v4979
  %v10186 = vmul.f32 %v10152, %v4981
  %v10187 = vmul.f32 %v10153, %v4981
  %v10188 = vmul.f32 %v10154, %v4983
  %v10189 = vmul.f32 %v10155, %v4983
  %v10190 = vmul.f32 %v10156, %v4985
  %v10191 = vmul.f32 %v10157, %v4985
  %v10192 = vmul.f32 %v10158, %v4987
  %v10193 = vmul.f32 %v10159, %v4987
  %v10194 = vmul.f32 %v10160, %v4989
  %v10195 = vmul.f32 %v10161, %v4989
  %v10196 = vmul.f32 %v10162, %v4991
  %v10197 = vmul.f32 %v10163, %v4991
  %v10198 = vmul.f32 %v10164, %v4993
  %v10199 = vmul.f32 %v10165, %v4993
  %v10200 = vmul.f32 %v10166, %v4995
  %v10201 = vmul.f32 %v10167, %v4995
  %v10202 = vmul.f32 %v10168, %v4997
  %v10203 = vmul.f32 %v10169, %v4997
  %v10204 = vmul.f32 %v10170, %v4999
  %v10205 = vmul.f32 %v10171, %v4999
  %v10206 = vmul.f32 %v10172, %v5001
  %v10207 = vmul.f32 %v10173, %v5001
  %v10208 = vmul.f32 %v10174, %v5003
  %v10209 = vmul.f32 %v10175, %v5003
  %v10210 = vmul.f32 %v10176, %v5005
  %v10211 = vmul.f32 %v10177, %v5005
  %v10212 = vmul.f32 %v10178, %v5007
  %v10213 = vmul.f32 %v10179, %v5007
  %v10214 = vmul.f32 %v10180, %v5006
  %v10215 = vmul.f32 %v10181, %v5006
  %v10216 = vadd.f32 %v10102, %v10182
  %v10217 = vadd.f32 %v10103, %v10183
  %v10218 = vadd.f32 %v10104, %v10184
  %v10219 = vadd.f32 %v10105, %v10185
  %v10220 = vadd.f32 %v10106, %v10186
  %v10221 = vadd.f32 %v10107, %v10187
  %v10222 = vadd.f32 %v10108, %v10188
  %v10223 = vadd.f32 %v10109, %v10189
  %v10224 = vadd.f32 %v10110, %v10190
  %v10225 = vadd.f32 %v10111, %v10191
  %v10226 = vadd.f32 %v10112, %v10192
  %v10227 = vadd.f32 %v10113, %v10193
  %v10228 = vadd.f32 %v10114, %v10194
  %v10229 = vadd.f32 %v10115, %v10195
  %v10230 = vadd.f32 %v10116, %v10196
  %v10231 = vadd.f32 %v10117, %v10197
  %v10232 = vadd.f32 %v10118, %v10198
  %v10233 = vadd.f32 %v10119, %v10199
  %v10234 = vadd.f32 %v10120, %v10200
  %v10235 = vadd.f32 %v10121, %v10201
  %v10236 = vadd.f32 %v10122, %v10202
  %v10237 = vadd.f32 %v10123, %v10203
  %v10238 = vadd.f32 %v10124, %v10204
  %v10239 = vadd.f32 %v10125, %v10205
  %v10240 = vadd.f32 %v10126, %v10206
  %v10241 = vadd.f32 %v10127, %v10207
  %v10242 = vadd.f32 %v10128, %v10208
  %v10243 = vadd.f32 %v10129, %v10209
  %v10244 = vadd.f32 %v10130, %v10210
  %v10245 = vadd.f32 %v10131, %v10211
  %v10246 = vadd.f32 %v10132, %v10212
  %v10247 = vadd.f32 %v10133, %v10213
  %v10248 = vadd.f32 %v10134, %v10214
  %v10249 = vadd.f32 %v10135, %v10215
  %v10250 = vld [vmem:[#allocation3 + $0x120] sm:$0xff]
  %v10251 = vld [vmem:[#allocation3 + $0x128] sm:$0xff]
  %v10252 = vlaneseq
  %v10253 = vshrl.u32 %v10252, 7
  %v10254 = vsub.s32 7, %v10253
  %v10255 = vrot.slane %v8906, %v10254
  %v10256 = vlaneseq
  %v10257 = vshrl.u32 %v10256, 7
  %v10258 = vsub.s32 7, %v10257
  %v10259 = vrot.slane %v8907, %v10258
  %v10260 = vmul.f32 %v8948, %v10255
  %v10261 = vmul.f32 %v8949, %v10259
  %v10262 = vmul.f32 %v8950, %v10255
  %v10263 = vmul.f32 %v8951, %v10259
  %v10264 = vmul.f32 %v8952, %v10255
  %v10265 = vmul.f32 %v8953, %v10259
  %v10266 = vmul.f32 %v8954, %v10255
  %v10267 = vmul.f32 %v8955, %v10259
  %v10268 = vmul.f32 %v8956, %v10255
  %v10269 = vmul.f32 %v8957, %v10259
  %v10270 = vmul.f32 %v8958, %v10255
  %v10271 = vmul.f32 %v8959, %v10259
  %v10272 = vmul.f32 %v8960, %v10255
  %v10273 = vmul.f32 %v8961, %v10259
  %v10274 = vmul.f32 %v8962, %v10255
  %v10275 = vmul.f32 %v8963, %v10259
  %v10276 = vmul.f32 %v8964, %v10255
  %v10277 = vmul.f32 %v8965, %v10259
  %v10278 = vmul.f32 %v8966, %v10255
  %v10279 = vmul.f32 %v8967, %v10259
  %v10280 = vmul.f32 %v8968, %v10255
  %v10281 = vmul.f32 %v8969, %v10259
  %v10282 = vmul.f32 %v8970, %v10255
  %v10283 = vmul.f32 %v8971, %v10259
  %v10284 = vmul.f32 %v8972, %v10255
  %v10285 = vmul.f32 %v8973, %v10259
  %v10286 = vmul.f32 %v9086, %v10255
  %v10287 = vmul.f32 %v9087, %v10259
  %v10288 = vmul.f32 %v9684, %v10255
  %v10289 = vmul.f32 %v9685, %v10259
  %v10290 = vmul.f32 %v10250, %v10255
  %v10291 = vmul.f32 %v10251, %v10259
  %v10292 = vmul.f32 %v10260, %v1723
  %v10293 = vmul.f32 %v10261, %v1723
  %v10294 = vmul.f32 %v10262, %v1727
  %v10295 = vmul.f32 %v10263, %v1727
  %v10296 = vmul.f32 %v10264, %v1731
  %v10297 = vmul.f32 %v10265, %v1731
  %v10298 = vmul.f32 %v10266, %v1735
  %v10299 = vmul.f32 %v10267, %v1735
  %v10300 = vmul.f32 %v10268, %v1739
  %v10301 = vmul.f32 %v10269, %v1739
  %v10302 = vmul.f32 %v10270, %v1743
  %v10303 = vmul.f32 %v10271, %v1743
  %v10304 = vmul.f32 %v10272, %v1747
  %v10305 = vmul.f32 %v10273, %v1747
  %v10306 = vmul.f32 %v10274, %v1751
  %v10307 = vmul.f32 %v10275, %v1751
  %v10308 = vmul.f32 %v10276, %v1755
  %v10309 = vmul.f32 %v10277, %v1755
  %v10310 = vmul.f32 %v10278, %v1759
  %v10311 = vmul.f32 %v10279, %v1759
  %v10312 = vmul.f32 %v10280, %v1763
  %v10313 = vmul.f32 %v10281, %v1763
  %v10314 = vmul.f32 %v10282, %v1767
  %v10315 = vmul.f32 %v10283, %v1767
  %v10316 = vmul.f32 %v10284, %v1771
  %v10317 = vmul.f32 %v10285, %v1771
  %v10318 = vmul.f32 %v10286, %v1775
  %v10319 = vmul.f32 %v10287, %v1775
  %v10320 = vmul.f32 %v10288, %v1779
  %v10321 = vmul.f32 %v10289, %v1779
  %v10322 = vmul.f32 %v10290, %v1783
  %v10323 = vmul.f32 %v10291, %v1783
  %v10356 = vrot.slane %v10292, 1
  %v10357 = vrot.slane %v10293, 1
  %v10358 = vrot.slane %v10294, 1
  %v10359 = vsel %vm3618, %v10356, %v10358
  %v10360 = vrot.slane %v10295, 1
  %v10361 = vsel %vm3618, %v10357, %v10360
  %v10362 = vrot.slane %v10296, 1
  %v10363 = vsel %vm3618, %v10358, %v10362
  %v10364 = vrot.slane %v10297, 1
  %v10365 = vsel %vm3618, %v10360, %v10364
  %v10366 = vrot.slane %v10298, 1
  %v10367 = vsel %vm3618, %v10362, %v10366
  %v10368 = vrot.slane %v10299, 1
  %v10369 = vsel %vm3618, %v10364, %v10368
  %v10370 = vrot.slane %v10300, 1
  %v10371 = vsel %vm3618, %v10366, %v10370
  %v10372 = vrot.slane %v10301, 1
  %v10373 = vsel %vm3618, %v10368, %v10372
  %v10374 = vrot.slane %v10302, 1
  %v10375 = vsel %vm3618, %v10370, %v10374
  %v10376 = vrot.slane %v10303, 1
  %v10377 = vsel %vm3618, %v10372, %v10376
  %v10378 = vrot.slane %v10304, 1
  %v10379 = vsel %vm3618, %v10374, %v10378
  %v10380 = vrot.slane %v10305, 1
  %v10381 = vsel %vm3618, %v10376, %v10380
  %v10382 = vrot.slane %v10306, 1
  %v10383 = vsel %vm3618, %v10378, %v10382
  %v10384 = vrot.slane %v10307, 1
  %v10385 = vsel %vm3618, %v10380, %v10384
  %v10386 = vrot.slane %v10308, 1
  %v10387 = vsel %vm3618, %v10382, %v10386
  %v10388 = vrot.slane %v10309, 1
  %v10389 = vsel %vm3618, %v10384, %v10388
  %v10390 = vrot.slane %v10310, 1
  %v10391 = vsel %vm3618, %v10386, %v10390
  %v10392 = vrot.slane %v10311, 1
  %v10393 = vsel %vm3618, %v10388, %v10392
  %v10394 = vrot.slane %v10312, 1
  %v10395 = vsel %vm3618, %v10390, %v10394
  %v10396 = vrot.slane %v10313, 1
  %v10397 = vsel %vm3618, %v10392, %v10396
  %v10398 = vrot.slane %v10314, 1
  %v10399 = vsel %vm3618, %v10394, %v10398
  %v10400 = vrot.slane %v10315, 1
  %v10401 = vsel %vm3618, %v10396, %v10400
  %v10402 = vrot.slane %v10316, 1
  %v10403 = vsel %vm3618, %v10398, %v10402
  %v10404 = vrot.slane %v10317, 1
  %v10405 = vsel %vm3618, %v10400, %v10404
  %v10406 = vrot.slane %v10318, 1
  %v10407 = vsel %vm3618, %v10402, %v10406
  %v10408 = vrot.slane %v10319, 1
  %v10409 = vsel %vm3618, %v10404, %v10408
  %v10410 = vrot.slane %v10320, 1
  %v10411 = vsel %vm3618, %v10406, %v10410
  %v10412 = vrot.slane %v10321, 1
  %v10413 = vsel %vm3618, %v10408, %v10412
  %v10414 = vrot.slane %v10322, 1
  %v10415 = vsel %vm3618, %v10410, %v10414
  %v10416 = vrot.slane %v10323, 1
  %v10417 = vsel %vm3618, %v10412, %v10416
  %v10452 = vadd.f32 %v10216, %v10356
  %v10453 = vadd.f32 %v10217, %v10357
  %v10454 = vadd.f32 %v10218, %v10359
  %v10455 = vadd.f32 %v10219, %v10361
  %v10456 = vadd.f32 %v10220, %v10363
  %v10457 = vadd.f32 %v10221, %v10365
  %v10458 = vadd.f32 %v10222, %v10367
  %v10459 = vadd.f32 %v10223, %v10369
  %v10460 = vadd.f32 %v10224, %v10371
  %v10461 = vadd.f32 %v10225, %v10373
  %v10462 = vadd.f32 %v10226, %v10375
  %v10463 = vadd.f32 %v10227, %v10377
  %v10464 = vadd.f32 %v10228, %v10379
  %v10465 = vadd.f32 %v10229, %v10381
  %v10466 = vadd.f32 %v10230, %v10383
  %v10467 = vadd.f32 %v10231, %v10385
  %v10468 = vadd.f32 %v10232, %v10387
  %v10469 = vadd.f32 %v10233, %v10389
  %v10470 = vadd.f32 %v10234, %v10391
  %v10471 = vadd.f32 %v10235, %v10393
  %v10472 = vadd.f32 %v10236, %v10395
  %v10473 = vadd.f32 %v10237, %v10397
  %v10474 = vadd.f32 %v10238, %v10399
  %v10475 = vadd.f32 %v10239, %v10401
  %v10476 = vadd.f32 %v10240, %v10403
  %v10477 = vadd.f32 %v10241, %v10405
  %v10478 = vadd.f32 %v10242, %v10407
  %v10479 = vadd.f32 %v10243, %v10409
  %v10480 = vadd.f32 %v10244, %v10411
  %v10481 = vadd.f32 %v10245, %v10413
  %v10482 = vadd.f32 %v10246, %v10415
  %v10483 = vadd.f32 %v10247, %v10417
  %v10484 = vadd.f32 %v10248, %v10414
  %v10485 = vadd.f32 %v10249, %v10416
  %v10486 = vld [vmem:[#allocation3 + $0x30] sm:$0xfe]
  %v10487 = vld [vmem:[#allocation3 + $0x38] sm:$0xfe]
  %v10488 = vld [vmem:[#allocation3 + $0x40] sm:$0xff]
  %v10489 = vld [vmem:[#allocation3 + $0x48] sm:$0xff]
  %v10490 = vld [vmem:[#allocation3 + $0x50] sm:$0xff]
  %v10491 = vld [vmem:[#allocation3 + $0x58] sm:$0xff]
  %v10492 = vld [vmem:[#allocation3 + $0x60] sm:$0xff]
  %v10493 = vld [vmem:[#allocation3 + $0x68] sm:$0xff]
  %v10494 = vld [vmem:[#allocation3 + $0x70] sm:$0xff]
  %v10495 = vld [vmem:[#allocation3 + $0x78] sm:$0xff]
  %v10496 = vld [vmem:[#allocation3 + $0x80] sm:$0xff]
  %v10497 = vld [vmem:[#allocation3 + $0x88] sm:$0xff]
  %v10498 = vld [vmem:[#allocation3 + $0x90] sm:$0xff]
  %v10499 = vld [vmem:[#allocation3 + $0x98] sm:$0xff]
  %v10500 = vld [vmem:[#allocation3 + $0xa0] sm:$0xff]
  %v10501 = vld [vmem:[#allocation3 + $0xa8] sm:$0xff]
  %v10502 = vld [vmem:[#allocation3 + $0xb0] sm:$0xff]
  %v10503 = vld [vmem:[#allocation3 + $0xb8] sm:$0xff]
  %v10504 = vld [vmem:[#allocation3 + $0xc0] sm:$0xff]
  %v10505 = vld [vmem:[#allocation3 + $0xc8] sm:$0xff]
  %v10506 = vld [vmem:[#allocation3 + $0xd0] sm:$0xff]
  %v10507 = vld [vmem:[#allocation3 + $0xd8] sm:$0xff]
  %v10508 = vld [vmem:[#allocation3 + $0xe0] sm:$0xff]
  %v10509 = vld [vmem:[#allocation3 + $0xe8] sm:$0xff]
  %v10510 = vld [vmem:[#allocation3 + $0xf0] sm:$0xff]
  %v10511 = vld [vmem:[#allocation3 + $0xf8] sm:$0xff]
  %v10512 = vld [vmem:[#allocation3 + $0x100] sm:$0xff]
  %v10513 = vld [vmem:[#allocation3 + $0x108] sm:$0xff]
  %v10514 = vld [vmem:[#allocation3 + $0x110] sm:$0xff]
  %v10515 = vld [vmem:[#allocation3 + $0x118] sm:$0xff]
  %v10516 = vld [vmem:[#allocation3 + $0x120] sm:$0xff]
  %v10517 = vld [vmem:[#allocation3 + $0x128] sm:$0xff]
  %v10518 = vld [vmem:[#allocation3 + $0x130] sm:$0x1]
  %v10519 = vld [vmem:[#allocation3 + $0x138] sm:$0x1]
  %v10520 = vlaneseq
  %v10521 = vshrl.u32 %v10520, 7
  %v10522 = vsub.s32 0, %v10521
  %v10523 = vrot.slane %v8908, %v10522
  %v10524 = vlaneseq
  %v10525 = vshrl.u32 %v10524, 7
  %v10526 = vsub.s32 0, %v10525
  %v10527 = vrot.slane %v8909, %v10526
  %v10528 = vmul.f32 %v10486, %v10523
  %v10529 = vmul.f32 %v10487, %v10527
  %v10530 = vmul.f32 %v10488, %v10523
  %v10531 = vmul.f32 %v10489, %v10527
  %v10532 = vmul.f32 %v10490, %v10523
  %v10533 = vmul.f32 %v10491, %v10527
  %v10534 = vmul.f32 %v10492, %v10523
  %v10535 = vmul.f32 %v10493, %v10527
  %v10536 = vmul.f32 %v10494, %v10523
  %v10537 = vmul.f32 %v10495, %v10527
  %v10538 = vmul.f32 %v10496, %v10523
  %v10539 = vmul.f32 %v10497, %v10527
  %v10540 = vmul.f32 %v10498, %v10523
  %v10541 = vmul.f32 %v10499, %v10527
  %v10542 = vmul.f32 %v10500, %v10523
  %v10543 = vmul.f32 %v10501, %v10527
  %v10544 = vmul.f32 %v10502, %v10523
  %v10545 = vmul.f32 %v10503, %v10527
  %v10546 = vmul.f32 %v10504, %v10523
  %v10547 = vmul.f32 %v10505, %v10527
  %v10548 = vmul.f32 %v10506, %v10523
  %v10549 = vmul.f32 %v10507, %v10527
  %v10550 = vmul.f32 %v10508, %v10523
  %v10551 = vmul.f32 %v10509, %v10527
  %v10552 = vmul.f32 %v10510, %v10523
  %v10553 = vmul.f32 %v10511, %v10527
  %v10554 = vmul.f32 %v10512, %v10523
  %v10555 = vmul.f32 %v10513, %v10527
  %v10556 = vmul.f32 %v10514, %v10523
  %v10557 = vmul.f32 %v10515, %v10527
  %v10558 = vmul.f32 %v10516, %v10523
  %v10559 = vmul.f32 %v10517, %v10527
  %v10560 = vmul.f32 %v10518, %v10523
  %v10561 = vmul.f32 %v10519, %v10527
  %v10562 = vmul.f32 %v10528, %v5405
  %v10563 = vmul.f32 %v10529, %v5405
  %v10564 = vmul.f32 %v10530, %v5407
  %v10565 = vmul.f32 %v10531, %v5407
  %v10566 = vmul.f32 %v10532, %v5409
  %v10567 = vmul.f32 %v10533, %v5409
  %v10568 = vmul.f32 %v10534, %v5411
  %v10569 = vmul.f32 %v10535, %v5411
  %v10570 = vmul.f32 %v10536, %v5413
  %v10571 = vmul.f32 %v10537, %v5413
  %v10572 = vmul.f32 %v10538, %v5415
  %v10573 = vmul.f32 %v10539, %v5415
  %v10574 = vmul.f32 %v10540, %v5417
  %v10575 = vmul.f32 %v10541, %v5417
  %v10576 = vmul.f32 %v10542, %v5419
  %v10577 = vmul.f32 %v10543, %v5419
  %v10578 = vmul.f32 %v10544, %v5421
  %v10579 = vmul.f32 %v10545, %v5421
  %v10580 = vmul.f32 %v10546, %v5423
  %v10581 = vmul.f32 %v10547, %v5423
  %v10582 = vmul.f32 %v10548, %v5425
  %v10583 = vmul.f32 %v10549, %v5425
  %v10584 = vmul.f32 %v10550, %v5427
  %v10585 = vmul.f32 %v10551, %v5427
  %v10586 = vmul.f32 %v10552, %v5429
  %v10587 = vmul.f32 %v10553, %v5429
  %v10588 = vmul.f32 %v10554, %v5431
  %v10589 = vmul.f32 %v10555, %v5431
  %v10590 = vmul.f32 %v10556, %v5433
  %v10591 = vmul.f32 %v10557, %v5433
  %v10592 = vmul.f32 %v10558, %v5435
  %v10593 = vmul.f32 %v10559, %v5435
  %v10594 = vmul.f32 %v10560, %v5434
  %v10595 = vmul.f32 %v10561, %v5434
  %v10630 = vrot.slane %v10562, 2
  %v10631 = vrot.slane %v10563, 2
  %v10632 = vrot.slane %v10564, 2
  %v10633 = vsel %vm4134, %v10630, %v10632
  %v10634 = vrot.slane %v10565, 2
  %v10635 = vsel %vm4134, %v10631, %v10634
  %v10636 = vrot.slane %v10566, 2
  %v10637 = vsel %vm4134, %v10632, %v10636
  %v10638 = vrot.slane %v10567, 2
  %v10639 = vsel %vm4134, %v10634, %v10638
  %v10640 = vrot.slane %v10568, 2
  %v10641 = vsel %vm4134, %v10636, %v10640
  %v10642 = vrot.slane %v10569, 2
  %v10643 = vsel %vm4134, %v10638, %v10642
  %v10644 = vrot.slane %v10570, 2
  %v10645 = vsel %vm4134, %v10640, %v10644
  %v10646 = vrot.slane %v10571, 2
  %v10647 = vsel %vm4134, %v10642, %v10646
  %v10648 = vrot.slane %v10572, 2
  %v10649 = vsel %vm4134, %v10644, %v10648
  %v10650 = vrot.slane %v10573, 2
  %v10651 = vsel %vm4134, %v10646, %v10650
  %v10652 = vrot.slane %v10574, 2
  %v10653 = vsel %vm4134, %v10648, %v10652
  %v10654 = vrot.slane %v10575, 2
  %v10655 = vsel %vm4134, %v10650, %v10654
  %v10656 = vrot.slane %v10576, 2
  %v10657 = vsel %vm4134, %v10652, %v10656
  %v10658 = vrot.slane %v10577, 2
  %v10659 = vsel %vm4134, %v10654, %v10658
  %v10660 = vrot.slane %v10578, 2
  %v10661 = vsel %vm4134, %v10656, %v10660
  %v10662 = vrot.slane %v10579, 2
  %v10663 = vsel %vm4134, %v10658, %v10662
  %v10664 = vrot.slane %v10580, 2
  %v10665 = vsel %vm4134, %v10660, %v10664
  %v10666 = vrot.slane %v10581, 2
  %v10667 = vsel %vm4134, %v10662, %v10666
  %v10668 = vrot.slane %v10582, 2
  %v10669 = vsel %vm4134, %v10664, %v10668
  %v10670 = vrot.slane %v10583, 2
  %v10671 = vsel %vm4134, %v10666, %v10670
  %v10672 = vrot.slane %v10584, 2
  %v10673 = vsel %vm4134, %v10668, %v10672
  %v10674 = vrot.slane %v10585, 2
  %v10675 = vsel %vm4134, %v10670, %v10674
  %v10676 = vrot.slane %v10586, 2
  %v10677 = vsel %vm4134, %v10672, %v10676
  %v10678 = vrot.slane %v10587, 2
  %v10679 = vsel %vm4134, %v10674, %v10678
  %v10680 = vrot.slane %v10588, 2
  %v10681 = vsel %vm4134, %v10676, %v10680
  %v10682 = vrot.slane %v10589, 2
  %v10683 = vsel %vm4134, %v10678, %v10682
  %v10684 = vrot.slane %v10590, 2
  %v10685 = vsel %vm4134, %v10680, %v10684
  %v10686 = vrot.slane %v10591, 2
  %v10687 = vsel %vm4134, %v10682, %v10686
  %v10688 = vrot.slane %v10592, 2
  %v10689 = vsel %vm4134, %v10684, %v10688
  %v10690 = vrot.slane %v10593, 2
  %v10691 = vsel %vm4134, %v10686, %v10690
  %v10692 = vrot.slane %v10594, 2
  %v10693 = vsel %vm4134, %v10688, %v10692
  %v10694 = vrot.slane %v10595, 2
  %v10695 = vsel %vm4134, %v10690, %v10694
  %v10730 = vadd.f32 %v10452, %v10630
  %v10731 = vadd.f32 %v10453, %v10631
  %v10732 = vadd.f32 %v10454, %v10633
  %v10733 = vadd.f32 %v10455, %v10635
  %v10734 = vadd.f32 %v10456, %v10637
  %v10735 = vadd.f32 %v10457, %v10639
  %v10736 = vadd.f32 %v10458, %v10641
  %v10737 = vadd.f32 %v10459, %v10643
  %v10738 = vadd.f32 %v10460, %v10645
  %v10739 = vadd.f32 %v10461, %v10647
  %v10740 = vadd.f32 %v10462, %v10649
  %v10741 = vadd.f32 %v10463, %v10651
  %v10742 = vadd.f32 %v10464, %v10653
  %v10743 = vadd.f32 %v10465, %v10655
  %v10744 = vadd.f32 %v10466, %v10657
  %v10745 = vadd.f32 %v10467, %v10659
  %v10746 = vadd.f32 %v10468, %v10661
  %v10747 = vadd.f32 %v10469, %v10663
  %v10748 = vadd.f32 %v10470, %v10665
  %v10749 = vadd.f32 %v10471, %v10667
  %v10750 = vadd.f32 %v10472, %v10669
  %v10751 = vadd.f32 %v10473, %v10671
  %v10752 = vadd.f32 %v10474, %v10673
  %v10753 = vadd.f32 %v10475, %v10675
  %v10754 = vadd.f32 %v10476, %v10677
  %v10755 = vadd.f32 %v10477, %v10679
  %v10756 = vadd.f32 %v10478, %v10681
  %v10757 = vadd.f32 %v10479, %v10683
  %v10758 = vadd.f32 %v10480, %v10685
  %v10759 = vadd.f32 %v10481, %v10687
  %v10760 = vadd.f32 %v10482, %v10689
  %v10761 = vadd.f32 %v10483, %v10691
  %v10762 = vadd.f32 %v10484, %v10693
  %v10763 = vadd.f32 %v10485, %v10695
  %v10764 = vmul.f32 %v10730, 0.5
  %v10765 = vmul.f32 %v10732, 0.5
  %v10766 = vmul.f32 %v10734, 0.5
  %v10767 = vmul.f32 %v10736, 0.5
  %v10768 = vmul.f32 %v10738, 0.5
  %v10769 = vmul.f32 %v10740, 0.5
  %v10770 = vmul.f32 %v10742, 0.5
  %v10771 = vmul.f32 %v10744, 0.5
  %v10772 = vmul.f32 %v10746, 0.5
  %v10773 = vmul.f32 %v10748, 0.5
  %v10774 = vmul.f32 %v10750, 0.5
  %v10775 = vmul.f32 %v10752, 0.5
  %v10776 = vmul.f32 %v10754, 0.5
  %v10777 = vmul.f32 %v10756, 0.5
  %v10778 = vmul.f32 %v10758, 0.5
  %v10779 = vmul.f32 %v10760, 0.5
  %v10780 = vmul.f32 %v10762, 0.5
  %v10781 = vmul.f32 %v10730, 0.70710677
  %v10782 = vmul.f32 %v10732, 0.70710677
  %v10783 = vmul.f32 %v10734, 0.70710677
  %v10784 = vmul.f32 %v10736, 0.70710677
  %v10785 = vmul.f32 %v10738, 0.70710677
  %v10786 = vmul.f32 %v10740, 0.70710677
  %v10787 = vmul.f32 %v10742, 0.70710677
  %v10788 = vmul.f32 %v10744, 0.70710677
  %v10789 = vmul.f32 %v10746, 0.70710677
  %v10790 = vmul.f32 %v10748, 0.70710677
  %v10791 = vmul.f32 %v10750, 0.70710677
  %v10792 = vmul.f32 %v10752, 0.70710677
  %v10793 = vmul.f32 %v10754, 0.70710677
  %v10794 = vmul.f32 %v10756, 0.70710677
  %v10795 = vmul.f32 %v10758, 0.70710677
  %v10796 = vmul.f32 %v10760, 0.70710677
  %v10797 = vmul.f32 %v10762, 0.70710677
  %vm10798 = vcmp.ge.f32.partialorder %v10781, 0.0
  %vm10799 = vcmp.ge.f32.partialorder %v10782, 0.0
  %vm10800 = vcmp.ge.f32.partialorder %v10783, 0.0
  %vm10801 = vcmp.ge.f32.partialorder %v10784, 0.0
  %vm10802 = vcmp.ge.f32.partialorder %v10785, 0.0
  %vm10803 = vcmp.ge.f32.partialorder %v10786, 0.0
  %vm10804 = vcmp.ge.f32.partialorder %v10787, 0.0
  %vm10805 = vcmp.ge.f32.partialorder %v10788, 0.0
  %vm10806 = vcmp.ge.f32.partialorder %v10789, 0.0
  %vm10807 = vcmp.ge.f32.partialorder %v10790, 0.0
  %vm10808 = vcmp.ge.f32.partialorder %v10791, 0.0
  %vm10809 = vcmp.ge.f32.partialorder %v10792, 0.0
  %vm10810 = vcmp.ge.f32.partialorder %v10793, 0.0
  %vm10811 = vcmp.ge.f32.partialorder %v10794, 0.0
  %vm10812 = vcmp.ge.f32.partialorder %v10795, 0.0
  %vm10813 = vcmp.ge.f32.partialorder %v10796, 0.0
  %vm10814 = vcmp.ge.f32.partialorder %v10797, 0.0
  %v10815 = vsel %vm10798, 1.0, -1.0
  %v10816 = vsel %vm10799, 1.0, -1.0
  %v10817 = vsel %vm10800, 1.0, -1.0
  %v10818 = vsel %vm10801, 1.0, -1.0
  %v10819 = vsel %vm10802, 1.0, -1.0
  %v10820 = vsel %vm10803, 1.0, -1.0
  %v10821 = vsel %vm10804, 1.0, -1.0
  %v10822 = vsel %vm10805, 1.0, -1.0
  %v10823 = vsel %vm10806, 1.0, -1.0
  %v10824 = vsel %vm10807, 1.0, -1.0
  %v10825 = vsel %vm10808, 1.0, -1.0
  %v10826 = vsel %vm10809, 1.0, -1.0
  %v10827 = vsel %vm10810, 1.0, -1.0
  %v10828 = vsel %vm10811, 1.0, -1.0
  %v10829 = vsel %vm10812, 1.0, -1.0
  %v10830 = vsel %vm10813, 1.0, -1.0
  %v10831 = vsel %vm10814, 1.0, -1.0
  %v10832 = vand.u32 2147483647, %v10781
  %v10833 = vand.u32 2147483647, %v10782
  %v10834 = vand.u32 2147483647, %v10783
  %v10835 = vand.u32 2147483647, %v10784
  %v10836 = vand.u32 2147483647, %v10785
  %v10837 = vand.u32 2147483647, %v10786
  %v10838 = vand.u32 2147483647, %v10787
  %v10839 = vand.u32 2147483647, %v10788
  %v10840 = vand.u32 2147483647, %v10789
  %v10841 = vand.u32 2147483647, %v10790
  %v10842 = vand.u32 2147483647, %v10791
  %v10843 = vand.u32 2147483647, %v10792
  %v10844 = vand.u32 2147483647, %v10793
  %v10845 = vand.u32 2147483647, %v10794
  %v10846 = vand.u32 2147483647, %v10795
  %v10847 = vand.u32 2147483647, %v10796
  %v10848 = vand.u32 2147483647, %v10797
  %v10849 = vmul.f32 %v10832, 0.3275911
  %v10850 = vmul.f32 %v10833, 0.3275911
  %v10851 = vmul.f32 %v10834, 0.3275911
  %v10852 = vmul.f32 %v10835, 0.3275911
  %v10853 = vmul.f32 %v10836, 0.3275911
  %v10854 = vmul.f32 %v10837, 0.3275911
  %v10855 = vmul.f32 %v10838, 0.3275911
  %v10856 = vmul.f32 %v10839, 0.3275911
  %v10857 = vmul.f32 %v10840, 0.3275911
  %v10858 = vmul.f32 %v10841, 0.3275911
  %v10859 = vmul.f32 %v10842, 0.3275911
  %v10860 = vmul.f32 %v10843, 0.3275911
  %v10861 = vmul.f32 %v10844, 0.3275911
  %v10862 = vmul.f32 %v10845, 0.3275911
  %v10863 = vmul.f32 %v10846, 0.3275911
  %v10864 = vmul.f32 %v10847, 0.3275911
  %v10865 = vmul.f32 %v10848, 0.3275911
  %v10866 = vadd.f32 %v10849, 1.0
  %v10867 = vadd.f32 %v10850, 1.0
  %v10868 = vadd.f32 %v10851, 1.0
  %v10869 = vadd.f32 %v10852, 1.0
  %v10870 = vadd.f32 %v10853, 1.0
  %v10871 = vadd.f32 %v10854, 1.0
  %v10872 = vadd.f32 %v10855, 1.0
  %v10873 = vadd.f32 %v10856, 1.0
  %v10874 = vadd.f32 %v10857, 1.0
  %v10875 = vadd.f32 %v10858, 1.0
  %v10876 = vadd.f32 %v10859, 1.0
  %v10877 = vadd.f32 %v10860, 1.0
  %v10878 = vadd.f32 %v10861, 1.0
  %v10879 = vadd.f32 %v10862, 1.0
  %v10880 = vadd.f32 %v10863, 1.0
  %v10881 = vadd.f32 %v10864, 1.0
  %v10882 = vadd.f32 %v10865, 1.0
  %v10883 = vrcp.pop %v10866
  %v10884 = vmul.f32 1.0, %v10883
  %v10885 = vrcp.pop %v10867
  %v10886 = vmul.f32 1.0, %v10885
  %v10887 = vrcp.pop %v10868
  %v10888 = vmul.f32 1.0, %v10887
  %v10889 = vrcp.pop %v10869
  %v10890 = vmul.f32 1.0, %v10889
  %v10891 = vrcp.pop %v10870
  %v10892 = vmul.f32 1.0, %v10891
  %v10893 = vrcp.pop %v10871
  %v10894 = vmul.f32 1.0, %v10893
  %v10895 = vrcp.pop %v10872
  %v10896 = vmul.f32 1.0, %v10895
  %v10897 = vrcp.pop %v10873
  %v10898 = vmul.f32 1.0, %v10897
  %v10899 = vrcp.pop %v10874
  %v10900 = vmul.f32 1.0, %v10899
  %v10901 = vrcp.pop %v10875
  %v10902 = vmul.f32 1.0, %v10901
  %v10903 = vrcp.pop %v10876
  %v10904 = vmul.f32 1.0, %v10903
  %v10905 = vrcp.pop %v10877
  %v10906 = vmul.f32 1.0, %v10905
  %v10907 = vrcp.pop %v10878
  %v10908 = vmul.f32 1.0, %v10907
  %v10909 = vrcp.pop %v10879
  %v10910 = vmul.f32 1.0, %v10909
  %v10911 = vrcp.pop %v10880
  %v10912 = vmul.f32 1.0, %v10911
  %v10913 = vrcp.pop %v10881
  %v10914 = vmul.f32 1.0, %v10913
  %v10915 = vrcp.pop %v10882
  %v10916 = vmul.f32 1.0, %v10915
  %v10917 = vmul.f32 %v10884, 1.0614054
  %v10918 = vmul.f32 %v10886, 1.0614054
  %v10919 = vmul.f32 %v10888, 1.0614054
  %v10920 = vmul.f32 %v10890, 1.0614054
  %v10921 = vmul.f32 %v10892, 1.0614054
  %v10922 = vmul.f32 %v10894, 1.0614054
  %v10923 = vmul.f32 %v10896, 1.0614054
  %v10924 = vmul.f32 %v10898, 1.0614054
  %v10925 = vmul.f32 %v10900, 1.0614054
  %v10926 = vmul.f32 %v10902, 1.0614054
  %v10927 = vmul.f32 %v10904, 1.0614054
  %v10928 = vmul.f32 %v10906, 1.0614054
  %v10929 = vmul.f32 %v10908, 1.0614054
  %v10930 = vmul.f32 %v10910, 1.0614054
  %v10931 = vmul.f32 %v10912, 1.0614054
  %v10932 = vmul.f32 %v10914, 1.0614054
  %v10933 = vmul.f32 %v10916, 1.0614054
  %v10934 = vadd.f32 %v10917, -1.4531521
  %v10935 = vadd.f32 %v10918, -1.4531521
  %v10936 = vadd.f32 %v10919, -1.4531521
  %v10937 = vadd.f32 %v10920, -1.4531521
  %v10938 = vadd.f32 %v10921, -1.4531521
  %v10939 = vadd.f32 %v10922, -1.4531521
  %v10940 = vadd.f32 %v10923, -1.4531521
  %v10941 = vadd.f32 %v10924, -1.4531521
  %v10942 = vadd.f32 %v10925, -1.4531521
  %v10943 = vadd.f32 %v10926, -1.4531521
  %v10944 = vadd.f32 %v10927, -1.4531521
  %v10945 = vadd.f32 %v10928, -1.4531521
  %v10946 = vadd.f32 %v10929, -1.4531521
  %v10947 = vadd.f32 %v10930, -1.4531521
  %v10948 = vadd.f32 %v10931, -1.4531521
  %v10949 = vadd.f32 %v10932, -1.4531521
  %v10950 = vadd.f32 %v10933, -1.4531521
  %v10951 = vmul.f32 %v10934, %v10884
  %v10952 = vmul.f32 %v10935, %v10886
  %v10953 = vmul.f32 %v10936, %v10888
  %v10954 = vmul.f32 %v10937, %v10890
  %v10955 = vmul.f32 %v10938, %v10892
  %v10956 = vmul.f32 %v10939, %v10894
  %v10957 = vmul.f32 %v10940, %v10896
  %v10958 = vmul.f32 %v10941, %v10898
  %v10959 = vmul.f32 %v10942, %v10900
  %v10960 = vmul.f32 %v10943, %v10902
  %v10961 = vmul.f32 %v10944, %v10904
  %v10962 = vmul.f32 %v10945, %v10906
  %v10963 = vmul.f32 %v10946, %v10908
  %v10964 = vmul.f32 %v10947, %v10910
  %v10965 = vmul.f32 %v10948, %v10912
  %v10966 = vmul.f32 %v10949, %v10914
  %v10967 = vmul.f32 %v10950, %v10916
  %v10968 = vadd.f32 %v10951, 1.4214138
  %v10969 = vadd.f32 %v10952, 1.4214138
  %v10970 = vadd.f32 %v10953, 1.4214138
  %v10971 = vadd.f32 %v10954, 1.4214138
  %v10972 = vadd.f32 %v10955, 1.4214138
  %v10973 = vadd.f32 %v10956, 1.4214138
  %v10974 = vadd.f32 %v10957, 1.4214138
  %v10975 = vadd.f32 %v10958, 1.4214138
  %v10976 = vadd.f32 %v10959, 1.4214138
  %v10977 = vadd.f32 %v10960, 1.4214138
  %v10978 = vadd.f32 %v10961, 1.4214138
  %v10979 = vadd.f32 %v10962, 1.4214138
  %v10980 = vadd.f32 %v10963, 1.4214138
  %v10981 = vadd.f32 %v10964, 1.4214138
  %v10982 = vadd.f32 %v10965, 1.4214138
  %v10983 = vadd.f32 %v10966, 1.4214138
  %v10984 = vadd.f32 %v10967, 1.4214138
  %v10985 = vmul.f32 %v10968, %v10884
  %v10986 = vmul.f32 %v10969, %v10886
  %v10987 = vmul.f32 %v10970, %v10888
  %v10988 = vmul.f32 %v10971, %v10890
  %v10989 = vmul.f32 %v10972, %v10892
  %v10990 = vmul.f32 %v10973, %v10894
  %v10991 = vmul.f32 %v10974, %v10896
  %v10992 = vmul.f32 %v10975, %v10898
  %v10993 = vmul.f32 %v10976, %v10900
  %v10994 = vmul.f32 %v10977, %v10902
  %v10995 = vmul.f32 %v10978, %v10904
  %v10996 = vmul.f32 %v10979, %v10906
  %v10997 = vmul.f32 %v10980, %v10908
  %v10998 = vmul.f32 %v10981, %v10910
  %v10999 = vmul.f32 %v10982, %v10912
  %v11000 = vmul.f32 %v10983, %v10914
  %v11001 = vmul.f32 %v10984, %v10916
  %v11002 = vadd.f32 %v10985, -0.28449672
  %v11003 = vadd.f32 %v10986, -0.28449672
  %v11004 = vadd.f32 %v10987, -0.28449672
  %v11005 = vadd.f32 %v10988, -0.28449672
  %v11006 = vadd.f32 %v10989, -0.28449672
  %v11007 = vadd.f32 %v10990, -0.28449672
  %v11008 = vadd.f32 %v10991, -0.28449672
  %v11009 = vadd.f32 %v10992, -0.28449672
  %v11010 = vadd.f32 %v10993, -0.28449672
  %v11011 = vadd.f32 %v10994, -0.28449672
  %v11012 = vadd.f32 %v10995, -0.28449672
  %v11013 = vadd.f32 %v10996, -0.28449672
  %v11014 = vadd.f32 %v10997, -0.28449672
  %v11015 = vadd.f32 %v10998, -0.28449672
  %v11016 = vadd.f32 %v10999, -0.28449672
  %v11017 = vadd.f32 %v11000, -0.28449672
  %v11018 = vadd.f32 %v11001, -0.28449672
  %v11019 = vmul.f32 %v11002, %v10884
  %v11020 = vmul.f32 %v11003, %v10886
  %v11021 = vmul.f32 %v11004, %v10888
  %v11022 = vmul.f32 %v11005, %v10890
  %v11023 = vmul.f32 %v11006, %v10892
  %v11024 = vmul.f32 %v11007, %v10894
  %v11025 = vmul.f32 %v11008, %v10896
  %v11026 = vmul.f32 %v11009, %v10898
  %v11027 = vmul.f32 %v11010, %v10900
  %v11028 = vmul.f32 %v11011, %v10902
  %v11029 = vmul.f32 %v11012, %v10904
  %v11030 = vmul.f32 %v11013, %v10906
  %v11031 = vmul.f32 %v11014, %v10908
  %v11032 = vmul.f32 %v11015, %v10910
  %v11033 = vmul.f32 %v11016, %v10912
  %v11034 = vmul.f32 %v11017, %v10914
  %v11035 = vmul.f32 %v11018, %v10916
  %v11036 = vadd.f32 %v11019, 0.2548296
  %v11037 = vadd.f32 %v11020, 0.2548296
  %v11038 = vadd.f32 %v11021, 0.2548296
  %v11039 = vadd.f32 %v11022, 0.2548296
  %v11040 = vadd.f32 %v11023, 0.2548296
  %v11041 = vadd.f32 %v11024, 0.2548296
  %v11042 = vadd.f32 %v11025, 0.2548296
  %v11043 = vadd.f32 %v11026, 0.2548296
  %v11044 = vadd.f32 %v11027, 0.2548296
  %v11045 = vadd.f32 %v11028, 0.2548296
  %v11046 = vadd.f32 %v11029, 0.2548296
  %v11047 = vadd.f32 %v11030, 0.2548296
  %v11048 = vadd.f32 %v11031, 0.2548296
  %v11049 = vadd.f32 %v11032, 0.2548296
  %v11050 = vadd.f32 %v11033, 0.2548296
  %v11051 = vadd.f32 %v11034, 0.2548296
  %v11052 = vadd.f32 %v11035, 0.2548296
  %v11053 = vmul.f32 %v11036, %v10884
  %v11054 = vmul.f32 %v11037, %v10886
  %v11055 = vmul.f32 %v11038, %v10888
  %v11056 = vmul.f32 %v11039, %v10890
  %v11057 = vmul.f32 %v11040, %v10892
  %v11058 = vmul.f32 %v11041, %v10894
  %v11059 = vmul.f32 %v11042, %v10896
  %v11060 = vmul.f32 %v11043, %v10898
  %v11061 = vmul.f32 %v11044, %v10900
  %v11062 = vmul.f32 %v11045, %v10902
  %v11063 = vmul.f32 %v11046, %v10904
  %v11064 = vmul.f32 %v11047, %v10906
  %v11065 = vmul.f32 %v11048, %v10908
  %v11066 = vmul.f32 %v11049, %v10910
  %v11067 = vmul.f32 %v11050, %v10912
  %v11068 = vmul.f32 %v11051, %v10914
  %v11069 = vmul.f32 %v11052, %v10916
  %v11070 = vsub.f32 0.0, %v10832
  %v11071 = vsub.f32 0.0, %v10833
  %v11072 = vsub.f32 0.0, %v10834
  %v11073 = vsub.f32 0.0, %v10835
  %v11074 = vsub.f32 0.0, %v10836
  %v11075 = vsub.f32 0.0, %v10837
  %v11076 = vsub.f32 0.0, %v10838
  %v11077 = vsub.f32 0.0, %v10839
  %v11078 = vsub.f32 0.0, %v10840
  %v11079 = vsub.f32 0.0, %v10841
  %v11080 = vsub.f32 0.0, %v10842
  %v11081 = vsub.f32 0.0, %v10843
  %v11082 = vsub.f32 0.0, %v10844
  %v11083 = vsub.f32 0.0, %v10845
  %v11084 = vsub.f32 0.0, %v10846
  %v11085 = vsub.f32 0.0, %v10847
  %v11086 = vsub.f32 0.0, %v10848
  %v11087 = vmul.f32 %v11070, %v10832
  %v11088 = vmul.f32 %v11071, %v10833
  %v11089 = vmul.f32 %v11072, %v10834
  %v11090 = vmul.f32 %v11073, %v10835
  %v11091 = vmul.f32 %v11074, %v10836
  %v11092 = vmul.f32 %v11075, %v10837
  %v11093 = vmul.f32 %v11076, %v10838
  %v11094 = vmul.f32 %v11077, %v10839
  %v11095 = vmul.f32 %v11078, %v10840
  %v11096 = vmul.f32 %v11079, %v10841
  %v11097 = vmul.f32 %v11080, %v10842
  %v11098 = vmul.f32 %v11081, %v10843
  %v11099 = vmul.f32 %v11082, %v10844
  %v11100 = vmul.f32 %v11083, %v10845
  %v11101 = vmul.f32 %v11084, %v10846
  %v11102 = vmul.f32 %v11085, %v10847
  %v11103 = vmul.f32 %v11086, %v10848
  %v11104 = vmul.f32 %v11087, 1.442695
  %v11105 = vpow.pop %v11104
  %v11106 = vmul.f32 %v11088, 1.442695
  %v11107 = vpow.pop %v11106
  %v11108 = vmul.f32 %v11089, 1.442695
  %v11109 = vpow.pop %v11108
  %v11110 = vmul.f32 %v11090, 1.442695
  %v11111 = vpow.pop %v11110
  %v11112 = vmul.f32 %v11091, 1.442695
  %v11113 = vpow.pop %v11112
  %v11114 = vmul.f32 %v11092, 1.442695
  %v11115 = vpow.pop %v11114
  %v11116 = vmul.f32 %v11093, 1.442695
  %v11117 = vpow.pop %v11116
  %v11118 = vmul.f32 %v11094, 1.442695
  %v11119 = vpow.pop %v11118
  %v11120 = vmul.f32 %v11095, 1.442695
  %v11121 = vpow.pop %v11120
  %v11122 = vmul.f32 %v11096, 1.442695
  %v11123 = vpow.pop %v11122
  %v11124 = vmul.f32 %v11097, 1.442695
  %v11125 = vpow.pop %v11124
  %v11126 = vmul.f32 %v11098, 1.442695
  %v11127 = vpow.pop %v11126
  %v11128 = vmul.f32 %v11099, 1.442695
  %v11129 = vpow.pop %v11128
  %v11130 = vmul.f32 %v11100, 1.442695
  %v11131 = vpow.pop %v11130
  %v11132 = vmul.f32 %v11101, 1.442695
  %v11133 = vpow.pop %v11132
  %v11134 = vmul.f32 %v11102, 1.442695
  %v11135 = vpow.pop %v11134
  %v11136 = vmul.f32 %v11103, 1.442695
  %v11137 = vpow.pop %v11136
  %v11138 = vmul.f32 %v11053, %v11105
  %v11139 = vmul.f32 %v11054, %v11107
  %v11140 = vmul.f32 %v11055, %v11109
  %v11141 = vmul.f32 %v11056, %v11111
  %v11142 = vmul.f32 %v11057, %v11113
  %v11143 = vmul.f32 %v11058, %v11115
  %v11144 = vmul.f32 %v11059, %v11117
  %v11145 = vmul.f32 %v11060, %v11119
  %v11146 = vmul.f32 %v11061, %v11121
  %v11147 = vmul.f32 %v11062, %v11123
  %v11148 = vmul.f32 %v11063, %v11125
  %v11149 = vmul.f32 %v11064, %v11127
  %v11150 = vmul.f32 %v11065, %v11129
  %v11151 = vmul.f32 %v11066, %v11131
  %v11152 = vmul.f32 %v11067, %v11133
  %v11153 = vmul.f32 %v11068, %v11135
  %v11154 = vmul.f32 %v11069, %v11137
  %v11155 = vsub.f32 1.0, %v11138
  %v11156 = vsub.f32 1.0, %v11139
  %v11157 = vsub.f32 1.0, %v11140
  %v11158 = vsub.f32 1.0, %v11141
  %v11159 = vsub.f32 1.0, %v11142
  %v11160 = vsub.f32 1.0, %v11143
  %v11161 = vsub.f32 1.0, %v11144
  %v11162 = vsub.f32 1.0, %v11145
  %v11163 = vsub.f32 1.0, %v11146
  %v11164 = vsub.f32 1.0, %v11147
  %v11165 = vsub.f32 1.0, %v11148
  %v11166 = vsub.f32 1.0, %v11149
  %v11167 = vsub.f32 1.0, %v11150
  %v11168 = vsub.f32 1.0, %v11151
  %v11169 = vsub.f32 1.0, %v11152
  %v11170 = vsub.f32 1.0, %v11153
  %v11171 = vsub.f32 1.0, %v11154
  %v11172 = vmul.f32 %v10815, %v11155
  %v11173 = vmul.f32 %v10816, %v11156
  %v11174 = vmul.f32 %v10817, %v11157
  %v11175 = vmul.f32 %v10818, %v11158
  %v11176 = vmul.f32 %v10819, %v11159
  %v11177 = vmul.f32 %v10820, %v11160
  %v11178 = vmul.f32 %v10821, %v11161
  %v11179 = vmul.f32 %v10822, %v11162
  %v11180 = vmul.f32 %v10823, %v11163
  %v11181 = vmul.f32 %v10824, %v11164
  %v11182 = vmul.f32 %v10825, %v11165
  %v11183 = vmul.f32 %v10826, %v11166
  %v11184 = vmul.f32 %v10827, %v11167
  %v11185 = vmul.f32 %v10828, %v11168
  %v11186 = vmul.f32 %v10829, %v11169
  %v11187 = vmul.f32 %v10830, %v11170
  %v11188 = vmul.f32 %v10831, %v11171
  %v11189 = vadd.f32 %v11172, 1.0
  %v11190 = vadd.f32 %v11173, 1.0
  %v11191 = vadd.f32 %v11174, 1.0
  %v11192 = vadd.f32 %v11175, 1.0
  %v11193 = vadd.f32 %v11176, 1.0
  %v11194 = vadd.f32 %v11177, 1.0
  %v11195 = vadd.f32 %v11178, 1.0
  %v11196 = vadd.f32 %v11179, 1.0
  %v11197 = vadd.f32 %v11180, 1.0
  %v11198 = vadd.f32 %v11181, 1.0
  %v11199 = vadd.f32 %v11182, 1.0
  %v11200 = vadd.f32 %v11183, 1.0
  %v11201 = vadd.f32 %v11184, 1.0
  %v11202 = vadd.f32 %v11185, 1.0
  %v11203 = vadd.f32 %v11186, 1.0
  %v11204 = vadd.f32 %v11187, 1.0
  %v11205 = vadd.f32 %v11188, 1.0
  %v11206 = vmul.f32 %v10764, %v11189
  %v11207 = vmul.f32 %v10765, %v11190
  %v11208 = vmul.f32 %v10766, %v11191
  %v11209 = vmul.f32 %v10767, %v11192
  %v11210 = vmul.f32 %v10768, %v11193
  %v11211 = vmul.f32 %v10769, %v11194
  %v11212 = vmul.f32 %v10770, %v11195
  %v11213 = vmul.f32 %v10771, %v11196
  %v11214 = vmul.f32 %v10772, %v11197
  %v11215 = vmul.f32 %v10773, %v11198
  %v11216 = vmul.f32 %v10774, %v11199
  %v11217 = vmul.f32 %v10775, %v11200
  %v11218 = vmul.f32 %v10776, %v11201
  %v11219 = vmul.f32 %v10777, %v11202
  %v11220 = vmul.f32 %v10778, %v11203
  %v11221 = vmul.f32 %v10779, %v11204
  %v11222 = vmul.f32 %v10780, %v11205
  %v11223 = vmul.f32 %v11206, %v10731
  %v11224 = vmul.f32 %v11207, %v10733
  %v11225 = vmul.f32 %v11208, %v10735
  %v11226 = vmul.f32 %v11209, %v10737
  %v11227 = vmul.f32 %v11210, %v10739
  %v11228 = vmul.f32 %v11211, %v10741
  %v11229 = vmul.f32 %v11212, %v10743
  %v11230 = vmul.f32 %v11213, %v10745
  %v11231 = vmul.f32 %v11214, %v10747
  %v11232 = vmul.f32 %v11215, %v10749
  %v11233 = vmul.f32 %v11216, %v10751
  %v11234 = vmul.f32 %v11217, %v10753
  %v11235 = vmul.f32 %v11218, %v10755
  %v11236 = vmul.f32 %v11219, %v10757
  %v11237 = vmul.f32 %v11220, %v10759
  %v11238 = vmul.f32 %v11221, %v10761
  %v11239 = vmul.f32 %v11222, %v10763
  %s11240 = scalar_lea.vmem %s9, 128
  %v11241 = vld [vmem:[%s11240] sm:$0xff]
  %v11242 = vld [vmem:[%s11240 + $0x8] sm:$0xff]
  %v11243 = vld [vmem:[%s11240 + $0x10] sm:$0xff]
  %v11244 = vld [vmem:[%s11240 + $0x18] sm:$0xff]
  %v11245 = vld [vmem:[%s11240 + $0x20] sm:$0xff]
  %v11246 = vld [vmem:[%s11240 + $0x28] sm:$0xff]
  %v11247 = vld [vmem:[%s11240 + $0x30] sm:$0xff]
  %v11248 = vld [vmem:[%s11240 + $0x38] sm:$0xff]
  %v11249 = vld [vmem:[%s11240 + $0x40] sm:$0xff]
  %v11250 = vld [vmem:[%s11240 + $0x48] sm:$0xff]
  %v11251 = vld [vmem:[%s11240 + $0x50] sm:$0xff]
  %v11252 = vld [vmem:[%s11240 + $0x58] sm:$0xff]
  %v11253 = vld [vmem:[%s11240 + $0x60] sm:$0xff]
  %v11254 = vld [vmem:[%s11240 + $0x68] sm:$0xff]
  %v11255 = vld [vmem:[%s11240 + $0x70] sm:$0xff]
  %v11256 = vld [vmem:[%s11240 + $0x78] sm:$0xff]
  %v11274 = vrot.slane %v11223, 7
  %v11275 = vrot.slane %v11224, 7
  %v11276 = vsel %vm4017, %v11274, %v11275
  %v11277 = vrot.slane %v11225, 7
  %v11278 = vsel %vm4017, %v11275, %v11277
  %v11279 = vrot.slane %v11226, 7
  %v11280 = vsel %vm4017, %v11277, %v11279
  %v11281 = vrot.slane %v11227, 7
  %v11282 = vsel %vm4017, %v11279, %v11281
  %v11283 = vrot.slane %v11228, 7
  %v11284 = vsel %vm4017, %v11281, %v11283
  %v11285 = vrot.slane %v11229, 7
  %v11286 = vsel %vm4017, %v11283, %v11285
  %v11287 = vrot.slane %v11230, 7
  %v11288 = vsel %vm4017, %v11285, %v11287
  %v11289 = vrot.slane %v11231, 7
  %v11290 = vsel %vm4017, %v11287, %v11289
  %v11291 = vrot.slane %v11232, 7
  %v11292 = vsel %vm4017, %v11289, %v11291
  %v11293 = vrot.slane %v11233, 7
  %v11294 = vsel %vm4017, %v11291, %v11293
  %v11295 = vrot.slane %v11234, 7
  %v11296 = vsel %vm4017, %v11293, %v11295
  %v11297 = vrot.slane %v11235, 7
  %v11298 = vsel %vm4017, %v11295, %v11297
  %v11299 = vrot.slane %v11236, 7
  %v11300 = vsel %vm4017, %v11297, %v11299
  %v11301 = vrot.slane %v11237, 7
  %v11302 = vsel %vm4017, %v11299, %v11301
  %v11303 = vrot.slane %v11238, 7
  %v11304 = vsel %vm4017, %v11301, %v11303
  %v11305 = vrot.slane %v11239, 7
  %v11306 = vsel %vm4017, %v11303, %v11305
  %11323 = vmatprep.subr.mxu0 0.0
  %11324 = vmatpush1.msra.mxu0 %v11241
  %11325 = vmatprep.subr.mxu0 0.0
  %11326 = vmatpush1.msra.mxu0 %v11242
  %11327 = vmatprep.subr.mxu0 0.0
  %11328 = vmatpush1.msra.mxu0 %v11243
  %11329 = vmatprep.subr.mxu0 0.0
  %11330 = vmatpush1.msra.mxu0 %v11244
  %11331 = vmatprep.subr.mxu0 0.0
  %11332 = vmatpush1.msra.mxu0 %v11245
  %11333 = vmatprep.subr.mxu0 0.0
  %11334 = vmatpush1.msra.mxu0 %v11246
  %11335 = vmatprep.subr.mxu0 0.0
  %11336 = vmatpush1.msra.mxu0 %v11247
  %11337 = vmatprep.subr.mxu0 0.0
  %11338 = vmatpush1.msra.mxu0 %v11248
  %11339 = vmatprep.subr.mxu0 0.0
  %11340 = vmatpush1.msra.mxu0 %v11249
  %11341 = vmatprep.subr.mxu0 0.0
  %11342 = vmatpush1.msra.mxu0 %v11250
  %11343 = vmatprep.subr.mxu0 0.0
  %11344 = vmatpush1.msra.mxu0 %v11251
  %11345 = vmatprep.subr.mxu0 0.0
  %11346 = vmatpush1.msra.mxu0 %v11252
  %11347 = vmatprep.subr.mxu0 0.0
  %11348 = vmatpush1.msra.mxu0 %v11253
  %11349 = vmatprep.subr.mxu0 0.0
  %11350 = vmatpush1.msra.mxu0 %v11254
  %11351 = vmatprep.subr.mxu0 0.0
  %11352 = vmatpush1.msra.mxu0 %v11255
  %11353 = vmatprep.subr.mxu0 0.0
  %11354 = vmatpush1.msra.mxu0 %v11256
  %11355 = vmatprep.subr.mxu0 0.0
  %11356 = vmatpush1.msra.mxu0 0.0
  %11357 = vmatprep.subr.mxu0 0.0
  %11358 = vmatpush1.msra.mxu0 0.0
  %11359 = vmatprep.subr.mxu0 0.0
  %11360 = vmatpush1.msra.mxu0 0.0
  %11361 = vmatprep.subr.mxu0 0.0
  %11362 = vmatpush1.msra.mxu0 0.0
  %11363 = vmatprep.subr.mxu0 0.0
  %11364 = vmatpush1.msra.mxu0 0.0
  %11365 = vmatprep.subr.mxu0 0.0
  %11366 = vmatpush1.msra.mxu0 0.0
  %11367 = vmatprep.subr.mxu0 0.0
  %11368 = vmatpush1.msra.mxu0 0.0
  %11369 = vmatprep.subr.mxu0 0.0
  %11370 = vmatpush1.msra.mxu0 0.0
  %11371 = vmatprep.subr.mxu0 0.0
  %11372 = vmatpush1.msra.mxu0 0.0
  %11373 = vmatprep.subr.mxu0 0.0
  %11374 = vmatpush1.msra.mxu0 0.0
  %11375 = vmatprep.subr.mxu0 0.0
  %11376 = vmatpush1.msra.mxu0 0.0
  %11377 = vmatprep.subr.mxu0 0.0
  %11378 = vmatpush1.msra.mxu0 0.0
  %11379 = vmatprep.subr.mxu0 0.0
  %11380 = vmatpush1.msra.mxu0 0.0
  %11381 = vmatprep.subr.mxu0 0.0
  %11382 = vmatpush1.msra.mxu0 0.0
  %11383 = vmatprep.subr.mxu0 0.0
  %11384 = vmatpush1.msra.mxu0 0.0
  %11385 = vmatprep.subr.mxu0 0.0
  %11386 = vmatpush1.msra.mxu0 0.0
  %11387 = vmatprep.mubr.f32.mxu0 0.0
  %11388 = vmatmul.mubr.f32.gmra.mrb[0].mxu0 %v11276
  %v11389 = vpop.f32.mrb[0].mxu0
  %v11390 = vadd.f32 0.0, %v11389
  %v11391 = vpop.f32.mrb[0].mxu0
  %11392 = vmatprep.mubr.f32.mxu0 0.0
  %11393 = vmatmul.mubr.f32.gmra.mrb[0].mxu0 %v11278
  %v11394 = vpop.f32.mrb[0].mxu0
  %v11395 = vadd.f32 0.0, %v11394
  %v11396 = vpop.f32.mrb[0].mxu0
  %11397 = vmatprep.mubr.f32.mxu0 0.0
  %11398 = vmatmul.mubr.f32.gmra.mrb[0].mxu0 %v11280
  %v11399 = vpop.f32.mrb[0].mxu0
  %v11400 = vadd.f32 0.0, %v11399
  %v11401 = vpop.f32.mrb[0].mxu0
  %11402 = vmatprep.mubr.f32.mxu0 0.0
  %11403 = vmatmul.mubr.f32.gmra.mrb[0].mxu0 %v11282
  %v11404 = vpop.f32.mrb[0].mxu0
  %v11405 = vadd.f32 0.0, %v11404
  %v11406 = vpop.f32.mrb[0].mxu0
  %11407 = vmatprep.mubr.f32.mxu0 0.0
  %11408 = vmatmul.mubr.f32.gmra.mrb[0].mxu0 %v11284
  %v11409 = vpop.f32.mrb[0].mxu0
  %v11410 = vadd.f32 0.0, %v11409
  %v11411 = vpop.f32.mrb[0].mxu0
  %11412 = vmatprep.mubr.f32.mxu0 0.0
  %11413 = vmatmul.mubr.f32.gmra.mrb[0].mxu0 %v11286
  %v11414 = vpop.f32.mrb[0].mxu0
  %v11415 = vadd.f32 0.0, %v11414
  %v11416 = vpop.f32.mrb[0].mxu0
  %11417 = vmatprep.mubr.f32.mxu0 0.0
  %11418 = vmatmul.mubr.f32.gmra.mrb[0].mxu0 %v11288
  %v11419 = vpop.f32.mrb[0].mxu0
  %v11420 = vadd.f32 0.0, %v11419
  %v11421 = vpop.f32.mrb[0].mxu0
  %11422 = vmatprep.mubr.f32.mxu0 0.0
  %11423 = vmatmul.mubr.f32.gmra.mrb[0].mxu0 %v11290
  %v11424 = vpop.f32.mrb[0].mxu0
  %v11425 = vadd.f32 0.0, %v11424
  %v11426 = vpop.f32.mrb[0].mxu0
  %11427 = vmatprep.mubr.f32.mxu0 0.0
  %11428 = vmatmul.mubr.f32.gmra.mrb[0].mxu0 %v11292
  %v11429 = vpop.f32.mrb[0].mxu0
  %v11430 = vadd.f32 0.0, %v11429
  %v11431 = vpop.f32.mrb[0].mxu0
  %11432 = vmatprep.mubr.f32.mxu0 0.0
  %11433 = vmatmul.mubr.f32.gmra.mrb[0].mxu0 %v11294
  %v11434 = vpop.f32.mrb[0].mxu0
  %v11435 = vadd.f32 0.0, %v11434
  %v11436 = vpop.f32.mrb[0].mxu0
  %11437 = vmatprep.mubr.f32.mxu0 0.0
  %11438 = vmatmul.mubr.f32.gmra.mrb[0].mxu0 %v11296
  %v11439 = vpop.f32.mrb[0].mxu0
  %v11440 = vadd.f32 0.0, %v11439
  %v11441 = vpop.f32.mrb[0].mxu0
  %11442 = vmatprep.mubr.f32.mxu0 0.0
  %11443 = vmatmul.mubr.f32.gmra.mrb[0].mxu0 %v11298
  %v11444 = vpop.f32.mrb[0].mxu0
  %v11445 = vadd.f32 0.0, %v11444
  %v11446 = vpop.f32.mrb[0].mxu0
  %11447 = vmatprep.mubr.f32.mxu0 0.0
  %11448 = vmatmul.mubr.f32.gmra.mrb[0].mxu0 %v11300
  %v11449 = vpop.f32.mrb[0].mxu0
  %v11450 = vadd.f32 0.0, %v11449
  %v11451 = vpop.f32.mrb[0].mxu0
  %11452 = vmatprep.mubr.f32.mxu0 0.0
  %11453 = vmatmul.mubr.f32.gmra.mrb[0].mxu0 %v11302
  %v11454 = vpop.f32.mrb[0].mxu0
  %v11455 = vadd.f32 0.0, %v11454
  %v11456 = vpop.f32.mrb[0].mxu0
  %11457 = vmatprep.mubr.f32.mxu0 0.0
  %11458 = vmatmul.mubr.f32.gmra.mrb[0].mxu0 %v11304
  %v11459 = vpop.f32.mrb[0].mxu0
  %v11460 = vadd.f32 0.0, %v11459
  %v11461 = vpop.f32.mrb[0].mxu0
  %11462 = vmatprep.mubr.f32.mxu0 0.0
  %11463 = vmatmul.mubr.f32.gmra.mrb[0].mxu0 %v11306
  %v11464 = vpop.f32.mrb[0].mxu0
  %v11465 = vadd.f32 0.0, %v11464
  %v11466 = vpop.f32.mrb[0].mxu0
  %11467 = vdwg.mxu0
  %v11468 = vadd.f32 %v8423, %v11390
  %v11469 = vadd.f32 %v8424, %v11395
  %v11470 = vadd.f32 %v8425, %v11400
  %v11471 = vadd.f32 %v8426, %v11405
  %v11472 = vadd.f32 %v8427, %v11410
  %v11473 = vadd.f32 %v8428, %v11415
  %v11474 = vadd.f32 %v8429, %v11420
  %v11475 = vadd.f32 %v8430, %v11425
  %v11476 = vadd.f32 %v8431, %v11430
  %v11477 = vadd.f32 %v8432, %v11435
  %v11478 = vadd.f32 %v8433, %v11440
  %v11479 = vadd.f32 %v8434, %v11445
  %v11480 = vadd.f32 %v8435, %v11450
  %v11481 = vadd.f32 %v8436, %v11455
  %v11482 = vadd.f32 %v8437, %v11460
  %v11483 = vadd.f32 %v8438, %v11465
  %11484 = vxpose.xlu0.b32.start [1/16] %v11468, 128
  %11485 = vxpose.xlu0.b32.cont [2/16] %v11469, 128
  %11486 = vxpose.xlu0.b32.cont [3/16] %v11470, 128
  %11487 = vxpose.xlu0.b32.cont [4/16] %v11471, 128
  %11488 = vxpose.xlu0.b32.cont [5/16] %v11472, 128
  %11489 = vxpose.xlu0.b32.cont [6/16] %v11473, 128
  %11490 = vxpose.xlu0.b32.cont [7/16] %v11474, 128
  %11491 = vxpose.xlu0.b32.cont [8/16] %v11475, 128
  %11492 = vxpose.xlu0.b32.cont [9/16] 0.0, 128
  %11493 = vxpose.xlu0.b32.cont [10/16] 0.0, 128
  %11494 = vxpose.xlu0.b32.cont [11/16] 0.0, 128
  %11495 = vxpose.xlu0.b32.cont [12/16] 0.0, 128
  %11496 = vxpose.xlu0.b32.cont [13/16] 0.0, 128
  %11497 = vxpose.xlu0.b32.cont [14/16] 0.0, 128
  %11498 = vxpose.xlu0.b32.cont [15/16] 0.0, 128
  %11499 = vxpose.xlu0.b32.end [16/16] 0.0, 128
  %v11500 = vpop.trf.xlu0
  %v11501 = vpop.trf.xlu0
  %v11502 = vpop.trf.xlu0
  %v11503 = vpop.trf.xlu0
  %v11504 = vpop.trf.xlu0
  %v11505 = vpop.trf.xlu0
  %v11506 = vpop.trf.xlu0
  %v11507 = vpop.trf.xlu0
  %v11508 = vpop.trf.xlu0
  %v11509 = vpop.trf.xlu0
  %v11510 = vpop.trf.xlu0
  %v11511 = vpop.trf.xlu0
  %v11512 = vpop.trf.xlu0
  %v11513 = vpop.trf.xlu0
  %v11514 = vpop.trf.xlu0
  %v11515 = vpop.trf.xlu0
  %v11517 = vsel %vm95, %v11500, 0
  %v11520 = vsel %vm95, %v11501, 0
  %v11523 = vsel %vm95, %v11502, 0
  %v11526 = vsel %vm95, %v11503, 0
  %11528 = vmatprep.subr.mxu0 0.0
  %11529 = vmatpush1.msra.mxu0 %v54
  %11530 = vmatprep.subr.mxu0 0.0
  %11531 = vmatpush1.msra.mxu0 %v55
  %11532 = vmatprep.subr.mxu0 0.0
  %11533 = vmatpush1.msra.mxu0 %v56
  %11534 = vmatprep.subr.mxu0 0.0
  %11535 = vmatpush1.msra.mxu0 %v57
  %11536 = vmatprep.subr.mxu0 0.0
  %11537 = vmatpush1.msra.mxu0 %v58
  %11538 = vmatprep.subr.mxu0 0.0
  %11539 = vmatpush1.msra.mxu0 %v59
  %11540 = vmatprep.subr.mxu0 0.0
  %11541 = vmatpush1.msra.mxu0 %v60
  %11542 = vmatprep.subr.mxu0 0.0
  %11543 = vmatpush1.msra.mxu0 %v61
  %11544 = vmatprep.subr.mxu0 0.0
  %11545 = vmatpush1.msra.mxu0 0.0
  %11546 = vmatprep.subr.mxu0 0.0
  %11547 = vmatpush1.msra.mxu0 0.0
  %11548 = vmatprep.subr.mxu0 0.0
  %11549 = vmatpush1.msra.mxu0 0.0
  %11550 = vmatprep.subr.mxu0 0.0
  %11551 = vmatpush1.msra.mxu0 0.0
  %11552 = vmatprep.subr.mxu0 0.0
  %11553 = vmatpush1.msra.mxu0 0.0
  %11554 = vmatprep.subr.mxu0 0.0
  %11555 = vmatpush1.msra.mxu0 0.0
  %11556 = vmatprep.subr.mxu0 0.0
  %11557 = vmatpush1.msra.mxu0 0.0
  %11558 = vmatprep.subr.mxu0 0.0
  %11559 = vmatpush1.msra.mxu0 0.0
  %11560 = vmatprep.subr.mxu0 0.0
  %11561 = vmatpush1.msra.mxu0 0.0
  %11562 = vmatprep.subr.mxu0 0.0
  %11563 = vmatpush1.msra.mxu0 0.0
  %11564 = vmatprep.subr.mxu0 0.0
  %11565 = vmatpush1.msra.mxu0 0.0
  %11566 = vmatprep.subr.mxu0 0.0
  %11567 = vmatpush1.msra.mxu0 0.0
  %11568 = vmatprep.subr.mxu0 0.0
  %11569 = vmatpush1.msra.mxu0 0.0
  %11570 = vmatprep.subr.mxu0 0.0
  %11571 = vmatpush1.msra.mxu0 0.0
  %11572 = vmatprep.subr.mxu0 0.0
  %11573 = vmatpush1.msra.mxu0 0.0
  %11574 = vmatprep.subr.mxu0 0.0
  %11575 = vmatpush1.msra.mxu0 0.0
  %11576 = vmatprep.subr.mxu0 0.0
  %11577 = vmatpush1.msra.mxu0 0.0
  %11578 = vmatprep.subr.mxu0 0.0
  %11579 = vmatpush1.msra.mxu0 0.0
  %11580 = vmatprep.subr.mxu0 0.0
  %11581 = vmatpush1.msra.mxu0 0.0
  %11582 = vmatprep.subr.mxu0 0.0
  %11583 = vmatpush1.msra.mxu0 0.0
  %11584 = vmatprep.subr.mxu0 0.0
  %11585 = vmatpush1.msra.mxu0 0.0
  %11586 = vmatprep.subr.mxu0 0.0
  %11587 = vmatpush1.msra.mxu0 0.0
  %11588 = vmatprep.subr.mxu0 0.0
  %11589 = vmatpush1.msra.mxu0 0.0
  %11590 = vmatprep.subr.mxu0 0.0
  %11591 = vmatpush1.msra.mxu0 0.0
  %11592 = vmatprep.mubr.f32.mxu0 0.0
  %11593 = vmatmul.mubr.f32.gmra.mrb[0].mxu0 %v11517
  %v11594 = vpop.f32.mrb[0].mxu0
  %v11595 = vadd.f32 0.0, %v11594
  %v11596 = vpop.f32.mrb[0].mxu0
  %11597 = vmatprep.mubr.f32.mxu0 0.0
  %11598 = vmatmul.mubr.f32.gmra.mrb[0].mxu0 %v11520
  %v11599 = vpop.f32.mrb[0].mxu0
  %v11600 = vadd.f32 0.0, %v11599
  %v11601 = vpop.f32.mrb[0].mxu0
  %11602 = vmatprep.mubr.f32.mxu0 0.0
  %11603 = vmatmul.mubr.f32.gmra.mrb[0].mxu0 %v11523
  %v11604 = vpop.f32.mrb[0].mxu0
  %v11605 = vadd.f32 0.0, %v11604
  %v11606 = vpop.f32.mrb[0].mxu0
  %11607 = vmatprep.mubr.f32.mxu0 0.0
  %11608 = vmatmul.mubr.f32.gmra.mrb[0].mxu0 %v11526
  %v11609 = vpop.f32.mrb[0].mxu0
  %v11610 = vadd.f32 0.0, %v11609
  %v11611 = vpop.f32.mrb[0].mxu0
  %11612 = vdwg.mxu0
  %11613 = vst.msk [vmem:[%s10] sm:$0xff] %vm95, %v11595
  %11614 = vst.msk [vmem:[%s10 + $0x8] sm:$0xff] %vm95, %v11600
  %11615 = vst.msk [vmem:[%s10 + $0x10] sm:$0xff] %vm95, %v11605
  %11616 = vst.msk [vmem:[%s10 + $0x18] sm:$0xff] %vm95, %v11610
  %11617 = vxpose.xlu0.b32.start [1/16] %v11476, 128
  %11618 = vxpose.xlu0.b32.cont [2/16] %v11477, 128
  %11619 = vxpose.xlu0.b32.cont [3/16] %v11478, 128
  %11620 = vxpose.xlu0.b32.cont [4/16] %v11479, 128
  %11621 = vxpose.xlu0.b32.cont [5/16] %v11480, 128
  %11622 = vxpose.xlu0.b32.cont [6/16] %v11481, 128
  %11623 = vxpose.xlu0.b32.cont [7/16] %v11482, 128
  %11624 = vxpose.xlu0.b32.cont [8/16] %v11483, 128
  %11625 = vxpose.xlu0.b32.cont [9/16] 0.0, 128
  %11626 = vxpose.xlu0.b32.cont [10/16] 0.0, 128
  %11627 = vxpose.xlu0.b32.cont [11/16] 0.0, 128
  %11628 = vxpose.xlu0.b32.cont [12/16] 0.0, 128
  %11629 = vxpose.xlu0.b32.cont [13/16] 0.0, 128
  %11630 = vxpose.xlu0.b32.cont [14/16] 0.0, 128
  %11631 = vxpose.xlu0.b32.cont [15/16] 0.0, 128
  %11632 = vxpose.xlu0.b32.end [16/16] 0.0, 128
  %v11633 = vpop.trf.xlu0
  %v11634 = vpop.trf.xlu0
  %v11635 = vpop.trf.xlu0
  %v11636 = vpop.trf.xlu0
  %v11637 = vpop.trf.xlu0
  %v11638 = vpop.trf.xlu0
  %v11639 = vpop.trf.xlu0
  %v11640 = vpop.trf.xlu0
  %v11641 = vpop.trf.xlu0
  %v11642 = vpop.trf.xlu0
  %v11643 = vpop.trf.xlu0
  %v11644 = vpop.trf.xlu0
  %v11645 = vpop.trf.xlu0
  %v11646 = vpop.trf.xlu0
  %v11647 = vpop.trf.xlu0
  %v11648 = vpop.trf.xlu0
  %v11650 = vsel %vm95, %v11633, 0
  %v11653 = vsel %vm95, %v11634, 0
  %v11656 = vsel %vm95, %v11635, 0
  %v11659 = vsel %vm95, %v11636, 0
  %11661 = vmatprep.subr.mxu0 0.0
  %11662 = vmatpush1.msra.mxu0 %v54
  %11663 = vmatprep.subr.mxu0 0.0
  %11664 = vmatpush1.msra.mxu0 %v55
  %11665 = vmatprep.subr.mxu0 0.0
  %11666 = vmatpush1.msra.mxu0 %v56
  %11667 = vmatprep.subr.mxu0 0.0
  %11668 = vmatpush1.msra.mxu0 %v57
  %11669 = vmatprep.subr.mxu0 0.0
  %11670 = vmatpush1.msra.mxu0 %v58
  %11671 = vmatprep.subr.mxu0 0.0
  %11672 = vmatpush1.msra.mxu0 %v59
  %11673 = vmatprep.subr.mxu0 0.0
  %11674 = vmatpush1.msra.mxu0 %v60
  %11675 = vmatprep.subr.mxu0 0.0
  %11676 = vmatpush1.msra.mxu0 %v61
  %11677 = vmatprep.subr.mxu0 0.0
  %11678 = vmatpush1.msra.mxu0 0.0
  %11679 = vmatprep.subr.mxu0 0.0
  %11680 = vmatpush1.msra.mxu0 0.0
  %11681 = vmatprep.subr.mxu0 0.0
  %11682 = vmatpush1.msra.mxu0 0.0
  %11683 = vmatprep.subr.mxu0 0.0
  %11684 = vmatpush1.msra.mxu0 0.0
  %11685 = vmatprep.subr.mxu0 0.0
  %11686 = vmatpush1.msra.mxu0 0.0
  %11687 = vmatprep.subr.mxu0 0.0
  %11688 = vmatpush1.msra.mxu0 0.0
  %11689 = vmatprep.subr.mxu0 0.0
  %11690 = vmatpush1.msra.mxu0 0.0
  %11691 = vmatprep.subr.mxu0 0.0
  %11692 = vmatpush1.msra.mxu0 0.0
  %11693 = vmatprep.subr.mxu0 0.0
  %11694 = vmatpush1.msra.mxu0 0.0
  %11695 = vmatprep.subr.mxu0 0.0
  %11696 = vmatpush1.msra.mxu0 0.0
  %11697 = vmatprep.subr.mxu0 0.0
  %11698 = vmatpush1.msra.mxu0 0.0
  %11699 = vmatprep.subr.mxu0 0.0
  %11700 = vmatpush1.msra.mxu0 0.0
  %11701 = vmatprep.subr.mxu0 0.0
  %11702 = vmatpush1.msra.mxu0 0.0
  %11703 = vmatprep.subr.mxu0 0.0
  %11704 = vmatpush1.msra.mxu0 0.0
  %11705 = vmatprep.subr.mxu0 0.0
  %11706 = vmatpush1.msra.mxu0 0.0
  %11707 = vmatprep.subr.mxu0 0.0
  %11708 = vmatpush1.msra.mxu0 0.0
  %11709 = vmatprep.subr.mxu0 0.0
  %11710 = vmatpush1.msra.mxu0 0.0
  %11711 = vmatprep.subr.mxu0 0.0
  %11712 = vmatpush1.msra.mxu0 0.0
  %11713 = vmatprep.subr.mxu0 0.0
  %11714 = vmatpush1.msra.mxu0 0.0
  %11715 = vmatprep.subr.mxu0 0.0
  %11716 = vmatpush1.msra.mxu0 0.0
  %11717 = vmatprep.subr.mxu0 0.0
  %11718 = vmatpush1.msra.mxu0 0.0
  %11719 = vmatprep.subr.mxu0 0.0
  %11720 = vmatpush1.msra.mxu0 0.0
  %11721 = vmatprep.subr.mxu0 0.0
  %11722 = vmatpush1.msra.mxu0 0.0
  %11723 = vmatprep.subr.mxu0 0.0
  %11724 = vmatpush1.msra.mxu0 0.0
  %11725 = vmatprep.mubr.f32.mxu0 0.0
  %11726 = vmatmul.mubr.f32.gmra.mrb[0].mxu0 %v11650
  %v11727 = vpop.f32.mrb[0].mxu0
  %v11728 = vadd.f32 0.0, %v11727
  %v11729 = vpop.f32.mrb[0].mxu0
  %11730 = vmatprep.mubr.f32.mxu0 0.0
  %11731 = vmatmul.mubr.f32.gmra.mrb[0].mxu0 %v11653
  %v11732 = vpop.f32.mrb[0].mxu0
  %v11733 = vadd.f32 0.0, %v11732
  %v11734 = vpop.f32.mrb[0].mxu0
  %11735 = vmatprep.mubr.f32.mxu0 0.0
  %11736 = vmatmul.mubr.f32.gmra.mrb[0].mxu0 %v11656
  %v11737 = vpop.f32.mrb[0].mxu0
  %v11738 = vadd.f32 0.0, %v11737
  %v11739 = vpop.f32.mrb[0].mxu0
  %11740 = vmatprep.mubr.f32.mxu0 0.0
  %11741 = vmatmul.mubr.f32.gmra.mrb[0].mxu0 %v11659
  %v11742 = vpop.f32.mrb[0].mxu0
  %v11743 = vadd.f32 0.0, %v11742
  %v11744 = vpop.f32.mrb[0].mxu0
  %11745 = vdwg.mxu0
  %s11746 = scalar_lea.vmem %s10, 32
  %11747 = vst.msk [vmem:[%s11746] sm:$0xff] %vm95, %v11728
  %11748 = vst.msk [vmem:[%s11746 + $0x8] sm:$0xff] %vm95, %v11733
  %11749 = vst.msk [vmem:[%s11746 + $0x10] sm:$0xff] %vm95, %v11738
  %11750 = vst.msk [vmem:[%s11746 + $0x18] sm:$0xff] %vm95, %v11743
  // Predicated region
  $region42: #{basic_block_forward.1} parent=0 // pred_check
    _
  $region43: #{basic_block_forward.1} parent=0 // pred_check_branch
    %11752 = sbr.rel (0) target = $region45
  $region44: #{basic_block_forward.1} parent=0 // pred_region
    _
  $region45: #{basic_block_forward.1} parent=0 // pred_fallthru
    _
  // Predicated region
  $region46: #{basic_block_forward.1} parent=0 // pred_check
    _
  $region47: #{basic_block_forward.1} parent=0 // pred_check_branch
    %11754 = sbr.rel (0) target = $region49
  $region48: #{basic_block_forward.1} parent=0 // pred_region
    _
  $region49: #{basic_block_forward.1} parent=0 // pred_fallthru
    _

</llo_original>
